<compile_context>
chip_gen: v6e
topology: v6e:2x2x1
jax: 0.10.0
libtpu: 0.0.40
codegen_flags: <defaults>
</compile_context>

<pallas_src>
import functools

import jax
import jax.numpy as jnp
from jax import lax
from jax.experimental import pallas as pl
from jax.experimental.pallas import tpu as pltpu


def _round_up(x, m):
    return (x + m - 1) // m * m


_PAD_MODE = {'reflect': 'reflect', 'replicate': 'edge', 'zero': 'constant'}


# --------------------------- fused conv Pallas kernel -----------------------

def _conv3x3_instnorm_kernel(*refs, H, W, Wp8, R, Lp, eps, apply_relu,
                             padding_type, has_residual, emit_padded):
    """3x3 conv (stride 1) + InstanceNorm2d(affine=False) [+ReLU] [+residual].

    One grid step == one (image, Cout-tile).  x_ref holds the spatially padded
    image flattened to (Lp, Cin) rows in bf16 with the padded width rounded up
    to Wp8 (multiple of 8).  The 3 kj-shifted copies of the activation are
    packed side by side (K = 3*Cin) into a persistent VMEM scratch once per
    image; the conv is then 3 MXU matmuls whose ki slice starts (ki*Wp8) are
    sublane aligned.  Columns w in [W, Wp8) of each output row are wrap-around
    garbage; they are masked out of the norm statistics and never written to
    the valid output region.
    """
    if has_residual:
        x_ref, w_ref, r_ref, o_ref, xcat_ref = refs
    else:
        x_ref, w_ref, o_ref, xcat_ref = refs

    Mout = H * Wp8
    Ct = o_ref.shape[-1]                            # Cout tile width

    # kj-folded activation, built once per image (Cout-tile 0 only); the
    # scratch persists across grid steps so the later Cout tiles reuse it.
    @pl.when(pl.program_id(1) == 0)
    def _():
        x = x_ref[0]                                # (Lp, Cin) bf16 in VMEM
        xcat_ref[...] = jnp.concatenate(
            [x[0:R, :], x[1:R + 1, :], x[2:R + 2, :]], axis=-1)

    # Conv: 3 MXU matmuls with K = 3*Cin (kj folded into the contraction).
    acc = jnp.zeros((Mout, Ct), jnp.float32)
    for ki in range(3):
        start = ki * Wp8                            # sublane-aligned (Wp8 % 8 == 0)
        a = xcat_ref[start:start + Mout, :]         # (Mout, 3*Cin) bf16
        acc = acc + jnp.dot(a, w_ref[ki], preferred_element_type=jnp.float32)

    # NOTE: no conv bias — with InstanceNorm2d(affine=False) directly after the
    # conv a per-channel bias is cancelled exactly by the mean subtraction.

    # One-pass InstanceNorm over the H*W valid pixels; mask built in-kernel.
    col = lax.broadcasted_iota(jnp.int32, (Mout, 1), 0) % Wp8
    mask = (col < W).astype(jnp.float32)            # 1 = valid column
    cnt = jnp.float32(H * W)
    s1 = jnp.sum(acc * mask, axis=0, keepdims=True)
    s2 = jnp.sum(acc * acc * mask, axis=0, keepdims=True)
    mean = s1 / cnt
    var = jnp.maximum(s2 / cnt - mean * mean, 0.0)
    y = (acc - mean) * lax.rsqrt(var + eps)         # rsqrt -> EUP (free slot)
    if apply_relu:
        y = jnp.maximum(y, 0.0)

    y3 = y.reshape(H, Wp8, Ct)                      # layout-preserving reshape
    yv = y3[:, :W, :]                               # drop garbage columns

    if not emit_padded:
        if has_residual:
            yv = yv + r_ref[0].astype(jnp.float32)  # fused skip connection
        o_ref[0] = yv.astype(o_ref.dtype)
        return

    # Emit the output already spatially padded (padding_type) + zero-extended
    # to Wp8 columns + flattened — the exact layout the next conv consumes.
    yv = yv.astype(o_ref.dtype)
    if padding_type == 'reflect':
        lcol, rcol = yv[:, 1:2, :], yv[:, W - 2:W - 1, :]
    elif padding_type == 'replicate':
        lcol, rcol = yv[:, 0:1, :], yv[:, W - 1:W, :]
    else:                                           # 'zero'
        lcol = rcol = jnp.zeros((H, 1, Ct), yv.dtype)
    parts = [lcol, yv, rcol]
    if Wp8 - (W + 2) > 0:                           # zero-fill garbage columns
        parts.append(jnp.zeros((H, Wp8 - (W + 2), Ct), yv.dtype))
    cp = jnp.concatenate(parts, axis=1)             # (H, Wp8, Ct)
    if padding_type == 'reflect':
        trow, brow = cp[1:2], cp[H - 2:H - 1]
    elif padding_type == 'replicate':
        trow, brow = cp[0:1], cp[H - 1:H]
    else:
        trow = brow = jnp.zeros((1, Wp8, Ct), cp.dtype)
    rp = jnp.concatenate([trow, cp, brow], axis=0).reshape(R, Ct)
    # Zero the (Lp - R) trailing rows so the next conv never reads garbage.
    o_ref[0] = jnp.concatenate([rp, jnp.zeros((Lp - R, Ct), rp.dtype)], axis=0)


def conv3x3_instnorm(x, w9, *, H, W, padding_type='reflect', eps=1e-5,
                     apply_relu=False, residual=None, emit_padded=False,
                     x_prepadded=False):
    """One fused Pallas call: 3x3 conv + InstanceNorm [+ReLU] [+residual].

    x : (N, H, W, Cin) NHWC, or (N, Lp, Cin) already in the padded/flattened
        layout produced by a previous emit_padded=True call.
    w9: (3, 3*Cin, Cout) bf16; w9[ki, kj*Cin+ci, co] = torch_w[co, ci, ki, kj].
    Returns (N, Lp, Cout) bf16 if emit_padded else (N, H, W, Cout) bf16.
    """
    N = x.shape[0]
    Cin = x.shape[-1]
    Cout = w9.shape[-1]
    Wp8 = _round_up(W + 2, 8)                 # sublane-aligned padded width
    R = (H + 2) * Wp8                         # flattened padded-image rows
    Lp = _round_up(R + 2, 8)                  # +2 rows keep tap slices in bounds
    Mout = H * Wp8

    if x_prepadded:
        assert x.shape == (N, Lp, Cin), x.shape
        z = x
    else:
        assert x.shape == (N, H, W, Cin), x.shape
        if padding_type in ('reflect', 'replicate'):
            assert H >= 2 and W >= 2, "reflect/replicate padding needs H,W >= 2"
        xb = x.astype(jnp.bfloat16)
        xp = jnp.pad(xb, ((0, 0), (1, 1), (1, 1), (0, 0)),
                     mode=_PAD_MODE[padding_type])
        xp = jnp.pad(xp, ((0, 0), (0, 0), (0, Wp8 - (W + 2)), (0, 0)))
        z = jnp.pad(xp.reshape(N, R, Cin), ((0, 0), (0, Lp - R), (0, 0)))

    # Cout tile: lane-dense 128-wide tiles at dim >= 256, otherwise one tile.
    # TODO(synk): for dim < 128 the output stores stay lane-masked; a
    # (Mout, C)->(Mout/2, 2C) lane-dense repack would help but scrambles the
    # residual layout, so it is not done here.
    TC = 128 if (Cout > 128 and Cout % 128 == 0) else Cout
    n_ct = Cout // TC

    inputs = [z, w9]
    in_specs = [
        pl.BlockSpec((1, Lp, Cin), lambda n, c: (n, 0, 0)),    # padded activation
        pl.BlockSpec((3, 3 * Cin, TC), lambda n, c: (0, 0, c)),  # folded weights
    ]
    has_residual = residual is not None
    if has_residual:
        assert residual.shape == (N, H, W, Cout), residual.shape
        inputs.append(residual.astype(jnp.bfloat16))           # bf16 skip input
        in_specs.append(pl.BlockSpec((1, H, W, TC), lambda n, c: (n, 0, 0, c)))

    if emit_padded:
        out_shape = jax.ShapeDtypeStruct((N, Lp, Cout), jnp.bfloat16)
        out_spec = pl.BlockSpec((1, Lp, TC), lambda n, c: (n, 0, c))
        out_elems = Lp * TC
    else:
        out_shape = jax.ShapeDtypeStruct((N, H, W, Cout), jnp.bfloat16)
        out_spec = pl.BlockSpec((1, H, W, TC), lambda n, c: (n, 0, 0, c))
        out_elems = H * W * TC

    kernel = functools.partial(
        _conv3x3_instnorm_kernel, H=H, W=W, Wp8=Wp8, R=R, Lp=Lp, eps=eps,
        apply_relu=apply_relu, padding_type=padding_type,
        has_residual=has_residual, emit_padded=emit_padded)

    # Per-step VMEM budget (double-buffered tiles + scratch + f32 epilogue
    # temps), clamped to 64 MiB so it also fits v7x's physical VMEM.
    per_step = (2 * Lp * Cin * 2 + 2 * 3 * 3 * Cin * TC * 2
                + R * 3 * Cin * 2 + 4 * Mout * TC * 4
                + 2 * out_elems * 2
                + (2 * H * W * TC * 2 if has_residual else 0))
    vmem_limit = int(min(64 * 2 ** 20, max(32 * 2 ** 20, int(1.25 * per_step))))

    cost = pl.CostEstimate(
        flops=2 * N * Mout * 9 * Cin * Cout,
        transcendentals=N * Cout,
        bytes_accessed=int(z.size * 2 + w9.size * 2
                           + (N * H * W * Cout * 2 if has_residual else 0)
                           + N * (Lp if emit_padded else H * W) * Cout * 2))

    return pl.pallas_call(
        kernel,
        out_shape=out_shape,
        grid_spec=pltpu.PrefetchScalarGridSpec(
            num_scalar_prefetch=0,
            grid=(N, n_ct),                    # Cout tiles innermost: xcat reuse
            in_specs=in_specs,
            out_specs=out_spec,
            scratch_shapes=[pltpu.VMEM((R, 3 * Cin), jnp.bfloat16)],
        ),
        compiler_params=pltpu.CompilerParams(
            dimension_semantics=("parallel", "arbitrary"),
            vmem_limit_bytes=vmem_limit),
        cost_estimate=cost,
    )(*inputs)


# ------------------------------ ResnetBlock ---------------------------------

def build_resnet_block_params(key, dim):
    """Conv weights pre-reshaped to (3, 3*Cin, Cout) and pre-cast to bf16.

    No conv biases: with InstanceNorm2d(affine=False) directly after each conv
    a per-channel bias is removed exactly by the mean subtraction (exact no-op),
    so the bias parameters and their in-kernel add are dropped.
    """
    k1, k2 = jax.random.split(key, 2)
    fan_in = dim * 9

    def conv_w(k):
        w = jax.random.normal(k, (dim, dim, 3, 3), jnp.float32)   # (Co,Ci,kh,kw)
        w = w * (2.0 / fan_in) ** 0.5
        return (jnp.transpose(w, (2, 3, 1, 0))                    # (kh,kw,Ci,Co)
                .reshape(3, 3 * dim, dim).astype(jnp.bfloat16))   # (3, 3*Ci, Co)

    return {'w1': conv_w(k1), 'w2': conv_w(k2)}


def resnet_block_forward(params, x_nchw, *, padding_type='reflect', eps=1e-5):
    """out = x + conv_block(x); NCHW in / NCHW out, matching the PyTorch module.

    norm_layer implemented: InstanceNorm2d(affine=False) — the CycleGAN default.
    # TODO(synk): use_dropout=True (nn.Dropout(0.5)) not implemented (inference
    # config); norm_layer=BatchNorm2d (cross-batch statistics) not implemented.
    """
    N, C, H, W = x_nchw.shape
    x = jnp.transpose(x_nchw, (0, 2, 3, 1)).astype(jnp.bfloat16)   # NHWC, once

    # conv1 writes its output already reflect-padded + flattened in conv2's
    # input layout (no wrapper-side slice/pad/reshape between the two convs).
    h = conv3x3_instnorm(x, params['w1'], H=H, W=W, padding_type=padding_type,
                         eps=eps, apply_relu=True, emit_padded=True)
    y = conv3x3_instnorm(h, params['w2'], H=H, W=W, padding_type=padding_type,
                         eps=eps, apply_relu=False, residual=x,   # fused skip
                         emit_padded=False, x_prepadded=True)
    return jnp.transpose(y.astype(jnp.float32), (0, 3, 1, 2))      # NHWC->NCHW


# ------------------------- pure-JAX reference (check) -----------------------

def resnet_block_reference(params, x_nchw, *, padding_type='reflect', eps=1e-5):
    """XLA reference reproducing the same bf16 rounding points as the kernel."""
    mode = _PAD_MODE[padding_type]
    x = jnp.transpose(x_nchw, (0, 2, 3, 1)).astype(jnp.bfloat16)

    def conv_in(h_b16, w9, relu):
        Cin = h_b16.shape[-1]
        hp = jnp.pad(h_b16.astype(jnp.float32), ((0, 0), (1, 1), (1, 1), (0, 0)),
                     mode=mode)
        w = w9.astype(jnp.float32).reshape(3, 3, Cin, -1)          # HWIO
        y = lax.conv_general_dilated(
            hp, w, window_strides=(1, 1), padding='VALID',
            dimension_numbers=('NHWC', 'HWIO', 'NHWC'),
            precision=lax.Precision.HIGHEST)
        mean = jnp.mean(y, axis=(1, 2), keepdims=True)
        var = jnp.maximum(jnp.mean(y * y, axis=(1, 2), keepdims=True)
                          - mean * mean, 0.0)
        y = (y - mean) * lax.rsqrt(var + eps)
        return jnp.maximum(y, 0.0) if relu else y

    h = conv_in(x, params['w1'], True).astype(jnp.bfloat16)
    y = conv_in(h, params['w2'], False)
    out = (y + x.astype(jnp.float32)).astype(jnp.bfloat16)
    return jnp.transpose(out.astype(jnp.float32), (0, 3, 1, 2))


if __name__ == "__main__":
    key = jax.random.PRNGKey(0)
    pkey, xkey = jax.random.split(key)
    N, dim, H, W = 2, 64, 16, 16                   # small test shapes
    params = build_resnet_block_params(pkey, dim)
    x = jax.random.normal(xkey, (N, dim, H, W), jnp.float32)

    fwd = jax.jit(functools.partial(resnet_block_forward,
                                    padding_type='reflect'))
    out = fwd(params, x)
    jax.block_until_ready(out)

    assert out.shape == (N, dim, H, W), out.shape
    assert bool(jnp.all(jnp.isfinite(out)))

    ref = resnet_block_reference(params, x, padding_type='reflect')
    err = float(jnp.max(jnp.abs(out - ref)))
    assert err < 5e-2, f"max abs error vs reference: {err}"

    print("KERNEL_OK")
</pallas_src>

<mosaic_0001>
module attributes {stable_mosaic.version = 11 : i64} {
  func.func @_conv3x3_instnorm_kernel(%arg0: i32, %arg1: i32, %arg2: memref<1x440x64xbf16, #tpu.memory_space<vmem>>, %arg3: memref<3x192x64xbf16, #tpu.memory_space<vmem>>, %arg4: memref<1x440x64xbf16, #tpu.memory_space<vmem>>, %arg5: memref<432x192xbf16, #tpu.memory_space<vmem>>) attributes {dimension_semantics = [#tpu.dimension_semantics<parallel>, #tpu.dimension_semantics<arbitrary>], iteration_bounds = array<i64: 2, 1>, scalar_prefetch = 0 : i64, scratch_operands = 1 : i64, tpu.core_type = #tpu.core_type<tc>, window_params = [{transform_indices = @transform_0, window_bounds = array<i64: 1, 440, 64>}, {transform_indices = @transform_1, window_bounds = array<i64: 3, 192, 64>}, {transform_indices = @transform_2, window_bounds = array<i64: 1, 440, 64>}]} {
    %c0_i32 = arith.constant 0 : i32
    %0 = arith.cmpi eq, %arg1, %c0_i32 : i32
    %1 = arith.extui %0 : i1 to i32
    %c0_i32_0 = arith.constant 0 : i32
    %2 = arith.cmpi ne, %1, %c0_i32_0 : i32
    scf.if %2 {
      %c0_30 = arith.constant 0 : index
      %c0_31 = arith.constant 0 : index
      %c0_32 = arith.constant 0 : index
      %82 = vector.load %arg2[%c0_30, %c0_31, %c0_32] : memref<1x440x64xbf16, #tpu.memory_space<vmem>>, vector<1x440x64xbf16>
      %83 = vector.shape_cast %82 : vector<1x440x64xbf16> to vector<440x64xbf16>
      %84 = vector.extract_strided_slice %83 {offsets = [0, 0], sizes = [432, 64], strides = [1, 1]} : vector<440x64xbf16> to vector<432x64xbf16>
      %85 = vector.extract_strided_slice %83 {offsets = [1, 0], sizes = [432, 64], strides = [1, 1]} : vector<440x64xbf16> to vector<432x64xbf16>
      %86 = vector.extract_strided_slice %83 {offsets = [2, 0], sizes = [432, 64], strides = [1, 1]} : vector<440x64xbf16> to vector<432x64xbf16>
      %87 = tpu.concatenate %84, %85, %86 in 1 : vector<432x64xbf16>, vector<432x64xbf16>, vector<432x64xbf16> -> vector<432x192xbf16>
      %c0_33 = arith.constant 0 : index
      %c0_34 = arith.constant 0 : index
      %88 = vector.load %arg5[%c0_33, %c0_34] : memref<432x192xbf16, #tpu.memory_space<vmem>>, vector<432x192xbf16>
      tpu.vector_store %arg5[%c0_33, %c0_34], %87 {strides = array<i32>} : memref<432x192xbf16, #tpu.memory_space<vmem>>, vector<432x192xbf16>,
    } else {
    }
    %cst = arith.constant 0.000000e+00 : f32
    %3 = vector.broadcast %cst : f32 to vector<384x64xf32>
    %c0 = arith.constant 0 : index
    %c0_1 = arith.constant 0 : index
    %4 = vector.load %arg5[%c0, %c0_1] : memref<432x192xbf16, #tpu.memory_space<vmem>>, vector<384x192xbf16>
    %c0_2 = arith.constant 0 : index
    %c0_3 = arith.constant 0 : index
    %c0_4 = arith.constant 0 : index
    %5 = vector.load %arg3[%c0_2, %c0_3, %c0_4] : memref<3x192x64xbf16, #tpu.memory_space<vmem>>, vector<1x192x64xbf16>
    %6 = vector.shape_cast %5 : vector<1x192x64xbf16> to vector<192x64xbf16>
    %cst_5 = arith.constant dense<0.000000e+00> : vector<384x64xf32>
    %7 = tpu.matmul %4, %6, %cst_5 {dimension_numbers = #tpu.dot_dimension_numbers<[1], [0], [0], [1], [0, 0, 1, 1], [], []>} : vector<384x192xbf16>, vector<192x64xbf16>, vector<384x64xf32> -> vector<384x64xf32>
    %8 = arith.addf %3, %7 : vector<384x64xf32>
    %c24 = arith.constant 24 : index
    %c0_6 = arith.constant 0 : index
    %9 = vector.load %arg5[%c24, %c0_6] : memref<432x192xbf16, #tpu.memory_space<vmem>>, vector<384x192xbf16>
    %c1 = arith.constant 1 : index
    %c0_7 = arith.constant 0 : index
    %c0_8 = arith.constant 0 : index
    %10 = vector.load %arg3[%c1, %c0_7, %c0_8] : memref<3x192x64xbf16, #tpu.memory_space<vmem>>, vector<1x192x64xbf16>
    %11 = vector.shape_cast %10 : vector<1x192x64xbf16> to vector<192x64xbf16>
    %cst_9 = arith.constant dense<0.000000e+00> : vector<384x64xf32>
    %12 = tpu.matmul %9, %11, %cst_9 {dimension_numbers = #tpu.dot_dimension_numbers<[1], [0], [0], [1], [0, 0, 1, 1], [], []>} : vector<384x192xbf16>, vector<192x64xbf16>, vector<384x64xf32> -> vector<384x64xf32>
    %13 = arith.addf %8, %12 : vector<384x64xf32>
    %c48 = arith.constant 48 : index
    %c0_10 = arith.constant 0 : index
    %14 = vector.load %arg5[%c48, %c0_10] : memref<432x192xbf16, #tpu.memory_space<vmem>>, vector<384x192xbf16>
    %c2 = arith.constant 2 : index
    %c0_11 = arith.constant 0 : index
    %c0_12 = arith.constant 0 : index
    %15 = vector.load %arg3[%c2, %c0_11, %c0_12] : memref<3x192x64xbf16, #tpu.memory_space<vmem>>, vector<1x192x64xbf16>
    %16 = vector.shape_cast %15 : vector<1x192x64xbf16> to vector<192x64xbf16>
    %cst_13 = arith.constant dense<0.000000e+00> : vector<384x64xf32>
    %17 = tpu.matmul %14, %16, %cst_13 {dimension_numbers = #tpu.dot_dimension_numbers<[1], [0], [0], [1], [0, 0, 1, 1], [], []>} : vector<384x192xbf16>, vector<192x64xbf16>, vector<384x64xf32> -> vector<384x64xf32>
    %18 = arith.addf %13, %17 : vector<384x64xf32>
    %19 = tpu.iota {dimensions = array<i32: 0>} : vector<384x1xi32>
    %c24_i32 = arith.constant 24 : i32
    %c0_i32_14 = arith.constant 0 : i32
    %20 = arith.cmpi eq, %c24_i32, %c0_i32_14 : i32
    %c1_i32 = arith.constant 1 : i32
    %21 = arith.select %20, %c1_i32, %c24_i32 : i32
    %22 = vector.broadcast %21 : i32 to vector<384x1xi32>
    %23 = arith.remsi %19, %22 : vector<384x1xi32>
    %c0_i32_15 = arith.constant 0 : i32
    %24 = vector.broadcast %c0_i32_15 : i32 to vector<384x1xi32>
    %25 = arith.cmpi ne, %23, %24 : vector<384x1xi32>
    %c0_i32_16 = arith.constant 0 : i32
    %26 = vector.broadcast %c0_i32_16 : i32 to vector<384x1xi32>
    %27 = arith.cmpi slt, %23, %26 : vector<384x1xi32>
    %c0_i32_17 = arith.constant 0 : i32
    %28 = arith.cmpi slt, %21, %c0_i32_17 : i32
    %29 = vector.broadcast %28 : i1 to vector<384x1xi1>
    %30 = vector.broadcast %29 : vector<384x1xi1> to vector<384x1xi1>
    %31 = arith.xori %27, %30 : vector<384x1xi1>
    %32 = arith.andi %31, %25 : vector<384x1xi1>
    %33 = vector.broadcast %21 : i32 to vector<384x1xi32>
    %34 = arith.addi %23, %33 : vector<384x1xi32>
    %35 = arith.select %32, %34, %23 : vector<384x1xi1>, vector<384x1xi32>
    %c16_i32 = arith.constant 16 : i32
    %36 = vector.broadcast %c16_i32 : i32 to vector<384x1xi32>
    %37 = arith.cmpi slt, %35, %36 : vector<384x1xi32>
    %38 = arith.extui %37 : vector<384x1xi1> to vector<384x1xi32>
    %39 = arith.sitofp %38 : vector<384x1xi32> to vector<384x1xf32>
    %40 = vector.broadcast %39 : vector<384x1xf32> to vector<384x64xf32>
    %41 = arith.mulf %18, %40 : vector<384x64xf32>
    %cst_18 = arith.constant dense<0.000000e+00> : vector<64xf32>
    %42 = vector.multi_reduction <add>, %41, %cst_18 [0] : vector<384x64xf32> to vector<64xf32>
    %43 = vector.shape_cast %42 : vector<64xf32> to vector<1x64xf32>
    %44 = arith.mulf %18, %18 : vector<384x64xf32>
    %45 = vector.broadcast %39 : vector<384x1xf32> to vector<384x64xf32>
    %46 = arith.mulf %44, %45 : vector<384x64xf32>
    %cst_19 = arith.constant dense<0.000000e+00> : vector<64xf32>
    %47 = vector.multi_reduction <add>, %46, %cst_19 [0] : vector<384x64xf32> to vector<64xf32>
    %48 = vector.shape_cast %47 : vector<64xf32> to vector<1x64xf32>
    %cst_20 = arith.constant 2.560000e+02 : f32
    %49 = vector.broadcast %cst_20 : f32 to vector<1x64xf32>
    %50 = arith.divf %43, %49 : vector<1x64xf32>
    %cst_21 = arith.constant 2.560000e+02 : f32
    %51 = vector.broadcast %cst_21 : f32 to vector<1x64xf32>
    %52 = arith.divf %48, %51 : vector<1x64xf32>
    %53 = arith.mulf %50, %50 : vector<1x64xf32>
    %54 = arith.subf %52, %53 : vector<1x64xf32>
    %cst_22 = arith.constant 0.000000e+00 : f32
    %55 = vector.broadcast %cst_22 : f32 to vector<1x64xf32>
    %56 = arith.maximumf %54, %55 : vector<1x64xf32>
    %57 = vector.broadcast %50 : vector<1x64xf32> to vector<384x64xf32>
    %58 = arith.subf %18, %57 : vector<384x64xf32>
    %cst_23 = arith.constant 9.99999974E-6 : f32
    %59 = vector.broadcast %cst_23 : f32 to vector<1x64xf32>
    %60 = arith.addf %56, %59 : vector<1x64xf32>
    %61 = math.rsqrt %60 : vector<1x64xf32>
    %62 = vector.broadcast %61 : vector<1x64xf32> to vector<384x64xf32>
    %63 = arith.mulf %58, %62 : vector<384x64xf32>
    %cst_24 = arith.constant 0.000000e+00 : f32
    %64 = vector.broadcast %cst_24 : f32 to vector<384x64xf32>
    %65 = arith.maximumf %63, %64 : vector<384x64xf32>
    %66 = vector.shape_cast %65 : vector<384x64xf32> to vector<16x24x64xf32>
    %67 = vector.extract_strided_slice %66 {offsets = [0, 0, 0], sizes = [16, 16, 64], strides = [1, 1, 1]} : vector<16x24x64xf32> to vector<16x16x64xf32>
    %68 = arith.truncf %67 : vector<16x16x64xf32> to vector<16x16x64xbf16>
    %69 = vector.extract_strided_slice %68 {offsets = [0, 1, 0], sizes = [16, 1, 64], strides = [1, 1, 1]} : vector<16x16x64xbf16> to vector<16x1x64xbf16>
    %70 = vector.extract_strided_slice %68 {offsets = [0, 14, 0], sizes = [16, 1, 64], strides = [1, 1, 1]} : vector<16x16x64xbf16> to vector<16x1x64xbf16>
    %cst_25 = arith.constant 0.000000e+00 : bf16
    %71 = vector.broadcast %cst_25 : bf16 to vector<16x6x64xbf16>
    %72 = tpu.concatenate %69, %68, %70, %71 in 1 : vector<16x1x64xbf16>, vector<16x16x64xbf16>, vector<16x1x64xbf16>, vector<16x6x64xbf16> -> vector<16x24x64xbf16>
    %73 = vector.extract_strided_slice %72 {offsets = [1, 0, 0], sizes = [1, 24, 64], strides = [1, 1, 1]} : vector<16x24x64xbf16> to vector<1x24x64xbf16>
    %74 = vector.extract_strided_slice %72 {offsets = [14, 0, 0], sizes = [1, 24, 64], strides = [1, 1, 1]} : vector<16x24x64xbf16> to vector<1x24x64xbf16>
    %75 = tpu.concatenate %73, %72, %74 in 0 : vector<1x24x64xbf16>, vector<16x24x64xbf16>, vector<1x24x64xbf16> -> vector<18x24x64xbf16>
    %76 = vector.shape_cast %75 : vector<18x24x64xbf16> to vector<432x64xbf16>
    %cst_26 = arith.constant 0.000000e+00 : bf16
    %77 = vector.broadcast %cst_26 : bf16 to vector<8x64xbf16>
    %78 = tpu.concatenate %76, %77 in 0 : vector<432x64xbf16>, vector<8x64xbf16> -> vector<440x64xbf16>
    %c0_27 = arith.constant 0 : index
    %c0_28 = arith.constant 0 : index
    %c0_29 = arith.constant 0 : index
    %79 = vector.load %arg4[%c0_27, %c0_28, %c0_29] : memref<1x440x64xbf16, #tpu.memory_space<vmem>>, vector<1x440x64xbf16>
    %80 = vector.shape_cast %79 : vector<1x440x64xbf16> to vector<440x64xbf16>
    %81 = vector.shape_cast %78 : vector<440x64xbf16> to vector<1x440x64xbf16>
    tpu.vector_store %arg4[%c0_27, %c0_28, %c0_29], %81 {strides = array<i32>} : memref<1x440x64xbf16, #tpu.memory_space<vmem>>, vector<1x440x64xbf16>,
    return
  }
  func.func @transform_0(%arg0: i32, %arg1: i32) -> (i32, i32, i32) {
    %c0_i32 = arith.constant 0 : i32
    %c0_i32_0 = arith.constant 0 : i32
    %c0_i32_1 = arith.constant 0 : i32
    return %arg0, %c0_i32, %c0_i32_0 : i32, i32, i32
  }
  func.func @transform_1(%arg0: i32, %arg1: i32) -> (i32, i32, i32) {
    %c0_i32 = arith.constant 0 : i32
    %c0_i32_0 = arith.constant 0 : i32
    %c0_i32_1 = arith.constant 0 : i32
    return %c0_i32, %c0_i32_0, %arg1 : i32, i32, i32
  }
  func.func @transform_2(%arg0: i32, %arg1: i32) -> (i32, i32, i32) {
    %c0_i32 = arith.constant 0 : i32
    %c0_i32_0 = arith.constant 0 : i32
    return %arg0, %c0_i32, %arg1 : i32, i32, i32
  }
}

module attributes {stable_mosaic.version = 11 : i64} {
  func.func @_conv3x3_instnorm_kernel(%arg0: i32, %arg1: i32, %arg2: memref<1x440x64xbf16, #tpu.memory_space<vmem>>, %arg3: memref<3x192x64xbf16, #tpu.memory_space<vmem>>, %arg4: memref<1x16x16x64xbf16, #tpu.memory_space<vmem>>, %arg5: memref<1x16x16x64xbf16, #tpu.memory_space<vmem>>, %arg6: memref<432x192xbf16, #tpu.memory_space<vmem>>) attributes {dimension_semantics = [#tpu.dimension_semantics<parallel>, #tpu.dimension_semantics<arbitrary>], iteration_bounds = array<i64: 2, 1>, scalar_prefetch = 0 : i64, scratch_operands = 1 : i64, tpu.core_type = #tpu.core_type<tc>, window_params = [{transform_indices = @transform_0, window_bounds = array<i64: 1, 440, 64>}, {transform_indices = @transform_1, window_bounds = array<i64: 3, 192, 64>}, {transform_indices = @transform_2, window_bounds = array<i64: 1, 16, 16, 64>}, {transform_indices = @transform_3, window_bounds = array<i64: 1, 16, 16, 64>}]} {
    %c0_i32 = arith.constant 0 : i32
    %0 = arith.cmpi eq, %arg1, %c0_i32 : i32
    %1 = arith.extui %0 : i1 to i32
    %c0_i32_0 = arith.constant 0 : i32
    %2 = arith.cmpi ne, %1, %c0_i32_0 : i32
    scf.if %2 {
      %c0_32 = arith.constant 0 : index
      %c0_33 = arith.constant 0 : index
      %c0_34 = arith.constant 0 : index
      %74 = vector.load %arg2[%c0_32, %c0_33, %c0_34] : memref<1x440x64xbf16, #tpu.memory_space<vmem>>, vector<1x440x64xbf16>
      %75 = vector.shape_cast %74 : vector<1x440x64xbf16> to vector<440x64xbf16>
      %76 = vector.extract_strided_slice %75 {offsets = [0, 0], sizes = [432, 64], strides = [1, 1]} : vector<440x64xbf16> to vector<432x64xbf16>
      %77 = vector.extract_strided_slice %75 {offsets = [1, 0], sizes = [432, 64], strides = [1, 1]} : vector<440x64xbf16> to vector<432x64xbf16>
      %78 = vector.extract_strided_slice %75 {offsets = [2, 0], sizes = [432, 64], strides = [1, 1]} : vector<440x64xbf16> to vector<432x64xbf16>
      %79 = tpu.concatenate %76, %77, %78 in 1 : vector<432x64xbf16>, vector<432x64xbf16>, vector<432x64xbf16> -> vector<432x192xbf16>
      %c0_35 = arith.constant 0 : index
      %c0_36 = arith.constant 0 : index
      %80 = vector.load %arg6[%c0_35, %c0_36] : memref<432x192xbf16, #tpu.memory_space<vmem>>, vector<432x192xbf16>
      tpu.vector_store %arg6[%c0_35, %c0_36], %79 {strides = array<i32>} : memref<432x192xbf16, #tpu.memory_space<vmem>>, vector<432x192xbf16>,
    } else {
    }
    %cst = arith.constant 0.000000e+00 : f32
    %3 = vector.broadcast %cst : f32 to vector<384x64xf32>
    %c0 = arith.constant 0 : index
    %c0_1 = arith.constant 0 : index
    %4 = vector.load %arg6[%c0, %c0_1] : memref<432x192xbf16, #tpu.memory_space<vmem>>, vector<384x192xbf16>
    %c0_2 = arith.constant 0 : index
    %c0_3 = arith.constant 0 : index
    %c0_4 = arith.constant 0 : index
    %5 = vector.load %arg3[%c0_2, %c0_3, %c0_4] : memref<3x192x64xbf16, #tpu.memory_space<vmem>>, vector<1x192x64xbf16>
    %6 = vector.shape_cast %5 : vector<1x192x64xbf16> to vector<192x64xbf16>
    %cst_5 = arith.constant dense<0.000000e+00> : vector<384x64xf32>
    %7 = tpu.matmul %4, %6, %cst_5 {dimension_numbers = #tpu.dot_dimension_numbers<[1], [0], [0], [1], [0, 0, 1, 1], [], []>} : vector<384x192xbf16>, vector<192x64xbf16>, vector<384x64xf32> -> vector<384x64xf32>
    %8 = arith.addf %3, %7 : vector<384x64xf32>
    %c24 = arith.constant 24 : index
    %c0_6 = arith.constant 0 : index
    %9 = vector.load %arg6[%c24, %c0_6] : memref<432x192xbf16, #tpu.memory_space<vmem>>, vector<384x192xbf16>
    %c1 = arith.constant 1 : index
    %c0_7 = arith.constant 0 : index
    %c0_8 = arith.constant 0 : index
    %10 = vector.load %arg3[%c1, %c0_7, %c0_8] : memref<3x192x64xbf16, #tpu.memory_space<vmem>>, vector<1x192x64xbf16>
    %11 = vector.shape_cast %10 : vector<1x192x64xbf16> to vector<192x64xbf16>
    %cst_9 = arith.constant dense<0.000000e+00> : vector<384x64xf32>
    %12 = tpu.matmul %9, %11, %cst_9 {dimension_numbers = #tpu.dot_dimension_numbers<[1], [0], [0], [1], [0, 0, 1, 1], [], []>} : vector<384x192xbf16>, vector<192x64xbf16>, vector<384x64xf32> -> vector<384x64xf32>
    %13 = arith.addf %8, %12 : vector<384x64xf32>
    %c48 = arith.constant 48 : index
    %c0_10 = arith.constant 0 : index
    %14 = vector.load %arg6[%c48, %c0_10] : memref<432x192xbf16, #tpu.memory_space<vmem>>, vector<384x192xbf16>
    %c2 = arith.constant 2 : index
    %c0_11 = arith.constant 0 : index
    %c0_12 = arith.constant 0 : index
    %15 = vector.load %arg3[%c2, %c0_11, %c0_12] : memref<3x192x64xbf16, #tpu.memory_space<vmem>>, vector<1x192x64xbf16>
    %16 = vector.shape_cast %15 : vector<1x192x64xbf16> to vector<192x64xbf16>
    %cst_13 = arith.constant dense<0.000000e+00> : vector<384x64xf32>
    %17 = tpu.matmul %14, %16, %cst_13 {dimension_numbers = #tpu.dot_dimension_numbers<[1], [0], [0], [1], [0, 0, 1, 1], [], []>} : vector<384x192xbf16>, vector<192x64xbf16>, vector<384x64xf32> -> vector<384x64xf32>
    %18 = arith.addf %13, %17 : vector<384x64xf32>
    %19 = tpu.iota {dimensions = array<i32: 0>} : vector<384x1xi32>
    %c24_i32 = arith.constant 24 : i32
    %c0_i32_14 = arith.constant 0 : i32
    %20 = arith.cmpi eq, %c24_i32, %c0_i32_14 : i32
    %c1_i32 = arith.constant 1 : i32
    %21 = arith.select %20, %c1_i32, %c24_i32 : i32
    %22 = vector.broadcast %21 : i32 to vector<384x1xi32>
    %23 = arith.remsi %19, %22 : vector<384x1xi32>
    %c0_i32_15 = arith.constant 0 : i32
    %24 = vector.broadcast %c0_i32_15 : i32 to vector<384x1xi32>
    %25 = arith.cmpi ne, %23, %24 : vector<384x1xi32>
    %c0_i32_16 = arith.constant 0 : i32
    %26 = vector.broadcast %c0_i32_16 : i32 to vector<384x1xi32>
    %27 = arith.cmpi slt, %23, %26 : vector<384x1xi32>
    %c0_i32_17 = arith.constant 0 : i32
    %28 = arith.cmpi slt, %21, %c0_i32_17 : i32
    %29 = vector.broadcast %28 : i1 to vector<384x1xi1>
    %30 = vector.broadcast %29 : vector<384x1xi1> to vector<384x1xi1>
    %31 = arith.xori %27, %30 : vector<384x1xi1>
    %32 = arith.andi %31, %25 : vector<384x1xi1>
    %33 = vector.broadcast %21 : i32 to vector<384x1xi32>
    %34 = arith.addi %23, %33 : vector<384x1xi32>
    %35 = arith.select %32, %34, %23 : vector<384x1xi1>, vector<384x1xi32>
    %c16_i32 = arith.constant 16 : i32
    %36 = vector.broadcast %c16_i32 : i32 to vector<384x1xi32>
    %37 = arith.cmpi slt, %35, %36 : vector<384x1xi32>
    %38 = arith.extui %37 : vector<384x1xi1> to vector<384x1xi32>
    %39 = arith.sitofp %38 : vector<384x1xi32> to vector<384x1xf32>
    %40 = vector.broadcast %39 : vector<384x1xf32> to vector<384x64xf32>
    %41 = arith.mulf %18, %40 : vector<384x64xf32>
    %cst_18 = arith.constant dense<0.000000e+00> : vector<64xf32>
    %42 = vector.multi_reduction <add>, %41, %cst_18 [0] : vector<384x64xf32> to vector<64xf32>
    %43 = vector.shape_cast %42 : vector<64xf32> to vector<1x64xf32>
    %44 = arith.mulf %18, %18 : vector<384x64xf32>
    %45 = vector.broadcast %39 : vector<384x1xf32> to vector<384x64xf32>
    %46 = arith.mulf %44, %45 : vector<384x64xf32>
    %cst_19 = arith.constant dense<0.000000e+00> : vector<64xf32>
    %47 = vector.multi_reduction <add>, %46, %cst_19 [0] : vector<384x64xf32> to vector<64xf32>
    %48 = vector.shape_cast %47 : vector<64xf32> to vector<1x64xf32>
    %cst_20 = arith.constant 2.560000e+02 : f32
    %49 = vector.broadcast %cst_20 : f32 to vector<1x64xf32>
    %50 = arith.divf %43, %49 : vector<1x64xf32>
    %cst_21 = arith.constant 2.560000e+02 : f32
    %51 = vector.broadcast %cst_21 : f32 to vector<1x64xf32>
    %52 = arith.divf %48, %51 : vector<1x64xf32>
    %53 = arith.mulf %50, %50 : vector<1x64xf32>
    %54 = arith.subf %52, %53 : vector<1x64xf32>
    %cst_22 = arith.constant 0.000000e+00 : f32
    %55 = vector.broadcast %cst_22 : f32 to vector<1x64xf32>
    %56 = arith.maximumf %54, %55 : vector<1x64xf32>
    %57 = vector.broadcast %50 : vector<1x64xf32> to vector<384x64xf32>
    %58 = arith.subf %18, %57 : vector<384x64xf32>
    %cst_23 = arith.constant 9.99999974E-6 : f32
    %59 = vector.broadcast %cst_23 : f32 to vector<1x64xf32>
    %60 = arith.addf %56, %59 : vector<1x64xf32>
    %61 = math.rsqrt %60 : vector<1x64xf32>
    %62 = vector.broadcast %61 : vector<1x64xf32> to vector<384x64xf32>
    %63 = arith.mulf %58, %62 : vector<384x64xf32>
    %64 = vector.shape_cast %63 : vector<384x64xf32> to vector<16x24x64xf32>
    %65 = vector.extract_strided_slice %64 {offsets = [0, 0, 0], sizes = [16, 16, 64], strides = [1, 1, 1]} : vector<16x24x64xf32> to vector<16x16x64xf32>
    %c0_24 = arith.constant 0 : index
    %c0_25 = arith.constant 0 : index
    %c0_26 = arith.constant 0 : index
    %c0_27 = arith.constant 0 : index
    %66 = vector.load %arg4[%c0_24, %c0_25, %c0_26, %c0_27] : memref<1x16x16x64xbf16, #tpu.memory_space<vmem>>, vector<1x16x16x64xbf16>
    %67 = vector.shape_cast %66 : vector<1x16x16x64xbf16> to vector<16x16x64xbf16>
    %68 = arith.extf %67 : vector<16x16x64xbf16> to vector<16x16x64xf32>
    %69 = arith.addf %65, %68 : vector<16x16x64xf32>
    %70 = arith.truncf %69 : vector<16x16x64xf32> to vector<16x16x64xbf16>
    %c0_28 = arith.constant 0 : index
    %c0_29 = arith.constant 0 : index
    %c0_30 = arith.constant 0 : index
    %c0_31 = arith.constant 0 : index
    %71 = vector.load %arg5[%c0_28, %c0_29, %c0_30, %c0_31] : memref<1x16x16x64xbf16, #tpu.memory_space<vmem>>, vector<1x16x16x64xbf16>
    %72 = vector.shape_cast %71 : vector<1x16x16x64xbf16> to vector<16x16x64xbf16>
    %73 = vector.shape_cast %70 : vector<16x16x64xbf16> to vector<1x16x16x64xbf16>
    tpu.vector_store %arg5[%c0_28, %c0_29, %c0_30, %c0_31], %73 {strides = array<i32>} : memref<1x16x16x64xbf16, #tpu.memory_space<vmem>>, vector<1x16x16x64xbf16>,
    return
  }
  func.func @transform_0(%arg0: i32, %arg1: i32) -> (i32, i32, i32) {
    %c0_i32 = arith.constant 0 : i32
    %c0_i32_0 = arith.constant 0 : i32
    %c0_i32_1 = arith.constant 0 : i32
    return %arg0, %c0_i32, %c0_i32_0 : i32, i32, i32
  }
  func.func @transform_1(%arg0: i32, %arg1: i32) -> (i32, i32, i32) {
    %c0_i32 = arith.constant 0 : i32
    %c0_i32_0 = arith.constant 0 : i32
    %c0_i32_1 = arith.constant 0 : i32
    return %c0_i32, %c0_i32_0, %arg1 : i32, i32, i32
  }
  func.func @transform_2(%arg0: i32, %arg1: i32) -> (i32, i32, i32, i32) {
    %c0_i32 = arith.constant 0 : i32
    %c0_i32_0 = arith.constant 0 : i32
    %c0_i32_1 = arith.constant 0 : i32
    return %arg0, %c0_i32, %c0_i32_0, %arg1 : i32, i32, i32, i32
  }
  func.func @transform_3(%arg0: i32, %arg1: i32) -> (i32, i32, i32, i32) {
    %c0_i32 = arith.constant 0 : i32
    %c0_i32_0 = arith.constant 0 : i32
    %c0_i32_1 = arith.constant 0 : i32
    return %arg0, %c0_i32, %c0_i32_0, %arg1 : i32, i32, i32, i32
  }
}

</mosaic_0001>

<llo_original>
// kernel: resnet_block_forward.3
$region0: #{resnet_block_forward.3}
  #allocation0 [shape = 'u32[]', space=smem, size = 0x4, offset = 0x4, fixed_abs, tag = 'smem constant byte address 0x4 - core index']
  #allocation1 [shape = 'u32[144,128]{1,0:T(1,128)}', space=vmem, size = 0x12000, scoped, tag = 'internal scratch']
  #allocation2 [shape = 'bf16[432,192]{1,0:T(8,128)(2,1)}', space=vmem, size = 0x36000, scoped, tag = 'scratch operand']
  %s0 = inlined_call_operand.vmem [shape: bf16[2,440,64], index: 0, kind: input, shape index: {}]
  %s1 = inlined_call_operand.vmem [shape: bf16[3,192,64], index: 1, kind: input, shape index: {}]
  %s2 = inlined_call_operand.vmem [shape: bf16[2,16,16,64], index: 2, kind: input, shape index: {}]
  %s3 = inlined_call_operand.vmem [shape: bf16[2,16,16,64], index: 3, kind: output, shape index: {}]
  %s4 = sld [smem:[#allocation0]]
  $region49: #{resnet_block_forward.3} parent=0
    _
  %s6 = ssub.s32 1, %s4
  %s7 = scalar_select 0, %s6, %s4
  loop: start=0, step=1, limit=4
  $region2: #{resnet_block_forward.3} parent=0 // loop_pre_header
    _
  $region3: #{resnet_block_forward.3} parent=0 // loop_header
    %s9 = sphi 0, %s13
    %p10 = scmp.ge.s32.totalorder %s9, 4
    %s16 = sphi 0, %s28
    %s17 = sphi 0, %s24
    %s18 = sphi 0, %s16
    %s19 = sphi 0, %s17
    %s20 = sphi 0, %s18
    %s21 = sphi 0, %s19
    %s31 = sphi 0, %s33
    %s34 = sphi 0, %s31
    %s35 = sphi 0, %s34
    %s51 = sphi 0, %s35
    %s57 = sphi 0, %s59
    %s60 = sphi 0, %s57
    %s61 = sphi 0, %s60
    %s77 = sphi 0, %s61
    %s85 = sphi 0, %s87
    %s88 = sphi 0, %s85
    %s89 = sphi 0, %s88
    %s105 = sphi 0, %s89
    %s113 = sphi 0, %s115
    %s116 = sphi 0, %s113
    %s117 = sphi 0, %s116
    %s133 = sphi 0, %s117
  $region4: #{resnet_block_forward.3} parent=0 // loop_header_branch
    %12 = sbr.rel (%p10) target = $region8
  $region5: #{resnet_block_forward.3} parent=0 // loop_body
    %s14 = ssub.s32 %s9, 1
    %s15 = ssub.s32 %s9, 2
    %s22 = sadd.s32 1, %s17
    %p23 = scmp.ge.s32.totalorder %s22, 1
    %s24 = scalar_select %p23, 0, %s22
    %s25 = sadd.s32 1, %s16
    %s26 = scalar_select %p23, %s25, %s16
    %p27 = scmp.ge.s32.totalorder %s26, 2
    %s28 = scalar_select %p27, 0, %s26
    %s29 = ssub.s32 %s16, %s28
    %p30 = scmp.eq.s32.totalorder %s29, 0
    %s32 = sadd.s32 %s31, 1
    %s33 = scalar_select %p30, %s31, %s32
    %p36 = pneg %p30
    %p37 = scmp.eq.s32.totalorder %s9, 1
    %p38 = por %p36, %p37
    %p39 = scmp.ne.s32.totalorder %s31, %s34
    %p40 = scmp.eq.s32.totalorder %s9, 0
    %p41 = por %p39, %p40
    %p42 = scmp.ne.s32.totalorder %s31, %s34
    %p43 = scmp.eq.s32.totalorder %s14, 1
    %p44 = por %p42, %p43
    %p45 = scmp.ne.s32.totalorder %s34, %s35
    %p46 = scmp.eq.s32.totalorder %s14, 0
    %p47 = por %p45, %p46
    %p48 = scmp.ne.s32.totalorder %s34, %s35
    %p49 = scmp.eq.s32.totalorder %s15, 1
    %p50 = por %p48, %p49
    %p52 = scmp.ne.s32.totalorder %s35, %s51
    %p53 = scmp.eq.s32.totalorder %s15, 0
    %p54 = por %p52, %p53
    %s55 = ssub.s32 %s17, %s24
    %p56 = scmp.eq.s32.totalorder %s55, 0
    %s58 = sadd.s32 %s57, 1
    %s59 = scalar_select %p56, %s57, %s58
    %p62 = pneg %p56
    %p63 = scmp.eq.s32.totalorder %s9, 1
    %p64 = por %p62, %p63
    %p65 = scmp.ne.s32.totalorder %s57, %s60
    %p66 = scmp.eq.s32.totalorder %s9, 0
    %p67 = por %p65, %p66
    %p68 = scmp.ne.s32.totalorder %s57, %s60
    %p69 = scmp.eq.s32.totalorder %s14, 1
    %p70 = por %p68, %p69
    %p71 = scmp.ne.s32.totalorder %s60, %s61
    %p72 = scmp.eq.s32.totalorder %s14, 0
    %p73 = por %p71, %p72
    %p74 = scmp.ne.s32.totalorder %s60, %s61
    %p75 = scmp.eq.s32.totalorder %s15, 1
    %p76 = por %p74, %p75
    %p78 = scmp.ne.s32.totalorder %s61, %s77
    %p79 = scmp.eq.s32.totalorder %s15, 0
    %p80 = por %p78, %p79
    %s81 = ssub.s32 %s16, %s28
    %s82 = ssub.s32 %s17, %s24
    %s83 = sor.u32 %s81, %s82
    %p84 = scmp.eq.s32.totalorder %s83, 0
    %s86 = sadd.s32 %s85, 1
    %s87 = scalar_select %p84, %s85, %s86
    %p90 = pneg %p84
    %p91 = scmp.eq.s32.totalorder %s9, 1
    %p92 = por %p90, %p91
    %p93 = scmp.ne.s32.totalorder %s85, %s88
    %p94 = scmp.eq.s32.totalorder %s9, 0
    %p95 = por %p93, %p94
    %p96 = scmp.ne.s32.totalorder %s85, %s88
    %p97 = scmp.eq.s32.totalorder %s14, 1
    %p98 = por %p96, %p97
    %p99 = scmp.ne.s32.totalorder %s88, %s89
    %p100 = scmp.eq.s32.totalorder %s14, 0
    %p101 = por %p99, %p100
    %p102 = scmp.ne.s32.totalorder %s88, %s89
    %p103 = scmp.eq.s32.totalorder %s15, 1
    %p104 = por %p102, %p103
    %p106 = scmp.ne.s32.totalorder %s89, %s105
    %p107 = scmp.eq.s32.totalorder %s15, 0
    %p108 = por %p106, %p107
    %s109 = ssub.s32 %s16, %s28
    %s110 = ssub.s32 %s17, %s24
    %s111 = sor.u32 %s109, %s110
    %p112 = scmp.eq.s32.totalorder %s111, 0
    %s114 = sadd.s32 %s113, 1
    %s115 = scalar_select %p112, %s113, %s114
    %p118 = pneg %p112
    %p119 = scmp.eq.s32.totalorder %s9, 1
    %p120 = por %p118, %p119
    %p121 = scmp.ne.s32.totalorder %s113, %s116
    %p122 = scmp.eq.s32.totalorder %s9, 0
    %p123 = por %p121, %p122
    %p124 = scmp.ne.s32.totalorder %s113, %s116
    %p125 = scmp.eq.s32.totalorder %s14, 1
    %p126 = por %p124, %p125
    %p127 = scmp.ne.s32.totalorder %s116, %s117
    %p128 = scmp.eq.s32.totalorder %s14, 0
    %p129 = por %p127, %p128
    %p130 = scmp.ne.s32.totalorder %s116, %s117
    %p131 = scmp.eq.s32.totalorder %s15, 1
    %p132 = por %p130, %p131
    %p134 = scmp.ne.s32.totalorder %s117, %s133
    %p135 = scmp.eq.s32.totalorder %s15, 0
    %p136 = por %p134, %p135
    %p137 = scmp.le.s32.totalorder 1, %s9
    %p138 = scmp.lt.s32.totalorder %s9, 3
    %p139 = pnand %p137, %p138
    %p140 = pneg %p139
    // Predicated region
    $region9: #{resnet_block_forward.3} parent=5 // pred_check
      _
    $region10: #{resnet_block_forward.3} parent=5 // pred_check_branch
      %142 = sbr.rel (%p139) target = $region12
    $region11: #{resnet_block_forward.3} parent=5 // pred_region
      %s143 = ssub.s32 %s9, 1
      // Predicated region
      $region13: #{resnet_block_forward.3} parent=11 // pred_check
        %p144 = pneg %p73
      $region14: #{resnet_block_forward.3} parent=11 // pred_check_branch
        %146 = sbr.rel (%p144) target = $region16
      $region15: #{resnet_block_forward.3} parent=11 // pred_region
        %p147 = scmp.lt.s32.totalorder %s19, 0
        %s148 = scalar_select %p147, %s19, 0
        %s149 = smul.addr %s148, 4
        %s150 = scalar_lea.vmem %s1, %s149
      $region16: #{resnet_block_forward.3} parent=11 // pred_fallthru
        _
    $region12: #{resnet_block_forward.3} parent=5 // pred_fallthru
      _
    %p151 = scmp.lt.s32.totalorder %s9, 2
    // Predicated region
    $region17: #{resnet_block_forward.3} parent=5 // pred_check
      %p152 = pneg %p151
    $region18: #{resnet_block_forward.3} parent=5 // pred_check_branch
      %154 = sbr.rel (%p152) target = $region20
    $region19: #{resnet_block_forward.3} parent=5 // pred_region
      // Predicated region
      $region21: #{resnet_block_forward.3} parent=19 // pred_check
        %p155 = pneg %p41
      $region22: #{resnet_block_forward.3} parent=19 // pred_check_branch
        %157 = sbr.rel (%p155) target = $region24
      $region23: #{resnet_block_forward.3} parent=19 // pred_region
        %p158 = scmp.lt.s32.totalorder %s16, 1
        %s159 = scalar_select %p158, %s16, 1
        %s160 = smul.addr %s159, 55
        %s161 = smul.addr %s160, 4
        %s162 = scalar_lea.vmem %s0, %s161
      $region24: #{resnet_block_forward.3} parent=19 // pred_fallthru
        _
      // Predicated region
      $region25: #{resnet_block_forward.3} parent=19 // pred_check
        %p163 = pneg %p95
      $region26: #{resnet_block_forward.3} parent=19 // pred_check_branch
        %165 = sbr.rel (%p163) target = $region28
      $region27: #{resnet_block_forward.3} parent=19 // pred_region
        %p166 = scmp.lt.s32.totalorder %s16, 1
        %s167 = scalar_select %p166, %s16, 1
        %p168 = scmp.lt.s32.totalorder %s17, 0
        %s169 = scalar_select %p168, %s17, 0
        %s170 = smul.addr %s167, 32
        %s171 = sadd.s32 %s169, %s170
        %s172 = smul.addr %s171, 4
        %s173 = scalar_lea.vmem %s2, %s172
      $region28: #{resnet_block_forward.3} parent=19 // pred_fallthru
        _
    $region20: #{resnet_block_forward.3} parent=5 // pred_fallthru
      _
    %p174 = scmp.le.s32.totalorder 1, %s9
    %p175 = scmp.lt.s32.totalorder %s9, 3
    %p176 = pnand %p174, %p175
    %p177 = pneg %p176
    // Predicated region
    $region29: #{resnet_block_forward.3} parent=5 // pred_check
      _
    $region30: #{resnet_block_forward.3} parent=5 // pred_check_branch
      %179 = sbr.rel (%p176) target = $region32
    $region31: #{resnet_block_forward.3} parent=5 // pred_region
      %s180 = ssub.s32 %s9, 1
      %p181 = scmp.lt.s32.totalorder %s18, 1
      %s182 = scalar_select %p181, %s18, 1
      %s183 = smul.addr %s182, 55
      %s184 = smul.addr %s183, 4
      %s185 = scalar_lea.vmem %s0, %s184
      %p186 = pneg %p47
      %p187 = pneg %p44
      %p188 = scmp.lt.s32.totalorder %s19, 0
      %s189 = scalar_select %p188, %s19, 0
      %s190 = smul.addr %s189, 4
      %s191 = scalar_lea.vmem %s1, %s190
      %p192 = pneg %p73
      %p193 = pneg %p70
      %p194 = scmp.lt.s32.totalorder %s18, 1
      %s195 = scalar_select %p194, %s18, 1
      %p196 = scmp.lt.s32.totalorder %s19, 0
      %s197 = scalar_select %p196, %s19, 0
      %s198 = smul.addr %s195, 32
      %s199 = sadd.s32 %s197, %s198
      %s200 = smul.addr %s199, 4
      %s201 = scalar_lea.vmem %s2, %s200
      %p202 = pneg %p101
      %p203 = pneg %p98
      %p204 = pneg %p129
      %p205 = pneg %p126
      %p206 = scmp.lt.s32.totalorder %s18, 1
      %s207 = scalar_select %p206, %s18, 1
      %p208 = scmp.lt.s32.totalorder %s19, 0
      %s209 = scalar_select %p208, %s19, 0
      %s210 = smul.addr %s207, 32
      %s211 = sadd.s32 %s209, %s210
      %s212 = smul.addr %s211, 4
      %s213 = scalar_lea.vmem %s3, %s212
      %p214 = scmp.lt.s32.totalorder %s18, 1
      %s215 = scalar_select %p214, %s18, 1
      %s216 = smul.addr %s215, 55
      %s217 = smul.addr %s216, 4
      %s218 = scalar_lea.vmem %s0, %s217
      %p219 = scmp.lt.s32.totalorder %s19, 0
      %s220 = scalar_select %p219, %s19, 0
      %s221 = smul.addr %s220, 4
      %s222 = scalar_lea.vmem %s1, %s221
      %p223 = scmp.lt.s32.totalorder %s18, 1
      %s224 = scalar_select %p223, %s18, 1
      %p225 = scmp.lt.s32.totalorder %s19, 0
      %s226 = scalar_select %p225, %s19, 0
      %s227 = smul.addr %s224, 32
      %s228 = sadd.s32 %s226, %s227
      %s229 = smul.addr %s228, 4
      %s230 = scalar_lea.vmem %s2, %s229
      %p231 = scmp.lt.s32.totalorder %s18, 1
      %s232 = scalar_select %p231, %s18, 1
      %p233 = scmp.lt.s32.totalorder %s19, 0
      %s234 = scalar_select %p233, %s19, 0
      %s235 = smul.addr %s232, 32
      %s236 = sadd.s32 %s234, %s235
      %s237 = smul.addr %s236, 4
      %s238 = scalar_lea.vmem %s3, %s237
      %p240 = scmp.eq.s32.totalorder %s19, 0
      // Predicated region
      $region33: #{resnet_block_forward.3} parent=31 // pred_check
        %p241 = pneg %p240
      $region34: #{resnet_block_forward.3} parent=31 // pred_check_branch
        %243 = sbr.rel (%p241) target = $region36
      $region35: #{resnet_block_forward.3} parent=31 // pred_region
        %v244 = vld [vmem:[%s218] sm:$0xf]
        %v245 = vld [vmem:[%s218 + $0x4] sm:$0xf]
        %v246 = vld [vmem:[%s218 + $0x8] sm:$0xf]
        %v247 = vld [vmem:[%s218 + $0xc] sm:$0xf]
        %v248 = vld [vmem:[%s218 + $0x10] sm:$0xf]
        %v249 = vld [vmem:[%s218 + $0x14] sm:$0xf]
        %v250 = vld [vmem:[%s218 + $0x18] sm:$0xf]
        %v251 = vld [vmem:[%s218 + $0x1c] sm:$0xf]
        %v252 = vld [vmem:[%s218 + $0x20] sm:$0xf]
        %v253 = vld [vmem:[%s218 + $0x24] sm:$0xf]
        %v254 = vld [vmem:[%s218 + $0x28] sm:$0xf]
        %v255 = vld [vmem:[%s218 + $0x2c] sm:$0xf]
        %v256 = vld [vmem:[%s218 + $0x30] sm:$0xf]
        %v257 = vld [vmem:[%s218 + $0x34] sm:$0xf]
        %v258 = vld [vmem:[%s218 + $0x38] sm:$0xf]
        %v259 = vld [vmem:[%s218 + $0x3c] sm:$0xf]
        %v260 = vld [vmem:[%s218 + $0x40] sm:$0xf]
        %v261 = vld [vmem:[%s218 + $0x44] sm:$0xf]
        %v262 = vld [vmem:[%s218 + $0x48] sm:$0xf]
        %v263 = vld [vmem:[%s218 + $0x4c] sm:$0xf]
        %v264 = vld [vmem:[%s218 + $0x50] sm:$0xf]
        %v265 = vld [vmem:[%s218 + $0x54] sm:$0xf]
        %v266 = vld [vmem:[%s218 + $0x58] sm:$0xf]
        %v267 = vld [vmem:[%s218 + $0x5c] sm:$0xf]
        %v268 = vld [vmem:[%s218 + $0x60] sm:$0xf]
        %v269 = vld [vmem:[%s218 + $0x64] sm:$0xf]
        %v270 = vld [vmem:[%s218 + $0x68] sm:$0xf]
        %v271 = vld [vmem:[%s218 + $0x6c] sm:$0xf]
        %v272 = vld [vmem:[%s218 + $0x70] sm:$0xf]
        %v273 = vld [vmem:[%s218 + $0x74] sm:$0xf]
        %v274 = vld [vmem:[%s218 + $0x78] sm:$0xf]
        %v275 = vld [vmem:[%s218 + $0x7c] sm:$0xf]
        %v276 = vld [vmem:[%s218 + $0x80] sm:$0xf]
        %v277 = vld [vmem:[%s218 + $0x84] sm:$0xf]
        %v278 = vld [vmem:[%s218 + $0x88] sm:$0xf]
        %v279 = vld [vmem:[%s218 + $0x8c] sm:$0xf]
        %v280 = vld [vmem:[%s218 + $0x90] sm:$0xf]
        %v281 = vld [vmem:[%s218 + $0x94] sm:$0xf]
        %v282 = vld [vmem:[%s218 + $0x98] sm:$0xf]
        %v283 = vld [vmem:[%s218 + $0x9c] sm:$0xf]
        %v284 = vld [vmem:[%s218 + $0xa0] sm:$0xf]
        %v285 = vld [vmem:[%s218 + $0xa4] sm:$0xf]
        %v286 = vld [vmem:[%s218 + $0xa8] sm:$0xf]
        %v287 = vld [vmem:[%s218 + $0xac] sm:$0xf]
        %v288 = vld [vmem:[%s218 + $0xb0] sm:$0xf]
        %v289 = vld [vmem:[%s218 + $0xb4] sm:$0xf]
        %v290 = vld [vmem:[%s218 + $0xb8] sm:$0xf]
        %v291 = vld [vmem:[%s218 + $0xbc] sm:$0xf]
        %v292 = vld [vmem:[%s218 + $0xc0] sm:$0xf]
        %v293 = vld [vmem:[%s218 + $0xc4] sm:$0xf]
        %v294 = vld [vmem:[%s218 + $0xc8] sm:$0xf]
        %v295 = vld [vmem:[%s218 + $0xcc] sm:$0xf]
        %v296 = vld [vmem:[%s218 + $0xd0] sm:$0xf]
        %v297 = vld [vmem:[%s218 + $0xd4] sm:$0xf]
        %v298 = vld [vmem:[%s218 + $0xd8] sm:$0xf]
        %v353 = vunpack.c.l.b16 %v244
        %v354 = vunpack.c.l.b16 %v245
        %v355 = vunpack.c.l.b16 %v246
        %v356 = vunpack.c.l.b16 %v247
        %v357 = vunpack.c.l.b16 %v248
        %v358 = vunpack.c.l.b16 %v249
        %v359 = vunpack.c.l.b16 %v250
        %v360 = vunpack.c.l.b16 %v251
        %v361 = vunpack.c.l.b16 %v252
        %v362 = vunpack.c.l.b16 %v253
        %v363 = vunpack.c.l.b16 %v254
        %v364 = vunpack.c.l.b16 %v255
        %v365 = vunpack.c.l.b16 %v256
        %v366 = vunpack.c.l.b16 %v257
        %v367 = vunpack.c.l.b16 %v258
        %v368 = vunpack.c.l.b16 %v259
        %v369 = vunpack.c.l.b16 %v260
        %v370 = vunpack.c.l.b16 %v261
        %v371 = vunpack.c.l.b16 %v262
        %v372 = vunpack.c.l.b16 %v263
        %v373 = vunpack.c.l.b16 %v264
        %v374 = vunpack.c.l.b16 %v265
        %v375 = vunpack.c.l.b16 %v266
        %v376 = vunpack.c.l.b16 %v267
        %v377 = vunpack.c.l.b16 %v268
        %v378 = vunpack.c.l.b16 %v269
        %v379 = vunpack.c.l.b16 %v270
        %v380 = vunpack.c.l.b16 %v271
        %v381 = vunpack.c.l.b16 %v272
        %v382 = vunpack.c.l.b16 %v273
        %v383 = vunpack.c.l.b16 %v274
        %v384 = vunpack.c.l.b16 %v275
        %v385 = vunpack.c.l.b16 %v276
        %v386 = vunpack.c.l.b16 %v277
        %v387 = vunpack.c.l.b16 %v278
        %v388 = vunpack.c.l.b16 %v279
        %v389 = vunpack.c.l.b16 %v280
        %v390 = vunpack.c.l.b16 %v281
        %v391 = vunpack.c.l.b16 %v282
        %v392 = vunpack.c.l.b16 %v283
        %v393 = vunpack.c.l.b16 %v284
        %v394 = vunpack.c.l.b16 %v285
        %v395 = vunpack.c.l.b16 %v286
        %v396 = vunpack.c.l.b16 %v287
        %v397 = vunpack.c.l.b16 %v288
        %v398 = vunpack.c.l.b16 %v289
        %v399 = vunpack.c.l.b16 %v290
        %v400 = vunpack.c.l.b16 %v291
        %v401 = vunpack.c.l.b16 %v292
        %v402 = vunpack.c.l.b16 %v293
        %v403 = vunpack.c.l.b16 %v294
        %v404 = vunpack.c.l.b16 %v295
        %v405 = vunpack.c.l.b16 %v296
        %v406 = vunpack.c.l.b16 %v297
        %v407 = vpack.c.b16 %v354, %v353
        %v408 = vpack.c.b16 %v356, %v355
        %v409 = vpack.c.b16 %v358, %v357
        %v410 = vpack.c.b16 %v360, %v359
        %v411 = vpack.c.b16 %v362, %v361
        %v412 = vpack.c.b16 %v364, %v363
        %v413 = vpack.c.b16 %v366, %v365
        %v414 = vpack.c.b16 %v368, %v367
        %v415 = vpack.c.b16 %v370, %v369
        %v416 = vpack.c.b16 %v372, %v371
        %v417 = vpack.c.b16 %v374, %v373
        %v418 = vpack.c.b16 %v376, %v375
        %v419 = vpack.c.b16 %v378, %v377
        %v420 = vpack.c.b16 %v380, %v379
        %v421 = vpack.c.b16 %v382, %v381
        %v422 = vpack.c.b16 %v384, %v383
        %v423 = vpack.c.b16 %v386, %v385
        %v424 = vpack.c.b16 %v388, %v387
        %v425 = vpack.c.b16 %v390, %v389
        %v426 = vpack.c.b16 %v392, %v391
        %v427 = vpack.c.b16 %v394, %v393
        %v428 = vpack.c.b16 %v396, %v395
        %v429 = vpack.c.b16 %v398, %v397
        %v430 = vpack.c.b16 %v400, %v399
        %v431 = vpack.c.b16 %v402, %v401
        %v432 = vpack.c.b16 %v404, %v403
        %v433 = vpack.c.b16 %v406, %v405
        %v435 = vunpack.c.l.b16 %v298
        %v436 = vpack.c.b16 %v435, %v435
        %vm437 = vsmask.f32 7424
        %v439 = vshrl.u32 %v407, 16
        %v441 = vshll.u32 %v407, 16
        %v443 = vrot.slane %v441, 1
        %v444 = vor.u32 %v439, %v443
        %v446 = vshll.u32 %v408, 16
        %v448 = vrot.slane %v446, 1
        %v449 = vsel %vm437, %v444, %v448
        %v450 = vshrl.u32 %v408, 16
        %v452 = vor.u32 %v450, %v448
        %v454 = vshll.u32 %v409, 16
        %v456 = vrot.slane %v454, 1
        %v457 = vsel %vm437, %v452, %v456
        %v458 = vshrl.u32 %v409, 16
        %v460 = vor.u32 %v458, %v456
        %v462 = vshll.u32 %v410, 16
        %v464 = vrot.slane %v462, 1
        %v465 = vsel %vm437, %v460, %v464
        %v466 = vshrl.u32 %v410, 16
        %v468 = vor.u32 %v466, %v464
        %v470 = vshll.u32 %v411, 16
        %v472 = vrot.slane %v470, 1
        %v473 = vsel %vm437, %v468, %v472
        %v474 = vshrl.u32 %v411, 16
        %v476 = vor.u32 %v474, %v472
        %v478 = vshll.u32 %v412, 16
        %v480 = vrot.slane %v478, 1
        %v481 = vsel %vm437, %v476, %v480
        %v482 = vshrl.u32 %v412, 16
        %v484 = vor.u32 %v482, %v480
        %v486 = vshll.u32 %v413, 16
        %v488 = vrot.slane %v486, 1
        %v489 = vsel %vm437, %v484, %v488
        %v490 = vshrl.u32 %v413, 16
        %v492 = vor.u32 %v490, %v488
        %v494 = vshll.u32 %v414, 16
        %v496 = vrot.slane %v494, 1
        %v497 = vsel %vm437, %v492, %v496
        %v498 = vshrl.u32 %v414, 16
        %v500 = vor.u32 %v498, %v496
        %v502 = vshll.u32 %v415, 16
        %v504 = vrot.slane %v502, 1
        %v505 = vsel %vm437, %v500, %v504
        %v506 = vshrl.u32 %v415, 16
        %v508 = vor.u32 %v506, %v504
        %v510 = vshll.u32 %v416, 16
        %v512 = vrot.slane %v510, 1
        %v513 = vsel %vm437, %v508, %v512
        %v514 = vshrl.u32 %v416, 16
        %v516 = vor.u32 %v514, %v512
        %v518 = vshll.u32 %v417, 16
        %v520 = vrot.slane %v518, 1
        %v521 = vsel %vm437, %v516, %v520
        %v522 = vshrl.u32 %v417, 16
        %v524 = vor.u32 %v522, %v520
        %v526 = vshll.u32 %v418, 16
        %v528 = vrot.slane %v526, 1
        %v529 = vsel %vm437, %v524, %v528
        %v530 = vshrl.u32 %v418, 16
        %v532 = vor.u32 %v530, %v528
        %v534 = vshll.u32 %v419, 16
        %v536 = vrot.slane %v534, 1
        %v537 = vsel %vm437, %v532, %v536
        %v538 = vshrl.u32 %v419, 16
        %v540 = vor.u32 %v538, %v536
        %v542 = vshll.u32 %v420, 16
        %v544 = vrot.slane %v542, 1
        %v545 = vsel %vm437, %v540, %v544
        %v546 = vshrl.u32 %v420, 16
        %v548 = vor.u32 %v546, %v544
        %v550 = vshll.u32 %v421, 16
        %v552 = vrot.slane %v550, 1
        %v553 = vsel %vm437, %v548, %v552
        %v554 = vshrl.u32 %v421, 16
        %v556 = vor.u32 %v554, %v552
        %v558 = vshll.u32 %v422, 16
        %v560 = vrot.slane %v558, 1
        %v561 = vsel %vm437, %v556, %v560
        %v562 = vshrl.u32 %v422, 16
        %v564 = vor.u32 %v562, %v560
        %v566 = vshll.u32 %v423, 16
        %v568 = vrot.slane %v566, 1
        %v569 = vsel %vm437, %v564, %v568
        %v570 = vshrl.u32 %v423, 16
        %v572 = vor.u32 %v570, %v568
        %v574 = vshll.u32 %v424, 16
        %v576 = vrot.slane %v574, 1
        %v577 = vsel %vm437, %v572, %v576
        %v578 = vshrl.u32 %v424, 16
        %v580 = vor.u32 %v578, %v576
        %v582 = vshll.u32 %v425, 16
        %v584 = vrot.slane %v582, 1
        %v585 = vsel %vm437, %v580, %v584
        %v586 = vshrl.u32 %v425, 16
        %v588 = vor.u32 %v586, %v584
        %v590 = vshll.u32 %v426, 16
        %v592 = vrot.slane %v590, 1
        %v593 = vsel %vm437, %v588, %v592
        %v594 = vshrl.u32 %v426, 16
        %v596 = vor.u32 %v594, %v592
        %v598 = vshll.u32 %v427, 16
        %v600 = vrot.slane %v598, 1
        %v601 = vsel %vm437, %v596, %v600
        %v602 = vshrl.u32 %v427, 16
        %v604 = vor.u32 %v602, %v600
        %v606 = vshll.u32 %v428, 16
        %v608 = vrot.slane %v606, 1
        %v609 = vsel %vm437, %v604, %v608
        %v610 = vshrl.u32 %v428, 16
        %v612 = vor.u32 %v610, %v608
        %v614 = vshll.u32 %v429, 16
        %v616 = vrot.slane %v614, 1
        %v617 = vsel %vm437, %v612, %v616
        %v618 = vshrl.u32 %v429, 16
        %v620 = vor.u32 %v618, %v616
        %v622 = vshll.u32 %v430, 16
        %v624 = vrot.slane %v622, 1
        %v625 = vsel %vm437, %v620, %v624
        %v626 = vshrl.u32 %v430, 16
        %v628 = vor.u32 %v626, %v624
        %v630 = vshll.u32 %v431, 16
        %v632 = vrot.slane %v630, 1
        %v633 = vsel %vm437, %v628, %v632
        %v634 = vshrl.u32 %v431, 16
        %v636 = vor.u32 %v634, %v632
        %v638 = vshll.u32 %v432, 16
        %v640 = vrot.slane %v638, 1
        %v641 = vsel %vm437, %v636, %v640
        %v642 = vshrl.u32 %v432, 16
        %v644 = vor.u32 %v642, %v640
        %v646 = vshll.u32 %v433, 16
        %v648 = vrot.slane %v646, 1
        %v649 = vsel %vm437, %v644, %v648
        %v650 = vshrl.u32 %v433, 16
        %v652 = vor.u32 %v650, %v648
        %v654 = vshll.u32 %v436, 16
        %v656 = vrot.slane %v654, 1
        %v657 = vsel %vm437, %v652, %v656
        %658 = vrot.lane.b32.xlu0 %v449, 64
        %v659 = vpop.permute.xlu0 %658
        %660 = vrot.lane.b32.xlu0 %v457, 64
        %v661 = vpop.permute.xlu0 %660
        %662 = vrot.lane.b32.xlu0 %v465, 64
        %v663 = vpop.permute.xlu0 %662
        %664 = vrot.lane.b32.xlu0 %v473, 64
        %v665 = vpop.permute.xlu0 %664
        %666 = vrot.lane.b32.xlu0 %v481, 64
        %v667 = vpop.permute.xlu0 %666
        %668 = vrot.lane.b32.xlu0 %v489, 64
        %v669 = vpop.permute.xlu0 %668
        %670 = vrot.lane.b32.xlu0 %v497, 64
        %v671 = vpop.permute.xlu0 %670
        %672 = vrot.lane.b32.xlu0 %v505, 64
        %v673 = vpop.permute.xlu0 %672
        %674 = vrot.lane.b32.xlu0 %v513, 64
        %v675 = vpop.permute.xlu0 %674
        %676 = vrot.lane.b32.xlu0 %v521, 64
        %v677 = vpop.permute.xlu0 %676
        %678 = vrot.lane.b32.xlu0 %v529, 64
        %v679 = vpop.permute.xlu0 %678
        %680 = vrot.lane.b32.xlu0 %v537, 64
        %v681 = vpop.permute.xlu0 %680
        %682 = vrot.lane.b32.xlu0 %v545, 64
        %v683 = vpop.permute.xlu0 %682
        %684 = vrot.lane.b32.xlu0 %v553, 64
        %v685 = vpop.permute.xlu0 %684
        %686 = vrot.lane.b32.xlu0 %v561, 64
        %v687 = vpop.permute.xlu0 %686
        %688 = vrot.lane.b32.xlu0 %v569, 64
        %v689 = vpop.permute.xlu0 %688
        %690 = vrot.lane.b32.xlu0 %v577, 64
        %v691 = vpop.permute.xlu0 %690
        %692 = vrot.lane.b32.xlu0 %v585, 64
        %v693 = vpop.permute.xlu0 %692
        %694 = vrot.lane.b32.xlu0 %v593, 64
        %v695 = vpop.permute.xlu0 %694
        %696 = vrot.lane.b32.xlu0 %v601, 64
        %v697 = vpop.permute.xlu0 %696
        %698 = vrot.lane.b32.xlu0 %v609, 64
        %v699 = vpop.permute.xlu0 %698
        %700 = vrot.lane.b32.xlu0 %v617, 64
        %v701 = vpop.permute.xlu0 %700
        %702 = vrot.lane.b32.xlu0 %v625, 64
        %v703 = vpop.permute.xlu0 %702
        %704 = vrot.lane.b32.xlu0 %v633, 64
        %v705 = vpop.permute.xlu0 %704
        %706 = vrot.lane.b32.xlu0 %v641, 64
        %v707 = vpop.permute.xlu0 %706
        %708 = vrot.lane.b32.xlu0 %v649, 64
        %v709 = vpop.permute.xlu0 %708
        %710 = vrot.lane.b32.xlu0 %v657, 64
        %v711 = vpop.permute.xlu0 %710
        %vm712 = vcmask 1046528
        %v713 = vrot.slane %v407, 1
        %v714 = vrot.slane %v408, 1
        %v715 = vsel %vm712, %v713, %v714
        %v716 = vrot.slane %v409, 1
        %v717 = vsel %vm712, %v714, %v716
        %v718 = vrot.slane %v410, 1
        %v719 = vsel %vm712, %v716, %v718
        %v720 = vrot.slane %v411, 1
        %v721 = vsel %vm712, %v718, %v720
        %v722 = vrot.slane %v412, 1
        %v723 = vsel %vm712, %v720, %v722
        %v724 = vrot.slane %v413, 1
        %v725 = vsel %vm712, %v722, %v724
        %v726 = vrot.slane %v414, 1
        %v727 = vsel %vm712, %v724, %v726
        %v728 = vrot.slane %v415, 1
        %v729 = vsel %vm712, %v726, %v728
        %v730 = vrot.slane %v416, 1
        %v731 = vsel %vm712, %v728, %v730
        %v732 = vrot.slane %v417, 1
        %v733 = vsel %vm712, %v730, %v732
        %v734 = vrot.slane %v418, 1
        %v735 = vsel %vm712, %v732, %v734
        %v736 = vrot.slane %v419, 1
        %v737 = vsel %vm712, %v734, %v736
        %v738 = vrot.slane %v420, 1
        %v739 = vsel %vm712, %v736, %v738
        %v740 = vrot.slane %v421, 1
        %v741 = vsel %vm712, %v738, %v740
        %v742 = vrot.slane %v422, 1
        %v743 = vsel %vm712, %v740, %v742
        %v744 = vrot.slane %v423, 1
        %v745 = vsel %vm712, %v742, %v744
        %v746 = vrot.slane %v424, 1
        %v747 = vsel %vm712, %v744, %v746
        %v748 = vrot.slane %v425, 1
        %v749 = vsel %vm712, %v746, %v748
        %v750 = vrot.slane %v426, 1
        %v751 = vsel %vm712, %v748, %v750
        %v752 = vrot.slane %v427, 1
        %v753 = vsel %vm712, %v750, %v752
        %v754 = vrot.slane %v428, 1
        %v755 = vsel %vm712, %v752, %v754
        %v756 = vrot.slane %v429, 1
        %v757 = vsel %vm712, %v754, %v756
        %v758 = vrot.slane %v430, 1
        %v759 = vsel %vm712, %v756, %v758
        %v760 = vrot.slane %v431, 1
        %v761 = vsel %vm712, %v758, %v760
        %v762 = vrot.slane %v432, 1
        %v763 = vsel %vm712, %v760, %v762
        %v764 = vrot.slane %v433, 1
        %v765 = vsel %vm712, %v762, %v764
        %v766 = vrot.slane %v436, 1
        %v767 = vsel %vm712, %v764, %v766
        %vm768 = vcmask 523264
        %v770 = vsel %vm768, %v407, %v659
        %v772 = vsel %vm768, %v408, %v661
        %v774 = vsel %vm768, %v409, %v663
        %v776 = vsel %vm768, %v410, %v665
        %v778 = vsel %vm768, %v411, %v667
        %v780 = vsel %vm768, %v412, %v669
        %v782 = vsel %vm768, %v413, %v671
        %v784 = vsel %vm768, %v414, %v673
        %v786 = vsel %vm768, %v415, %v675
        %v788 = vsel %vm768, %v416, %v677
        %v790 = vsel %vm768, %v417, %v679
        %v792 = vsel %vm768, %v418, %v681
        %v794 = vsel %vm768, %v419, %v683
        %v796 = vsel %vm768, %v420, %v685
        %v798 = vsel %vm768, %v421, %v687
        %v800 = vsel %vm768, %v422, %v689
        %v802 = vsel %vm768, %v423, %v691
        %v804 = vsel %vm768, %v424, %v693
        %v806 = vsel %vm768, %v425, %v695
        %v808 = vsel %vm768, %v426, %v697
        %v810 = vsel %vm768, %v427, %v699
        %v812 = vsel %vm768, %v428, %v701
        %v814 = vsel %vm768, %v429, %v703
        %v816 = vsel %vm768, %v430, %v705
        %v818 = vsel %vm768, %v431, %v707
        %v820 = vsel %vm768, %v432, %v709
        %v822 = vsel %vm768, %v433, %v711
        %v850 = vunpack.c.l.b16 %v770
        %v851 = vunpack.c.l.b16 %v715
        %v852 = vunpack.c.h.b16 %v770
        %v853 = vunpack.c.h.b16 %v715
        %v854 = vunpack.c.l.b16 %v772
        %v855 = vunpack.c.l.b16 %v717
        %v856 = vunpack.c.h.b16 %v772
        %v857 = vunpack.c.h.b16 %v717
        %v858 = vunpack.c.l.b16 %v774
        %v859 = vunpack.c.l.b16 %v719
        %v860 = vunpack.c.h.b16 %v774
        %v861 = vunpack.c.h.b16 %v719
        %v862 = vunpack.c.l.b16 %v776
        %v863 = vunpack.c.l.b16 %v721
        %v864 = vunpack.c.h.b16 %v776
        %v865 = vunpack.c.h.b16 %v721
        %v866 = vunpack.c.l.b16 %v778
        %v867 = vunpack.c.l.b16 %v723
        %v868 = vunpack.c.h.b16 %v778
        %v869 = vunpack.c.h.b16 %v723
        %v870 = vunpack.c.l.b16 %v780
        %v871 = vunpack.c.l.b16 %v725
        %v872 = vunpack.c.h.b16 %v780
        %v873 = vunpack.c.h.b16 %v725
        %v874 = vunpack.c.l.b16 %v782
        %v875 = vunpack.c.l.b16 %v727
        %v876 = vunpack.c.h.b16 %v782
        %v877 = vunpack.c.h.b16 %v727
        %v878 = vunpack.c.l.b16 %v784
        %v879 = vunpack.c.l.b16 %v729
        %v880 = vunpack.c.h.b16 %v784
        %v881 = vunpack.c.h.b16 %v729
        %v882 = vunpack.c.l.b16 %v786
        %v883 = vunpack.c.l.b16 %v731
        %v884 = vunpack.c.h.b16 %v786
        %v885 = vunpack.c.h.b16 %v731
        %v886 = vunpack.c.l.b16 %v788
        %v887 = vunpack.c.l.b16 %v733
        %v888 = vunpack.c.h.b16 %v788
        %v889 = vunpack.c.h.b16 %v733
        %v890 = vunpack.c.l.b16 %v790
        %v891 = vunpack.c.l.b16 %v735
        %v892 = vunpack.c.h.b16 %v790
        %v893 = vunpack.c.h.b16 %v735
        %v894 = vunpack.c.l.b16 %v792
        %v895 = vunpack.c.l.b16 %v737
        %v896 = vunpack.c.h.b16 %v792
        %v897 = vunpack.c.h.b16 %v737
        %v898 = vunpack.c.l.b16 %v794
        %v899 = vunpack.c.l.b16 %v739
        %v900 = vunpack.c.h.b16 %v794
        %v901 = vunpack.c.h.b16 %v739
        %v902 = vunpack.c.l.b16 %v796
        %v903 = vunpack.c.l.b16 %v741
        %v904 = vunpack.c.h.b16 %v796
        %v905 = vunpack.c.h.b16 %v741
        %v906 = vunpack.c.l.b16 %v798
        %v907 = vunpack.c.l.b16 %v743
        %v908 = vunpack.c.h.b16 %v798
        %v909 = vunpack.c.h.b16 %v743
        %v910 = vunpack.c.l.b16 %v800
        %v911 = vunpack.c.l.b16 %v745
        %v912 = vunpack.c.h.b16 %v800
        %v913 = vunpack.c.h.b16 %v745
        %v914 = vunpack.c.l.b16 %v802
        %v915 = vunpack.c.l.b16 %v747
        %v916 = vunpack.c.h.b16 %v802
        %v917 = vunpack.c.h.b16 %v747
        %v918 = vunpack.c.l.b16 %v804
        %v919 = vunpack.c.l.b16 %v749
        %v920 = vunpack.c.h.b16 %v804
        %v921 = vunpack.c.h.b16 %v749
        %v922 = vunpack.c.l.b16 %v806
        %v923 = vunpack.c.l.b16 %v751
        %v924 = vunpack.c.h.b16 %v806
        %v925 = vunpack.c.h.b16 %v751
        %v926 = vunpack.c.l.b16 %v808
        %v927 = vunpack.c.l.b16 %v753
        %v928 = vunpack.c.h.b16 %v808
        %v929 = vunpack.c.h.b16 %v753
        %v930 = vunpack.c.l.b16 %v810
        %v931 = vunpack.c.l.b16 %v755
        %v932 = vunpack.c.h.b16 %v810
        %v933 = vunpack.c.h.b16 %v755
        %v934 = vunpack.c.l.b16 %v812
        %v935 = vunpack.c.l.b16 %v757
        %v936 = vunpack.c.h.b16 %v812
        %v937 = vunpack.c.h.b16 %v757
        %v938 = vunpack.c.l.b16 %v814
        %v939 = vunpack.c.l.b16 %v759
        %v940 = vunpack.c.h.b16 %v814
        %v941 = vunpack.c.h.b16 %v759
        %v942 = vunpack.c.l.b16 %v816
        %v943 = vunpack.c.l.b16 %v761
        %v944 = vunpack.c.h.b16 %v816
        %v945 = vunpack.c.h.b16 %v761
        %v946 = vunpack.c.l.b16 %v818
        %v947 = vunpack.c.l.b16 %v763
        %v948 = vunpack.c.h.b16 %v818
        %v949 = vunpack.c.h.b16 %v763
        %v950 = vunpack.c.l.b16 %v820
        %v951 = vunpack.c.l.b16 %v765
        %v952 = vunpack.c.h.b16 %v820
        %v953 = vunpack.c.h.b16 %v765
        %v954 = vunpack.c.l.b16 %v822
        %v955 = vunpack.c.l.b16 %v767
        %v956 = vunpack.c.h.b16 %v822
        %v957 = vunpack.c.h.b16 %v767
        %v958 = vpack.c.b16 %v851, %v850
        %v959 = vpack.c.b16 %v853, %v852
        %v960 = vpack.c.b16 %v855, %v854
        %v961 = vpack.c.b16 %v857, %v856
        %v962 = vpack.c.b16 %v859, %v858
        %v963 = vpack.c.b16 %v861, %v860
        %v964 = vpack.c.b16 %v863, %v862
        %v965 = vpack.c.b16 %v865, %v864
        %v966 = vpack.c.b16 %v867, %v866
        %v967 = vpack.c.b16 %v869, %v868
        %v968 = vpack.c.b16 %v871, %v870
        %v969 = vpack.c.b16 %v873, %v872
        %v970 = vpack.c.b16 %v875, %v874
        %v971 = vpack.c.b16 %v877, %v876
        %v972 = vpack.c.b16 %v879, %v878
        %v973 = vpack.c.b16 %v881, %v880
        %v974 = vpack.c.b16 %v883, %v882
        %v975 = vpack.c.b16 %v885, %v884
        %v976 = vpack.c.b16 %v887, %v886
        %v977 = vpack.c.b16 %v889, %v888
        %v978 = vpack.c.b16 %v891, %v890
        %v979 = vpack.c.b16 %v893, %v892
        %v980 = vpack.c.b16 %v895, %v894
        %v981 = vpack.c.b16 %v897, %v896
        %v982 = vpack.c.b16 %v899, %v898
        %v983 = vpack.c.b16 %v901, %v900
        %v984 = vpack.c.b16 %v903, %v902
        %v985 = vpack.c.b16 %v905, %v904
        %v986 = vpack.c.b16 %v907, %v906
        %v987 = vpack.c.b16 %v909, %v908
        %v988 = vpack.c.b16 %v911, %v910
        %v989 = vpack.c.b16 %v913, %v912
        %v990 = vpack.c.b16 %v915, %v914
        %v991 = vpack.c.b16 %v917, %v916
        %v992 = vpack.c.b16 %v919, %v918
        %v993 = vpack.c.b16 %v921, %v920
        %v994 = vpack.c.b16 %v923, %v922
        %v995 = vpack.c.b16 %v925, %v924
        %v996 = vpack.c.b16 %v927, %v926
        %v997 = vpack.c.b16 %v929, %v928
        %v998 = vpack.c.b16 %v931, %v930
        %v999 = vpack.c.b16 %v933, %v932
        %v1000 = vpack.c.b16 %v935, %v934
        %v1001 = vpack.c.b16 %v937, %v936
        %v1002 = vpack.c.b16 %v939, %v938
        %v1003 = vpack.c.b16 %v941, %v940
        %v1004 = vpack.c.b16 %v943, %v942
        %v1005 = vpack.c.b16 %v945, %v944
        %v1006 = vpack.c.b16 %v947, %v946
        %v1007 = vpack.c.b16 %v949, %v948
        %v1008 = vpack.c.b16 %v951, %v950
        %v1009 = vpack.c.b16 %v953, %v952
        %v1010 = vpack.c.b16 %v955, %v954
        %v1011 = vpack.c.b16 %v957, %v956
        %vm1066 = vcmask 1043456
        %vm1067 = vcmask 523268
        %vm1068 = vmor %vm1067, %vm1066
        %1069 = vst.msk [vmem:[#allocation2] sm:$0xff] %vm1068, %v958
        %1070 = vst.msk [vmem:[#allocation2 + $0x8] sm:$0xff] %vm1068, %v959
        %1071 = vst.msk [vmem:[#allocation2 + $0x10] sm:$0xff] %vm1068, %v960
        %1072 = vst.msk [vmem:[#allocation2 + $0x18] sm:$0xff] %vm1068, %v961
        %1073 = vst.msk [vmem:[#allocation2 + $0x20] sm:$0xff] %vm1068, %v962
        %1074 = vst.msk [vmem:[#allocation2 + $0x28] sm:$0xff] %vm1068, %v963
        %1075 = vst.msk [vmem:[#allocation2 + $0x30] sm:$0xff] %vm1068, %v964
        %1076 = vst.msk [vmem:[#allocation2 + $0x38] sm:$0xff] %vm1068, %v965
        %1077 = vst.msk [vmem:[#allocation2 + $0x40] sm:$0xff] %vm1068, %v966
        %1078 = vst.msk [vmem:[#allocation2 + $0x48] sm:$0xff] %vm1068, %v967
        %1079 = vst.msk [vmem:[#allocation2 + $0x50] sm:$0xff] %vm1068, %v968
        %1080 = vst.msk [vmem:[#allocation2 + $0x58] sm:$0xff] %vm1068, %v969
        %1081 = vst.msk [vmem:[#allocation2 + $0x60] sm:$0xff] %vm1068, %v970
        %1082 = vst.msk [vmem:[#allocation2 + $0x68] sm:$0xff] %vm1068, %v971
        %1083 = vst.msk [vmem:[#allocation2 + $0x70] sm:$0xff] %vm1068, %v972
        %1084 = vst.msk [vmem:[#allocation2 + $0x78] sm:$0xff] %vm1068, %v973
        %1085 = vst.msk [vmem:[#allocation2 + $0x80] sm:$0xff] %vm1068, %v974
        %1086 = vst.msk [vmem:[#allocation2 + $0x88] sm:$0xff] %vm1068, %v975
        %1087 = vst.msk [vmem:[#allocation2 + $0x90] sm:$0xff] %vm1068, %v976
        %1088 = vst.msk [vmem:[#allocation2 + $0x98] sm:$0xff] %vm1068, %v977
        %1089 = vst.msk [vmem:[#allocation2 + $0xa0] sm:$0xff] %vm1068, %v978
        %1090 = vst.msk [vmem:[#allocation2 + $0xa8] sm:$0xff] %vm1068, %v979
        %1091 = vst.msk [vmem:[#allocation2 + $0xb0] sm:$0xff] %vm1068, %v980
        %1092 = vst.msk [vmem:[#allocation2 + $0xb8] sm:$0xff] %vm1068, %v981
        %1093 = vst.msk [vmem:[#allocation2 + $0xc0] sm:$0xff] %vm1068, %v982
        %1094 = vst.msk [vmem:[#allocation2 + $0xc8] sm:$0xff] %vm1068, %v983
        %1095 = vst.msk [vmem:[#allocation2 + $0xd0] sm:$0xff] %vm1068, %v984
        %1096 = vst.msk [vmem:[#allocation2 + $0xd8] sm:$0xff] %vm1068, %v985
        %1097 = vst.msk [vmem:[#allocation2 + $0xe0] sm:$0xff] %vm1068, %v986
        %1098 = vst.msk [vmem:[#allocation2 + $0xe8] sm:$0xff] %vm1068, %v987
        %1099 = vst.msk [vmem:[#allocation2 + $0xf0] sm:$0xff] %vm1068, %v988
        %1100 = vst.msk [vmem:[#allocation2 + $0xf8] sm:$0xff] %vm1068, %v989
        %1101 = vst.msk [vmem:[#allocation2 + $0x100] sm:$0xff] %vm1068, %v990
        %1102 = vst.msk [vmem:[#allocation2 + $0x108] sm:$0xff] %vm1068, %v991
        %1103 = vst.msk [vmem:[#allocation2 + $0x110] sm:$0xff] %vm1068, %v992
        %1104 = vst.msk [vmem:[#allocation2 + $0x118] sm:$0xff] %vm1068, %v993
        %1105 = vst.msk [vmem:[#allocation2 + $0x120] sm:$0xff] %vm1068, %v994
        %1106 = vst.msk [vmem:[#allocation2 + $0x128] sm:$0xff] %vm1068, %v995
        %1107 = vst.msk [vmem:[#allocation2 + $0x130] sm:$0xff] %vm1068, %v996
        %1108 = vst.msk [vmem:[#allocation2 + $0x138] sm:$0xff] %vm1068, %v997
        %1109 = vst.msk [vmem:[#allocation2 + $0x140] sm:$0xff] %vm1068, %v998
        %1110 = vst.msk [vmem:[#allocation2 + $0x148] sm:$0xff] %vm1068, %v999
        %1111 = vst.msk [vmem:[#allocation2 + $0x150] sm:$0xff] %vm1068, %v1000
        %1112 = vst.msk [vmem:[#allocation2 + $0x158] sm:$0xff] %vm1068, %v1001
        %1113 = vst.msk [vmem:[#allocation2 + $0x160] sm:$0xff] %vm1068, %v1002
        %1114 = vst.msk [vmem:[#allocation2 + $0x168] sm:$0xff] %vm1068, %v1003
        %1115 = vst.msk [vmem:[#allocation2 + $0x170] sm:$0xff] %vm1068, %v1004
        %1116 = vst.msk [vmem:[#allocation2 + $0x178] sm:$0xff] %vm1068, %v1005
        %1117 = vst.msk [vmem:[#allocation2 + $0x180] sm:$0xff] %vm1068, %v1006
        %1118 = vst.msk [vmem:[#allocation2 + $0x188] sm:$0xff] %vm1068, %v1007
        %1119 = vst.msk [vmem:[#allocation2 + $0x190] sm:$0xff] %vm1068, %v1008
        %1120 = vst.msk [vmem:[#allocation2 + $0x198] sm:$0xff] %vm1068, %v1009
        %1121 = vst.msk [vmem:[#allocation2 + $0x1a0] sm:$0xff] %vm1068, %v1010
        %1122 = vst.msk [vmem:[#allocation2 + $0x1a8] sm:$0xff] %vm1068, %v1011
      $region36: #{resnet_block_forward.3} parent=31 // pred_fallthru
        _
      %v1123 = vld [vmem:[#allocation2] sm:$0xff]
      %v1124 = vld [vmem:[#allocation2 + $0x8] sm:$0xff]
      %v1125 = vld [vmem:[#allocation2 + $0x10] sm:$0xff]
      %v1126 = vld [vmem:[#allocation2 + $0x18] sm:$0xff]
      %v1127 = vld [vmem:[#allocation2 + $0x20] sm:$0xff]
      %v1128 = vld [vmem:[#allocation2 + $0x28] sm:$0xff]
      %v1129 = vld [vmem:[#allocation2 + $0x30] sm:$0xff]
      %v1130 = vld [vmem:[#allocation2 + $0x38] sm:$0xff]
      %v1131 = vld [vmem:[#allocation2 + $0x40] sm:$0xff]
      %v1132 = vld [vmem:[#allocation2 + $0x48] sm:$0xff]
      %v1133 = vld [vmem:[#allocation2 + $0x50] sm:$0xff]
      %v1134 = vld [vmem:[#allocation2 + $0x58] sm:$0xff]
      %v1135 = vld [vmem:[#allocation2 + $0x60] sm:$0xff]
      %v1136 = vld [vmem:[#allocation2 + $0x68] sm:$0xff]
      %v1137 = vld [vmem:[#allocation2 + $0x70] sm:$0xff]
      %v1138 = vld [vmem:[#allocation2 + $0x78] sm:$0xff]
      %v1139 = vld [vmem:[#allocation2 + $0x80] sm:$0xff]
      %v1140 = vld [vmem:[#allocation2 + $0x88] sm:$0xff]
      %v1141 = vld [vmem:[#allocation2 + $0x90] sm:$0xff]
      %v1142 = vld [vmem:[#allocation2 + $0x98] sm:$0xff]
      %v1143 = vld [vmem:[#allocation2 + $0xa0] sm:$0xff]
      %v1144 = vld [vmem:[#allocation2 + $0xa8] sm:$0xff]
      %v1145 = vld [vmem:[#allocation2 + $0xb0] sm:$0xff]
      %v1146 = vld [vmem:[#allocation2 + $0xb8] sm:$0xff]
      %v1147 = vld [vmem:[#allocation2 + $0xc0] sm:$0xff]
      %v1148 = vld [vmem:[#allocation2 + $0xc8] sm:$0xff]
      %v1149 = vld [vmem:[#allocation2 + $0xd0] sm:$0xff]
      %v1150 = vld [vmem:[#allocation2 + $0xd8] sm:$0xff]
      %v1151 = vld [vmem:[#allocation2 + $0xe0] sm:$0xff]
      %v1152 = vld [vmem:[#allocation2 + $0xe8] sm:$0xff]
      %v1153 = vld [vmem:[#allocation2 + $0xf0] sm:$0xff]
      %v1154 = vld [vmem:[#allocation2 + $0xf8] sm:$0xff]
      %v1155 = vld [vmem:[#allocation2 + $0x100] sm:$0xff]
      %v1156 = vld [vmem:[#allocation2 + $0x108] sm:$0xff]
      %v1157 = vld [vmem:[#allocation2 + $0x110] sm:$0xff]
      %v1158 = vld [vmem:[#allocation2 + $0x118] sm:$0xff]
      %v1159 = vld [vmem:[#allocation2 + $0x120] sm:$0xff]
      %v1160 = vld [vmem:[#allocation2 + $0x128] sm:$0xff]
      %v1161 = vld [vmem:[#allocation2 + $0x130] sm:$0xff]
      %v1162 = vld [vmem:[#allocation2 + $0x138] sm:$0xff]
      %v1163 = vld [vmem:[#allocation2 + $0x140] sm:$0xff]
      %v1164 = vld [vmem:[#allocation2 + $0x148] sm:$0xff]
      %v1165 = vld [vmem:[#allocation2 + $0x150] sm:$0xff]
      %v1166 = vld [vmem:[#allocation2 + $0x158] sm:$0xff]
      %v1167 = vld [vmem:[#allocation2 + $0x160] sm:$0xff]
      %v1168 = vld [vmem:[#allocation2 + $0x168] sm:$0xff]
      %v1169 = vld [vmem:[#allocation2 + $0x170] sm:$0xff]
      %v1170 = vld [vmem:[#allocation2 + $0x178] sm:$0xff]
      %v1171 = vld [vmem:[%s222] sm:$0xf]
      %v1172 = vld [vmem:[%s222 + $0x4] sm:$0xf]
      %v1173 = vld [vmem:[%s222 + $0x8] sm:$0xf]
      %v1174 = vld [vmem:[%s222 + $0xc] sm:$0xf]
      %v1175 = vld [vmem:[%s222 + $0x10] sm:$0xf]
      %v1176 = vld [vmem:[%s222 + $0x14] sm:$0xf]
      %v1177 = vld [vmem:[%s222 + $0x18] sm:$0xf]
      %v1178 = vld [vmem:[%s222 + $0x1c] sm:$0xf]
      %v1179 = vld [vmem:[%s222 + $0x20] sm:$0xf]
      %v1180 = vld [vmem:[%s222 + $0x24] sm:$0xf]
      %v1181 = vld [vmem:[%s222 + $0x28] sm:$0xf]
      %v1182 = vld [vmem:[%s222 + $0x2c] sm:$0xf]
      %v1183 = vld [vmem:[%s222 + $0x30] sm:$0xf]
      %v1184 = vld [vmem:[%s222 + $0x34] sm:$0xf]
      %v1185 = vld [vmem:[%s222 + $0x38] sm:$0xf]
      %v1186 = vld [vmem:[%s222 + $0x3c] sm:$0xf]
      %v1187 = vld [vmem:[%s222 + $0x40] sm:$0xf]
      %v1188 = vld [vmem:[%s222 + $0x44] sm:$0xf]
      %v1189 = vld [vmem:[%s222 + $0x48] sm:$0xf]
      %v1190 = vld [vmem:[%s222 + $0x4c] sm:$0xf]
      %v1191 = vld [vmem:[%s222 + $0x50] sm:$0xf]
      %v1192 = vld [vmem:[%s222 + $0x54] sm:$0xf]
      %v1193 = vld [vmem:[%s222 + $0x58] sm:$0xf]
      %v1194 = vld [vmem:[%s222 + $0x5c] sm:$0xf]
      %v1195 = vld [vmem:[#allocation2 + $0x180] sm:$0xff]
      %v1196 = vld [vmem:[#allocation2 + $0x188] sm:$0xff]
      %v1197 = vld [vmem:[#allocation2 + $0x190] sm:$0xff]
      %s1198 = scalar_lea.vmem %s222, 96
      %v1199 = vld [vmem:[%s1198] sm:$0xf]
      %v1200 = vld [vmem:[%s1198 + $0x4] sm:$0xf]
      %v1201 = vld [vmem:[%s1198 + $0x8] sm:$0xf]
      %v1202 = vld [vmem:[%s1198 + $0xc] sm:$0xf]
      %v1203 = vld [vmem:[%s1198 + $0x10] sm:$0xf]
      %v1204 = vld [vmem:[%s1198 + $0x14] sm:$0xf]
      %v1205 = vld [vmem:[%s1198 + $0x18] sm:$0xf]
      %v1206 = vld [vmem:[%s1198 + $0x1c] sm:$0xf]
      %v1207 = vld [vmem:[%s1198 + $0x20] sm:$0xf]
      %v1208 = vld [vmem:[%s1198 + $0x24] sm:$0xf]
      %v1209 = vld [vmem:[%s1198 + $0x28] sm:$0xf]
      %v1210 = vld [vmem:[%s1198 + $0x2c] sm:$0xf]
      %v1211 = vld [vmem:[%s1198 + $0x30] sm:$0xf]
      %v1212 = vld [vmem:[%s1198 + $0x34] sm:$0xf]
      %v1213 = vld [vmem:[%s1198 + $0x38] sm:$0xf]
      %v1214 = vld [vmem:[%s1198 + $0x3c] sm:$0xf]
      %v1215 = vld [vmem:[%s1198 + $0x40] sm:$0xf]
      %v1216 = vld [vmem:[%s1198 + $0x44] sm:$0xf]
      %v1217 = vld [vmem:[%s1198 + $0x48] sm:$0xf]
      %v1218 = vld [vmem:[%s1198 + $0x4c] sm:$0xf]
      %v1219 = vld [vmem:[%s1198 + $0x50] sm:$0xf]
      %v1220 = vld [vmem:[%s1198 + $0x54] sm:$0xf]
      %v1221 = vld [vmem:[%s1198 + $0x58] sm:$0xf]
      %v1222 = vld [vmem:[%s1198 + $0x5c] sm:$0xf]
      %v1271 = vunpack.c.l.b16 %v1126
      %v1272 = vunpack.c.h.b16 %v1126
      %v1273 = vunpack.c.l.b16 %v1127
      %v1274 = vunpack.c.h.b16 %v1127
      %v1275 = vunpack.c.l.b16 %v1128
      %v1276 = vunpack.c.h.b16 %v1128
      %v1277 = vunpack.c.l.b16 %v1129
      %v1278 = vunpack.c.h.b16 %v1129
      %v1279 = vunpack.c.l.b16 %v1130
      %v1280 = vunpack.c.h.b16 %v1130
      %v1281 = vunpack.c.l.b16 %v1131
      %v1282 = vunpack.c.h.b16 %v1131
      %v1283 = vunpack.c.l.b16 %v1132
      %v1284 = vunpack.c.h.b16 %v1132
      %v1285 = vunpack.c.l.b16 %v1133
      %v1286 = vunpack.c.h.b16 %v1133
      %v1287 = vunpack.c.l.b16 %v1134
      %v1288 = vunpack.c.h.b16 %v1134
      %v1289 = vunpack.c.l.b16 %v1135
      %v1290 = vunpack.c.h.b16 %v1135
      %v1291 = vunpack.c.l.b16 %v1136
      %v1292 = vunpack.c.h.b16 %v1136
      %v1293 = vunpack.c.l.b16 %v1137
      %v1294 = vunpack.c.h.b16 %v1137
      %v1295 = vunpack.c.l.b16 %v1138
      %v1296 = vunpack.c.h.b16 %v1138
      %v1297 = vunpack.c.l.b16 %v1139
      %v1298 = vunpack.c.h.b16 %v1139
      %v1299 = vunpack.c.l.b16 %v1140
      %v1300 = vunpack.c.h.b16 %v1140
      %v1301 = vunpack.c.l.b16 %v1141
      %v1302 = vunpack.c.h.b16 %v1141
      %v1303 = vunpack.c.l.b16 %v1142
      %v1304 = vunpack.c.h.b16 %v1142
      %v1305 = vunpack.c.l.b16 %v1143
      %v1306 = vunpack.c.h.b16 %v1143
      %v1307 = vunpack.c.l.b16 %v1144
      %v1308 = vunpack.c.h.b16 %v1144
      %v1309 = vunpack.c.l.b16 %v1145
      %v1310 = vunpack.c.h.b16 %v1145
      %v1311 = vunpack.c.l.b16 %v1146
      %v1312 = vunpack.c.h.b16 %v1146
      %v1313 = vunpack.c.l.b16 %v1147
      %v1314 = vunpack.c.h.b16 %v1147
      %v1315 = vunpack.c.l.b16 %v1148
      %v1316 = vunpack.c.h.b16 %v1148
      %v1317 = vunpack.c.l.b16 %v1149
      %v1318 = vunpack.c.h.b16 %v1149
      %v1319 = vunpack.c.l.b16 %v1150
      %v1320 = vunpack.c.h.b16 %v1150
      %v1321 = vunpack.c.l.b16 %v1151
      %v1322 = vunpack.c.h.b16 %v1151
      %v1323 = vunpack.c.l.b16 %v1152
      %v1324 = vunpack.c.h.b16 %v1152
      %v1325 = vunpack.c.l.b16 %v1153
      %v1326 = vunpack.c.h.b16 %v1153
      %v1327 = vunpack.c.l.b16 %v1154
      %v1328 = vunpack.c.h.b16 %v1154
      %v1329 = vunpack.c.l.b16 %v1155
      %v1330 = vunpack.c.h.b16 %v1155
      %v1331 = vunpack.c.l.b16 %v1156
      %v1332 = vunpack.c.h.b16 %v1156
      %v1333 = vunpack.c.l.b16 %v1157
      %v1334 = vunpack.c.h.b16 %v1157
      %v1335 = vunpack.c.l.b16 %v1158
      %v1336 = vunpack.c.h.b16 %v1158
      %v1337 = vunpack.c.l.b16 %v1159
      %v1338 = vunpack.c.h.b16 %v1159
      %v1339 = vunpack.c.l.b16 %v1160
      %v1340 = vunpack.c.h.b16 %v1160
      %v1341 = vunpack.c.l.b16 %v1161
      %v1342 = vunpack.c.h.b16 %v1161
      %v1343 = vunpack.c.l.b16 %v1162
      %v1344 = vunpack.c.h.b16 %v1162
      %v1345 = vunpack.c.l.b16 %v1163
      %v1346 = vunpack.c.h.b16 %v1163
      %v1347 = vunpack.c.l.b16 %v1164
      %v1348 = vunpack.c.h.b16 %v1164
      %v1349 = vunpack.c.l.b16 %v1165
      %v1350 = vunpack.c.h.b16 %v1165
      %v1351 = vunpack.c.l.b16 %v1166
      %v1352 = vunpack.c.h.b16 %v1166
      %v1353 = vunpack.c.l.b16 %v1167
      %v1354 = vunpack.c.h.b16 %v1167
      %v1355 = vunpack.c.l.b16 %v1168
      %v1356 = vunpack.c.h.b16 %v1168
      %v1357 = vunpack.c.l.b16 %v1169
      %v1358 = vunpack.c.h.b16 %v1169
      %v1359 = vunpack.c.l.b16 %v1170
      %v1360 = vunpack.c.h.b16 %v1170
      %v1361 = vunpack.c.l.b16 %v1195
      %v1362 = vunpack.c.h.b16 %v1195
      %v1363 = vunpack.c.l.b16 %v1196
      %v1364 = vunpack.c.h.b16 %v1196
      %v1365 = vunpack.c.l.b16 %v1197
      %v1366 = vunpack.c.h.b16 %v1197
      %v1367 = vpack.c.b16 %v1273, %v1271
      %v1368 = vpack.c.b16 %v1274, %v1272
      %v1369 = vpack.c.b16 %v1277, %v1275
      %v1370 = vpack.c.b16 %v1278, %v1276
      %v1371 = vpack.c.b16 %v1281, %v1279
      %v1372 = vpack.c.b16 %v1282, %v1280
      %v1373 = vpack.c.b16 %v1285, %v1283
      %v1374 = vpack.c.b16 %v1286, %v1284
      %v1375 = vpack.c.b16 %v1289, %v1287
      %v1376 = vpack.c.b16 %v1290, %v1288
      %v1377 = vpack.c.b16 %v1293, %v1291
      %v1378 = vpack.c.b16 %v1294, %v1292
      %v1379 = vpack.c.b16 %v1297, %v1295
      %v1380 = vpack.c.b16 %v1298, %v1296
      %v1381 = vpack.c.b16 %v1301, %v1299
      %v1382 = vpack.c.b16 %v1302, %v1300
      %v1383 = vpack.c.b16 %v1305, %v1303
      %v1384 = vpack.c.b16 %v1306, %v1304
      %v1385 = vpack.c.b16 %v1309, %v1307
      %v1386 = vpack.c.b16 %v1310, %v1308
      %v1387 = vpack.c.b16 %v1313, %v1311
      %v1388 = vpack.c.b16 %v1314, %v1312
      %v1389 = vpack.c.b16 %v1317, %v1315
      %v1390 = vpack.c.b16 %v1318, %v1316
      %v1391 = vpack.c.b16 %v1321, %v1319
      %v1392 = vpack.c.b16 %v1322, %v1320
      %v1393 = vpack.c.b16 %v1325, %v1323
      %v1394 = vpack.c.b16 %v1326, %v1324
      %v1395 = vpack.c.b16 %v1329, %v1327
      %v1396 = vpack.c.b16 %v1330, %v1328
      %v1397 = vpack.c.b16 %v1333, %v1331
      %v1398 = vpack.c.b16 %v1334, %v1332
      %v1399 = vpack.c.b16 %v1337, %v1335
      %v1400 = vpack.c.b16 %v1338, %v1336
      %v1401 = vpack.c.b16 %v1341, %v1339
      %v1402 = vpack.c.b16 %v1342, %v1340
      %v1403 = vpack.c.b16 %v1345, %v1343
      %v1404 = vpack.c.b16 %v1346, %v1344
      %v1405 = vpack.c.b16 %v1349, %v1347
      %v1406 = vpack.c.b16 %v1350, %v1348
      %v1407 = vpack.c.b16 %v1353, %v1351
      %v1408 = vpack.c.b16 %v1354, %v1352
      %v1409 = vpack.c.b16 %v1357, %v1355
      %v1410 = vpack.c.b16 %v1358, %v1356
      %v1411 = vpack.c.b16 %v1361, %v1359
      %v1412 = vpack.c.b16 %v1362, %v1360
      %v1413 = vpack.c.b16 %v1365, %v1363
      %v1414 = vpack.c.b16 %v1366, %v1364
      %v1463 = vunpack.c.l.b16 %v1199
      %v1464 = vunpack.c.l.b16 %v1200
      %v1465 = vunpack.c.l.b16 %v1201
      %v1466 = vunpack.c.l.b16 %v1202
      %v1467 = vunpack.c.l.b16 %v1203
      %v1468 = vunpack.c.l.b16 %v1204
      %v1469 = vunpack.c.l.b16 %v1205
      %v1470 = vunpack.c.l.b16 %v1206
      %v1471 = vunpack.c.l.b16 %v1207
      %v1472 = vunpack.c.l.b16 %v1208
      %v1473 = vunpack.c.l.b16 %v1209
      %v1474 = vunpack.c.l.b16 %v1210
      %v1475 = vunpack.c.l.b16 %v1211
      %v1476 = vunpack.c.l.b16 %v1212
      %v1477 = vunpack.c.l.b16 %v1213
      %v1478 = vunpack.c.l.b16 %v1214
      %v1479 = vunpack.c.l.b16 %v1215
      %v1480 = vunpack.c.l.b16 %v1216
      %v1481 = vunpack.c.l.b16 %v1217
      %v1482 = vunpack.c.l.b16 %v1218
      %v1483 = vunpack.c.l.b16 %v1219
      %v1484 = vunpack.c.l.b16 %v1220
      %v1485 = vunpack.c.l.b16 %v1221
      %v1486 = vunpack.c.l.b16 %v1222
      %v1487 = vpack.c.b16 %v1464, %v1463
      %v1488 = vpack.c.b16 %v1466, %v1465
      %v1489 = vpack.c.b16 %v1468, %v1467
      %v1490 = vpack.c.b16 %v1470, %v1469
      %v1491 = vpack.c.b16 %v1472, %v1471
      %v1492 = vpack.c.b16 %v1474, %v1473
      %v1493 = vpack.c.b16 %v1476, %v1475
      %v1494 = vpack.c.b16 %v1478, %v1477
      %v1495 = vpack.c.b16 %v1480, %v1479
      %v1496 = vpack.c.b16 %v1482, %v1481
      %v1497 = vpack.c.b16 %v1484, %v1483
      %v1498 = vpack.c.b16 %v1486, %v1485
      %vm1511 = vcmask 523264
      %v1513 = vsel %vm1511, %v1368, 0
      %v1516 = vsel %vm1511, %v1370, 0
      %v1519 = vsel %vm1511, %v1372, 0
      %v1522 = vsel %vm1511, %v1374, 0
      %v1525 = vsel %vm1511, %v1376, 0
      %v1528 = vsel %vm1511, %v1378, 0
      %v1531 = vsel %vm1511, %v1380, 0
      %v1534 = vsel %vm1511, %v1382, 0
      %v1537 = vsel %vm1511, %v1384, 0
      %v1540 = vsel %vm1511, %v1386, 0
      %v1543 = vsel %vm1511, %v1388, 0
      %v1546 = vsel %vm1511, %v1390, 0
      %v1549 = vsel %vm1511, %v1392, 0
      %v1552 = vsel %vm1511, %v1394, 0
      %v1555 = vsel %vm1511, %v1396, 0
      %v1558 = vsel %vm1511, %v1398, 0
      %v1561 = vsel %vm1511, %v1400, 0
      %v1564 = vsel %vm1511, %v1402, 0
      %v1567 = vsel %vm1511, %v1404, 0
      %v1570 = vsel %vm1511, %v1406, 0
      %v1573 = vsel %vm1511, %v1408, 0
      %v1576 = vsel %vm1511, %v1410, 0
      %v1579 = vsel %vm1511, %v1412, 0
      %v1582 = vsel %vm1511, %v1414, 0
      %1584 = vmatprep.subr.bf16.mxu0 0
      %1585 = vmatpush1.bf16.msra.mxu0 %v1494
      %1586 = vmatprep.subr.bf16.mxu0 0
      %1587 = vmatpush1.bf16.msra.mxu0 %v1493
      %1588 = vmatprep.subr.bf16.mxu0 0
      %1589 = vmatpush1.bf16.msra.mxu0 %v1492
      %1590 = vmatprep.subr.bf16.mxu0 0
      %1591 = vmatpush1.bf16.msra.mxu0 %v1491
      %1592 = vmatprep.subr.bf16.mxu0 0
      %1593 = vmatpush1.bf16.msra.mxu0 %v1490
      %1594 = vmatprep.subr.bf16.mxu0 0
      %1595 = vmatpush1.bf16.msra.mxu0 %v1489
      %1596 = vmatprep.subr.bf16.mxu0 0
      %1597 = vmatpush1.bf16.msra.mxu0 %v1488
      %1598 = vmatprep.subr.bf16.mxu0 0
      %1599 = vmatpush1.bf16.msra.mxu0 %v1487
      %1600 = vmatprep.subr.bf16.mxu0 0
      %1601 = vmatpush2.bf16.msra.mxu0 0
      %1602 = vmatprep.subr.bf16.mxu0 0
      %1603 = vmatpush2.bf16.msra.mxu0 0
      %1604 = vmatprep.subr.bf16.mxu0 0
      %1605 = vmatpush2.bf16.msra.mxu0 0
      %1606 = vmatprep.subr.bf16.mxu0 0
      %1607 = vmatpush2.bf16.msra.mxu0 0
      %1608 = vmatprep.subr.bf16.mxu0 0
      %1609 = vmatpush2.bf16.msra.mxu0 %v1498
      %1610 = vmatprep.subr.bf16.mxu0 0
      %1611 = vmatpush2.bf16.msra.mxu0 %v1497
      %1612 = vmatprep.subr.bf16.mxu0 0
      %1613 = vmatpush2.bf16.msra.mxu0 %v1496
      %1614 = vmatprep.subr.bf16.mxu0 0
      %1615 = vmatpush2.bf16.msra.mxu0 %v1495
      %1616 = vmatprep.mubr.bf16.mxu0 %v1513
      %1617 = vmatmul.mubr.bf16.gmra.mxu0 %v1367
      %v1618 = vpop.f32.mrf.mxu0
      %v1619 = vadd.f32 0.0, %v1618
      %v1620 = vpop.f32.mrf.mxu0
      %v1621 = vpop.f32.mrf.mxu0
      %v1622 = vadd.f32 0.0, %v1621
      %v1623 = vpop.f32.mrf.mxu0
      %1624 = vmatprep.mubr.bf16.mxu0 %v1516
      %1625 = vmatmul.mubr.bf16.gmra.mxu0 %v1369
      %v1626 = vpop.f32.mrf.mxu0
      %v1627 = vadd.f32 0.0, %v1626
      %v1628 = vpop.f32.mrf.mxu0
      %v1629 = vpop.f32.mrf.mxu0
      %v1630 = vadd.f32 0.0, %v1629
      %v1631 = vpop.f32.mrf.mxu0
      %1632 = vmatprep.mubr.bf16.mxu0 %v1519
      %1633 = vmatmul.mubr.bf16.gmra.mxu0 %v1371
      %v1634 = vpop.f32.mrf.mxu0
      %v1635 = vadd.f32 0.0, %v1634
      %v1636 = vpop.f32.mrf.mxu0
      %v1637 = vpop.f32.mrf.mxu0
      %v1638 = vadd.f32 0.0, %v1637
      %v1639 = vpop.f32.mrf.mxu0
      %1640 = vmatprep.mubr.bf16.mxu0 %v1522
      %1641 = vmatmul.mubr.bf16.gmra.mxu0 %v1373
      %v1642 = vpop.f32.mrf.mxu0
      %v1643 = vadd.f32 0.0, %v1642
      %v1644 = vpop.f32.mrf.mxu0
      %v1645 = vpop.f32.mrf.mxu0
      %v1646 = vadd.f32 0.0, %v1645
      %v1647 = vpop.f32.mrf.mxu0
      %1648 = vmatprep.mubr.bf16.mxu0 %v1525
      %1649 = vmatmul.mubr.bf16.gmra.mxu0 %v1375
      %v1650 = vpop.f32.mrf.mxu0
      %v1651 = vadd.f32 0.0, %v1650
      %v1652 = vpop.f32.mrf.mxu0
      %v1653 = vpop.f32.mrf.mxu0
      %v1654 = vadd.f32 0.0, %v1653
      %v1655 = vpop.f32.mrf.mxu0
      %1656 = vmatprep.mubr.bf16.mxu0 %v1528
      %1657 = vmatmul.mubr.bf16.gmra.mxu0 %v1377
      %v1658 = vpop.f32.mrf.mxu0
      %v1659 = vadd.f32 0.0, %v1658
      %v1660 = vpop.f32.mrf.mxu0
      %v1661 = vpop.f32.mrf.mxu0
      %v1662 = vadd.f32 0.0, %v1661
      %v1663 = vpop.f32.mrf.mxu0
      %1664 = vmatprep.mubr.bf16.mxu0 %v1531
      %1665 = vmatmul.mubr.bf16.gmra.mxu0 %v1379
      %v1666 = vpop.f32.mrf.mxu0
      %v1667 = vadd.f32 0.0, %v1666
      %v1668 = vpop.f32.mrf.mxu0
      %v1669 = vpop.f32.mrf.mxu0
      %v1670 = vadd.f32 0.0, %v1669
      %v1671 = vpop.f32.mrf.mxu0
      %1672 = vmatprep.mubr.bf16.mxu0 %v1534
      %1673 = vmatmul.mubr.bf16.gmra.mxu0 %v1381
      %v1674 = vpop.f32.mrf.mxu0
      %v1675 = vadd.f32 0.0, %v1674
      %v1676 = vpop.f32.mrf.mxu0
      %v1677 = vpop.f32.mrf.mxu0
      %v1678 = vadd.f32 0.0, %v1677
      %v1679 = vpop.f32.mrf.mxu0
      %1680 = vmatprep.mubr.bf16.mxu0 %v1537
      %1681 = vmatmul.mubr.bf16.gmra.mxu0 %v1383
      %v1682 = vpop.f32.mrf.mxu0
      %v1683 = vadd.f32 0.0, %v1682
      %v1684 = vpop.f32.mrf.mxu0
      %v1685 = vpop.f32.mrf.mxu0
      %v1686 = vadd.f32 0.0, %v1685
      %v1687 = vpop.f32.mrf.mxu0
      %1688 = vmatprep.mubr.bf16.mxu0 %v1540
      %1689 = vmatmul.mubr.bf16.gmra.mxu0 %v1385
      %v1690 = vpop.f32.mrf.mxu0
      %v1691 = vadd.f32 0.0, %v1690
      %v1692 = vpop.f32.mrf.mxu0
      %v1693 = vpop.f32.mrf.mxu0
      %v1694 = vadd.f32 0.0, %v1693
      %v1695 = vpop.f32.mrf.mxu0
      %1696 = vmatprep.mubr.bf16.mxu0 %v1543
      %1697 = vmatmul.mubr.bf16.gmra.mxu0 %v1387
      %v1698 = vpop.f32.mrf.mxu0
      %v1699 = vadd.f32 0.0, %v1698
      %v1700 = vpop.f32.mrf.mxu0
      %v1701 = vpop.f32.mrf.mxu0
      %v1702 = vadd.f32 0.0, %v1701
      %v1703 = vpop.f32.mrf.mxu0
      %1704 = vmatprep.mubr.bf16.mxu0 %v1546
      %1705 = vmatmul.mubr.bf16.gmra.mxu0 %v1389
      %v1706 = vpop.f32.mrf.mxu0
      %v1707 = vadd.f32 0.0, %v1706
      %v1708 = vpop.f32.mrf.mxu0
      %v1709 = vpop.f32.mrf.mxu0
      %v1710 = vadd.f32 0.0, %v1709
      %v1711 = vpop.f32.mrf.mxu0
      %1712 = vmatprep.mubr.bf16.mxu0 %v1549
      %1713 = vmatmul.mubr.bf16.gmra.mxu0 %v1391
      %v1714 = vpop.f32.mrf.mxu0
      %v1715 = vadd.f32 0.0, %v1714
      %v1716 = vpop.f32.mrf.mxu0
      %v1717 = vpop.f32.mrf.mxu0
      %v1718 = vadd.f32 0.0, %v1717
      %v1719 = vpop.f32.mrf.mxu0
      %1720 = vmatprep.mubr.bf16.mxu0 %v1552
      %1721 = vmatmul.mubr.bf16.gmra.mxu0 %v1393
      %v1722 = vpop.f32.mrf.mxu0
      %v1723 = vadd.f32 0.0, %v1722
      %v1724 = vpop.f32.mrf.mxu0
      %v1725 = vpop.f32.mrf.mxu0
      %v1726 = vadd.f32 0.0, %v1725
      %v1727 = vpop.f32.mrf.mxu0
      %1728 = vmatprep.mubr.bf16.mxu0 %v1555
      %1729 = vmatmul.mubr.bf16.gmra.mxu0 %v1395
      %v1730 = vpop.f32.mrf.mxu0
      %v1731 = vadd.f32 0.0, %v1730
      %v1732 = vpop.f32.mrf.mxu0
      %v1733 = vpop.f32.mrf.mxu0
      %v1734 = vadd.f32 0.0, %v1733
      %v1735 = vpop.f32.mrf.mxu0
      %1736 = vmatprep.mubr.bf16.mxu0 %v1558
      %1737 = vmatmul.mubr.bf16.gmra.mxu0 %v1397
      %v1738 = vpop.f32.mrf.mxu0
      %v1739 = vadd.f32 0.0, %v1738
      %v1740 = vpop.f32.mrf.mxu0
      %v1741 = vpop.f32.mrf.mxu0
      %v1742 = vadd.f32 0.0, %v1741
      %v1743 = vpop.f32.mrf.mxu0
      %1744 = vmatprep.mubr.bf16.mxu0 %v1561
      %1745 = vmatmul.mubr.bf16.gmra.mxu0 %v1399
      %v1746 = vpop.f32.mrf.mxu0
      %v1747 = vadd.f32 0.0, %v1746
      %v1748 = vpop.f32.mrf.mxu0
      %v1749 = vpop.f32.mrf.mxu0
      %v1750 = vadd.f32 0.0, %v1749
      %v1751 = vpop.f32.mrf.mxu0
      %1752 = vmatprep.mubr.bf16.mxu0 %v1564
      %1753 = vmatmul.mubr.bf16.gmra.mxu0 %v1401
      %v1754 = vpop.f32.mrf.mxu0
      %v1755 = vadd.f32 0.0, %v1754
      %v1756 = vpop.f32.mrf.mxu0
      %v1757 = vpop.f32.mrf.mxu0
      %v1758 = vadd.f32 0.0, %v1757
      %v1759 = vpop.f32.mrf.mxu0
      %1760 = vmatprep.mubr.bf16.mxu0 %v1567
      %1761 = vmatmul.mubr.bf16.gmra.mxu0 %v1403
      %v1762 = vpop.f32.mrf.mxu0
      %v1763 = vadd.f32 0.0, %v1762
      %v1764 = vpop.f32.mrf.mxu0
      %v1765 = vpop.f32.mrf.mxu0
      %v1766 = vadd.f32 0.0, %v1765
      %v1767 = vpop.f32.mrf.mxu0
      %1768 = vmatprep.mubr.bf16.mxu0 %v1570
      %1769 = vmatmul.mubr.bf16.gmra.mxu0 %v1405
      %v1770 = vpop.f32.mrf.mxu0
      %v1771 = vadd.f32 0.0, %v1770
      %v1772 = vpop.f32.mrf.mxu0
      %v1773 = vpop.f32.mrf.mxu0
      %v1774 = vadd.f32 0.0, %v1773
      %v1775 = vpop.f32.mrf.mxu0
      %1776 = vmatprep.mubr.bf16.mxu0 %v1573
      %1777 = vmatmul.mubr.bf16.gmra.mxu0 %v1407
      %v1778 = vpop.f32.mrf.mxu0
      %v1779 = vadd.f32 0.0, %v1778
      %v1780 = vpop.f32.mrf.mxu0
      %v1781 = vpop.f32.mrf.mxu0
      %v1782 = vadd.f32 0.0, %v1781
      %v1783 = vpop.f32.mrf.mxu0
      %1784 = vmatprep.mubr.bf16.mxu0 %v1576
      %1785 = vmatmul.mubr.bf16.gmra.mxu0 %v1409
      %v1786 = vpop.f32.mrf.mxu0
      %v1787 = vadd.f32 0.0, %v1786
      %v1788 = vpop.f32.mrf.mxu0
      %v1789 = vpop.f32.mrf.mxu0
      %v1790 = vadd.f32 0.0, %v1789
      %v1791 = vpop.f32.mrf.mxu0
      %1792 = vmatprep.mubr.bf16.mxu0 %v1579
      %1793 = vmatmul.mubr.bf16.gmra.mxu0 %v1411
      %v1794 = vpop.f32.mrf.mxu0
      %v1795 = vadd.f32 0.0, %v1794
      %v1796 = vpop.f32.mrf.mxu0
      %v1797 = vpop.f32.mrf.mxu0
      %v1798 = vadd.f32 0.0, %v1797
      %v1799 = vpop.f32.mrf.mxu0
      %1800 = vmatprep.mubr.bf16.mxu0 %v1582
      %1801 = vmatmul.mubr.bf16.gmra.mxu0 %v1413
      %v1802 = vpop.f32.mrf.mxu0
      %v1803 = vadd.f32 0.0, %v1802
      %v1804 = vpop.f32.mrf.mxu0
      %v1805 = vpop.f32.mrf.mxu0
      %v1806 = vadd.f32 0.0, %v1805
      %v1807 = vpop.f32.mrf.mxu0
      %1808 = vdwg.mxu0
      %v1812 = vunpack.c.l.b16 %v1123
      %v1813 = vunpack.c.h.b16 %v1123
      %v1814 = vunpack.c.l.b16 %v1124
      %v1815 = vunpack.c.h.b16 %v1124
      %v1816 = vunpack.c.l.b16 %v1125
      %v1817 = vunpack.c.h.b16 %v1125
      %v1818 = vpack.c.b16 %v1814, %v1812
      %v1819 = vpack.c.b16 %v1815, %v1813
      %v1820 = vpack.c.b16 %v1271, %v1816
      %v1821 = vpack.c.b16 %v1272, %v1817
      %v1822 = vpack.c.b16 %v1275, %v1273
      %v1823 = vpack.c.b16 %v1276, %v1274
      %v1824 = vpack.c.b16 %v1279, %v1277
      %v1825 = vpack.c.b16 %v1280, %v1278
      %v1826 = vpack.c.b16 %v1283, %v1281
      %v1827 = vpack.c.b16 %v1284, %v1282
      %v1828 = vpack.c.b16 %v1287, %v1285
      %v1829 = vpack.c.b16 %v1288, %v1286
      %v1830 = vpack.c.b16 %v1291, %v1289
      %v1831 = vpack.c.b16 %v1292, %v1290
      %v1832 = vpack.c.b16 %v1295, %v1293
      %v1833 = vpack.c.b16 %v1296, %v1294
      %v1834 = vpack.c.b16 %v1299, %v1297
      %v1835 = vpack.c.b16 %v1300, %v1298
      %v1836 = vpack.c.b16 %v1303, %v1301
      %v1837 = vpack.c.b16 %v1304, %v1302
      %v1838 = vpack.c.b16 %v1307, %v1305
      %v1839 = vpack.c.b16 %v1308, %v1306
      %v1840 = vpack.c.b16 %v1311, %v1309
      %v1841 = vpack.c.b16 %v1312, %v1310
      %v1842 = vpack.c.b16 %v1315, %v1313
      %v1843 = vpack.c.b16 %v1316, %v1314
      %v1844 = vpack.c.b16 %v1319, %v1317
      %v1845 = vpack.c.b16 %v1320, %v1318
      %v1846 = vpack.c.b16 %v1323, %v1321
      %v1847 = vpack.c.b16 %v1324, %v1322
      %v1848 = vpack.c.b16 %v1327, %v1325
      %v1849 = vpack.c.b16 %v1328, %v1326
      %v1850 = vpack.c.b16 %v1331, %v1329
      %v1851 = vpack.c.b16 %v1332, %v1330
      %v1852 = vpack.c.b16 %v1335, %v1333
      %v1853 = vpack.c.b16 %v1336, %v1334
      %v1854 = vpack.c.b16 %v1339, %v1337
      %v1855 = vpack.c.b16 %v1340, %v1338
      %v1856 = vpack.c.b16 %v1343, %v1341
      %v1857 = vpack.c.b16 %v1344, %v1342
      %v1858 = vpack.c.b16 %v1347, %v1345
      %v1859 = vpack.c.b16 %v1348, %v1346
      %v1860 = vpack.c.b16 %v1351, %v1349
      %v1861 = vpack.c.b16 %v1352, %v1350
      %v1862 = vpack.c.b16 %v1355, %v1353
      %v1863 = vpack.c.b16 %v1356, %v1354
      %v1864 = vpack.c.b16 %v1359, %v1357
      %v1865 = vpack.c.b16 %v1360, %v1358
      %v1914 = vunpack.c.l.b16 %v1171
      %v1915 = vunpack.c.l.b16 %v1172
      %v1916 = vunpack.c.l.b16 %v1173
      %v1917 = vunpack.c.l.b16 %v1174
      %v1918 = vunpack.c.l.b16 %v1175
      %v1919 = vunpack.c.l.b16 %v1176
      %v1920 = vunpack.c.l.b16 %v1177
      %v1921 = vunpack.c.l.b16 %v1178
      %v1922 = vunpack.c.l.b16 %v1179
      %v1923 = vunpack.c.l.b16 %v1180
      %v1924 = vunpack.c.l.b16 %v1181
      %v1925 = vunpack.c.l.b16 %v1182
      %v1926 = vunpack.c.l.b16 %v1183
      %v1927 = vunpack.c.l.b16 %v1184
      %v1928 = vunpack.c.l.b16 %v1185
      %v1929 = vunpack.c.l.b16 %v1186
      %v1930 = vunpack.c.l.b16 %v1187
      %v1931 = vunpack.c.l.b16 %v1188
      %v1932 = vunpack.c.l.b16 %v1189
      %v1933 = vunpack.c.l.b16 %v1190
      %v1934 = vunpack.c.l.b16 %v1191
      %v1935 = vunpack.c.l.b16 %v1192
      %v1936 = vunpack.c.l.b16 %v1193
      %v1937 = vunpack.c.l.b16 %v1194
      %v1938 = vpack.c.b16 %v1915, %v1914
      %v1939 = vpack.c.b16 %v1917, %v1916
      %v1940 = vpack.c.b16 %v1919, %v1918
      %v1941 = vpack.c.b16 %v1921, %v1920
      %v1942 = vpack.c.b16 %v1923, %v1922
      %v1943 = vpack.c.b16 %v1925, %v1924
      %v1944 = vpack.c.b16 %v1927, %v1926
      %v1945 = vpack.c.b16 %v1929, %v1928
      %v1946 = vpack.c.b16 %v1931, %v1930
      %v1947 = vpack.c.b16 %v1933, %v1932
      %v1948 = vpack.c.b16 %v1935, %v1934
      %v1949 = vpack.c.b16 %v1937, %v1936
      %v1963 = vsel %vm1511, %v1819, 0
      %v1966 = vsel %vm1511, %v1821, 0
      %v1969 = vsel %vm1511, %v1823, 0
      %v1972 = vsel %vm1511, %v1825, 0
      %v1975 = vsel %vm1511, %v1827, 0
      %v1978 = vsel %vm1511, %v1829, 0
      %v1981 = vsel %vm1511, %v1831, 0
      %v1984 = vsel %vm1511, %v1833, 0
      %v1987 = vsel %vm1511, %v1835, 0
      %v1990 = vsel %vm1511, %v1837, 0
      %v1993 = vsel %vm1511, %v1839, 0
      %v1996 = vsel %vm1511, %v1841, 0
      %v1999 = vsel %vm1511, %v1843, 0
      %v2002 = vsel %vm1511, %v1845, 0
      %v2005 = vsel %vm1511, %v1847, 0
      %v2008 = vsel %vm1511, %v1849, 0
      %v2011 = vsel %vm1511, %v1851, 0
      %v2014 = vsel %vm1511, %v1853, 0
      %v2017 = vsel %vm1511, %v1855, 0
      %v2020 = vsel %vm1511, %v1857, 0
      %v2023 = vsel %vm1511, %v1859, 0
      %v2026 = vsel %vm1511, %v1861, 0
      %v2029 = vsel %vm1511, %v1863, 0
      %v2032 = vsel %vm1511, %v1865, 0
      %2034 = vmatprep.subr.bf16.mxu0 0
      %2035 = vmatpush1.bf16.msra.mxu0 %v1945
      %2036 = vmatprep.subr.bf16.mxu0 0
      %2037 = vmatpush1.bf16.msra.mxu0 %v1944
      %2038 = vmatprep.subr.bf16.mxu0 0
      %2039 = vmatpush1.bf16.msra.mxu0 %v1943
      %2040 = vmatprep.subr.bf16.mxu0 0
      %2041 = vmatpush1.bf16.msra.mxu0 %v1942
      %2042 = vmatprep.subr.bf16.mxu0 0
      %2043 = vmatpush1.bf16.msra.mxu0 %v1941
      %2044 = vmatprep.subr.bf16.mxu0 0
      %2045 = vmatpush1.bf16.msra.mxu0 %v1940
      %2046 = vmatprep.subr.bf16.mxu0 0
      %2047 = vmatpush1.bf16.msra.mxu0 %v1939
      %2048 = vmatprep.subr.bf16.mxu0 0
      %2049 = vmatpush1.bf16.msra.mxu0 %v1938
      %2050 = vmatprep.subr.bf16.mxu0 0
      %2051 = vmatpush2.bf16.msra.mxu0 0
      %2052 = vmatprep.subr.bf16.mxu0 0
      %2053 = vmatpush2.bf16.msra.mxu0 0
      %2054 = vmatprep.subr.bf16.mxu0 0
      %2055 = vmatpush2.bf16.msra.mxu0 0
      %2056 = vmatprep.subr.bf16.mxu0 0
      %2057 = vmatpush2.bf16.msra.mxu0 0
      %2058 = vmatprep.subr.bf16.mxu0 0
      %2059 = vmatpush2.bf16.msra.mxu0 %v1949
      %2060 = vmatprep.subr.bf16.mxu0 0
      %2061 = vmatpush2.bf16.msra.mxu0 %v1948
      %2062 = vmatprep.subr.bf16.mxu0 0
      %2063 = vmatpush2.bf16.msra.mxu0 %v1947
      %2064 = vmatprep.subr.bf16.mxu0 0
      %2065 = vmatpush2.bf16.msra.mxu0 %v1946
      %2066 = vmatprep.mubr.bf16.mxu0 %v1963
      %2067 = vmatmul.mubr.bf16.gmra.mxu0 %v1818
      %v2068 = vpop.f32.mrf.mxu0
      %v2069 = vadd.f32 %v1619, %v2068
      %v2070 = vpop.f32.mrf.mxu0
      %v2071 = vpop.f32.mrf.mxu0
      %v2072 = vadd.f32 %v1622, %v2071
      %v2073 = vpop.f32.mrf.mxu0
      %2074 = vmatprep.mubr.bf16.mxu0 %v1966
      %2075 = vmatmul.mubr.bf16.gmra.mxu0 %v1820
      %v2076 = vpop.f32.mrf.mxu0
      %v2077 = vadd.f32 %v1627, %v2076
      %v2078 = vpop.f32.mrf.mxu0
      %v2079 = vpop.f32.mrf.mxu0
      %v2080 = vadd.f32 %v1630, %v2079
      %v2081 = vpop.f32.mrf.mxu0
      %2082 = vmatprep.mubr.bf16.mxu0 %v1969
      %2083 = vmatmul.mubr.bf16.gmra.mxu0 %v1822
      %v2084 = vpop.f32.mrf.mxu0
      %v2085 = vadd.f32 %v1635, %v2084
      %v2086 = vpop.f32.mrf.mxu0
      %v2087 = vpop.f32.mrf.mxu0
      %v2088 = vadd.f32 %v1638, %v2087
      %v2089 = vpop.f32.mrf.mxu0
      %2090 = vmatprep.mubr.bf16.mxu0 %v1972
      %2091 = vmatmul.mubr.bf16.gmra.mxu0 %v1824
      %v2092 = vpop.f32.mrf.mxu0
      %v2093 = vadd.f32 %v1643, %v2092
      %v2094 = vpop.f32.mrf.mxu0
      %v2095 = vpop.f32.mrf.mxu0
      %v2096 = vadd.f32 %v1646, %v2095
      %v2097 = vpop.f32.mrf.mxu0
      %2098 = vmatprep.mubr.bf16.mxu0 %v1975
      %2099 = vmatmul.mubr.bf16.gmra.mxu0 %v1826
      %v2100 = vpop.f32.mrf.mxu0
      %v2101 = vadd.f32 %v1651, %v2100
      %v2102 = vpop.f32.mrf.mxu0
      %v2103 = vpop.f32.mrf.mxu0
      %v2104 = vadd.f32 %v1654, %v2103
      %v2105 = vpop.f32.mrf.mxu0
      %2106 = vmatprep.mubr.bf16.mxu0 %v1978
      %2107 = vmatmul.mubr.bf16.gmra.mxu0 %v1828
      %v2108 = vpop.f32.mrf.mxu0
      %v2109 = vadd.f32 %v1659, %v2108
      %v2110 = vpop.f32.mrf.mxu0
      %v2111 = vpop.f32.mrf.mxu0
      %v2112 = vadd.f32 %v1662, %v2111
      %v2113 = vpop.f32.mrf.mxu0
      %2114 = vmatprep.mubr.bf16.mxu0 %v1981
      %2115 = vmatmul.mubr.bf16.gmra.mxu0 %v1830
      %v2116 = vpop.f32.mrf.mxu0
      %v2117 = vadd.f32 %v1667, %v2116
      %v2118 = vpop.f32.mrf.mxu0
      %v2119 = vpop.f32.mrf.mxu0
      %v2120 = vadd.f32 %v1670, %v2119
      %v2121 = vpop.f32.mrf.mxu0
      %2122 = vmatprep.mubr.bf16.mxu0 %v1984
      %2123 = vmatmul.mubr.bf16.gmra.mxu0 %v1832
      %v2124 = vpop.f32.mrf.mxu0
      %v2125 = vadd.f32 %v1675, %v2124
      %v2126 = vpop.f32.mrf.mxu0
      %v2127 = vpop.f32.mrf.mxu0
      %v2128 = vadd.f32 %v1678, %v2127
      %v2129 = vpop.f32.mrf.mxu0
      %2130 = vmatprep.mubr.bf16.mxu0 %v1987
      %2131 = vmatmul.mubr.bf16.gmra.mxu0 %v1834
      %v2132 = vpop.f32.mrf.mxu0
      %v2133 = vadd.f32 %v1683, %v2132
      %v2134 = vpop.f32.mrf.mxu0
      %v2135 = vpop.f32.mrf.mxu0
      %v2136 = vadd.f32 %v1686, %v2135
      %v2137 = vpop.f32.mrf.mxu0
      %2138 = vmatprep.mubr.bf16.mxu0 %v1990
      %2139 = vmatmul.mubr.bf16.gmra.mxu0 %v1836
      %v2140 = vpop.f32.mrf.mxu0
      %v2141 = vadd.f32 %v1691, %v2140
      %v2142 = vpop.f32.mrf.mxu0
      %v2143 = vpop.f32.mrf.mxu0
      %v2144 = vadd.f32 %v1694, %v2143
      %v2145 = vpop.f32.mrf.mxu0
      %2146 = vmatprep.mubr.bf16.mxu0 %v1993
      %2147 = vmatmul.mubr.bf16.gmra.mxu0 %v1838
      %v2148 = vpop.f32.mrf.mxu0
      %v2149 = vadd.f32 %v1699, %v2148
      %v2150 = vpop.f32.mrf.mxu0
      %v2151 = vpop.f32.mrf.mxu0
      %v2152 = vadd.f32 %v1702, %v2151
      %v2153 = vpop.f32.mrf.mxu0
      %2154 = vmatprep.mubr.bf16.mxu0 %v1996
      %2155 = vmatmul.mubr.bf16.gmra.mxu0 %v1840
      %v2156 = vpop.f32.mrf.mxu0
      %v2157 = vadd.f32 %v1707, %v2156
      %v2158 = vpop.f32.mrf.mxu0
      %v2159 = vpop.f32.mrf.mxu0
      %v2160 = vadd.f32 %v1710, %v2159
      %v2161 = vpop.f32.mrf.mxu0
      %2162 = vmatprep.mubr.bf16.mxu0 %v1999
      %2163 = vmatmul.mubr.bf16.gmra.mxu0 %v1842
      %v2164 = vpop.f32.mrf.mxu0
      %v2165 = vadd.f32 %v1715, %v2164
      %v2166 = vpop.f32.mrf.mxu0
      %v2167 = vpop.f32.mrf.mxu0
      %v2168 = vadd.f32 %v1718, %v2167
      %v2169 = vpop.f32.mrf.mxu0
      %2170 = vmatprep.mubr.bf16.mxu0 %v2002
      %2171 = vmatmul.mubr.bf16.gmra.mxu0 %v1844
      %v2172 = vpop.f32.mrf.mxu0
      %v2173 = vadd.f32 %v1723, %v2172
      %v2174 = vpop.f32.mrf.mxu0
      %v2175 = vpop.f32.mrf.mxu0
      %v2176 = vadd.f32 %v1726, %v2175
      %v2177 = vpop.f32.mrf.mxu0
      %2178 = vmatprep.mubr.bf16.mxu0 %v2005
      %2179 = vmatmul.mubr.bf16.gmra.mxu0 %v1846
      %v2180 = vpop.f32.mrf.mxu0
      %v2181 = vadd.f32 %v1731, %v2180
      %v2182 = vpop.f32.mrf.mxu0
      %v2183 = vpop.f32.mrf.mxu0
      %v2184 = vadd.f32 %v1734, %v2183
      %v2185 = vpop.f32.mrf.mxu0
      %2186 = vmatprep.mubr.bf16.mxu0 %v2008
      %2187 = vmatmul.mubr.bf16.gmra.mxu0 %v1848
      %v2188 = vpop.f32.mrf.mxu0
      %v2189 = vadd.f32 %v1739, %v2188
      %v2190 = vpop.f32.mrf.mxu0
      %v2191 = vpop.f32.mrf.mxu0
      %v2192 = vadd.f32 %v1742, %v2191
      %v2193 = vpop.f32.mrf.mxu0
      %2194 = vmatprep.mubr.bf16.mxu0 %v2011
      %2195 = vmatmul.mubr.bf16.gmra.mxu0 %v1850
      %v2196 = vpop.f32.mrf.mxu0
      %v2197 = vadd.f32 %v1747, %v2196
      %v2198 = vpop.f32.mrf.mxu0
      %v2199 = vpop.f32.mrf.mxu0
      %v2200 = vadd.f32 %v1750, %v2199
      %v2201 = vpop.f32.mrf.mxu0
      %2202 = vmatprep.mubr.bf16.mxu0 %v2014
      %2203 = vmatmul.mubr.bf16.gmra.mxu0 %v1852
      %v2204 = vpop.f32.mrf.mxu0
      %v2205 = vadd.f32 %v1755, %v2204
      %v2206 = vpop.f32.mrf.mxu0
      %v2207 = vpop.f32.mrf.mxu0
      %v2208 = vadd.f32 %v1758, %v2207
      %v2209 = vpop.f32.mrf.mxu0
      %2210 = vmatprep.mubr.bf16.mxu0 %v2017
      %2211 = vmatmul.mubr.bf16.gmra.mxu0 %v1854
      %v2212 = vpop.f32.mrf.mxu0
      %v2213 = vadd.f32 %v1763, %v2212
      %v2214 = vpop.f32.mrf.mxu0
      %v2215 = vpop.f32.mrf.mxu0
      %v2216 = vadd.f32 %v1766, %v2215
      %v2217 = vpop.f32.mrf.mxu0
      %2218 = vmatprep.mubr.bf16.mxu0 %v2020
      %2219 = vmatmul.mubr.bf16.gmra.mxu0 %v1856
      %v2220 = vpop.f32.mrf.mxu0
      %v2221 = vadd.f32 %v1771, %v2220
      %v2222 = vpop.f32.mrf.mxu0
      %v2223 = vpop.f32.mrf.mxu0
      %v2224 = vadd.f32 %v1774, %v2223
      %v2225 = vpop.f32.mrf.mxu0
      %2226 = vmatprep.mubr.bf16.mxu0 %v2023
      %2227 = vmatmul.mubr.bf16.gmra.mxu0 %v1858
      %v2228 = vpop.f32.mrf.mxu0
      %v2229 = vadd.f32 %v1779, %v2228
      %v2230 = vpop.f32.mrf.mxu0
      %v2231 = vpop.f32.mrf.mxu0
      %v2232 = vadd.f32 %v1782, %v2231
      %v2233 = vpop.f32.mrf.mxu0
      %2234 = vmatprep.mubr.bf16.mxu0 %v2026
      %2235 = vmatmul.mubr.bf16.gmra.mxu0 %v1860
      %v2236 = vpop.f32.mrf.mxu0
      %v2237 = vadd.f32 %v1787, %v2236
      %v2238 = vpop.f32.mrf.mxu0
      %v2239 = vpop.f32.mrf.mxu0
      %v2240 = vadd.f32 %v1790, %v2239
      %v2241 = vpop.f32.mrf.mxu0
      %2242 = vmatprep.mubr.bf16.mxu0 %v2029
      %2243 = vmatmul.mubr.bf16.gmra.mxu0 %v1862
      %v2244 = vpop.f32.mrf.mxu0
      %v2245 = vadd.f32 %v1795, %v2244
      %v2246 = vpop.f32.mrf.mxu0
      %v2247 = vpop.f32.mrf.mxu0
      %v2248 = vadd.f32 %v1798, %v2247
      %v2249 = vpop.f32.mrf.mxu0
      %2250 = vmatprep.mubr.bf16.mxu0 %v2032
      %2251 = vmatmul.mubr.bf16.gmra.mxu0 %v1864
      %v2252 = vpop.f32.mrf.mxu0
      %v2253 = vadd.f32 %v1803, %v2252
      %v2254 = vpop.f32.mrf.mxu0
      %v2255 = vpop.f32.mrf.mxu0
      %v2256 = vadd.f32 %v1806, %v2255
      %v2257 = vpop.f32.mrf.mxu0
      %2258 = vdwg.mxu0
      %v2259 = vld [vmem:[#allocation2 + $0x30] sm:$0xff]
      %v2260 = vld [vmem:[#allocation2 + $0x38] sm:$0xff]
      %v2261 = vld [vmem:[#allocation2 + $0x40] sm:$0xff]
      %v2262 = vld [vmem:[#allocation2 + $0x48] sm:$0xff]
      %v2263 = vld [vmem:[#allocation2 + $0x50] sm:$0xff]
      %v2264 = vld [vmem:[#allocation2 + $0x58] sm:$0xff]
      %v2265 = vld [vmem:[#allocation2 + $0x60] sm:$0xff]
      %v2266 = vld [vmem:[#allocation2 + $0x68] sm:$0xff]
      %v2267 = vld [vmem:[#allocation2 + $0x70] sm:$0xff]
      %v2268 = vld [vmem:[#allocation2 + $0x78] sm:$0xff]
      %v2269 = vld [vmem:[#allocation2 + $0x80] sm:$0xff]
      %v2270 = vld [vmem:[#allocation2 + $0x88] sm:$0xff]
      %v2271 = vld [vmem:[#allocation2 + $0x90] sm:$0xff]
      %v2272 = vld [vmem:[#allocation2 + $0x98] sm:$0xff]
      %v2273 = vld [vmem:[#allocation2 + $0xa0] sm:$0xff]
      %v2274 = vld [vmem:[#allocation2 + $0xa8] sm:$0xff]
      %v2275 = vld [vmem:[#allocation2 + $0xb0] sm:$0xff]
      %v2276 = vld [vmem:[#allocation2 + $0xb8] sm:$0xff]
      %v2277 = vld [vmem:[#allocation2 + $0xc0] sm:$0xff]
      %v2278 = vld [vmem:[#allocation2 + $0xc8] sm:$0xff]
      %v2279 = vld [vmem:[#allocation2 + $0xd0] sm:$0xff]
      %v2280 = vld [vmem:[#allocation2 + $0xd8] sm:$0xff]
      %v2281 = vld [vmem:[#allocation2 + $0xe0] sm:$0xff]
      %v2282 = vld [vmem:[#allocation2 + $0xe8] sm:$0xff]
      %v2283 = vld [vmem:[#allocation2 + $0xf0] sm:$0xff]
      %v2284 = vld [vmem:[#allocation2 + $0xf8] sm:$0xff]
      %v2285 = vld [vmem:[#allocation2 + $0x100] sm:$0xff]
      %v2286 = vld [vmem:[#allocation2 + $0x108] sm:$0xff]
      %v2287 = vld [vmem:[#allocation2 + $0x110] sm:$0xff]
      %v2288 = vld [vmem:[#allocation2 + $0x118] sm:$0xff]
      %v2289 = vld [vmem:[#allocation2 + $0x120] sm:$0xff]
      %v2290 = vld [vmem:[#allocation2 + $0x128] sm:$0xff]
      %v2291 = vld [vmem:[#allocation2 + $0x130] sm:$0xff]
      %v2292 = vld [vmem:[#allocation2 + $0x138] sm:$0xff]
      %v2293 = vld [vmem:[#allocation2 + $0x140] sm:$0xff]
      %v2294 = vld [vmem:[#allocation2 + $0x148] sm:$0xff]
      %v2295 = vld [vmem:[#allocation2 + $0x150] sm:$0xff]
      %v2296 = vld [vmem:[#allocation2 + $0x158] sm:$0xff]
      %v2297 = vld [vmem:[#allocation2 + $0x160] sm:$0xff]
      %v2298 = vld [vmem:[#allocation2 + $0x168] sm:$0xff]
      %v2299 = vld [vmem:[#allocation2 + $0x170] sm:$0xff]
      %v2300 = vld [vmem:[#allocation2 + $0x178] sm:$0xff]
      %v2301 = vld [vmem:[#allocation2 + $0x180] sm:$0xff]
      %v2302 = vld [vmem:[#allocation2 + $0x188] sm:$0xff]
      %v2303 = vld [vmem:[#allocation2 + $0x190] sm:$0xff]
      %v2304 = vld [vmem:[#allocation2 + $0x198] sm:$0xff]
      %v2305 = vld [vmem:[#allocation2 + $0x1a0] sm:$0xff]
      %v2306 = vld [vmem:[#allocation2 + $0x1a8] sm:$0xff]
      %s2307 = scalar_lea.vmem %s222, 192
      %v2308 = vld [vmem:[%s2307] sm:$0xf]
      %v2309 = vld [vmem:[%s2307 + $0x4] sm:$0xf]
      %v2310 = vld [vmem:[%s2307 + $0x8] sm:$0xf]
      %v2311 = vld [vmem:[%s2307 + $0xc] sm:$0xf]
      %v2312 = vld [vmem:[%s2307 + $0x10] sm:$0xf]
      %v2313 = vld [vmem:[%s2307 + $0x14] sm:$0xf]
      %v2314 = vld [vmem:[%s2307 + $0x18] sm:$0xf]
      %v2315 = vld [vmem:[%s2307 + $0x1c] sm:$0xf]
      %v2316 = vld [vmem:[%s2307 + $0x20] sm:$0xf]
      %v2317 = vld [vmem:[%s2307 + $0x24] sm:$0xf]
      %v2318 = vld [vmem:[%s2307 + $0x28] sm:$0xf]
      %v2319 = vld [vmem:[%s2307 + $0x2c] sm:$0xf]
      %v2320 = vld [vmem:[%s2307 + $0x30] sm:$0xf]
      %v2321 = vld [vmem:[%s2307 + $0x34] sm:$0xf]
      %v2322 = vld [vmem:[%s2307 + $0x38] sm:$0xf]
      %v2323 = vld [vmem:[%s2307 + $0x3c] sm:$0xf]
      %v2324 = vld [vmem:[%s2307 + $0x40] sm:$0xf]
      %v2325 = vld [vmem:[%s2307 + $0x44] sm:$0xf]
      %v2326 = vld [vmem:[%s2307 + $0x48] sm:$0xf]
      %v2327 = vld [vmem:[%s2307 + $0x4c] sm:$0xf]
      %v2328 = vld [vmem:[%s2307 + $0x50] sm:$0xf]
      %v2329 = vld [vmem:[%s2307 + $0x54] sm:$0xf]
      %v2330 = vld [vmem:[%s2307 + $0x58] sm:$0xf]
      %v2331 = vld [vmem:[%s2307 + $0x5c] sm:$0xf]
      %v2380 = vunpack.c.l.b16 %v2259
      %v2381 = vunpack.c.h.b16 %v2259
      %v2382 = vunpack.c.l.b16 %v2260
      %v2383 = vunpack.c.h.b16 %v2260
      %v2384 = vunpack.c.l.b16 %v2261
      %v2385 = vunpack.c.h.b16 %v2261
      %v2386 = vunpack.c.l.b16 %v2262
      %v2387 = vunpack.c.h.b16 %v2262
      %v2388 = vunpack.c.l.b16 %v2263
      %v2389 = vunpack.c.h.b16 %v2263
      %v2390 = vunpack.c.l.b16 %v2264
      %v2391 = vunpack.c.h.b16 %v2264
      %v2392 = vunpack.c.l.b16 %v2265
      %v2393 = vunpack.c.h.b16 %v2265
      %v2394 = vunpack.c.l.b16 %v2266
      %v2395 = vunpack.c.h.b16 %v2266
      %v2396 = vunpack.c.l.b16 %v2267
      %v2397 = vunpack.c.h.b16 %v2267
      %v2398 = vunpack.c.l.b16 %v2268
      %v2399 = vunpack.c.h.b16 %v2268
      %v2400 = vunpack.c.l.b16 %v2269
      %v2401 = vunpack.c.h.b16 %v2269
      %v2402 = vunpack.c.l.b16 %v2270
      %v2403 = vunpack.c.h.b16 %v2270
      %v2404 = vunpack.c.l.b16 %v2271
      %v2405 = vunpack.c.h.b16 %v2271
      %v2406 = vunpack.c.l.b16 %v2272
      %v2407 = vunpack.c.h.b16 %v2272
      %v2408 = vunpack.c.l.b16 %v2273
      %v2409 = vunpack.c.h.b16 %v2273
      %v2410 = vunpack.c.l.b16 %v2274
      %v2411 = vunpack.c.h.b16 %v2274
      %v2412 = vunpack.c.l.b16 %v2275
      %v2413 = vunpack.c.h.b16 %v2275
      %v2414 = vunpack.c.l.b16 %v2276
      %v2415 = vunpack.c.h.b16 %v2276
      %v2416 = vunpack.c.l.b16 %v2277
      %v2417 = vunpack.c.h.b16 %v2277
      %v2418 = vunpack.c.l.b16 %v2278
      %v2419 = vunpack.c.h.b16 %v2278
      %v2420 = vunpack.c.l.b16 %v2279
      %v2421 = vunpack.c.h.b16 %v2279
      %v2422 = vunpack.c.l.b16 %v2280
      %v2423 = vunpack.c.h.b16 %v2280
      %v2424 = vunpack.c.l.b16 %v2281
      %v2425 = vunpack.c.h.b16 %v2281
      %v2426 = vunpack.c.l.b16 %v2282
      %v2427 = vunpack.c.h.b16 %v2282
      %v2428 = vunpack.c.l.b16 %v2283
      %v2429 = vunpack.c.h.b16 %v2283
      %v2430 = vunpack.c.l.b16 %v2284
      %v2431 = vunpack.c.h.b16 %v2284
      %v2432 = vunpack.c.l.b16 %v2285
      %v2433 = vunpack.c.h.b16 %v2285
      %v2434 = vunpack.c.l.b16 %v2286
      %v2435 = vunpack.c.h.b16 %v2286
      %v2436 = vunpack.c.l.b16 %v2287
      %v2437 = vunpack.c.h.b16 %v2287
      %v2438 = vunpack.c.l.b16 %v2288
      %v2439 = vunpack.c.h.b16 %v2288
      %v2440 = vunpack.c.l.b16 %v2289
      %v2441 = vunpack.c.h.b16 %v2289
      %v2442 = vunpack.c.l.b16 %v2290
      %v2443 = vunpack.c.h.b16 %v2290
      %v2444 = vunpack.c.l.b16 %v2291
      %v2445 = vunpack.c.h.b16 %v2291
      %v2446 = vunpack.c.l.b16 %v2292
      %v2447 = vunpack.c.h.b16 %v2292
      %v2448 = vunpack.c.l.b16 %v2293
      %v2449 = vunpack.c.h.b16 %v2293
      %v2450 = vunpack.c.l.b16 %v2294
      %v2451 = vunpack.c.h.b16 %v2294
      %v2452 = vunpack.c.l.b16 %v2295
      %v2453 = vunpack.c.h.b16 %v2295
      %v2454 = vunpack.c.l.b16 %v2296
      %v2455 = vunpack.c.h.b16 %v2296
      %v2456 = vunpack.c.l.b16 %v2297
      %v2457 = vunpack.c.h.b16 %v2297
      %v2458 = vunpack.c.l.b16 %v2298
      %v2459 = vunpack.c.h.b16 %v2298
      %v2460 = vunpack.c.l.b16 %v2299
      %v2461 = vunpack.c.h.b16 %v2299
      %v2462 = vunpack.c.l.b16 %v2300
      %v2463 = vunpack.c.h.b16 %v2300
      %v2464 = vunpack.c.l.b16 %v2301
      %v2465 = vunpack.c.h.b16 %v2301
      %v2466 = vunpack.c.l.b16 %v2302
      %v2467 = vunpack.c.h.b16 %v2302
      %v2468 = vunpack.c.l.b16 %v2303
      %v2469 = vunpack.c.h.b16 %v2303
      %v2470 = vunpack.c.l.b16 %v2304
      %v2471 = vunpack.c.h.b16 %v2304
      %v2472 = vunpack.c.l.b16 %v2305
      %v2473 = vunpack.c.h.b16 %v2305
      %v2474 = vunpack.c.l.b16 %v2306
      %v2475 = vunpack.c.h.b16 %v2306
      %v2476 = vpack.c.b16 %v2382, %v2380
      %v2477 = vpack.c.b16 %v2383, %v2381
      %v2478 = vpack.c.b16 %v2386, %v2384
      %v2479 = vpack.c.b16 %v2387, %v2385
      %v2480 = vpack.c.b16 %v2390, %v2388
      %v2481 = vpack.c.b16 %v2391, %v2389
      %v2482 = vpack.c.b16 %v2394, %v2392
      %v2483 = vpack.c.b16 %v2395, %v2393
      %v2484 = vpack.c.b16 %v2398, %v2396
      %v2485 = vpack.c.b16 %v2399, %v2397
      %v2486 = vpack.c.b16 %v2402, %v2400
      %v2487 = vpack.c.b16 %v2403, %v2401
      %v2488 = vpack.c.b16 %v2406, %v2404
      %v2489 = vpack.c.b16 %v2407, %v2405
      %v2490 = vpack.c.b16 %v2410, %v2408
      %v2491 = vpack.c.b16 %v2411, %v2409
      %v2492 = vpack.c.b16 %v2414, %v2412
      %v2493 = vpack.c.b16 %v2415, %v2413
      %v2494 = vpack.c.b16 %v2418, %v2416
      %v2495 = vpack.c.b16 %v2419, %v2417
      %v2496 = vpack.c.b16 %v2422, %v2420
      %v2497 = vpack.c.b16 %v2423, %v2421
      %v2498 = vpack.c.b16 %v2426, %v2424
      %v2499 = vpack.c.b16 %v2427, %v2425
      %v2500 = vpack.c.b16 %v2430, %v2428
      %v2501 = vpack.c.b16 %v2431, %v2429
      %v2502 = vpack.c.b16 %v2434, %v2432
      %v2503 = vpack.c.b16 %v2435, %v2433
      %v2504 = vpack.c.b16 %v2438, %v2436
      %v2505 = vpack.c.b16 %v2439, %v2437
      %v2506 = vpack.c.b16 %v2442, %v2440
      %v2507 = vpack.c.b16 %v2443, %v2441
      %v2508 = vpack.c.b16 %v2446, %v2444
      %v2509 = vpack.c.b16 %v2447, %v2445
      %v2510 = vpack.c.b16 %v2450, %v2448
      %v2511 = vpack.c.b16 %v2451, %v2449
      %v2512 = vpack.c.b16 %v2454, %v2452
      %v2513 = vpack.c.b16 %v2455, %v2453
      %v2514 = vpack.c.b16 %v2458, %v2456
      %v2515 = vpack.c.b16 %v2459, %v2457
      %v2516 = vpack.c.b16 %v2462, %v2460
      %v2517 = vpack.c.b16 %v2463, %v2461
      %v2518 = vpack.c.b16 %v2466, %v2464
      %v2519 = vpack.c.b16 %v2467, %v2465
      %v2520 = vpack.c.b16 %v2470, %v2468
      %v2521 = vpack.c.b16 %v2471, %v2469
      %v2522 = vpack.c.b16 %v2474, %v2472
      %v2523 = vpack.c.b16 %v2475, %v2473
      %v2572 = vunpack.c.l.b16 %v2308
      %v2573 = vunpack.c.l.b16 %v2309
      %v2574 = vunpack.c.l.b16 %v2310
      %v2575 = vunpack.c.l.b16 %v2311
      %v2576 = vunpack.c.l.b16 %v2312
      %v2577 = vunpack.c.l.b16 %v2313
      %v2578 = vunpack.c.l.b16 %v2314
      %v2579 = vunpack.c.l.b16 %v2315
      %v2580 = vunpack.c.l.b16 %v2316
      %v2581 = vunpack.c.l.b16 %v2317
      %v2582 = vunpack.c.l.b16 %v2318
      %v2583 = vunpack.c.l.b16 %v2319
      %v2584 = vunpack.c.l.b16 %v2320
      %v2585 = vunpack.c.l.b16 %v2321
      %v2586 = vunpack.c.l.b16 %v2322
      %v2587 = vunpack.c.l.b16 %v2323
      %v2588 = vunpack.c.l.b16 %v2324
      %v2589 = vunpack.c.l.b16 %v2325
      %v2590 = vunpack.c.l.b16 %v2326
      %v2591 = vunpack.c.l.b16 %v2327
      %v2592 = vunpack.c.l.b16 %v2328
      %v2593 = vunpack.c.l.b16 %v2329
      %v2594 = vunpack.c.l.b16 %v2330
      %v2595 = vunpack.c.l.b16 %v2331
      %v2596 = vpack.c.b16 %v2573, %v2572
      %v2597 = vpack.c.b16 %v2575, %v2574
      %v2598 = vpack.c.b16 %v2577, %v2576
      %v2599 = vpack.c.b16 %v2579, %v2578
      %v2600 = vpack.c.b16 %v2581, %v2580
      %v2601 = vpack.c.b16 %v2583, %v2582
      %v2602 = vpack.c.b16 %v2585, %v2584
      %v2603 = vpack.c.b16 %v2587, %v2586
      %v2604 = vpack.c.b16 %v2589, %v2588
      %v2605 = vpack.c.b16 %v2591, %v2590
      %v2606 = vpack.c.b16 %v2593, %v2592
      %v2607 = vpack.c.b16 %v2595, %v2594
      %v2621 = vsel %vm1511, %v2477, 0
      %v2624 = vsel %vm1511, %v2479, 0
      %v2627 = vsel %vm1511, %v2481, 0
      %v2630 = vsel %vm1511, %v2483, 0
      %v2633 = vsel %vm1511, %v2485, 0
      %v2636 = vsel %vm1511, %v2487, 0
      %v2639 = vsel %vm1511, %v2489, 0
      %v2642 = vsel %vm1511, %v2491, 0
      %v2645 = vsel %vm1511, %v2493, 0
      %v2648 = vsel %vm1511, %v2495, 0
      %v2651 = vsel %vm1511, %v2497, 0
      %v2654 = vsel %vm1511, %v2499, 0
      %v2657 = vsel %vm1511, %v2501, 0
      %v2660 = vsel %vm1511, %v2503, 0
      %v2663 = vsel %vm1511, %v2505, 0
      %v2666 = vsel %vm1511, %v2507, 0
      %v2669 = vsel %vm1511, %v2509, 0
      %v2672 = vsel %vm1511, %v2511, 0
      %v2675 = vsel %vm1511, %v2513, 0
      %v2678 = vsel %vm1511, %v2515, 0
      %v2681 = vsel %vm1511, %v2517, 0
      %v2684 = vsel %vm1511, %v2519, 0
      %v2687 = vsel %vm1511, %v2521, 0
      %v2690 = vsel %vm1511, %v2523, 0
      %2692 = vmatprep.subr.bf16.mxu0 0
      %2693 = vmatpush1.bf16.msra.mxu0 %v2603
      %2694 = vmatprep.subr.bf16.mxu0 0
      %2695 = vmatpush1.bf16.msra.mxu0 %v2602
      %2696 = vmatprep.subr.bf16.mxu0 0
      %2697 = vmatpush1.bf16.msra.mxu0 %v2601
      %2698 = vmatprep.subr.bf16.mxu0 0
      %2699 = vmatpush1.bf16.msra.mxu0 %v2600
      %2700 = vmatprep.subr.bf16.mxu0 0
      %2701 = vmatpush1.bf16.msra.mxu0 %v2599
      %2702 = vmatprep.subr.bf16.mxu0 0
      %2703 = vmatpush1.bf16.msra.mxu0 %v2598
      %2704 = vmatprep.subr.bf16.mxu0 0
      %2705 = vmatpush1.bf16.msra.mxu0 %v2597
      %2706 = vmatprep.subr.bf16.mxu0 0
      %2707 = vmatpush1.bf16.msra.mxu0 %v2596
      %2708 = vmatprep.subr.bf16.mxu0 0
      %2709 = vmatpush2.bf16.msra.mxu0 0
      %2710 = vmatprep.subr.bf16.mxu0 0
      %2711 = vmatpush2.bf16.msra.mxu0 0
      %2712 = vmatprep.subr.bf16.mxu0 0
      %2713 = vmatpush2.bf16.msra.mxu0 0
      %2714 = vmatprep.subr.bf16.mxu0 0
      %2715 = vmatpush2.bf16.msra.mxu0 0
      %2716 = vmatprep.subr.bf16.mxu0 0
      %2717 = vmatpush2.bf16.msra.mxu0 %v2607
      %2718 = vmatprep.subr.bf16.mxu0 0
      %2719 = vmatpush2.bf16.msra.mxu0 %v2606
      %2720 = vmatprep.subr.bf16.mxu0 0
      %2721 = vmatpush2.bf16.msra.mxu0 %v2605
      %2722 = vmatprep.subr.bf16.mxu0 0
      %2723 = vmatpush2.bf16.msra.mxu0 %v2604
      %2724 = vmatprep.mubr.bf16.mxu0 %v2621
      %2725 = vmatmul.mubr.bf16.gmra.mxu0 %v2476
      %v2726 = vpop.f32.mrf.mxu0
      %v2727 = vadd.f32 0.0, %v2726
      %v2728 = vpop.f32.mrf.mxu0
      %v2729 = vpop.f32.mrf.mxu0
      %v2730 = vadd.f32 0.0, %v2729
      %v2731 = vpop.f32.mrf.mxu0
      %2732 = vmatprep.mubr.bf16.mxu0 %v2624
      %2733 = vmatmul.mubr.bf16.gmra.mxu0 %v2478
      %v2734 = vpop.f32.mrf.mxu0
      %v2735 = vadd.f32 0.0, %v2734
      %v2736 = vpop.f32.mrf.mxu0
      %v2737 = vpop.f32.mrf.mxu0
      %v2738 = vadd.f32 0.0, %v2737
      %v2739 = vpop.f32.mrf.mxu0
      %2740 = vmatprep.mubr.bf16.mxu0 %v2627
      %2741 = vmatmul.mubr.bf16.gmra.mxu0 %v2480
      %v2742 = vpop.f32.mrf.mxu0
      %v2743 = vadd.f32 0.0, %v2742
      %v2744 = vpop.f32.mrf.mxu0
      %v2745 = vpop.f32.mrf.mxu0
      %v2746 = vadd.f32 0.0, %v2745
      %v2747 = vpop.f32.mrf.mxu0
      %2748 = vmatprep.mubr.bf16.mxu0 %v2630
      %2749 = vmatmul.mubr.bf16.gmra.mxu0 %v2482
      %v2750 = vpop.f32.mrf.mxu0
      %v2751 = vadd.f32 0.0, %v2750
      %v2752 = vpop.f32.mrf.mxu0
      %v2753 = vpop.f32.mrf.mxu0
      %v2754 = vadd.f32 0.0, %v2753
      %v2755 = vpop.f32.mrf.mxu0
      %2756 = vmatprep.mubr.bf16.mxu0 %v2633
      %2757 = vmatmul.mubr.bf16.gmra.mxu0 %v2484
      %v2758 = vpop.f32.mrf.mxu0
      %v2759 = vadd.f32 0.0, %v2758
      %v2760 = vpop.f32.mrf.mxu0
      %v2761 = vpop.f32.mrf.mxu0
      %v2762 = vadd.f32 0.0, %v2761
      %v2763 = vpop.f32.mrf.mxu0
      %2764 = vmatprep.mubr.bf16.mxu0 %v2636
      %2765 = vmatmul.mubr.bf16.gmra.mxu0 %v2486
      %v2766 = vpop.f32.mrf.mxu0
      %v2767 = vadd.f32 0.0, %v2766
      %v2768 = vpop.f32.mrf.mxu0
      %v2769 = vpop.f32.mrf.mxu0
      %v2770 = vadd.f32 0.0, %v2769
      %v2771 = vpop.f32.mrf.mxu0
      %2772 = vmatprep.mubr.bf16.mxu0 %v2639
      %2773 = vmatmul.mubr.bf16.gmra.mxu0 %v2488
      %v2774 = vpop.f32.mrf.mxu0
      %v2775 = vadd.f32 0.0, %v2774
      %v2776 = vpop.f32.mrf.mxu0
      %v2777 = vpop.f32.mrf.mxu0
      %v2778 = vadd.f32 0.0, %v2777
      %v2779 = vpop.f32.mrf.mxu0
      %2780 = vmatprep.mubr.bf16.mxu0 %v2642
      %2781 = vmatmul.mubr.bf16.gmra.mxu0 %v2490
      %v2782 = vpop.f32.mrf.mxu0
      %v2783 = vadd.f32 0.0, %v2782
      %v2784 = vpop.f32.mrf.mxu0
      %v2785 = vpop.f32.mrf.mxu0
      %v2786 = vadd.f32 0.0, %v2785
      %v2787 = vpop.f32.mrf.mxu0
      %2788 = vmatprep.mubr.bf16.mxu0 %v2645
      %2789 = vmatmul.mubr.bf16.gmra.mxu0 %v2492
      %v2790 = vpop.f32.mrf.mxu0
      %v2791 = vadd.f32 0.0, %v2790
      %v2792 = vpop.f32.mrf.mxu0
      %v2793 = vpop.f32.mrf.mxu0
      %v2794 = vadd.f32 0.0, %v2793
      %v2795 = vpop.f32.mrf.mxu0
      %2796 = vmatprep.mubr.bf16.mxu0 %v2648
      %2797 = vmatmul.mubr.bf16.gmra.mxu0 %v2494
      %v2798 = vpop.f32.mrf.mxu0
      %v2799 = vadd.f32 0.0, %v2798
      %v2800 = vpop.f32.mrf.mxu0
      %v2801 = vpop.f32.mrf.mxu0
      %v2802 = vadd.f32 0.0, %v2801
      %v2803 = vpop.f32.mrf.mxu0
      %2804 = vmatprep.mubr.bf16.mxu0 %v2651
      %2805 = vmatmul.mubr.bf16.gmra.mxu0 %v2496
      %v2806 = vpop.f32.mrf.mxu0
      %v2807 = vadd.f32 0.0, %v2806
      %v2808 = vpop.f32.mrf.mxu0
      %v2809 = vpop.f32.mrf.mxu0
      %v2810 = vadd.f32 0.0, %v2809
      %v2811 = vpop.f32.mrf.mxu0
      %2812 = vmatprep.mubr.bf16.mxu0 %v2654
      %2813 = vmatmul.mubr.bf16.gmra.mxu0 %v2498
      %v2814 = vpop.f32.mrf.mxu0
      %v2815 = vadd.f32 0.0, %v2814
      %v2816 = vpop.f32.mrf.mxu0
      %v2817 = vpop.f32.mrf.mxu0
      %v2818 = vadd.f32 0.0, %v2817
      %v2819 = vpop.f32.mrf.mxu0
      %2820 = vmatprep.mubr.bf16.mxu0 %v2657
      %2821 = vmatmul.mubr.bf16.gmra.mxu0 %v2500
      %v2822 = vpop.f32.mrf.mxu0
      %v2823 = vadd.f32 0.0, %v2822
      %v2824 = vpop.f32.mrf.mxu0
      %v2825 = vpop.f32.mrf.mxu0
      %v2826 = vadd.f32 0.0, %v2825
      %v2827 = vpop.f32.mrf.mxu0
      %2828 = vmatprep.mubr.bf16.mxu0 %v2660
      %2829 = vmatmul.mubr.bf16.gmra.mxu0 %v2502
      %v2830 = vpop.f32.mrf.mxu0
      %v2831 = vadd.f32 0.0, %v2830
      %v2832 = vpop.f32.mrf.mxu0
      %v2833 = vpop.f32.mrf.mxu0
      %v2834 = vadd.f32 0.0, %v2833
      %v2835 = vpop.f32.mrf.mxu0
      %2836 = vmatprep.mubr.bf16.mxu0 %v2663
      %2837 = vmatmul.mubr.bf16.gmra.mxu0 %v2504
      %v2838 = vpop.f32.mrf.mxu0
      %v2839 = vadd.f32 0.0, %v2838
      %v2840 = vpop.f32.mrf.mxu0
      %v2841 = vpop.f32.mrf.mxu0
      %v2842 = vadd.f32 0.0, %v2841
      %v2843 = vpop.f32.mrf.mxu0
      %2844 = vmatprep.mubr.bf16.mxu0 %v2666
      %2845 = vmatmul.mubr.bf16.gmra.mxu0 %v2506
      %v2846 = vpop.f32.mrf.mxu0
      %v2847 = vadd.f32 0.0, %v2846
      %v2848 = vpop.f32.mrf.mxu0
      %v2849 = vpop.f32.mrf.mxu0
      %v2850 = vadd.f32 0.0, %v2849
      %v2851 = vpop.f32.mrf.mxu0
      %2852 = vmatprep.mubr.bf16.mxu0 %v2669
      %2853 = vmatmul.mubr.bf16.gmra.mxu0 %v2508
      %v2854 = vpop.f32.mrf.mxu0
      %v2855 = vadd.f32 0.0, %v2854
      %v2856 = vpop.f32.mrf.mxu0
      %v2857 = vpop.f32.mrf.mxu0
      %v2858 = vadd.f32 0.0, %v2857
      %v2859 = vpop.f32.mrf.mxu0
      %2860 = vmatprep.mubr.bf16.mxu0 %v2672
      %2861 = vmatmul.mubr.bf16.gmra.mxu0 %v2510
      %v2862 = vpop.f32.mrf.mxu0
      %v2863 = vadd.f32 0.0, %v2862
      %v2864 = vpop.f32.mrf.mxu0
      %v2865 = vpop.f32.mrf.mxu0
      %v2866 = vadd.f32 0.0, %v2865
      %v2867 = vpop.f32.mrf.mxu0
      %2868 = vmatprep.mubr.bf16.mxu0 %v2675
      %2869 = vmatmul.mubr.bf16.gmra.mxu0 %v2512
      %v2870 = vpop.f32.mrf.mxu0
      %v2871 = vadd.f32 0.0, %v2870
      %v2872 = vpop.f32.mrf.mxu0
      %v2873 = vpop.f32.mrf.mxu0
      %v2874 = vadd.f32 0.0, %v2873
      %v2875 = vpop.f32.mrf.mxu0
      %2876 = vmatprep.mubr.bf16.mxu0 %v2678
      %2877 = vmatmul.mubr.bf16.gmra.mxu0 %v2514
      %v2878 = vpop.f32.mrf.mxu0
      %v2879 = vadd.f32 0.0, %v2878
      %v2880 = vpop.f32.mrf.mxu0
      %v2881 = vpop.f32.mrf.mxu0
      %v2882 = vadd.f32 0.0, %v2881
      %v2883 = vpop.f32.mrf.mxu0
      %2884 = vmatprep.mubr.bf16.mxu0 %v2681
      %2885 = vmatmul.mubr.bf16.gmra.mxu0 %v2516
      %v2886 = vpop.f32.mrf.mxu0
      %v2887 = vadd.f32 0.0, %v2886
      %v2888 = vpop.f32.mrf.mxu0
      %v2889 = vpop.f32.mrf.mxu0
      %v2890 = vadd.f32 0.0, %v2889
      %v2891 = vpop.f32.mrf.mxu0
      %2892 = vmatprep.mubr.bf16.mxu0 %v2684
      %2893 = vmatmul.mubr.bf16.gmra.mxu0 %v2518
      %v2894 = vpop.f32.mrf.mxu0
      %v2895 = vadd.f32 0.0, %v2894
      %v2896 = vpop.f32.mrf.mxu0
      %v2897 = vpop.f32.mrf.mxu0
      %v2898 = vadd.f32 0.0, %v2897
      %v2899 = vpop.f32.mrf.mxu0
      %2900 = vmatprep.mubr.bf16.mxu0 %v2687
      %2901 = vmatmul.mubr.bf16.gmra.mxu0 %v2520
      %v2902 = vpop.f32.mrf.mxu0
      %v2903 = vadd.f32 0.0, %v2902
      %v2904 = vpop.f32.mrf.mxu0
      %v2905 = vpop.f32.mrf.mxu0
      %v2906 = vadd.f32 0.0, %v2905
      %v2907 = vpop.f32.mrf.mxu0
      %2908 = vmatprep.mubr.bf16.mxu0 %v2690
      %2909 = vmatmul.mubr.bf16.gmra.mxu0 %v2522
      %v2910 = vpop.f32.mrf.mxu0
      %v2911 = vadd.f32 0.0, %v2910
      %v2912 = vpop.f32.mrf.mxu0
      %v2913 = vpop.f32.mrf.mxu0
      %v2914 = vadd.f32 0.0, %v2913
      %v2915 = vpop.f32.mrf.mxu0
      %2916 = vdwg.mxu0
      %v2917 = vadd.f32 %v2069, %v2727
      %v2918 = vadd.f32 %v2072, %v2730
      %v2919 = vadd.f32 %v2077, %v2735
      %v2920 = vadd.f32 %v2080, %v2738
      %v2921 = vadd.f32 %v2085, %v2743
      %v2922 = vadd.f32 %v2088, %v2746
      %v2923 = vadd.f32 %v2093, %v2751
      %v2924 = vadd.f32 %v2096, %v2754
      %v2925 = vadd.f32 %v2101, %v2759
      %v2926 = vadd.f32 %v2104, %v2762
      %v2927 = vadd.f32 %v2109, %v2767
      %v2928 = vadd.f32 %v2112, %v2770
      %v2929 = vadd.f32 %v2117, %v2775
      %v2930 = vadd.f32 %v2120, %v2778
      %v2931 = vadd.f32 %v2125, %v2783
      %v2932 = vadd.f32 %v2128, %v2786
      %v2933 = vadd.f32 %v2133, %v2791
      %v2934 = vadd.f32 %v2136, %v2794
      %v2935 = vadd.f32 %v2141, %v2799
      %v2936 = vadd.f32 %v2144, %v2802
      %v2937 = vadd.f32 %v2149, %v2807
      %v2938 = vadd.f32 %v2152, %v2810
      %v2939 = vadd.f32 %v2157, %v2815
      %v2940 = vadd.f32 %v2160, %v2818
      %v2941 = vadd.f32 %v2165, %v2823
      %v2942 = vadd.f32 %v2168, %v2826
      %v2943 = vadd.f32 %v2173, %v2831
      %v2944 = vadd.f32 %v2176, %v2834
      %v2945 = vadd.f32 %v2181, %v2839
      %v2946 = vadd.f32 %v2184, %v2842
      %v2947 = vadd.f32 %v2189, %v2847
      %v2948 = vadd.f32 %v2192, %v2850
      %v2949 = vadd.f32 %v2197, %v2855
      %v2950 = vadd.f32 %v2200, %v2858
      %v2951 = vadd.f32 %v2205, %v2863
      %v2952 = vadd.f32 %v2208, %v2866
      %v2953 = vadd.f32 %v2213, %v2871
      %v2954 = vadd.f32 %v2216, %v2874
      %v2955 = vadd.f32 %v2221, %v2879
      %v2956 = vadd.f32 %v2224, %v2882
      %v2957 = vadd.f32 %v2229, %v2887
      %v2958 = vadd.f32 %v2232, %v2890
      %v2959 = vadd.f32 %v2237, %v2895
      %v2960 = vadd.f32 %v2240, %v2898
      %v2961 = vadd.f32 %v2245, %v2903
      %v2962 = vadd.f32 %v2248, %v2906
      %v2963 = vadd.f32 %v2253, %v2911
      %v2964 = vadd.f32 %v2256, %v2914
      %v2965 = vlaneseq
      %v2966 = vshrl.u32 %v2965, 7
      %v2967 = vadd.s32 %v2966, 8
      %v2968 = vadd.s32 %v2966, 16
      %v2969 = vadd.s32 %v2966, 24
      %v2970 = vadd.s32 %v2966, 32
      %v2971 = vadd.s32 %v2966, 40
      %v2972 = vadd.s32 %v2966, 48
      %v2973 = vadd.s32 %v2966, 56
      %v2974 = vadd.s32 %v2966, 64
      %v2975 = vadd.s32 %v2966, 72
      %v2976 = vadd.s32 %v2966, 80
      %v2977 = vadd.s32 %v2966, 88
      %v2978 = vadd.s32 %v2966, 96
      %v2979 = vadd.s32 %v2966, 104
      %v2980 = vadd.s32 %v2966, 112
      %v2981 = vadd.s32 %v2966, 120
      %v2982 = vadd.s32 %v2966, 128
      %v2983 = vadd.s32 %v2966, 136
      %v2984 = vadd.s32 %v2966, 144
      %v2985 = vadd.s32 %v2966, 152
      %v2986 = vadd.s32 %v2966, 160
      %v2987 = vadd.s32 %v2966, 168
      %v2988 = vadd.s32 %v2966, 176
      %v2989 = vadd.s32 %v2966, 184
      %v2990 = vadd.s32 %v2966, 192
      %v2991 = vadd.s32 %v2966, 200
      %v2992 = vadd.s32 %v2966, 208
      %v2993 = vadd.s32 %v2966, 216
      %v2994 = vadd.s32 %v2966, 224
      %v2995 = vadd.s32 %v2966, 232
      %v2996 = vadd.s32 %v2966, 240
      %v2997 = vadd.s32 %v2966, 248
      %v2998 = vadd.s32 %v2966, 256
      %v2999 = vadd.s32 %v2966, 264
      %v3000 = vadd.s32 %v2966, 272
      %v3001 = vadd.s32 %v2966, 280
      %v3002 = vadd.s32 %v2966, 288
      %v3003 = vadd.s32 %v2966, 296
      %v3004 = vadd.s32 %v2966, 304
      %v3005 = vadd.s32 %v2966, 312
      %v3006 = vadd.s32 %v2966, 320
      %v3007 = vadd.s32 %v2966, 328
      %v3008 = vadd.s32 %v2966, 336
      %v3009 = vadd.s32 %v2966, 344
      %v3010 = vadd.s32 %v2966, 352
      %v3011 = vadd.s32 %v2966, 360
      %v3012 = vadd.s32 %v2966, 368
      %v3013 = vadd.s32 %v2966, 376
      %vm3014 = vcmp.lt.s32.totalorder %v2966, 0
      %v3015 = vsub.s32 0, %v2966
      %v3016 = vsel %vm3014, %v3015, %v2966
      %v3017 = vmul.u32.u64.compose %v3016, 2863311531
      %v3018 = vextract.low.u32 %v3017
      %v3019 = vextract.high.u32 %v3017
      %v3020 = vshrl.u32 %v3019, 4
      %v3021 = vmul.u32 %v3020, 24
      %v3022 = vsub.s32 %v3016, %v3021
      %v3023 = vsub.s32 0, %v3022
      %v3024 = vsel %vm3014, %v3023, %v3022
      %vm3025 = vcmp.lt.s32.totalorder %v2967, 0
      %v3026 = vsub.s32 0, %v2967
      %v3027 = vsel %vm3025, %v3026, %v2967
      %v3028 = vmul.u32.u64.compose %v3027, 2863311531
      %v3029 = vextract.low.u32 %v3028
      %v3030 = vextract.high.u32 %v3028
      %v3031 = vshrl.u32 %v3030, 4
      %v3032 = vmul.u32 %v3031, 24
      %v3033 = vsub.s32 %v3027, %v3032
      %v3034 = vsub.s32 0, %v3033
      %v3035 = vsel %vm3025, %v3034, %v3033
      %vm3036 = vcmp.lt.s32.totalorder %v2968, 0
      %v3037 = vsub.s32 0, %v2968
      %v3038 = vsel %vm3036, %v3037, %v2968
      %v3039 = vmul.u32.u64.compose %v3038, 2863311531
      %v3040 = vextract.low.u32 %v3039
      %v3041 = vextract.high.u32 %v3039
      %v3042 = vshrl.u32 %v3041, 4
      %v3043 = vmul.u32 %v3042, 24
      %v3044 = vsub.s32 %v3038, %v3043
      %v3045 = vsub.s32 0, %v3044
      %v3046 = vsel %vm3036, %v3045, %v3044
      %vm3047 = vcmp.lt.s32.totalorder %v2969, 0
      %v3048 = vsub.s32 0, %v2969
      %v3049 = vsel %vm3047, %v3048, %v2969
      %v3050 = vmul.u32.u64.compose %v3049, 2863311531
      %v3051 = vextract.low.u32 %v3050
      %v3052 = vextract.high.u32 %v3050
      %v3053 = vshrl.u32 %v3052, 4
      %v3054 = vmul.u32 %v3053, 24
      %v3055 = vsub.s32 %v3049, %v3054
      %v3056 = vsub.s32 0, %v3055
      %v3057 = vsel %vm3047, %v3056, %v3055
      %vm3058 = vcmp.lt.s32.totalorder %v2970, 0
      %v3059 = vsub.s32 0, %v2970
      %v3060 = vsel %vm3058, %v3059, %v2970
      %v3061 = vmul.u32.u64.compose %v3060, 2863311531
      %v3062 = vextract.low.u32 %v3061
      %v3063 = vextract.high.u32 %v3061
      %v3064 = vshrl.u32 %v3063, 4
      %v3065 = vmul.u32 %v3064, 24
      %v3066 = vsub.s32 %v3060, %v3065
      %v3067 = vsub.s32 0, %v3066
      %v3068 = vsel %vm3058, %v3067, %v3066
      %vm3069 = vcmp.lt.s32.totalorder %v2971, 0
      %v3070 = vsub.s32 0, %v2971
      %v3071 = vsel %vm3069, %v3070, %v2971
      %v3072 = vmul.u32.u64.compose %v3071, 2863311531
      %v3073 = vextract.low.u32 %v3072
      %v3074 = vextract.high.u32 %v3072
      %v3075 = vshrl.u32 %v3074, 4
      %v3076 = vmul.u32 %v3075, 24
      %v3077 = vsub.s32 %v3071, %v3076
      %v3078 = vsub.s32 0, %v3077
      %v3079 = vsel %vm3069, %v3078, %v3077
      %vm3080 = vcmp.lt.s32.totalorder %v2972, 0
      %v3081 = vsub.s32 0, %v2972
      %v3082 = vsel %vm3080, %v3081, %v2972
      %v3083 = vmul.u32.u64.compose %v3082, 2863311531
      %v3084 = vextract.low.u32 %v3083
      %v3085 = vextract.high.u32 %v3083
      %v3086 = vshrl.u32 %v3085, 4
      %v3087 = vmul.u32 %v3086, 24
      %v3088 = vsub.s32 %v3082, %v3087
      %v3089 = vsub.s32 0, %v3088
      %v3090 = vsel %vm3080, %v3089, %v3088
      %vm3091 = vcmp.lt.s32.totalorder %v2973, 0
      %v3092 = vsub.s32 0, %v2973
      %v3093 = vsel %vm3091, %v3092, %v2973
      %v3094 = vmul.u32.u64.compose %v3093, 2863311531
      %v3095 = vextract.low.u32 %v3094
      %v3096 = vextract.high.u32 %v3094
      %v3097 = vshrl.u32 %v3096, 4
      %v3098 = vmul.u32 %v3097, 24
      %v3099 = vsub.s32 %v3093, %v3098
      %v3100 = vsub.s32 0, %v3099
      %v3101 = vsel %vm3091, %v3100, %v3099
      %vm3102 = vcmp.lt.s32.totalorder %v2974, 0
      %v3103 = vsub.s32 0, %v2974
      %v3104 = vsel %vm3102, %v3103, %v2974
      %v3105 = vmul.u32.u64.compose %v3104, 2863311531
      %v3106 = vextract.low.u32 %v3105
      %v3107 = vextract.high.u32 %v3105
      %v3108 = vshrl.u32 %v3107, 4
      %v3109 = vmul.u32 %v3108, 24
      %v3110 = vsub.s32 %v3104, %v3109
      %v3111 = vsub.s32 0, %v3110
      %v3112 = vsel %vm3102, %v3111, %v3110
      %vm3113 = vcmp.lt.s32.totalorder %v2975, 0
      %v3114 = vsub.s32 0, %v2975
      %v3115 = vsel %vm3113, %v3114, %v2975
      %v3116 = vmul.u32.u64.compose %v3115, 2863311531
      %v3117 = vextract.low.u32 %v3116
      %v3118 = vextract.high.u32 %v3116
      %v3119 = vshrl.u32 %v3118, 4
      %v3120 = vmul.u32 %v3119, 24
      %v3121 = vsub.s32 %v3115, %v3120
      %v3122 = vsub.s32 0, %v3121
      %v3123 = vsel %vm3113, %v3122, %v3121
      %vm3124 = vcmp.lt.s32.totalorder %v2976, 0
      %v3125 = vsub.s32 0, %v2976
      %v3126 = vsel %vm3124, %v3125, %v2976
      %v3127 = vmul.u32.u64.compose %v3126, 2863311531
      %v3128 = vextract.low.u32 %v3127
      %v3129 = vextract.high.u32 %v3127
      %v3130 = vshrl.u32 %v3129, 4
      %v3131 = vmul.u32 %v3130, 24
      %v3132 = vsub.s32 %v3126, %v3131
      %v3133 = vsub.s32 0, %v3132
      %v3134 = vsel %vm3124, %v3133, %v3132
      %vm3135 = vcmp.lt.s32.totalorder %v2977, 0
      %v3136 = vsub.s32 0, %v2977
      %v3137 = vsel %vm3135, %v3136, %v2977
      %v3138 = vmul.u32.u64.compose %v3137, 2863311531
      %v3139 = vextract.low.u32 %v3138
      %v3140 = vextract.high.u32 %v3138
      %v3141 = vshrl.u32 %v3140, 4
      %v3142 = vmul.u32 %v3141, 24
      %v3143 = vsub.s32 %v3137, %v3142
      %v3144 = vsub.s32 0, %v3143
      %v3145 = vsel %vm3135, %v3144, %v3143
      %vm3146 = vcmp.lt.s32.totalorder %v2978, 0
      %v3147 = vsub.s32 0, %v2978
      %v3148 = vsel %vm3146, %v3147, %v2978
      %v3149 = vmul.u32.u64.compose %v3148, 2863311531
      %v3150 = vextract.low.u32 %v3149
      %v3151 = vextract.high.u32 %v3149
      %v3152 = vshrl.u32 %v3151, 4
      %v3153 = vmul.u32 %v3152, 24
      %v3154 = vsub.s32 %v3148, %v3153
      %v3155 = vsub.s32 0, %v3154
      %v3156 = vsel %vm3146, %v3155, %v3154
      %vm3157 = vcmp.lt.s32.totalorder %v2979, 0
      %v3158 = vsub.s32 0, %v2979
      %v3159 = vsel %vm3157, %v3158, %v2979
      %v3160 = vmul.u32.u64.compose %v3159, 2863311531
      %v3161 = vextract.low.u32 %v3160
      %v3162 = vextract.high.u32 %v3160
      %v3163 = vshrl.u32 %v3162, 4
      %v3164 = vmul.u32 %v3163, 24
      %v3165 = vsub.s32 %v3159, %v3164
      %v3166 = vsub.s32 0, %v3165
      %v3167 = vsel %vm3157, %v3166, %v3165
      %vm3168 = vcmp.lt.s32.totalorder %v2980, 0
      %v3169 = vsub.s32 0, %v2980
      %v3170 = vsel %vm3168, %v3169, %v2980
      %v3171 = vmul.u32.u64.compose %v3170, 2863311531
      %v3172 = vextract.low.u32 %v3171
      %v3173 = vextract.high.u32 %v3171
      %v3174 = vshrl.u32 %v3173, 4
      %v3175 = vmul.u32 %v3174, 24
      %v3176 = vsub.s32 %v3170, %v3175
      %v3177 = vsub.s32 0, %v3176
      %v3178 = vsel %vm3168, %v3177, %v3176
      %vm3179 = vcmp.lt.s32.totalorder %v2981, 0
      %v3180 = vsub.s32 0, %v2981
      %v3181 = vsel %vm3179, %v3180, %v2981
      %v3182 = vmul.u32.u64.compose %v3181, 2863311531
      %v3183 = vextract.low.u32 %v3182
      %v3184 = vextract.high.u32 %v3182
      %v3185 = vshrl.u32 %v3184, 4
      %v3186 = vmul.u32 %v3185, 24
      %v3187 = vsub.s32 %v3181, %v3186
      %v3188 = vsub.s32 0, %v3187
      %v3189 = vsel %vm3179, %v3188, %v3187
      %vm3190 = vcmp.lt.s32.totalorder %v2982, 0
      %v3191 = vsub.s32 0, %v2982
      %v3192 = vsel %vm3190, %v3191, %v2982
      %v3193 = vmul.u32.u64.compose %v3192, 2863311531
      %v3194 = vextract.low.u32 %v3193
      %v3195 = vextract.high.u32 %v3193
      %v3196 = vshrl.u32 %v3195, 4
      %v3197 = vmul.u32 %v3196, 24
      %v3198 = vsub.s32 %v3192, %v3197
      %v3199 = vsub.s32 0, %v3198
      %v3200 = vsel %vm3190, %v3199, %v3198
      %vm3201 = vcmp.lt.s32.totalorder %v2983, 0
      %v3202 = vsub.s32 0, %v2983
      %v3203 = vsel %vm3201, %v3202, %v2983
      %v3204 = vmul.u32.u64.compose %v3203, 2863311531
      %v3205 = vextract.low.u32 %v3204
      %v3206 = vextract.high.u32 %v3204
      %v3207 = vshrl.u32 %v3206, 4
      %v3208 = vmul.u32 %v3207, 24
      %v3209 = vsub.s32 %v3203, %v3208
      %v3210 = vsub.s32 0, %v3209
      %v3211 = vsel %vm3201, %v3210, %v3209
      %vm3212 = vcmp.lt.s32.totalorder %v2984, 0
      %v3213 = vsub.s32 0, %v2984
      %v3214 = vsel %vm3212, %v3213, %v2984
      %v3215 = vmul.u32.u64.compose %v3214, 2863311531
      %v3216 = vextract.low.u32 %v3215
      %v3217 = vextract.high.u32 %v3215
      %v3218 = vshrl.u32 %v3217, 4
      %v3219 = vmul.u32 %v3218, 24
      %v3220 = vsub.s32 %v3214, %v3219
      %v3221 = vsub.s32 0, %v3220
      %v3222 = vsel %vm3212, %v3221, %v3220
      %vm3223 = vcmp.lt.s32.totalorder %v2985, 0
      %v3224 = vsub.s32 0, %v2985
      %v3225 = vsel %vm3223, %v3224, %v2985
      %v3226 = vmul.u32.u64.compose %v3225, 2863311531
      %v3227 = vextract.low.u32 %v3226
      %v3228 = vextract.high.u32 %v3226
      %v3229 = vshrl.u32 %v3228, 4
      %v3230 = vmul.u32 %v3229, 24
      %v3231 = vsub.s32 %v3225, %v3230
      %v3232 = vsub.s32 0, %v3231
      %v3233 = vsel %vm3223, %v3232, %v3231
      %vm3234 = vcmp.lt.s32.totalorder %v2986, 0
      %v3235 = vsub.s32 0, %v2986
      %v3236 = vsel %vm3234, %v3235, %v2986
      %v3237 = vmul.u32.u64.compose %v3236, 2863311531
      %v3238 = vextract.low.u32 %v3237
      %v3239 = vextract.high.u32 %v3237
      %v3240 = vshrl.u32 %v3239, 4
      %v3241 = vmul.u32 %v3240, 24
      %v3242 = vsub.s32 %v3236, %v3241
      %v3243 = vsub.s32 0, %v3242
      %v3244 = vsel %vm3234, %v3243, %v3242
      %vm3245 = vcmp.lt.s32.totalorder %v2987, 0
      %v3246 = vsub.s32 0, %v2987
      %v3247 = vsel %vm3245, %v3246, %v2987
      %v3248 = vmul.u32.u64.compose %v3247, 2863311531
      %v3249 = vextract.low.u32 %v3248
      %v3250 = vextract.high.u32 %v3248
      %v3251 = vshrl.u32 %v3250, 4
      %v3252 = vmul.u32 %v3251, 24
      %v3253 = vsub.s32 %v3247, %v3252
      %v3254 = vsub.s32 0, %v3253
      %v3255 = vsel %vm3245, %v3254, %v3253
      %vm3256 = vcmp.lt.s32.totalorder %v2988, 0
      %v3257 = vsub.s32 0, %v2988
      %v3258 = vsel %vm3256, %v3257, %v2988
      %v3259 = vmul.u32.u64.compose %v3258, 2863311531
      %v3260 = vextract.low.u32 %v3259
      %v3261 = vextract.high.u32 %v3259
      %v3262 = vshrl.u32 %v3261, 4
      %v3263 = vmul.u32 %v3262, 24
      %v3264 = vsub.s32 %v3258, %v3263
      %v3265 = vsub.s32 0, %v3264
      %v3266 = vsel %vm3256, %v3265, %v3264
      %vm3267 = vcmp.lt.s32.totalorder %v2989, 0
      %v3268 = vsub.s32 0, %v2989
      %v3269 = vsel %vm3267, %v3268, %v2989
      %v3270 = vmul.u32.u64.compose %v3269, 2863311531
      %v3271 = vextract.low.u32 %v3270
      %v3272 = vextract.high.u32 %v3270
      %v3273 = vshrl.u32 %v3272, 4
      %v3274 = vmul.u32 %v3273, 24
      %v3275 = vsub.s32 %v3269, %v3274
      %v3276 = vsub.s32 0, %v3275
      %v3277 = vsel %vm3267, %v3276, %v3275
      %vm3278 = vcmp.lt.s32.totalorder %v2990, 0
      %v3279 = vsub.s32 0, %v2990
      %v3280 = vsel %vm3278, %v3279, %v2990
      %v3281 = vmul.u32.u64.compose %v3280, 2863311531
      %v3282 = vextract.low.u32 %v3281
      %v3283 = vextract.high.u32 %v3281
      %v3284 = vshrl.u32 %v3283, 4
      %v3285 = vmul.u32 %v3284, 24
      %v3286 = vsub.s32 %v3280, %v3285
      %v3287 = vsub.s32 0, %v3286
      %v3288 = vsel %vm3278, %v3287, %v3286
      %vm3289 = vcmp.lt.s32.totalorder %v2991, 0
      %v3290 = vsub.s32 0, %v2991
      %v3291 = vsel %vm3289, %v3290, %v2991
      %v3292 = vmul.u32.u64.compose %v3291, 2863311531
      %v3293 = vextract.low.u32 %v3292
      %v3294 = vextract.high.u32 %v3292
      %v3295 = vshrl.u32 %v3294, 4
      %v3296 = vmul.u32 %v3295, 24
      %v3297 = vsub.s32 %v3291, %v3296
      %v3298 = vsub.s32 0, %v3297
      %v3299 = vsel %vm3289, %v3298, %v3297
      %vm3300 = vcmp.lt.s32.totalorder %v2992, 0
      %v3301 = vsub.s32 0, %v2992
      %v3302 = vsel %vm3300, %v3301, %v2992
      %v3303 = vmul.u32.u64.compose %v3302, 2863311531
      %v3304 = vextract.low.u32 %v3303
      %v3305 = vextract.high.u32 %v3303
      %v3306 = vshrl.u32 %v3305, 4
      %v3307 = vmul.u32 %v3306, 24
      %v3308 = vsub.s32 %v3302, %v3307
      %v3309 = vsub.s32 0, %v3308
      %v3310 = vsel %vm3300, %v3309, %v3308
      %vm3311 = vcmp.lt.s32.totalorder %v2993, 0
      %v3312 = vsub.s32 0, %v2993
      %v3313 = vsel %vm3311, %v3312, %v2993
      %v3314 = vmul.u32.u64.compose %v3313, 2863311531
      %v3315 = vextract.low.u32 %v3314
      %v3316 = vextract.high.u32 %v3314
      %v3317 = vshrl.u32 %v3316, 4
      %v3318 = vmul.u32 %v3317, 24
      %v3319 = vsub.s32 %v3313, %v3318
      %v3320 = vsub.s32 0, %v3319
      %v3321 = vsel %vm3311, %v3320, %v3319
      %vm3322 = vcmp.lt.s32.totalorder %v2994, 0
      %v3323 = vsub.s32 0, %v2994
      %v3324 = vsel %vm3322, %v3323, %v2994
      %v3325 = vmul.u32.u64.compose %v3324, 2863311531
      %v3326 = vextract.low.u32 %v3325
      %v3327 = vextract.high.u32 %v3325
      %v3328 = vshrl.u32 %v3327, 4
      %v3329 = vmul.u32 %v3328, 24
      %v3330 = vsub.s32 %v3324, %v3329
      %v3331 = vsub.s32 0, %v3330
      %v3332 = vsel %vm3322, %v3331, %v3330
      %vm3333 = vcmp.lt.s32.totalorder %v2995, 0
      %v3334 = vsub.s32 0, %v2995
      %v3335 = vsel %vm3333, %v3334, %v2995
      %v3336 = vmul.u32.u64.compose %v3335, 2863311531
      %v3337 = vextract.low.u32 %v3336
      %v3338 = vextract.high.u32 %v3336
      %v3339 = vshrl.u32 %v3338, 4
      %v3340 = vmul.u32 %v3339, 24
      %v3341 = vsub.s32 %v3335, %v3340
      %v3342 = vsub.s32 0, %v3341
      %v3343 = vsel %vm3333, %v3342, %v3341
      %vm3344 = vcmp.lt.s32.totalorder %v2996, 0
      %v3345 = vsub.s32 0, %v2996
      %v3346 = vsel %vm3344, %v3345, %v2996
      %v3347 = vmul.u32.u64.compose %v3346, 2863311531
      %v3348 = vextract.low.u32 %v3347
      %v3349 = vextract.high.u32 %v3347
      %v3350 = vshrl.u32 %v3349, 4
      %v3351 = vmul.u32 %v3350, 24
      %v3352 = vsub.s32 %v3346, %v3351
      %v3353 = vsub.s32 0, %v3352
      %v3354 = vsel %vm3344, %v3353, %v3352
      %vm3355 = vcmp.lt.s32.totalorder %v2997, 0
      %v3356 = vsub.s32 0, %v2997
      %v3357 = vsel %vm3355, %v3356, %v2997
      %v3358 = vmul.u32.u64.compose %v3357, 2863311531
      %v3359 = vextract.low.u32 %v3358
      %v3360 = vextract.high.u32 %v3358
      %v3361 = vshrl.u32 %v3360, 4
      %v3362 = vmul.u32 %v3361, 24
      %v3363 = vsub.s32 %v3357, %v3362
      %v3364 = vsub.s32 0, %v3363
      %v3365 = vsel %vm3355, %v3364, %v3363
      %vm3366 = vcmp.lt.s32.totalorder %v2998, 0
      %v3367 = vsub.s32 0, %v2998
      %v3368 = vsel %vm3366, %v3367, %v2998
      %v3369 = vmul.u32.u64.compose %v3368, 2863311531
      %v3370 = vextract.low.u32 %v3369
      %v3371 = vextract.high.u32 %v3369
      %v3372 = vshrl.u32 %v3371, 4
      %v3373 = vmul.u32 %v3372, 24
      %v3374 = vsub.s32 %v3368, %v3373
      %v3375 = vsub.s32 0, %v3374
      %v3376 = vsel %vm3366, %v3375, %v3374
      %vm3377 = vcmp.lt.s32.totalorder %v2999, 0
      %v3378 = vsub.s32 0, %v2999
      %v3379 = vsel %vm3377, %v3378, %v2999
      %v3380 = vmul.u32.u64.compose %v3379, 2863311531
      %v3381 = vextract.low.u32 %v3380
      %v3382 = vextract.high.u32 %v3380
      %v3383 = vshrl.u32 %v3382, 4
      %v3384 = vmul.u32 %v3383, 24
      %v3385 = vsub.s32 %v3379, %v3384
      %v3386 = vsub.s32 0, %v3385
      %v3387 = vsel %vm3377, %v3386, %v3385
      %vm3388 = vcmp.lt.s32.totalorder %v3000, 0
      %v3389 = vsub.s32 0, %v3000
      %v3390 = vsel %vm3388, %v3389, %v3000
      %v3391 = vmul.u32.u64.compose %v3390, 2863311531
      %v3392 = vextract.low.u32 %v3391
      %v3393 = vextract.high.u32 %v3391
      %v3394 = vshrl.u32 %v3393, 4
      %v3395 = vmul.u32 %v3394, 24
      %v3396 = vsub.s32 %v3390, %v3395
      %v3397 = vsub.s32 0, %v3396
      %v3398 = vsel %vm3388, %v3397, %v3396
      %vm3399 = vcmp.lt.s32.totalorder %v3001, 0
      %v3400 = vsub.s32 0, %v3001
      %v3401 = vsel %vm3399, %v3400, %v3001
      %v3402 = vmul.u32.u64.compose %v3401, 2863311531
      %v3403 = vextract.low.u32 %v3402
      %v3404 = vextract.high.u32 %v3402
      %v3405 = vshrl.u32 %v3404, 4
      %v3406 = vmul.u32 %v3405, 24
      %v3407 = vsub.s32 %v3401, %v3406
      %v3408 = vsub.s32 0, %v3407
      %v3409 = vsel %vm3399, %v3408, %v3407
      %vm3410 = vcmp.lt.s32.totalorder %v3002, 0
      %v3411 = vsub.s32 0, %v3002
      %v3412 = vsel %vm3410, %v3411, %v3002
      %v3413 = vmul.u32.u64.compose %v3412, 2863311531
      %v3414 = vextract.low.u32 %v3413
      %v3415 = vextract.high.u32 %v3413
      %v3416 = vshrl.u32 %v3415, 4
      %v3417 = vmul.u32 %v3416, 24
      %v3418 = vsub.s32 %v3412, %v3417
      %v3419 = vsub.s32 0, %v3418
      %v3420 = vsel %vm3410, %v3419, %v3418
      %vm3421 = vcmp.lt.s32.totalorder %v3003, 0
      %v3422 = vsub.s32 0, %v3003
      %v3423 = vsel %vm3421, %v3422, %v3003
      %v3424 = vmul.u32.u64.compose %v3423, 2863311531
      %v3425 = vextract.low.u32 %v3424
      %v3426 = vextract.high.u32 %v3424
      %v3427 = vshrl.u32 %v3426, 4
      %v3428 = vmul.u32 %v3427, 24
      %v3429 = vsub.s32 %v3423, %v3428
      %v3430 = vsub.s32 0, %v3429
      %v3431 = vsel %vm3421, %v3430, %v3429
      %vm3432 = vcmp.lt.s32.totalorder %v3004, 0
      %v3433 = vsub.s32 0, %v3004
      %v3434 = vsel %vm3432, %v3433, %v3004
      %v3435 = vmul.u32.u64.compose %v3434, 2863311531
      %v3436 = vextract.low.u32 %v3435
      %v3437 = vextract.high.u32 %v3435
      %v3438 = vshrl.u32 %v3437, 4
      %v3439 = vmul.u32 %v3438, 24
      %v3440 = vsub.s32 %v3434, %v3439
      %v3441 = vsub.s32 0, %v3440
      %v3442 = vsel %vm3432, %v3441, %v3440
      %vm3443 = vcmp.lt.s32.totalorder %v3005, 0
      %v3444 = vsub.s32 0, %v3005
      %v3445 = vsel %vm3443, %v3444, %v3005
      %v3446 = vmul.u32.u64.compose %v3445, 2863311531
      %v3447 = vextract.low.u32 %v3446
      %v3448 = vextract.high.u32 %v3446
      %v3449 = vshrl.u32 %v3448, 4
      %v3450 = vmul.u32 %v3449, 24
      %v3451 = vsub.s32 %v3445, %v3450
      %v3452 = vsub.s32 0, %v3451
      %v3453 = vsel %vm3443, %v3452, %v3451
      %vm3454 = vcmp.lt.s32.totalorder %v3006, 0
      %v3455 = vsub.s32 0, %v3006
      %v3456 = vsel %vm3454, %v3455, %v3006
      %v3457 = vmul.u32.u64.compose %v3456, 2863311531
      %v3458 = vextract.low.u32 %v3457
      %v3459 = vextract.high.u32 %v3457
      %v3460 = vshrl.u32 %v3459, 4
      %v3461 = vmul.u32 %v3460, 24
      %v3462 = vsub.s32 %v3456, %v3461
      %v3463 = vsub.s32 0, %v3462
      %v3464 = vsel %vm3454, %v3463, %v3462
      %vm3465 = vcmp.lt.s32.totalorder %v3007, 0
      %v3466 = vsub.s32 0, %v3007
      %v3467 = vsel %vm3465, %v3466, %v3007
      %v3468 = vmul.u32.u64.compose %v3467, 2863311531
      %v3469 = vextract.low.u32 %v3468
      %v3470 = vextract.high.u32 %v3468
      %v3471 = vshrl.u32 %v3470, 4
      %v3472 = vmul.u32 %v3471, 24
      %v3473 = vsub.s32 %v3467, %v3472
      %v3474 = vsub.s32 0, %v3473
      %v3475 = vsel %vm3465, %v3474, %v3473
      %vm3476 = vcmp.lt.s32.totalorder %v3008, 0
      %v3477 = vsub.s32 0, %v3008
      %v3478 = vsel %vm3476, %v3477, %v3008
      %v3479 = vmul.u32.u64.compose %v3478, 2863311531
      %v3480 = vextract.low.u32 %v3479
      %v3481 = vextract.high.u32 %v3479
      %v3482 = vshrl.u32 %v3481, 4
      %v3483 = vmul.u32 %v3482, 24
      %v3484 = vsub.s32 %v3478, %v3483
      %v3485 = vsub.s32 0, %v3484
      %v3486 = vsel %vm3476, %v3485, %v3484
      %vm3487 = vcmp.lt.s32.totalorder %v3009, 0
      %v3488 = vsub.s32 0, %v3009
      %v3489 = vsel %vm3487, %v3488, %v3009
      %v3490 = vmul.u32.u64.compose %v3489, 2863311531
      %v3491 = vextract.low.u32 %v3490
      %v3492 = vextract.high.u32 %v3490
      %v3493 = vshrl.u32 %v3492, 4
      %v3494 = vmul.u32 %v3493, 24
      %v3495 = vsub.s32 %v3489, %v3494
      %v3496 = vsub.s32 0, %v3495
      %v3497 = vsel %vm3487, %v3496, %v3495
      %vm3498 = vcmp.lt.s32.totalorder %v3010, 0
      %v3499 = vsub.s32 0, %v3010
      %v3500 = vsel %vm3498, %v3499, %v3010
      %v3501 = vmul.u32.u64.compose %v3500, 2863311531
      %v3502 = vextract.low.u32 %v3501
      %v3503 = vextract.high.u32 %v3501
      %v3504 = vshrl.u32 %v3503, 4
      %v3505 = vmul.u32 %v3504, 24
      %v3506 = vsub.s32 %v3500, %v3505
      %v3507 = vsub.s32 0, %v3506
      %v3508 = vsel %vm3498, %v3507, %v3506
      %vm3509 = vcmp.lt.s32.totalorder %v3011, 0
      %v3510 = vsub.s32 0, %v3011
      %v3511 = vsel %vm3509, %v3510, %v3011
      %v3512 = vmul.u32.u64.compose %v3511, 2863311531
      %v3513 = vextract.low.u32 %v3512
      %v3514 = vextract.high.u32 %v3512
      %v3515 = vshrl.u32 %v3514, 4
      %v3516 = vmul.u32 %v3515, 24
      %v3517 = vsub.s32 %v3511, %v3516
      %v3518 = vsub.s32 0, %v3517
      %v3519 = vsel %vm3509, %v3518, %v3517
      %vm3520 = vcmp.lt.s32.totalorder %v3012, 0
      %v3521 = vsub.s32 0, %v3012
      %v3522 = vsel %vm3520, %v3521, %v3012
      %v3523 = vmul.u32.u64.compose %v3522, 2863311531
      %v3524 = vextract.low.u32 %v3523
      %v3525 = vextract.high.u32 %v3523
      %v3526 = vshrl.u32 %v3525, 4
      %v3527 = vmul.u32 %v3526, 24
      %v3528 = vsub.s32 %v3522, %v3527
      %v3529 = vsub.s32 0, %v3528
      %v3530 = vsel %vm3520, %v3529, %v3528
      %vm3531 = vcmp.lt.s32.totalorder %v3013, 0
      %v3532 = vsub.s32 0, %v3013
      %v3533 = vsel %vm3531, %v3532, %v3013
      %v3534 = vmul.u32.u64.compose %v3533, 2863311531
      %v3535 = vextract.low.u32 %v3534
      %v3536 = vextract.high.u32 %v3534
      %v3537 = vshrl.u32 %v3536, 4
      %v3538 = vmul.u32 %v3537, 24
      %v3539 = vsub.s32 %v3533, %v3538
      %v3540 = vsub.s32 0, %v3539
      %v3541 = vsel %vm3531, %v3540, %v3539
      %vm3542 = vcmp.ne.s32.totalorder %v3024, 0
      %vm3543 = vcmp.ne.s32.totalorder %v3035, 0
      %vm3544 = vcmp.ne.s32.totalorder %v3046, 0
      %vm3545 = vcmp.ne.s32.totalorder %v3057, 0
      %vm3546 = vcmp.ne.s32.totalorder %v3068, 0
      %vm3547 = vcmp.ne.s32.totalorder %v3079, 0
      %vm3548 = vcmp.ne.s32.totalorder %v3090, 0
      %vm3549 = vcmp.ne.s32.totalorder %v3101, 0
      %vm3550 = vcmp.ne.s32.totalorder %v3112, 0
      %vm3551 = vcmp.ne.s32.totalorder %v3123, 0
      %vm3552 = vcmp.ne.s32.totalorder %v3134, 0
      %vm3553 = vcmp.ne.s32.totalorder %v3145, 0
      %vm3554 = vcmp.ne.s32.totalorder %v3156, 0
      %vm3555 = vcmp.ne.s32.totalorder %v3167, 0
      %vm3556 = vcmp.ne.s32.totalorder %v3178, 0
      %vm3557 = vcmp.ne.s32.totalorder %v3189, 0
      %vm3558 = vcmp.ne.s32.totalorder %v3200, 0
      %vm3559 = vcmp.ne.s32.totalorder %v3211, 0
      %vm3560 = vcmp.ne.s32.totalorder %v3222, 0
      %vm3561 = vcmp.ne.s32.totalorder %v3233, 0
      %vm3562 = vcmp.ne.s32.totalorder %v3244, 0
      %vm3563 = vcmp.ne.s32.totalorder %v3255, 0
      %vm3564 = vcmp.ne.s32.totalorder %v3266, 0
      %vm3565 = vcmp.ne.s32.totalorder %v3277, 0
      %vm3566 = vcmp.ne.s32.totalorder %v3288, 0
      %vm3567 = vcmp.ne.s32.totalorder %v3299, 0
      %vm3568 = vcmp.ne.s32.totalorder %v3310, 0
      %vm3569 = vcmp.ne.s32.totalorder %v3321, 0
      %vm3570 = vcmp.ne.s32.totalorder %v3332, 0
      %vm3571 = vcmp.ne.s32.totalorder %v3343, 0
      %vm3572 = vcmp.ne.s32.totalorder %v3354, 0
      %vm3573 = vcmp.ne.s32.totalorder %v3365, 0
      %vm3574 = vcmp.ne.s32.totalorder %v3376, 0
      %vm3575 = vcmp.ne.s32.totalorder %v3387, 0
      %vm3576 = vcmp.ne.s32.totalorder %v3398, 0
      %vm3577 = vcmp.ne.s32.totalorder %v3409, 0
      %vm3578 = vcmp.ne.s32.totalorder %v3420, 0
      %vm3579 = vcmp.ne.s32.totalorder %v3431, 0
      %vm3580 = vcmp.ne.s32.totalorder %v3442, 0
      %vm3581 = vcmp.ne.s32.totalorder %v3453, 0
      %vm3582 = vcmp.ne.s32.totalorder %v3464, 0
      %vm3583 = vcmp.ne.s32.totalorder %v3475, 0
      %vm3584 = vcmp.ne.s32.totalorder %v3486, 0
      %vm3585 = vcmp.ne.s32.totalorder %v3497, 0
      %vm3586 = vcmp.ne.s32.totalorder %v3508, 0
      %vm3587 = vcmp.ne.s32.totalorder %v3519, 0
      %vm3588 = vcmp.ne.s32.totalorder %v3530, 0
      %vm3589 = vcmp.ne.s32.totalorder %v3541, 0
      %vm3590 = vcmp.lt.s32.totalorder %v3024, 0
      %vm3591 = vcmp.lt.s32.totalorder %v3035, 0
      %vm3592 = vcmp.lt.s32.totalorder %v3046, 0
      %vm3593 = vcmp.lt.s32.totalorder %v3057, 0
      %vm3594 = vcmp.lt.s32.totalorder %v3068, 0
      %vm3595 = vcmp.lt.s32.totalorder %v3079, 0
      %vm3596 = vcmp.lt.s32.totalorder %v3090, 0
      %vm3597 = vcmp.lt.s32.totalorder %v3101, 0
      %vm3598 = vcmp.lt.s32.totalorder %v3112, 0
      %vm3599 = vcmp.lt.s32.totalorder %v3123, 0
      %vm3600 = vcmp.lt.s32.totalorder %v3134, 0
      %vm3601 = vcmp.lt.s32.totalorder %v3145, 0
      %vm3602 = vcmp.lt.s32.totalorder %v3156, 0
      %vm3603 = vcmp.lt.s32.totalorder %v3167, 0
      %vm3604 = vcmp.lt.s32.totalorder %v3178, 0
      %vm3605 = vcmp.lt.s32.totalorder %v3189, 0
      %vm3606 = vcmp.lt.s32.totalorder %v3200, 0
      %vm3607 = vcmp.lt.s32.totalorder %v3211, 0
      %vm3608 = vcmp.lt.s32.totalorder %v3222, 0
      %vm3609 = vcmp.lt.s32.totalorder %v3233, 0
      %vm3610 = vcmp.lt.s32.totalorder %v3244, 0
      %vm3611 = vcmp.lt.s32.totalorder %v3255, 0
      %vm3612 = vcmp.lt.s32.totalorder %v3266, 0
      %vm3613 = vcmp.lt.s32.totalorder %v3277, 0
      %vm3614 = vcmp.lt.s32.totalorder %v3288, 0
      %vm3615 = vcmp.lt.s32.totalorder %v3299, 0
      %vm3616 = vcmp.lt.s32.totalorder %v3310, 0
      %vm3617 = vcmp.lt.s32.totalorder %v3321, 0
      %vm3618 = vcmp.lt.s32.totalorder %v3332, 0
      %vm3619 = vcmp.lt.s32.totalorder %v3343, 0
      %vm3620 = vcmp.lt.s32.totalorder %v3354, 0
      %vm3621 = vcmp.lt.s32.totalorder %v3365, 0
      %vm3622 = vcmp.lt.s32.totalorder %v3376, 0
      %vm3623 = vcmp.lt.s32.totalorder %v3387, 0
      %vm3624 = vcmp.lt.s32.totalorder %v3398, 0
      %vm3625 = vcmp.lt.s32.totalorder %v3409, 0
      %vm3626 = vcmp.lt.s32.totalorder %v3420, 0
      %vm3627 = vcmp.lt.s32.totalorder %v3431, 0
      %vm3628 = vcmp.lt.s32.totalorder %v3442, 0
      %vm3629 = vcmp.lt.s32.totalorder %v3453, 0
      %vm3630 = vcmp.lt.s32.totalorder %v3464, 0
      %vm3631 = vcmp.lt.s32.totalorder %v3475, 0
      %vm3632 = vcmp.lt.s32.totalorder %v3486, 0
      %vm3633 = vcmp.lt.s32.totalorder %v3497, 0
      %vm3634 = vcmp.lt.s32.totalorder %v3508, 0
      %vm3635 = vcmp.lt.s32.totalorder %v3519, 0
      %vm3636 = vcmp.lt.s32.totalorder %v3530, 0
      %vm3637 = vcmp.lt.s32.totalorder %v3541, 0
      %vm3638 = vmand %vm3590, %vm3542
      %vm3639 = vmand %vm3591, %vm3543
      %vm3640 = vmand %vm3592, %vm3544
      %vm3641 = vmand %vm3593, %vm3545
      %vm3642 = vmand %vm3594, %vm3546
      %vm3643 = vmand %vm3595, %vm3547
      %vm3644 = vmand %vm3596, %vm3548
      %vm3645 = vmand %vm3597, %vm3549
      %vm3646 = vmand %vm3598, %vm3550
      %vm3647 = vmand %vm3599, %vm3551
      %vm3648 = vmand %vm3600, %vm3552
      %vm3649 = vmand %vm3601, %vm3553
      %vm3650 = vmand %vm3602, %vm3554
      %vm3651 = vmand %vm3603, %vm3555
      %vm3652 = vmand %vm3604, %vm3556
      %vm3653 = vmand %vm3605, %vm3557
      %vm3654 = vmand %vm3606, %vm3558
      %vm3655 = vmand %vm3607, %vm3559
      %vm3656 = vmand %vm3608, %vm3560
      %vm3657 = vmand %vm3609, %vm3561
      %vm3658 = vmand %vm3610, %vm3562
      %vm3659 = vmand %vm3611, %vm3563
      %vm3660 = vmand %vm3612, %vm3564
      %vm3661 = vmand %vm3613, %vm3565
      %vm3662 = vmand %vm3614, %vm3566
      %vm3663 = vmand %vm3615, %vm3567
      %vm3664 = vmand %vm3616, %vm3568
      %vm3665 = vmand %vm3617, %vm3569
      %vm3666 = vmand %vm3618, %vm3570
      %vm3667 = vmand %vm3619, %vm3571
      %vm3668 = vmand %vm3620, %vm3572
      %vm3669 = vmand %vm3621, %vm3573
      %vm3670 = vmand %vm3622, %vm3574
      %vm3671 = vmand %vm3623, %vm3575
      %vm3672 = vmand %vm3624, %vm3576
      %vm3673 = vmand %vm3625, %vm3577
      %vm3674 = vmand %vm3626, %vm3578
      %vm3675 = vmand %vm3627, %vm3579
      %vm3676 = vmand %vm3628, %vm3580
      %vm3677 = vmand %vm3629, %vm3581
      %vm3678 = vmand %vm3630, %vm3582
      %vm3679 = vmand %vm3631, %vm3583
      %vm3680 = vmand %vm3632, %vm3584
      %vm3681 = vmand %vm3633, %vm3585
      %vm3682 = vmand %vm3634, %vm3586
      %vm3683 = vmand %vm3635, %vm3587
      %vm3684 = vmand %vm3636, %vm3588
      %vm3685 = vmand %vm3637, %vm3589
      %v3686 = vadd.s32 %v3024, 24
      %v3687 = vadd.s32 %v3035, 24
      %v3688 = vadd.s32 %v3046, 24
      %v3689 = vadd.s32 %v3057, 24
      %v3690 = vadd.s32 %v3068, 24
      %v3691 = vadd.s32 %v3079, 24
      %v3692 = vadd.s32 %v3090, 24
      %v3693 = vadd.s32 %v3101, 24
      %v3694 = vadd.s32 %v3112, 24
      %v3695 = vadd.s32 %v3123, 24
      %v3696 = vadd.s32 %v3134, 24
      %v3697 = vadd.s32 %v3145, 24
      %v3698 = vadd.s32 %v3156, 24
      %v3699 = vadd.s32 %v3167, 24
      %v3700 = vadd.s32 %v3178, 24
      %v3701 = vadd.s32 %v3189, 24
      %v3702 = vadd.s32 %v3200, 24
      %v3703 = vadd.s32 %v3211, 24
      %v3704 = vadd.s32 %v3222, 24
      %v3705 = vadd.s32 %v3233, 24
      %v3706 = vadd.s32 %v3244, 24
      %v3707 = vadd.s32 %v3255, 24
      %v3708 = vadd.s32 %v3266, 24
      %v3709 = vadd.s32 %v3277, 24
      %v3710 = vadd.s32 %v3288, 24
      %v3711 = vadd.s32 %v3299, 24
      %v3712 = vadd.s32 %v3310, 24
      %v3713 = vadd.s32 %v3321, 24
      %v3714 = vadd.s32 %v3332, 24
      %v3715 = vadd.s32 %v3343, 24
      %v3716 = vadd.s32 %v3354, 24
      %v3717 = vadd.s32 %v3365, 24
      %v3718 = vadd.s32 %v3376, 24
      %v3719 = vadd.s32 %v3387, 24
      %v3720 = vadd.s32 %v3398, 24
      %v3721 = vadd.s32 %v3409, 24
      %v3722 = vadd.s32 %v3420, 24
      %v3723 = vadd.s32 %v3431, 24
      %v3724 = vadd.s32 %v3442, 24
      %v3725 = vadd.s32 %v3453, 24
      %v3726 = vadd.s32 %v3464, 24
      %v3727 = vadd.s32 %v3475, 24
      %v3728 = vadd.s32 %v3486, 24
      %v3729 = vadd.s32 %v3497, 24
      %v3730 = vadd.s32 %v3508, 24
      %v3731 = vadd.s32 %v3519, 24
      %v3732 = vadd.s32 %v3530, 24
      %v3733 = vadd.s32 %v3541, 24
      %v3734 = vsel %vm3638, %v3686, %v3024
      %v3735 = vsel %vm3639, %v3687, %v3035
      %v3736 = vsel %vm3640, %v3688, %v3046
      %v3737 = vsel %vm3641, %v3689, %v3057
      %v3738 = vsel %vm3642, %v3690, %v3068
      %v3739 = vsel %vm3643, %v3691, %v3079
      %v3740 = vsel %vm3644, %v3692, %v3090
      %v3741 = vsel %vm3645, %v3693, %v3101
      %v3742 = vsel %vm3646, %v3694, %v3112
      %v3743 = vsel %vm3647, %v3695, %v3123
      %v3744 = vsel %vm3648, %v3696, %v3134
      %v3745 = vsel %vm3649, %v3697, %v3145
      %v3746 = vsel %vm3650, %v3698, %v3156
      %v3747 = vsel %vm3651, %v3699, %v3167
      %v3748 = vsel %vm3652, %v3700, %v3178
      %v3749 = vsel %vm3653, %v3701, %v3189
      %v3750 = vsel %vm3654, %v3702, %v3200
      %v3751 = vsel %vm3655, %v3703, %v3211
      %v3752 = vsel %vm3656, %v3704, %v3222
      %v3753 = vsel %vm3657, %v3705, %v3233
      %v3754 = vsel %vm3658, %v3706, %v3244
      %v3755 = vsel %vm3659, %v3707, %v3255
      %v3756 = vsel %vm3660, %v3708, %v3266
      %v3757 = vsel %vm3661, %v3709, %v3277
      %v3758 = vsel %vm3662, %v3710, %v3288
      %v3759 = vsel %vm3663, %v3711, %v3299
      %v3760 = vsel %vm3664, %v3712, %v3310
      %v3761 = vsel %vm3665, %v3713, %v3321
      %v3762 = vsel %vm3666, %v3714, %v3332
      %v3763 = vsel %vm3667, %v3715, %v3343
      %v3764 = vsel %vm3668, %v3716, %v3354
      %v3765 = vsel %vm3669, %v3717, %v3365
      %v3766 = vsel %vm3670, %v3718, %v3376
      %v3767 = vsel %vm3671, %v3719, %v3387
      %v3768 = vsel %vm3672, %v3720, %v3398
      %v3769 = vsel %vm3673, %v3721, %v3409
      %v3770 = vsel %vm3674, %v3722, %v3420
      %v3771 = vsel %vm3675, %v3723, %v3431
      %v3772 = vsel %vm3676, %v3724, %v3442
      %v3773 = vsel %vm3677, %v3725, %v3453
      %v3774 = vsel %vm3678, %v3726, %v3464
      %v3775 = vsel %vm3679, %v3727, %v3475
      %v3776 = vsel %vm3680, %v3728, %v3486
      %v3777 = vsel %vm3681, %v3729, %v3497
      %v3778 = vsel %vm3682, %v3730, %v3508
      %v3779 = vsel %vm3683, %v3731, %v3519
      %v3780 = vsel %vm3684, %v3732, %v3530
      %v3781 = vsel %vm3685, %v3733, %v3541
      %vm3782 = vcmp.lt.s32.totalorder %v3734, 16
      %vm3783 = vcmp.lt.s32.totalorder %v3735, 16
      %vm3784 = vcmp.lt.s32.totalorder %v3736, 16
      %vm3785 = vcmp.lt.s32.totalorder %v3737, 16
      %vm3786 = vcmp.lt.s32.totalorder %v3738, 16
      %vm3787 = vcmp.lt.s32.totalorder %v3739, 16
      %vm3788 = vcmp.lt.s32.totalorder %v3740, 16
      %vm3789 = vcmp.lt.s32.totalorder %v3741, 16
      %vm3790 = vcmp.lt.s32.totalorder %v3742, 16
      %vm3791 = vcmp.lt.s32.totalorder %v3743, 16
      %vm3792 = vcmp.lt.s32.totalorder %v3744, 16
      %vm3793 = vcmp.lt.s32.totalorder %v3745, 16
      %vm3794 = vcmp.lt.s32.totalorder %v3746, 16
      %vm3795 = vcmp.lt.s32.totalorder %v3747, 16
      %vm3796 = vcmp.lt.s32.totalorder %v3748, 16
      %vm3797 = vcmp.lt.s32.totalorder %v3749, 16
      %vm3798 = vcmp.lt.s32.totalorder %v3750, 16
      %vm3799 = vcmp.lt.s32.totalorder %v3751, 16
      %vm3800 = vcmp.lt.s32.totalorder %v3752, 16
      %vm3801 = vcmp.lt.s32.totalorder %v3753, 16
      %vm3802 = vcmp.lt.s32.totalorder %v3754, 16
      %vm3803 = vcmp.lt.s32.totalorder %v3755, 16
      %vm3804 = vcmp.lt.s32.totalorder %v3756, 16
      %vm3805 = vcmp.lt.s32.totalorder %v3757, 16
      %vm3806 = vcmp.lt.s32.totalorder %v3758, 16
      %vm3807 = vcmp.lt.s32.totalorder %v3759, 16
      %vm3808 = vcmp.lt.s32.totalorder %v3760, 16
      %vm3809 = vcmp.lt.s32.totalorder %v3761, 16
      %vm3810 = vcmp.lt.s32.totalorder %v3762, 16
      %vm3811 = vcmp.lt.s32.totalorder %v3763, 16
      %vm3812 = vcmp.lt.s32.totalorder %v3764, 16
      %vm3813 = vcmp.lt.s32.totalorder %v3765, 16
      %vm3814 = vcmp.lt.s32.totalorder %v3766, 16
      %vm3815 = vcmp.lt.s32.totalorder %v3767, 16
      %vm3816 = vcmp.lt.s32.totalorder %v3768, 16
      %vm3817 = vcmp.lt.s32.totalorder %v3769, 16
      %vm3818 = vcmp.lt.s32.totalorder %v3770, 16
      %vm3819 = vcmp.lt.s32.totalorder %v3771, 16
      %vm3820 = vcmp.lt.s32.totalorder %v3772, 16
      %vm3821 = vcmp.lt.s32.totalorder %v3773, 16
      %vm3822 = vcmp.lt.s32.totalorder %v3774, 16
      %vm3823 = vcmp.lt.s32.totalorder %v3775, 16
      %vm3824 = vcmp.lt.s32.totalorder %v3776, 16
      %vm3825 = vcmp.lt.s32.totalorder %v3777, 16
      %vm3826 = vcmp.lt.s32.totalorder %v3778, 16
      %vm3827 = vcmp.lt.s32.totalorder %v3779, 16
      %vm3828 = vcmp.lt.s32.totalorder %v3780, 16
      %vm3829 = vcmp.lt.s32.totalorder %v3781, 16
      %v3830 = vsel %vm3782, 1, 0
      %v3831 = vsel %vm3783, 1, 0
      %v3832 = vsel %vm3784, 1, 0
      %v3833 = vsel %vm3785, 1, 0
      %v3834 = vsel %vm3786, 1, 0
      %v3835 = vsel %vm3787, 1, 0
      %v3836 = vsel %vm3788, 1, 0
      %v3837 = vsel %vm3789, 1, 0
      %v3838 = vsel %vm3790, 1, 0
      %v3839 = vsel %vm3791, 1, 0
      %v3840 = vsel %vm3792, 1, 0
      %v3841 = vsel %vm3793, 1, 0
      %v3842 = vsel %vm3794, 1, 0
      %v3843 = vsel %vm3795, 1, 0
      %v3844 = vsel %vm3796, 1, 0
      %v3845 = vsel %vm3797, 1, 0
      %v3846 = vsel %vm3798, 1, 0
      %v3847 = vsel %vm3799, 1, 0
      %v3848 = vsel %vm3800, 1, 0
      %v3849 = vsel %vm3801, 1, 0
      %v3850 = vsel %vm3802, 1, 0
      %v3851 = vsel %vm3803, 1, 0
      %v3852 = vsel %vm3804, 1, 0
      %v3853 = vsel %vm3805, 1, 0
      %v3854 = vsel %vm3806, 1, 0
      %v3855 = vsel %vm3807, 1, 0
      %v3856 = vsel %vm3808, 1, 0
      %v3857 = vsel %vm3809, 1, 0
      %v3858 = vsel %vm3810, 1, 0
      %v3859 = vsel %vm3811, 1, 0
      %v3860 = vsel %vm3812, 1, 0
      %v3861 = vsel %vm3813, 1, 0
      %v3862 = vsel %vm3814, 1, 0
      %v3863 = vsel %vm3815, 1, 0
      %v3864 = vsel %vm3816, 1, 0
      %v3865 = vsel %vm3817, 1, 0
      %v3866 = vsel %vm3818, 1, 0
      %v3867 = vsel %vm3819, 1, 0
      %v3868 = vsel %vm3820, 1, 0
      %v3869 = vsel %vm3821, 1, 0
      %v3870 = vsel %vm3822, 1, 0
      %v3871 = vsel %vm3823, 1, 0
      %v3872 = vsel %vm3824, 1, 0
      %v3873 = vsel %vm3825, 1, 0
      %v3874 = vsel %vm3826, 1, 0
      %v3875 = vsel %vm3827, 1, 0
      %v3876 = vsel %vm3828, 1, 0
      %v3877 = vsel %vm3829, 1, 0
      %v3878 = vcvt.s32.f32 %v3830
      %v3879 = vcvt.s32.f32 %v3831
      %v3880 = vcvt.s32.f32 %v3832
      %v3881 = vcvt.s32.f32 %v3833
      %v3882 = vcvt.s32.f32 %v3834
      %v3883 = vcvt.s32.f32 %v3835
      %v3884 = vcvt.s32.f32 %v3836
      %v3885 = vcvt.s32.f32 %v3837
      %v3886 = vcvt.s32.f32 %v3838
      %v3887 = vcvt.s32.f32 %v3839
      %v3888 = vcvt.s32.f32 %v3840
      %v3889 = vcvt.s32.f32 %v3841
      %v3890 = vcvt.s32.f32 %v3842
      %v3891 = vcvt.s32.f32 %v3843
      %v3892 = vcvt.s32.f32 %v3844
      %v3893 = vcvt.s32.f32 %v3845
      %v3894 = vcvt.s32.f32 %v3846
      %v3895 = vcvt.s32.f32 %v3847
      %v3896 = vcvt.s32.f32 %v3848
      %v3897 = vcvt.s32.f32 %v3849
      %v3898 = vcvt.s32.f32 %v3850
      %v3899 = vcvt.s32.f32 %v3851
      %v3900 = vcvt.s32.f32 %v3852
      %v3901 = vcvt.s32.f32 %v3853
      %v3902 = vcvt.s32.f32 %v3854
      %v3903 = vcvt.s32.f32 %v3855
      %v3904 = vcvt.s32.f32 %v3856
      %v3905 = vcvt.s32.f32 %v3857
      %v3906 = vcvt.s32.f32 %v3858
      %v3907 = vcvt.s32.f32 %v3859
      %v3908 = vcvt.s32.f32 %v3860
      %v3909 = vcvt.s32.f32 %v3861
      %v3910 = vcvt.s32.f32 %v3862
      %v3911 = vcvt.s32.f32 %v3863
      %v3912 = vcvt.s32.f32 %v3864
      %v3913 = vcvt.s32.f32 %v3865
      %v3914 = vcvt.s32.f32 %v3866
      %v3915 = vcvt.s32.f32 %v3867
      %v3916 = vcvt.s32.f32 %v3868
      %v3917 = vcvt.s32.f32 %v3869
      %v3918 = vcvt.s32.f32 %v3870
      %v3919 = vcvt.s32.f32 %v3871
      %v3920 = vcvt.s32.f32 %v3872
      %v3921 = vcvt.s32.f32 %v3873
      %v3922 = vcvt.s32.f32 %v3874
      %v3923 = vcvt.s32.f32 %v3875
      %v3924 = vcvt.s32.f32 %v3876
      %v3925 = vcvt.s32.f32 %v3877
      %v3926 = vmul.f32 %v2917, %v3878
      %v3927 = vmul.f32 %v2918, %v3879
      %v3928 = vmul.f32 %v2919, %v3880
      %v3929 = vmul.f32 %v2920, %v3881
      %v3930 = vmul.f32 %v2921, %v3882
      %v3931 = vmul.f32 %v2922, %v3883
      %v3932 = vmul.f32 %v2923, %v3884
      %v3933 = vmul.f32 %v2924, %v3885
      %v3934 = vmul.f32 %v2925, %v3886
      %v3935 = vmul.f32 %v2926, %v3887
      %v3936 = vmul.f32 %v2927, %v3888
      %v3937 = vmul.f32 %v2928, %v3889
      %v3938 = vmul.f32 %v2929, %v3890
      %v3939 = vmul.f32 %v2930, %v3891
      %v3940 = vmul.f32 %v2931, %v3892
      %v3941 = vmul.f32 %v2932, %v3893
      %v3942 = vmul.f32 %v2933, %v3894
      %v3943 = vmul.f32 %v2934, %v3895
      %v3944 = vmul.f32 %v2935, %v3896
      %v3945 = vmul.f32 %v2936, %v3897
      %v3946 = vmul.f32 %v2937, %v3898
      %v3947 = vmul.f32 %v2938, %v3899
      %v3948 = vmul.f32 %v2939, %v3900
      %v3949 = vmul.f32 %v2940, %v3901
      %v3950 = vmul.f32 %v2941, %v3902
      %v3951 = vmul.f32 %v2942, %v3903
      %v3952 = vmul.f32 %v2943, %v3904
      %v3953 = vmul.f32 %v2944, %v3905
      %v3954 = vmul.f32 %v2945, %v3906
      %v3955 = vmul.f32 %v2946, %v3907
      %v3956 = vmul.f32 %v2947, %v3908
      %v3957 = vmul.f32 %v2948, %v3909
      %v3958 = vmul.f32 %v2949, %v3910
      %v3959 = vmul.f32 %v2950, %v3911
      %v3960 = vmul.f32 %v2951, %v3912
      %v3961 = vmul.f32 %v2952, %v3913
      %v3962 = vmul.f32 %v2953, %v3914
      %v3963 = vmul.f32 %v2954, %v3915
      %v3964 = vmul.f32 %v2955, %v3916
      %v3965 = vmul.f32 %v2956, %v3917
      %v3966 = vmul.f32 %v2957, %v3918
      %v3967 = vmul.f32 %v2958, %v3919
      %v3968 = vmul.f32 %v2959, %v3920
      %v3969 = vmul.f32 %v2960, %v3921
      %v3970 = vmul.f32 %v2961, %v3922
      %v3971 = vmul.f32 %v2962, %v3923
      %v3972 = vmul.f32 %v2963, %v3924
      %v3973 = vmul.f32 %v2964, %v3925
      %v3974 = vsel %vm1511, %v3926, 0.0
      %v3975 = vsel %vm1511, %v3927, 0.0
      %v3976 = vadd.f32 %v3974, %v3975
      %v3977 = vsel %vm1511, %v3928, 0.0
      %v3978 = vadd.f32 %v3976, %v3977
      %v3979 = vsel %vm1511, %v3929, 0.0
      %v3980 = vadd.f32 %v3978, %v3979
      %v3981 = vsel %vm1511, %v3930, 0.0
      %v3982 = vadd.f32 %v3980, %v3981
      %v3983 = vsel %vm1511, %v3931, 0.0
      %v3984 = vadd.f32 %v3982, %v3983
      %v3985 = vsel %vm1511, %v3932, 0.0
      %v3986 = vadd.f32 %v3984, %v3985
      %v3987 = vsel %vm1511, %v3933, 0.0
      %v3988 = vadd.f32 %v3986, %v3987
      %v3989 = vsel %vm1511, %v3934, 0.0
      %v3990 = vadd.f32 %v3988, %v3989
      %v3991 = vsel %vm1511, %v3935, 0.0
      %v3992 = vadd.f32 %v3990, %v3991
      %v3993 = vsel %vm1511, %v3936, 0.0
      %v3994 = vadd.f32 %v3992, %v3993
      %v3995 = vsel %vm1511, %v3937, 0.0
      %v3996 = vadd.f32 %v3994, %v3995
      %v3997 = vsel %vm1511, %v3938, 0.0
      %v3998 = vadd.f32 %v3996, %v3997
      %v3999 = vsel %vm1511, %v3939, 0.0
      %v4000 = vadd.f32 %v3998, %v3999
      %v4001 = vsel %vm1511, %v3940, 0.0
      %v4002 = vadd.f32 %v4000, %v4001
      %v4003 = vsel %vm1511, %v3941, 0.0
      %v4004 = vadd.f32 %v4002, %v4003
      %v4005 = vsel %vm1511, %v3942, 0.0
      %v4006 = vadd.f32 %v4004, %v4005
      %v4007 = vsel %vm1511, %v3943, 0.0
      %v4008 = vadd.f32 %v4006, %v4007
      %v4009 = vsel %vm1511, %v3944, 0.0
      %v4010 = vadd.f32 %v4008, %v4009
      %v4011 = vsel %vm1511, %v3945, 0.0
      %v4012 = vadd.f32 %v4010, %v4011
      %v4013 = vsel %vm1511, %v3946, 0.0
      %v4014 = vadd.f32 %v4012, %v4013
      %v4015 = vsel %vm1511, %v3947, 0.0
      %v4016 = vadd.f32 %v4014, %v4015
      %v4017 = vsel %vm1511, %v3948, 0.0
      %v4018 = vadd.f32 %v4016, %v4017
      %v4019 = vsel %vm1511, %v3949, 0.0
      %v4020 = vadd.f32 %v4018, %v4019
      %v4021 = vsel %vm1511, %v3950, 0.0
      %v4022 = vadd.f32 %v4020, %v4021
      %v4023 = vsel %vm1511, %v3951, 0.0
      %v4024 = vadd.f32 %v4022, %v4023
      %v4025 = vsel %vm1511, %v3952, 0.0
      %v4026 = vadd.f32 %v4024, %v4025
      %v4027 = vsel %vm1511, %v3953, 0.0
      %v4028 = vadd.f32 %v4026, %v4027
      %v4029 = vsel %vm1511, %v3954, 0.0
      %v4030 = vadd.f32 %v4028, %v4029
      %v4031 = vsel %vm1511, %v3955, 0.0
      %v4032 = vadd.f32 %v4030, %v4031
      %v4033 = vsel %vm1511, %v3956, 0.0
      %v4034 = vadd.f32 %v4032, %v4033
      %v4035 = vsel %vm1511, %v3957, 0.0
      %v4036 = vadd.f32 %v4034, %v4035
      %v4037 = vsel %vm1511, %v3958, 0.0
      %v4038 = vadd.f32 %v4036, %v4037
      %v4039 = vsel %vm1511, %v3959, 0.0
      %v4040 = vadd.f32 %v4038, %v4039
      %v4041 = vsel %vm1511, %v3960, 0.0
      %v4042 = vadd.f32 %v4040, %v4041
      %v4043 = vsel %vm1511, %v3961, 0.0
      %v4044 = vadd.f32 %v4042, %v4043
      %v4045 = vsel %vm1511, %v3962, 0.0
      %v4046 = vadd.f32 %v4044, %v4045
      %v4047 = vsel %vm1511, %v3963, 0.0
      %v4048 = vadd.f32 %v4046, %v4047
      %v4049 = vsel %vm1511, %v3964, 0.0
      %v4050 = vadd.f32 %v4048, %v4049
      %v4051 = vsel %vm1511, %v3965, 0.0
      %v4052 = vadd.f32 %v4050, %v4051
      %v4053 = vsel %vm1511, %v3966, 0.0
      %v4054 = vadd.f32 %v4052, %v4053
      %v4055 = vsel %vm1511, %v3967, 0.0
      %v4056 = vadd.f32 %v4054, %v4055
      %v4057 = vsel %vm1511, %v3968, 0.0
      %v4058 = vadd.f32 %v4056, %v4057
      %v4059 = vsel %vm1511, %v3969, 0.0
      %v4060 = vadd.f32 %v4058, %v4059
      %v4061 = vsel %vm1511, %v3970, 0.0
      %v4062 = vadd.f32 %v4060, %v4061
      %v4063 = vsel %vm1511, %v3971, 0.0
      %v4064 = vadd.f32 %v4062, %v4063
      %v4065 = vsel %vm1511, %v3972, 0.0
      %v4066 = vadd.f32 %v4064, %v4065
      %v4067 = vsel %vm1511, %v3973, 0.0
      %v4068 = vadd.f32 %v4066, %v4067
      %v4069 = vrot.slane %v4068, 4
      %v4070 = vadd.f32 %v4068, %v4069
      %v4071 = vrot.slane %v4070, 2
      %v4072 = vadd.f32 %v4070, %v4071
      %v4073 = vrot.slane %v4072, 1
      %v4074 = vadd.f32 %v4072, %v4073
      %v4075 = vmul.f32 %v2917, %v2917
      %v4076 = vmul.f32 %v2918, %v2918
      %v4077 = vmul.f32 %v2919, %v2919
      %v4078 = vmul.f32 %v2920, %v2920
      %v4079 = vmul.f32 %v2921, %v2921
      %v4080 = vmul.f32 %v2922, %v2922
      %v4081 = vmul.f32 %v2923, %v2923
      %v4082 = vmul.f32 %v2924, %v2924
      %v4083 = vmul.f32 %v2925, %v2925
      %v4084 = vmul.f32 %v2926, %v2926
      %v4085 = vmul.f32 %v2927, %v2927
      %v4086 = vmul.f32 %v2928, %v2928
      %v4087 = vmul.f32 %v2929, %v2929
      %v4088 = vmul.f32 %v2930, %v2930
      %v4089 = vmul.f32 %v2931, %v2931
      %v4090 = vmul.f32 %v2932, %v2932
      %v4091 = vmul.f32 %v2933, %v2933
      %v4092 = vmul.f32 %v2934, %v2934
      %v4093 = vmul.f32 %v2935, %v2935
      %v4094 = vmul.f32 %v2936, %v2936
      %v4095 = vmul.f32 %v2937, %v2937
      %v4096 = vmul.f32 %v2938, %v2938
      %v4097 = vmul.f32 %v2939, %v2939
      %v4098 = vmul.f32 %v2940, %v2940
      %v4099 = vmul.f32 %v2941, %v2941
      %v4100 = vmul.f32 %v2942, %v2942
      %v4101 = vmul.f32 %v2943, %v2943
      %v4102 = vmul.f32 %v2944, %v2944
      %v4103 = vmul.f32 %v2945, %v2945
      %v4104 = vmul.f32 %v2946, %v2946
      %v4105 = vmul.f32 %v2947, %v2947
      %v4106 = vmul.f32 %v2948, %v2948
      %v4107 = vmul.f32 %v2949, %v2949
      %v4108 = vmul.f32 %v2950, %v2950
      %v4109 = vmul.f32 %v2951, %v2951
      %v4110 = vmul.f32 %v2952, %v2952
      %v4111 = vmul.f32 %v2953, %v2953
      %v4112 = vmul.f32 %v2954, %v2954
      %v4113 = vmul.f32 %v2955, %v2955
      %v4114 = vmul.f32 %v2956, %v2956
      %v4115 = vmul.f32 %v2957, %v2957
      %v4116 = vmul.f32 %v2958, %v2958
      %v4117 = vmul.f32 %v2959, %v2959
      %v4118 = vmul.f32 %v2960, %v2960
      %v4119 = vmul.f32 %v2961, %v2961
      %v4120 = vmul.f32 %v2962, %v2962
      %v4121 = vmul.f32 %v2963, %v2963
      %v4122 = vmul.f32 %v2964, %v2964
      %v4123 = vmul.f32 %v4075, %v3878
      %v4124 = vmul.f32 %v4076, %v3879
      %v4125 = vmul.f32 %v4077, %v3880
      %v4126 = vmul.f32 %v4078, %v3881
      %v4127 = vmul.f32 %v4079, %v3882
      %v4128 = vmul.f32 %v4080, %v3883
      %v4129 = vmul.f32 %v4081, %v3884
      %v4130 = vmul.f32 %v4082, %v3885
      %v4131 = vmul.f32 %v4083, %v3886
      %v4132 = vmul.f32 %v4084, %v3887
      %v4133 = vmul.f32 %v4085, %v3888
      %v4134 = vmul.f32 %v4086, %v3889
      %v4135 = vmul.f32 %v4087, %v3890
      %v4136 = vmul.f32 %v4088, %v3891
      %v4137 = vmul.f32 %v4089, %v3892
      %v4138 = vmul.f32 %v4090, %v3893
      %v4139 = vmul.f32 %v4091, %v3894
      %v4140 = vmul.f32 %v4092, %v3895
      %v4141 = vmul.f32 %v4093, %v3896
      %v4142 = vmul.f32 %v4094, %v3897
      %v4143 = vmul.f32 %v4095, %v3898
      %v4144 = vmul.f32 %v4096, %v3899
      %v4145 = vmul.f32 %v4097, %v3900
      %v4146 = vmul.f32 %v4098, %v3901
      %v4147 = vmul.f32 %v4099, %v3902
      %v4148 = vmul.f32 %v4100, %v3903
      %v4149 = vmul.f32 %v4101, %v3904
      %v4150 = vmul.f32 %v4102, %v3905
      %v4151 = vmul.f32 %v4103, %v3906
      %v4152 = vmul.f32 %v4104, %v3907
      %v4153 = vmul.f32 %v4105, %v3908
      %v4154 = vmul.f32 %v4106, %v3909
      %v4155 = vmul.f32 %v4107, %v3910
      %v4156 = vmul.f32 %v4108, %v3911
      %v4157 = vmul.f32 %v4109, %v3912
      %v4158 = vmul.f32 %v4110, %v3913
      %v4159 = vmul.f32 %v4111, %v3914
      %v4160 = vmul.f32 %v4112, %v3915
      %v4161 = vmul.f32 %v4113, %v3916
      %v4162 = vmul.f32 %v4114, %v3917
      %v4163 = vmul.f32 %v4115, %v3918
      %v4164 = vmul.f32 %v4116, %v3919
      %v4165 = vmul.f32 %v4117, %v3920
      %v4166 = vmul.f32 %v4118, %v3921
      %v4167 = vmul.f32 %v4119, %v3922
      %v4168 = vmul.f32 %v4120, %v3923
      %v4169 = vmul.f32 %v4121, %v3924
      %v4170 = vmul.f32 %v4122, %v3925
      %v4171 = vsel %vm1511, %v4123, 0.0
      %v4172 = vsel %vm1511, %v4124, 0.0
      %v4173 = vadd.f32 %v4171, %v4172
      %v4174 = vsel %vm1511, %v4125, 0.0
      %v4175 = vadd.f32 %v4173, %v4174
      %v4176 = vsel %vm1511, %v4126, 0.0
      %v4177 = vadd.f32 %v4175, %v4176
      %v4178 = vsel %vm1511, %v4127, 0.0
      %v4179 = vadd.f32 %v4177, %v4178
      %v4180 = vsel %vm1511, %v4128, 0.0
      %v4181 = vadd.f32 %v4179, %v4180
      %v4182 = vsel %vm1511, %v4129, 0.0
      %v4183 = vadd.f32 %v4181, %v4182
      %v4184 = vsel %vm1511, %v4130, 0.0
      %v4185 = vadd.f32 %v4183, %v4184
      %v4186 = vsel %vm1511, %v4131, 0.0
      %v4187 = vadd.f32 %v4185, %v4186
      %v4188 = vsel %vm1511, %v4132, 0.0
      %v4189 = vadd.f32 %v4187, %v4188
      %v4190 = vsel %vm1511, %v4133, 0.0
      %v4191 = vadd.f32 %v4189, %v4190
      %v4192 = vsel %vm1511, %v4134, 0.0
      %v4193 = vadd.f32 %v4191, %v4192
      %v4194 = vsel %vm1511, %v4135, 0.0
      %v4195 = vadd.f32 %v4193, %v4194
      %v4196 = vsel %vm1511, %v4136, 0.0
      %v4197 = vadd.f32 %v4195, %v4196
      %v4198 = vsel %vm1511, %v4137, 0.0
      %v4199 = vadd.f32 %v4197, %v4198
      %v4200 = vsel %vm1511, %v4138, 0.0
      %v4201 = vadd.f32 %v4199, %v4200
      %v4202 = vsel %vm1511, %v4139, 0.0
      %v4203 = vadd.f32 %v4201, %v4202
      %v4204 = vsel %vm1511, %v4140, 0.0
      %v4205 = vadd.f32 %v4203, %v4204
      %v4206 = vsel %vm1511, %v4141, 0.0
      %v4207 = vadd.f32 %v4205, %v4206
      %v4208 = vsel %vm1511, %v4142, 0.0
      %v4209 = vadd.f32 %v4207, %v4208
      %v4210 = vsel %vm1511, %v4143, 0.0
      %v4211 = vadd.f32 %v4209, %v4210
      %v4212 = vsel %vm1511, %v4144, 0.0
      %v4213 = vadd.f32 %v4211, %v4212
      %v4214 = vsel %vm1511, %v4145, 0.0
      %v4215 = vadd.f32 %v4213, %v4214
      %v4216 = vsel %vm1511, %v4146, 0.0
      %v4217 = vadd.f32 %v4215, %v4216
      %v4218 = vsel %vm1511, %v4147, 0.0
      %v4219 = vadd.f32 %v4217, %v4218
      %v4220 = vsel %vm1511, %v4148, 0.0
      %v4221 = vadd.f32 %v4219, %v4220
      %v4222 = vsel %vm1511, %v4149, 0.0
      %v4223 = vadd.f32 %v4221, %v4222
      %v4224 = vsel %vm1511, %v4150, 0.0
      %v4225 = vadd.f32 %v4223, %v4224
      %v4226 = vsel %vm1511, %v4151, 0.0
      %v4227 = vadd.f32 %v4225, %v4226
      %v4228 = vsel %vm1511, %v4152, 0.0
      %v4229 = vadd.f32 %v4227, %v4228
      %v4230 = vsel %vm1511, %v4153, 0.0
      %v4231 = vadd.f32 %v4229, %v4230
      %v4232 = vsel %vm1511, %v4154, 0.0
      %v4233 = vadd.f32 %v4231, %v4232
      %v4234 = vsel %vm1511, %v4155, 0.0
      %v4235 = vadd.f32 %v4233, %v4234
      %v4236 = vsel %vm1511, %v4156, 0.0
      %v4237 = vadd.f32 %v4235, %v4236
      %v4238 = vsel %vm1511, %v4157, 0.0
      %v4239 = vadd.f32 %v4237, %v4238
      %v4240 = vsel %vm1511, %v4158, 0.0
      %v4241 = vadd.f32 %v4239, %v4240
      %v4242 = vsel %vm1511, %v4159, 0.0
      %v4243 = vadd.f32 %v4241, %v4242
      %v4244 = vsel %vm1511, %v4160, 0.0
      %v4245 = vadd.f32 %v4243, %v4244
      %v4246 = vsel %vm1511, %v4161, 0.0
      %v4247 = vadd.f32 %v4245, %v4246
      %v4248 = vsel %vm1511, %v4162, 0.0
      %v4249 = vadd.f32 %v4247, %v4248
      %v4250 = vsel %vm1511, %v4163, 0.0
      %v4251 = vadd.f32 %v4249, %v4250
      %v4252 = vsel %vm1511, %v4164, 0.0
      %v4253 = vadd.f32 %v4251, %v4252
      %v4254 = vsel %vm1511, %v4165, 0.0
      %v4255 = vadd.f32 %v4253, %v4254
      %v4256 = vsel %vm1511, %v4166, 0.0
      %v4257 = vadd.f32 %v4255, %v4256
      %v4258 = vsel %vm1511, %v4167, 0.0
      %v4259 = vadd.f32 %v4257, %v4258
      %v4260 = vsel %vm1511, %v4168, 0.0
      %v4261 = vadd.f32 %v4259, %v4260
      %v4262 = vsel %vm1511, %v4169, 0.0
      %v4263 = vadd.f32 %v4261, %v4262
      %v4264 = vsel %vm1511, %v4170, 0.0
      %v4265 = vadd.f32 %v4263, %v4264
      %v4266 = vrot.slane %v4265, 4
      %v4267 = vadd.f32 %v4265, %v4266
      %v4268 = vrot.slane %v4267, 2
      %v4269 = vadd.f32 %v4267, %v4268
      %v4270 = vrot.slane %v4269, 1
      %v4271 = vadd.f32 %v4269, %v4270
      %v4272 = vrcp.pop 256.0
      %v4273 = vmul.f32 %v4074, %v4272
      %v4274 = vmul.f32 %v4271, %v4272
      %v4275 = vmul.f32 %v4273, %v4273
      %v4276 = vsub.f32 %v4274, %v4275
      %v4277 = vmax.f32 %v4276, 0.0
      %v4278 = vsub.f32 %v2917, %v4273
      %v4279 = vsub.f32 %v2918, %v4273
      %v4280 = vsub.f32 %v2920, %v4273
      %v4281 = vsub.f32 %v2921, %v4273
      %v4282 = vsub.f32 %v2923, %v4273
      %v4283 = vsub.f32 %v2924, %v4273
      %v4284 = vsub.f32 %v2926, %v4273
      %v4285 = vsub.f32 %v2927, %v4273
      %v4286 = vsub.f32 %v2929, %v4273
      %v4287 = vsub.f32 %v2930, %v4273
      %v4288 = vsub.f32 %v2932, %v4273
      %v4289 = vsub.f32 %v2933, %v4273
      %v4290 = vsub.f32 %v2935, %v4273
      %v4291 = vsub.f32 %v2936, %v4273
      %v4292 = vsub.f32 %v2938, %v4273
      %v4293 = vsub.f32 %v2939, %v4273
      %v4294 = vsub.f32 %v2941, %v4273
      %v4295 = vsub.f32 %v2942, %v4273
      %v4296 = vsub.f32 %v2944, %v4273
      %v4297 = vsub.f32 %v2945, %v4273
      %v4298 = vsub.f32 %v2947, %v4273
      %v4299 = vsub.f32 %v2948, %v4273
      %v4300 = vsub.f32 %v2950, %v4273
      %v4301 = vsub.f32 %v2951, %v4273
      %v4302 = vsub.f32 %v2953, %v4273
      %v4303 = vsub.f32 %v2954, %v4273
      %v4304 = vsub.f32 %v2956, %v4273
      %v4305 = vsub.f32 %v2957, %v4273
      %v4306 = vsub.f32 %v2959, %v4273
      %v4307 = vsub.f32 %v2960, %v4273
      %v4308 = vsub.f32 %v2962, %v4273
      %v4309 = vsub.f32 %v2963, %v4273
      %v4310 = vadd.f32 %v4277, 1e-05
      %v4311 = vrsqrt.pop %v4310
      %v4312 = vmul.f32 %v4278, %v4311
      %v4313 = vmul.f32 %v4279, %v4311
      %v4314 = vmul.f32 %v4280, %v4311
      %v4315 = vmul.f32 %v4281, %v4311
      %v4316 = vmul.f32 %v4282, %v4311
      %v4317 = vmul.f32 %v4283, %v4311
      %v4318 = vmul.f32 %v4284, %v4311
      %v4319 = vmul.f32 %v4285, %v4311
      %v4320 = vmul.f32 %v4286, %v4311
      %v4321 = vmul.f32 %v4287, %v4311
      %v4322 = vmul.f32 %v4288, %v4311
      %v4323 = vmul.f32 %v4289, %v4311
      %v4324 = vmul.f32 %v4290, %v4311
      %v4325 = vmul.f32 %v4291, %v4311
      %v4326 = vmul.f32 %v4292, %v4311
      %v4327 = vmul.f32 %v4293, %v4311
      %v4328 = vmul.f32 %v4294, %v4311
      %v4329 = vmul.f32 %v4295, %v4311
      %v4330 = vmul.f32 %v4296, %v4311
      %v4331 = vmul.f32 %v4297, %v4311
      %v4332 = vmul.f32 %v4298, %v4311
      %v4333 = vmul.f32 %v4299, %v4311
      %v4334 = vmul.f32 %v4300, %v4311
      %v4335 = vmul.f32 %v4301, %v4311
      %v4336 = vmul.f32 %v4302, %v4311
      %v4337 = vmul.f32 %v4303, %v4311
      %v4338 = vmul.f32 %v4304, %v4311
      %v4339 = vmul.f32 %v4305, %v4311
      %v4340 = vmul.f32 %v4306, %v4311
      %v4341 = vmul.f32 %v4307, %v4311
      %v4342 = vmul.f32 %v4308, %v4311
      %v4343 = vmul.f32 %v4309, %v4311
      %v4344 = vld [vmem:[%s230] sm:$0xf]
      %v4345 = vld [vmem:[%s230 + $0x4] sm:$0xf]
      %v4346 = vld [vmem:[%s230 + $0x8] sm:$0xf]
      %v4347 = vld [vmem:[%s230 + $0xc] sm:$0xf]
      %v4348 = vld [vmem:[%s230 + $0x10] sm:$0xf]
      %v4349 = vld [vmem:[%s230 + $0x14] sm:$0xf]
      %v4350 = vld [vmem:[%s230 + $0x18] sm:$0xf]
      %v4351 = vld [vmem:[%s230 + $0x1c] sm:$0xf]
      %v4352 = vld [vmem:[%s230 + $0x20] sm:$0xf]
      %v4353 = vld [vmem:[%s230 + $0x24] sm:$0xf]
      %v4354 = vld [vmem:[%s230 + $0x28] sm:$0xf]
      %v4355 = vld [vmem:[%s230 + $0x2c] sm:$0xf]
      %v4356 = vld [vmem:[%s230 + $0x30] sm:$0xf]
      %v4357 = vld [vmem:[%s230 + $0x34] sm:$0xf]
      %v4358 = vld [vmem:[%s230 + $0x38] sm:$0xf]
      %v4359 = vld [vmem:[%s230 + $0x3c] sm:$0xf]
      %v4360 = vld [vmem:[%s230 + $0x40] sm:$0xf]
      %v4361 = vld [vmem:[%s230 + $0x44] sm:$0xf]
      %v4362 = vld [vmem:[%s230 + $0x48] sm:$0xf]
      %v4363 = vld [vmem:[%s230 + $0x4c] sm:$0xf]
      %v4364 = vld [vmem:[%s230 + $0x50] sm:$0xf]
      %v4365 = vld [vmem:[%s230 + $0x54] sm:$0xf]
      %v4366 = vld [vmem:[%s230 + $0x58] sm:$0xf]
      %v4367 = vld [vmem:[%s230 + $0x5c] sm:$0xf]
      %v4368 = vld [vmem:[%s230 + $0x60] sm:$0xf]
      %v4369 = vld [vmem:[%s230 + $0x64] sm:$0xf]
      %v4370 = vld [vmem:[%s230 + $0x68] sm:$0xf]
      %v4371 = vld [vmem:[%s230 + $0x6c] sm:$0xf]
      %v4372 = vld [vmem:[%s230 + $0x70] sm:$0xf]
      %v4373 = vld [vmem:[%s230 + $0x74] sm:$0xf]
      %v4374 = vld [vmem:[%s230 + $0x78] sm:$0xf]
      %v4375 = vld [vmem:[%s230 + $0x7c] sm:$0xf]
      %v4376 = vunpack.c.l.bf16 %v4344
      %v4377 = vunpack.c.l.bf16 %v4345
      %v4378 = vunpack.c.l.bf16 %v4346
      %v4379 = vunpack.c.l.bf16 %v4347
      %v4380 = vunpack.c.l.bf16 %v4348
      %v4381 = vunpack.c.l.bf16 %v4349
      %v4382 = vunpack.c.l.bf16 %v4350
      %v4383 = vunpack.c.l.bf16 %v4351
      %v4384 = vunpack.c.l.bf16 %v4352
      %v4385 = vunpack.c.l.bf16 %v4353
      %v4386 = vunpack.c.l.bf16 %v4354
      %v4387 = vunpack.c.l.bf16 %v4355
      %v4388 = vunpack.c.l.bf16 %v4356
      %v4389 = vunpack.c.l.bf16 %v4357
      %v4390 = vunpack.c.l.bf16 %v4358
      %v4391 = vunpack.c.l.bf16 %v4359
      %v4392 = vunpack.c.l.bf16 %v4360
      %v4393 = vunpack.c.l.bf16 %v4361
      %v4394 = vunpack.c.l.bf16 %v4362
      %v4395 = vunpack.c.l.bf16 %v4363
      %v4396 = vunpack.c.l.bf16 %v4364
      %v4397 = vunpack.c.l.bf16 %v4365
      %v4398 = vunpack.c.l.bf16 %v4366
      %v4399 = vunpack.c.l.bf16 %v4367
      %v4400 = vunpack.c.l.bf16 %v4368
      %v4401 = vunpack.c.l.bf16 %v4369
      %v4402 = vunpack.c.l.bf16 %v4370
      %v4403 = vunpack.c.l.bf16 %v4371
      %v4404 = vunpack.c.l.bf16 %v4372
      %v4405 = vunpack.c.l.bf16 %v4373
      %v4406 = vunpack.c.l.bf16 %v4374
      %v4407 = vunpack.c.l.bf16 %v4375
      %v4408 = vadd.f32 %v4312, %v4376
      %v4409 = vadd.f32 %v4313, %v4377
      %v4410 = vadd.f32 %v4314, %v4378
      %v4411 = vadd.f32 %v4315, %v4379
      %v4412 = vadd.f32 %v4316, %v4380
      %v4413 = vadd.f32 %v4317, %v4381
      %v4414 = vadd.f32 %v4318, %v4382
      %v4415 = vadd.f32 %v4319, %v4383
      %v4416 = vadd.f32 %v4320, %v4384
      %v4417 = vadd.f32 %v4321, %v4385
      %v4418 = vadd.f32 %v4322, %v4386
      %v4419 = vadd.f32 %v4323, %v4387
      %v4420 = vadd.f32 %v4324, %v4388
      %v4421 = vadd.f32 %v4325, %v4389
      %v4422 = vadd.f32 %v4326, %v4390
      %v4423 = vadd.f32 %v4327, %v4391
      %v4424 = vadd.f32 %v4328, %v4392
      %v4425 = vadd.f32 %v4329, %v4393
      %v4426 = vadd.f32 %v4330, %v4394
      %v4427 = vadd.f32 %v4331, %v4395
      %v4428 = vadd.f32 %v4332, %v4396
      %v4429 = vadd.f32 %v4333, %v4397
      %v4430 = vadd.f32 %v4334, %v4398
      %v4431 = vadd.f32 %v4335, %v4399
      %v4432 = vadd.f32 %v4336, %v4400
      %v4433 = vadd.f32 %v4337, %v4401
      %v4434 = vadd.f32 %v4338, %v4402
      %v4435 = vadd.f32 %v4339, %v4403
      %v4436 = vadd.f32 %v4340, %v4404
      %v4437 = vadd.f32 %v4341, %v4405
      %v4438 = vadd.f32 %v4342, %v4406
      %v4439 = vadd.f32 %v4343, %v4407
      %v4440 = vpack.c.bf16 %v4409, %v4408
      %v4441 = vpack.c.bf16 %v4411, %v4410
      %v4442 = vpack.c.bf16 %v4413, %v4412
      %v4443 = vpack.c.bf16 %v4415, %v4414
      %v4444 = vpack.c.bf16 %v4417, %v4416
      %v4445 = vpack.c.bf16 %v4419, %v4418
      %v4446 = vpack.c.bf16 %v4421, %v4420
      %v4447 = vpack.c.bf16 %v4423, %v4422
      %v4448 = vpack.c.bf16 %v4425, %v4424
      %v4449 = vpack.c.bf16 %v4427, %v4426
      %v4450 = vpack.c.bf16 %v4429, %v4428
      %v4451 = vpack.c.bf16 %v4431, %v4430
      %v4452 = vpack.c.bf16 %v4433, %v4432
      %v4453 = vpack.c.bf16 %v4435, %v4434
      %v4454 = vpack.c.bf16 %v4437, %v4436
      %v4455 = vpack.c.bf16 %v4439, %v4438
      %v4472 = vunpack.c.l.b16 %v4440
      %v4473 = vunpack.c.h.b16 %v4440
      %v4474 = vunpack.c.l.b16 %v4441
      %v4475 = vunpack.c.h.b16 %v4441
      %v4476 = vunpack.c.l.b16 %v4442
      %v4477 = vunpack.c.h.b16 %v4442
      %v4478 = vunpack.c.l.b16 %v4443
      %v4479 = vunpack.c.h.b16 %v4443
      %v4480 = vunpack.c.l.b16 %v4444
      %v4481 = vunpack.c.h.b16 %v4444
      %v4482 = vunpack.c.l.b16 %v4445
      %v4483 = vunpack.c.h.b16 %v4445
      %v4484 = vunpack.c.l.b16 %v4446
      %v4485 = vunpack.c.h.b16 %v4446
      %v4486 = vunpack.c.l.b16 %v4447
      %v4487 = vunpack.c.h.b16 %v4447
      %v4488 = vunpack.c.l.b16 %v4448
      %v4489 = vunpack.c.h.b16 %v4448
      %v4490 = vunpack.c.l.b16 %v4449
      %v4491 = vunpack.c.h.b16 %v4449
      %v4492 = vunpack.c.l.b16 %v4450
      %v4493 = vunpack.c.h.b16 %v4450
      %v4494 = vunpack.c.l.b16 %v4451
      %v4495 = vunpack.c.h.b16 %v4451
      %v4496 = vunpack.c.l.b16 %v4452
      %v4497 = vunpack.c.h.b16 %v4452
      %v4498 = vunpack.c.l.b16 %v4453
      %v4499 = vunpack.c.h.b16 %v4453
      %v4500 = vunpack.c.l.b16 %v4454
      %v4501 = vunpack.c.h.b16 %v4454
      %v4502 = vunpack.c.l.b16 %v4455
      %v4503 = vunpack.c.h.b16 %v4455
      %v4504 = vpack.c.b16 %v4472, %v4472
      %v4505 = vpack.c.b16 %v4473, %v4473
      %v4506 = vpack.c.b16 %v4474, %v4474
      %v4507 = vpack.c.b16 %v4475, %v4475
      %v4508 = vpack.c.b16 %v4476, %v4476
      %v4509 = vpack.c.b16 %v4477, %v4477
      %v4510 = vpack.c.b16 %v4478, %v4478
      %v4511 = vpack.c.b16 %v4479, %v4479
      %v4512 = vpack.c.b16 %v4480, %v4480
      %v4513 = vpack.c.b16 %v4481, %v4481
      %v4514 = vpack.c.b16 %v4482, %v4482
      %v4515 = vpack.c.b16 %v4483, %v4483
      %v4516 = vpack.c.b16 %v4484, %v4484
      %v4517 = vpack.c.b16 %v4485, %v4485
      %v4518 = vpack.c.b16 %v4486, %v4486
      %v4519 = vpack.c.b16 %v4487, %v4487
      %v4520 = vpack.c.b16 %v4488, %v4488
      %v4521 = vpack.c.b16 %v4489, %v4489
      %v4522 = vpack.c.b16 %v4490, %v4490
      %v4523 = vpack.c.b16 %v4491, %v4491
      %v4524 = vpack.c.b16 %v4492, %v4492
      %v4525 = vpack.c.b16 %v4493, %v4493
      %v4526 = vpack.c.b16 %v4494, %v4494
      %v4527 = vpack.c.b16 %v4495, %v4495
      %v4528 = vpack.c.b16 %v4496, %v4496
      %v4529 = vpack.c.b16 %v4497, %v4497
      %v4530 = vpack.c.b16 %v4498, %v4498
      %v4531 = vpack.c.b16 %v4499, %v4499
      %v4532 = vpack.c.b16 %v4500, %v4500
      %v4533 = vpack.c.b16 %v4501, %v4501
      %v4534 = vpack.c.b16 %v4502, %v4502
      %v4535 = vpack.c.b16 %v4503, %v4503
      %vm4568 = vcmask 519168
      %4569 = vst.msk [vmem:[%s238] sm:$0xf] %vm4568, %v4504
      %4570 = vst.msk [vmem:[%s238 + $0x4] sm:$0xf] %vm4568, %v4505
      %4571 = vst.msk [vmem:[%s238 + $0x8] sm:$0xf] %vm4568, %v4506
      %4572 = vst.msk [vmem:[%s238 + $0xc] sm:$0xf] %vm4568, %v4507
      %4573 = vst.msk [vmem:[%s238 + $0x10] sm:$0xf] %vm4568, %v4508
      %4574 = vst.msk [vmem:[%s238 + $0x14] sm:$0xf] %vm4568, %v4509
      %4575 = vst.msk [vmem:[%s238 + $0x18] sm:$0xf] %vm4568, %v4510
      %4576 = vst.msk [vmem:[%s238 + $0x1c] sm:$0xf] %vm4568, %v4511
      %4577 = vst.msk [vmem:[%s238 + $0x20] sm:$0xf] %vm4568, %v4512
      %4578 = vst.msk [vmem:[%s238 + $0x24] sm:$0xf] %vm4568, %v4513
      %4579 = vst.msk [vmem:[%s238 + $0x28] sm:$0xf] %vm4568, %v4514
      %4580 = vst.msk [vmem:[%s238 + $0x2c] sm:$0xf] %vm4568, %v4515
      %4581 = vst.msk [vmem:[%s238 + $0x30] sm:$0xf] %vm4568, %v4516
      %4582 = vst.msk [vmem:[%s238 + $0x34] sm:$0xf] %vm4568, %v4517
      %4583 = vst.msk [vmem:[%s238 + $0x38] sm:$0xf] %vm4568, %v4518
      %4584 = vst.msk [vmem:[%s238 + $0x3c] sm:$0xf] %vm4568, %v4519
      %4585 = vst.msk [vmem:[%s238 + $0x40] sm:$0xf] %vm4568, %v4520
      %4586 = vst.msk [vmem:[%s238 + $0x44] sm:$0xf] %vm4568, %v4521
      %4587 = vst.msk [vmem:[%s238 + $0x48] sm:$0xf] %vm4568, %v4522
      %4588 = vst.msk [vmem:[%s238 + $0x4c] sm:$0xf] %vm4568, %v4523
      %4589 = vst.msk [vmem:[%s238 + $0x50] sm:$0xf] %vm4568, %v4524
      %4590 = vst.msk [vmem:[%s238 + $0x54] sm:$0xf] %vm4568, %v4525
      %4591 = vst.msk [vmem:[%s238 + $0x58] sm:$0xf] %vm4568, %v4526
      %4592 = vst.msk [vmem:[%s238 + $0x5c] sm:$0xf] %vm4568, %v4527
      %4593 = vst.msk [vmem:[%s238 + $0x60] sm:$0xf] %vm4568, %v4528
      %4594 = vst.msk [vmem:[%s238 + $0x64] sm:$0xf] %vm4568, %v4529
      %4595 = vst.msk [vmem:[%s238 + $0x68] sm:$0xf] %vm4568, %v4530
      %4596 = vst.msk [vmem:[%s238 + $0x6c] sm:$0xf] %vm4568, %v4531
      %4597 = vst.msk [vmem:[%s238 + $0x70] sm:$0xf] %vm4568, %v4532
      %4598 = vst.msk [vmem:[%s238 + $0x74] sm:$0xf] %vm4568, %v4533
      %4599 = vst.msk [vmem:[%s238 + $0x78] sm:$0xf] %vm4568, %v4534
      %4600 = vst.msk [vmem:[%s238 + $0x7c] sm:$0xf] %vm4568, %v4535
      %p4601 = scmp.lt.s32.totalorder %s18, 1
      %s4602 = scalar_select %p4601, %s18, 1
      %p4603 = scmp.lt.s32.totalorder %s19, 0
      %s4604 = scalar_select %p4603, %s19, 0
      %s4605 = smul.addr %s4602, 32
      %s4606 = sadd.s32 %s4604, %s4605
      %s4607 = smul.addr %s4606, 4
      %s4608 = scalar_lea.vmem %s3, %s4607
      // Predicated region
      $region37: #{resnet_block_forward.3} parent=31 // pred_check
        %p4609 = pneg %p126
      $region38: #{resnet_block_forward.3} parent=31 // pred_check_branch
        %4611 = sbr.rel (%p4609) target = $region40
      $region39: #{resnet_block_forward.3} parent=31 // pred_region
        _
      $region40: #{resnet_block_forward.3} parent=31 // pred_fallthru
        _
    $region32: #{resnet_block_forward.3} parent=5 // pred_fallthru
      _
    %p4612 = scmp.le.s32.totalorder 2, %s9
    // Predicated region
    $region41: #{resnet_block_forward.3} parent=5 // pred_check
      %p4613 = pneg %p4612
    $region42: #{resnet_block_forward.3} parent=5 // pred_check_branch
      %4615 = sbr.rel (%p4613) target = $region44
    $region43: #{resnet_block_forward.3} parent=5 // pred_region
      %s4616 = ssub.s32 %s9, 2
      // Predicated region
      $region45: #{resnet_block_forward.3} parent=43 // pred_check
        %p4617 = pneg %p132
      $region46: #{resnet_block_forward.3} parent=43 // pred_check_branch
        %4619 = sbr.rel (%p4617) target = $region48
      $region47: #{resnet_block_forward.3} parent=43 // pred_region
        %p4620 = scmp.lt.s32.totalorder %s20, 1
        %s4621 = scalar_select %p4620, %s20, 1
        %p4622 = scmp.lt.s32.totalorder %s21, 0
        %s4623 = scalar_select %p4622, %s21, 0
        %s4624 = smul.addr %s4621, 32
        %s4625 = sadd.s32 %s4623, %s4624
        %s4626 = smul.addr %s4625, 4
        %s4627 = scalar_lea.vmem %s3, %s4626
      $region48: #{resnet_block_forward.3} parent=43 // pred_fallthru
        _
    $region44: #{resnet_block_forward.3} parent=5 // pred_fallthru
      _
  $region6: #{resnet_block_forward.3} parent=0 // loop_footer
    %s13 = sadd.s32 1, %s9
  $region7: #{resnet_block_forward.3} parent=0 // loop_footer_branch
    %8 = sbr.rel target = $region3
  $region8: #{resnet_block_forward.3} parent=0 // loop_exit
    _

// kernel: resnet_block_forward.2
$region0: #{resnet_block_forward.2}
  #allocation0 [shape = 'u32[]', space=smem, size = 0x4, offset = 0x4, fixed_abs, tag = 'smem constant byte address 0x4 - core index']
  #allocation1 [shape = 'u32[144,128]{1,0:T(1,128)}', space=vmem, size = 0x12000, scoped, tag = 'internal scratch']
  #allocation2 [shape = 'bf16[432,192]{1,0:T(8,128)(2,1)}', space=vmem, size = 0x36000, scoped, tag = 'scratch operand']
  %s0 = inlined_call_operand.vmem [shape: bf16[2,440,64], index: 0, kind: input, shape index: {}]
  %s1 = inlined_call_operand.vmem [shape: bf16[3,192,64], index: 1, kind: input, shape index: {}]
  %s2 = inlined_call_operand.vmem [shape: bf16[2,440,64], index: 2, kind: output, shape index: {}]
  %s3 = sld [smem:[#allocation0]]
  $region45: #{resnet_block_forward.2} parent=0
    _
  %s5 = ssub.s32 1, %s3
  %s6 = scalar_select 0, %s5, %s3
  loop: start=0, step=1, limit=4
  $region2: #{resnet_block_forward.2} parent=0 // loop_pre_header
    _
  $region3: #{resnet_block_forward.2} parent=0 // loop_header
    %s8 = sphi 0, %s12
    %p9 = scmp.ge.s32.totalorder %s8, 4
    %s15 = sphi 0, %s27
    %s16 = sphi 0, %s23
    %s17 = sphi 0, %s15
    %s18 = sphi 0, %s16
    %s19 = sphi 0, %s17
    %s20 = sphi 0, %s18
    %s30 = sphi 0, %s32
    %s33 = sphi 0, %s30
    %s34 = sphi 0, %s33
    %s50 = sphi 0, %s34
    %s56 = sphi 0, %s58
    %s59 = sphi 0, %s56
    %s60 = sphi 0, %s59
    %s76 = sphi 0, %s60
    %s84 = sphi 0, %s86
    %s87 = sphi 0, %s84
    %s88 = sphi 0, %s87
    %s104 = sphi 0, %s88
  $region4: #{resnet_block_forward.2} parent=0 // loop_header_branch
    %11 = sbr.rel (%p9) target = $region8
  $region5: #{resnet_block_forward.2} parent=0 // loop_body
    %s13 = ssub.s32 %s8, 1
    %s14 = ssub.s32 %s8, 2
    %s21 = sadd.s32 1, %s16
    %p22 = scmp.ge.s32.totalorder %s21, 1
    %s23 = scalar_select %p22, 0, %s21
    %s24 = sadd.s32 1, %s15
    %s25 = scalar_select %p22, %s24, %s15
    %p26 = scmp.ge.s32.totalorder %s25, 2
    %s27 = scalar_select %p26, 0, %s25
    %s28 = ssub.s32 %s15, %s27
    %p29 = scmp.eq.s32.totalorder %s28, 0
    %s31 = sadd.s32 %s30, 1
    %s32 = scalar_select %p29, %s30, %s31
    %p35 = pneg %p29
    %p36 = scmp.eq.s32.totalorder %s8, 1
    %p37 = por %p35, %p36
    %p38 = scmp.ne.s32.totalorder %s30, %s33
    %p39 = scmp.eq.s32.totalorder %s8, 0
    %p40 = por %p38, %p39
    %p41 = scmp.ne.s32.totalorder %s30, %s33
    %p42 = scmp.eq.s32.totalorder %s13, 1
    %p43 = por %p41, %p42
    %p44 = scmp.ne.s32.totalorder %s33, %s34
    %p45 = scmp.eq.s32.totalorder %s13, 0
    %p46 = por %p44, %p45
    %p47 = scmp.ne.s32.totalorder %s33, %s34
    %p48 = scmp.eq.s32.totalorder %s14, 1
    %p49 = por %p47, %p48
    %p51 = scmp.ne.s32.totalorder %s34, %s50
    %p52 = scmp.eq.s32.totalorder %s14, 0
    %p53 = por %p51, %p52
    %s54 = ssub.s32 %s16, %s23
    %p55 = scmp.eq.s32.totalorder %s54, 0
    %s57 = sadd.s32 %s56, 1
    %s58 = scalar_select %p55, %s56, %s57
    %p61 = pneg %p55
    %p62 = scmp.eq.s32.totalorder %s8, 1
    %p63 = por %p61, %p62
    %p64 = scmp.ne.s32.totalorder %s56, %s59
    %p65 = scmp.eq.s32.totalorder %s8, 0
    %p66 = por %p64, %p65
    %p67 = scmp.ne.s32.totalorder %s56, %s59
    %p68 = scmp.eq.s32.totalorder %s13, 1
    %p69 = por %p67, %p68
    %p70 = scmp.ne.s32.totalorder %s59, %s60
    %p71 = scmp.eq.s32.totalorder %s13, 0
    %p72 = por %p70, %p71
    %p73 = scmp.ne.s32.totalorder %s59, %s60
    %p74 = scmp.eq.s32.totalorder %s14, 1
    %p75 = por %p73, %p74
    %p77 = scmp.ne.s32.totalorder %s60, %s76
    %p78 = scmp.eq.s32.totalorder %s14, 0
    %p79 = por %p77, %p78
    %s80 = ssub.s32 %s15, %s27
    %s81 = ssub.s32 %s16, %s23
    %s82 = sor.u32 %s80, %s81
    %p83 = scmp.eq.s32.totalorder %s82, 0
    %s85 = sadd.s32 %s84, 1
    %s86 = scalar_select %p83, %s84, %s85
    %p89 = pneg %p83
    %p90 = scmp.eq.s32.totalorder %s8, 1
    %p91 = por %p89, %p90
    %p92 = scmp.ne.s32.totalorder %s84, %s87
    %p93 = scmp.eq.s32.totalorder %s8, 0
    %p94 = por %p92, %p93
    %p95 = scmp.ne.s32.totalorder %s84, %s87
    %p96 = scmp.eq.s32.totalorder %s13, 1
    %p97 = por %p95, %p96
    %p98 = scmp.ne.s32.totalorder %s87, %s88
    %p99 = scmp.eq.s32.totalorder %s13, 0
    %p100 = por %p98, %p99
    %p101 = scmp.ne.s32.totalorder %s87, %s88
    %p102 = scmp.eq.s32.totalorder %s14, 1
    %p103 = por %p101, %p102
    %p105 = scmp.ne.s32.totalorder %s88, %s104
    %p106 = scmp.eq.s32.totalorder %s14, 0
    %p107 = por %p105, %p106
    %p108 = scmp.le.s32.totalorder 1, %s8
    %p109 = scmp.lt.s32.totalorder %s8, 3
    %p110 = pnand %p108, %p109
    %p111 = pneg %p110
    // Predicated region
    $region9: #{resnet_block_forward.2} parent=5 // pred_check
      _
    $region10: #{resnet_block_forward.2} parent=5 // pred_check_branch
      %113 = sbr.rel (%p110) target = $region12
    $region11: #{resnet_block_forward.2} parent=5 // pred_region
      %s114 = ssub.s32 %s8, 1
      // Predicated region
      $region13: #{resnet_block_forward.2} parent=11 // pred_check
        %p115 = pneg %p72
      $region14: #{resnet_block_forward.2} parent=11 // pred_check_branch
        %117 = sbr.rel (%p115) target = $region16
      $region15: #{resnet_block_forward.2} parent=11 // pred_region
        %p118 = scmp.lt.s32.totalorder %s18, 0
        %s119 = scalar_select %p118, %s18, 0
        %s120 = smul.addr %s119, 4
        %s121 = scalar_lea.vmem %s1, %s120
      $region16: #{resnet_block_forward.2} parent=11 // pred_fallthru
        _
    $region12: #{resnet_block_forward.2} parent=5 // pred_fallthru
      _
    %p122 = scmp.lt.s32.totalorder %s8, 2
    // Predicated region
    $region17: #{resnet_block_forward.2} parent=5 // pred_check
      %p123 = pneg %p122
    $region18: #{resnet_block_forward.2} parent=5 // pred_check_branch
      %125 = sbr.rel (%p123) target = $region20
    $region19: #{resnet_block_forward.2} parent=5 // pred_region
      // Predicated region
      $region21: #{resnet_block_forward.2} parent=19 // pred_check
        %p126 = pneg %p40
      $region22: #{resnet_block_forward.2} parent=19 // pred_check_branch
        %128 = sbr.rel (%p126) target = $region24
      $region23: #{resnet_block_forward.2} parent=19 // pred_region
        %p129 = scmp.lt.s32.totalorder %s15, 1
        %s130 = scalar_select %p129, %s15, 1
        %s131 = smul.addr %s130, 55
        %s132 = smul.addr %s131, 4
        %s133 = scalar_lea.vmem %s0, %s132
      $region24: #{resnet_block_forward.2} parent=19 // pred_fallthru
        _
    $region20: #{resnet_block_forward.2} parent=5 // pred_fallthru
      _
    %p134 = scmp.le.s32.totalorder 1, %s8
    %p135 = scmp.lt.s32.totalorder %s8, 3
    %p136 = pnand %p134, %p135
    %p137 = pneg %p136
    // Predicated region
    $region25: #{resnet_block_forward.2} parent=5 // pred_check
      _
    $region26: #{resnet_block_forward.2} parent=5 // pred_check_branch
      %139 = sbr.rel (%p136) target = $region28
    $region27: #{resnet_block_forward.2} parent=5 // pred_region
      %s140 = ssub.s32 %s8, 1
      %p141 = scmp.lt.s32.totalorder %s17, 1
      %s142 = scalar_select %p141, %s17, 1
      %s143 = smul.addr %s142, 55
      %s144 = smul.addr %s143, 4
      %s145 = scalar_lea.vmem %s0, %s144
      %p146 = pneg %p46
      %p147 = pneg %p43
      %p148 = scmp.lt.s32.totalorder %s18, 0
      %s149 = scalar_select %p148, %s18, 0
      %s150 = smul.addr %s149, 4
      %s151 = scalar_lea.vmem %s1, %s150
      %p152 = pneg %p72
      %p153 = pneg %p69
      %p154 = pneg %p100
      %p155 = pneg %p97
      %p156 = scmp.lt.s32.totalorder %s17, 1
      %s157 = scalar_select %p156, %s17, 1
      %p158 = scmp.lt.s32.totalorder %s18, 0
      %s159 = scalar_select %p158, %s18, 0
      %s160 = smul.addr %s157, 55
      %s161 = sadd.s32 %s159, %s160
      %s162 = smul.addr %s161, 4
      %s163 = scalar_lea.vmem %s2, %s162
      %p164 = scmp.lt.s32.totalorder %s17, 1
      %s165 = scalar_select %p164, %s17, 1
      %s166 = smul.addr %s165, 55
      %s167 = smul.addr %s166, 4
      %s168 = scalar_lea.vmem %s0, %s167
      %p169 = scmp.lt.s32.totalorder %s18, 0
      %s170 = scalar_select %p169, %s18, 0
      %s171 = smul.addr %s170, 4
      %s172 = scalar_lea.vmem %s1, %s171
      %p173 = scmp.lt.s32.totalorder %s17, 1
      %s174 = scalar_select %p173, %s17, 1
      %p175 = scmp.lt.s32.totalorder %s18, 0
      %s176 = scalar_select %p175, %s18, 0
      %s177 = smul.addr %s174, 55
      %s178 = sadd.s32 %s176, %s177
      %s179 = smul.addr %s178, 4
      %s180 = scalar_lea.vmem %s2, %s179
      %p182 = scmp.eq.s32.totalorder %s18, 0
      // Predicated region
      $region29: #{resnet_block_forward.2} parent=27 // pred_check
        %p183 = pneg %p182
      $region30: #{resnet_block_forward.2} parent=27 // pred_check_branch
        %185 = sbr.rel (%p183) target = $region32
      $region31: #{resnet_block_forward.2} parent=27 // pred_region
        %v186 = vld [vmem:[%s168] sm:$0xf]
        %v187 = vld [vmem:[%s168 + $0x4] sm:$0xf]
        %v188 = vld [vmem:[%s168 + $0x8] sm:$0xf]
        %v189 = vld [vmem:[%s168 + $0xc] sm:$0xf]
        %v190 = vld [vmem:[%s168 + $0x10] sm:$0xf]
        %v191 = vld [vmem:[%s168 + $0x14] sm:$0xf]
        %v192 = vld [vmem:[%s168 + $0x18] sm:$0xf]
        %v193 = vld [vmem:[%s168 + $0x1c] sm:$0xf]
        %v194 = vld [vmem:[%s168 + $0x20] sm:$0xf]
        %v195 = vld [vmem:[%s168 + $0x24] sm:$0xf]
        %v196 = vld [vmem:[%s168 + $0x28] sm:$0xf]
        %v197 = vld [vmem:[%s168 + $0x2c] sm:$0xf]
        %v198 = vld [vmem:[%s168 + $0x30] sm:$0xf]
        %v199 = vld [vmem:[%s168 + $0x34] sm:$0xf]
        %v200 = vld [vmem:[%s168 + $0x38] sm:$0xf]
        %v201 = vld [vmem:[%s168 + $0x3c] sm:$0xf]
        %v202 = vld [vmem:[%s168 + $0x40] sm:$0xf]
        %v203 = vld [vmem:[%s168 + $0x44] sm:$0xf]
        %v204 = vld [vmem:[%s168 + $0x48] sm:$0xf]
        %v205 = vld [vmem:[%s168 + $0x4c] sm:$0xf]
        %v206 = vld [vmem:[%s168 + $0x50] sm:$0xf]
        %v207 = vld [vmem:[%s168 + $0x54] sm:$0xf]
        %v208 = vld [vmem:[%s168 + $0x58] sm:$0xf]
        %v209 = vld [vmem:[%s168 + $0x5c] sm:$0xf]
        %v210 = vld [vmem:[%s168 + $0x60] sm:$0xf]
        %v211 = vld [vmem:[%s168 + $0x64] sm:$0xf]
        %v212 = vld [vmem:[%s168 + $0x68] sm:$0xf]
        %v213 = vld [vmem:[%s168 + $0x6c] sm:$0xf]
        %v214 = vld [vmem:[%s168 + $0x70] sm:$0xf]
        %v215 = vld [vmem:[%s168 + $0x74] sm:$0xf]
        %v216 = vld [vmem:[%s168 + $0x78] sm:$0xf]
        %v217 = vld [vmem:[%s168 + $0x7c] sm:$0xf]
        %v218 = vld [vmem:[%s168 + $0x80] sm:$0xf]
        %v219 = vld [vmem:[%s168 + $0x84] sm:$0xf]
        %v220 = vld [vmem:[%s168 + $0x88] sm:$0xf]
        %v221 = vld [vmem:[%s168 + $0x8c] sm:$0xf]
        %v222 = vld [vmem:[%s168 + $0x90] sm:$0xf]
        %v223 = vld [vmem:[%s168 + $0x94] sm:$0xf]
        %v224 = vld [vmem:[%s168 + $0x98] sm:$0xf]
        %v225 = vld [vmem:[%s168 + $0x9c] sm:$0xf]
        %v226 = vld [vmem:[%s168 + $0xa0] sm:$0xf]
        %v227 = vld [vmem:[%s168 + $0xa4] sm:$0xf]
        %v228 = vld [vmem:[%s168 + $0xa8] sm:$0xf]
        %v229 = vld [vmem:[%s168 + $0xac] sm:$0xf]
        %v230 = vld [vmem:[%s168 + $0xb0] sm:$0xf]
        %v231 = vld [vmem:[%s168 + $0xb4] sm:$0xf]
        %v232 = vld [vmem:[%s168 + $0xb8] sm:$0xf]
        %v233 = vld [vmem:[%s168 + $0xbc] sm:$0xf]
        %v234 = vld [vmem:[%s168 + $0xc0] sm:$0xf]
        %v235 = vld [vmem:[%s168 + $0xc4] sm:$0xf]
        %v236 = vld [vmem:[%s168 + $0xc8] sm:$0xf]
        %v237 = vld [vmem:[%s168 + $0xcc] sm:$0xf]
        %v238 = vld [vmem:[%s168 + $0xd0] sm:$0xf]
        %v239 = vld [vmem:[%s168 + $0xd4] sm:$0xf]
        %v240 = vld [vmem:[%s168 + $0xd8] sm:$0xf]
        %v295 = vunpack.c.l.b16 %v186
        %v296 = vunpack.c.l.b16 %v187
        %v297 = vunpack.c.l.b16 %v188
        %v298 = vunpack.c.l.b16 %v189
        %v299 = vunpack.c.l.b16 %v190
        %v300 = vunpack.c.l.b16 %v191
        %v301 = vunpack.c.l.b16 %v192
        %v302 = vunpack.c.l.b16 %v193
        %v303 = vunpack.c.l.b16 %v194
        %v304 = vunpack.c.l.b16 %v195
        %v305 = vunpack.c.l.b16 %v196
        %v306 = vunpack.c.l.b16 %v197
        %v307 = vunpack.c.l.b16 %v198
        %v308 = vunpack.c.l.b16 %v199
        %v309 = vunpack.c.l.b16 %v200
        %v310 = vunpack.c.l.b16 %v201
        %v311 = vunpack.c.l.b16 %v202
        %v312 = vunpack.c.l.b16 %v203
        %v313 = vunpack.c.l.b16 %v204
        %v314 = vunpack.c.l.b16 %v205
        %v315 = vunpack.c.l.b16 %v206
        %v316 = vunpack.c.l.b16 %v207
        %v317 = vunpack.c.l.b16 %v208
        %v318 = vunpack.c.l.b16 %v209
        %v319 = vunpack.c.l.b16 %v210
        %v320 = vunpack.c.l.b16 %v211
        %v321 = vunpack.c.l.b16 %v212
        %v322 = vunpack.c.l.b16 %v213
        %v323 = vunpack.c.l.b16 %v214
        %v324 = vunpack.c.l.b16 %v215
        %v325 = vunpack.c.l.b16 %v216
        %v326 = vunpack.c.l.b16 %v217
        %v327 = vunpack.c.l.b16 %v218
        %v328 = vunpack.c.l.b16 %v219
        %v329 = vunpack.c.l.b16 %v220
        %v330 = vunpack.c.l.b16 %v221
        %v331 = vunpack.c.l.b16 %v222
        %v332 = vunpack.c.l.b16 %v223
        %v333 = vunpack.c.l.b16 %v224
        %v334 = vunpack.c.l.b16 %v225
        %v335 = vunpack.c.l.b16 %v226
        %v336 = vunpack.c.l.b16 %v227
        %v337 = vunpack.c.l.b16 %v228
        %v338 = vunpack.c.l.b16 %v229
        %v339 = vunpack.c.l.b16 %v230
        %v340 = vunpack.c.l.b16 %v231
        %v341 = vunpack.c.l.b16 %v232
        %v342 = vunpack.c.l.b16 %v233
        %v343 = vunpack.c.l.b16 %v234
        %v344 = vunpack.c.l.b16 %v235
        %v345 = vunpack.c.l.b16 %v236
        %v346 = vunpack.c.l.b16 %v237
        %v347 = vunpack.c.l.b16 %v238
        %v348 = vunpack.c.l.b16 %v239
        %v349 = vpack.c.b16 %v296, %v295
        %v350 = vpack.c.b16 %v298, %v297
        %v351 = vpack.c.b16 %v300, %v299
        %v352 = vpack.c.b16 %v302, %v301
        %v353 = vpack.c.b16 %v304, %v303
        %v354 = vpack.c.b16 %v306, %v305
        %v355 = vpack.c.b16 %v308, %v307
        %v356 = vpack.c.b16 %v310, %v309
        %v357 = vpack.c.b16 %v312, %v311
        %v358 = vpack.c.b16 %v314, %v313
        %v359 = vpack.c.b16 %v316, %v315
        %v360 = vpack.c.b16 %v318, %v317
        %v361 = vpack.c.b16 %v320, %v319
        %v362 = vpack.c.b16 %v322, %v321
        %v363 = vpack.c.b16 %v324, %v323
        %v364 = vpack.c.b16 %v326, %v325
        %v365 = vpack.c.b16 %v328, %v327
        %v366 = vpack.c.b16 %v330, %v329
        %v367 = vpack.c.b16 %v332, %v331
        %v368 = vpack.c.b16 %v334, %v333
        %v369 = vpack.c.b16 %v336, %v335
        %v370 = vpack.c.b16 %v338, %v337
        %v371 = vpack.c.b16 %v340, %v339
        %v372 = vpack.c.b16 %v342, %v341
        %v373 = vpack.c.b16 %v344, %v343
        %v374 = vpack.c.b16 %v346, %v345
        %v375 = vpack.c.b16 %v348, %v347
        %v377 = vunpack.c.l.b16 %v240
        %v378 = vpack.c.b16 %v377, %v377
        %vm379 = vsmask.f32 7424
        %v381 = vshrl.u32 %v349, 16
        %v383 = vshll.u32 %v349, 16
        %v385 = vrot.slane %v383, 1
        %v386 = vor.u32 %v381, %v385
        %v388 = vshll.u32 %v350, 16
        %v390 = vrot.slane %v388, 1
        %v391 = vsel %vm379, %v386, %v390
        %v392 = vshrl.u32 %v350, 16
        %v394 = vor.u32 %v392, %v390
        %v396 = vshll.u32 %v351, 16
        %v398 = vrot.slane %v396, 1
        %v399 = vsel %vm379, %v394, %v398
        %v400 = vshrl.u32 %v351, 16
        %v402 = vor.u32 %v400, %v398
        %v404 = vshll.u32 %v352, 16
        %v406 = vrot.slane %v404, 1
        %v407 = vsel %vm379, %v402, %v406
        %v408 = vshrl.u32 %v352, 16
        %v410 = vor.u32 %v408, %v406
        %v412 = vshll.u32 %v353, 16
        %v414 = vrot.slane %v412, 1
        %v415 = vsel %vm379, %v410, %v414
        %v416 = vshrl.u32 %v353, 16
        %v418 = vor.u32 %v416, %v414
        %v420 = vshll.u32 %v354, 16
        %v422 = vrot.slane %v420, 1
        %v423 = vsel %vm379, %v418, %v422
        %v424 = vshrl.u32 %v354, 16
        %v426 = vor.u32 %v424, %v422
        %v428 = vshll.u32 %v355, 16
        %v430 = vrot.slane %v428, 1
        %v431 = vsel %vm379, %v426, %v430
        %v432 = vshrl.u32 %v355, 16
        %v434 = vor.u32 %v432, %v430
        %v436 = vshll.u32 %v356, 16
        %v438 = vrot.slane %v436, 1
        %v439 = vsel %vm379, %v434, %v438
        %v440 = vshrl.u32 %v356, 16
        %v442 = vor.u32 %v440, %v438
        %v444 = vshll.u32 %v357, 16
        %v446 = vrot.slane %v444, 1
        %v447 = vsel %vm379, %v442, %v446
        %v448 = vshrl.u32 %v357, 16
        %v450 = vor.u32 %v448, %v446
        %v452 = vshll.u32 %v358, 16
        %v454 = vrot.slane %v452, 1
        %v455 = vsel %vm379, %v450, %v454
        %v456 = vshrl.u32 %v358, 16
        %v458 = vor.u32 %v456, %v454
        %v460 = vshll.u32 %v359, 16
        %v462 = vrot.slane %v460, 1
        %v463 = vsel %vm379, %v458, %v462
        %v464 = vshrl.u32 %v359, 16
        %v466 = vor.u32 %v464, %v462
        %v468 = vshll.u32 %v360, 16
        %v470 = vrot.slane %v468, 1
        %v471 = vsel %vm379, %v466, %v470
        %v472 = vshrl.u32 %v360, 16
        %v474 = vor.u32 %v472, %v470
        %v476 = vshll.u32 %v361, 16
        %v478 = vrot.slane %v476, 1
        %v479 = vsel %vm379, %v474, %v478
        %v480 = vshrl.u32 %v361, 16
        %v482 = vor.u32 %v480, %v478
        %v484 = vshll.u32 %v362, 16
        %v486 = vrot.slane %v484, 1
        %v487 = vsel %vm379, %v482, %v486
        %v488 = vshrl.u32 %v362, 16
        %v490 = vor.u32 %v488, %v486
        %v492 = vshll.u32 %v363, 16
        %v494 = vrot.slane %v492, 1
        %v495 = vsel %vm379, %v490, %v494
        %v496 = vshrl.u32 %v363, 16
        %v498 = vor.u32 %v496, %v494
        %v500 = vshll.u32 %v364, 16
        %v502 = vrot.slane %v500, 1
        %v503 = vsel %vm379, %v498, %v502
        %v504 = vshrl.u32 %v364, 16
        %v506 = vor.u32 %v504, %v502
        %v508 = vshll.u32 %v365, 16
        %v510 = vrot.slane %v508, 1
        %v511 = vsel %vm379, %v506, %v510
        %v512 = vshrl.u32 %v365, 16
        %v514 = vor.u32 %v512, %v510
        %v516 = vshll.u32 %v366, 16
        %v518 = vrot.slane %v516, 1
        %v519 = vsel %vm379, %v514, %v518
        %v520 = vshrl.u32 %v366, 16
        %v522 = vor.u32 %v520, %v518
        %v524 = vshll.u32 %v367, 16
        %v526 = vrot.slane %v524, 1
        %v527 = vsel %vm379, %v522, %v526
        %v528 = vshrl.u32 %v367, 16
        %v530 = vor.u32 %v528, %v526
        %v532 = vshll.u32 %v368, 16
        %v534 = vrot.slane %v532, 1
        %v535 = vsel %vm379, %v530, %v534
        %v536 = vshrl.u32 %v368, 16
        %v538 = vor.u32 %v536, %v534
        %v540 = vshll.u32 %v369, 16
        %v542 = vrot.slane %v540, 1
        %v543 = vsel %vm379, %v538, %v542
        %v544 = vshrl.u32 %v369, 16
        %v546 = vor.u32 %v544, %v542
        %v548 = vshll.u32 %v370, 16
        %v550 = vrot.slane %v548, 1
        %v551 = vsel %vm379, %v546, %v550
        %v552 = vshrl.u32 %v370, 16
        %v554 = vor.u32 %v552, %v550
        %v556 = vshll.u32 %v371, 16
        %v558 = vrot.slane %v556, 1
        %v559 = vsel %vm379, %v554, %v558
        %v560 = vshrl.u32 %v371, 16
        %v562 = vor.u32 %v560, %v558
        %v564 = vshll.u32 %v372, 16
        %v566 = vrot.slane %v564, 1
        %v567 = vsel %vm379, %v562, %v566
        %v568 = vshrl.u32 %v372, 16
        %v570 = vor.u32 %v568, %v566
        %v572 = vshll.u32 %v373, 16
        %v574 = vrot.slane %v572, 1
        %v575 = vsel %vm379, %v570, %v574
        %v576 = vshrl.u32 %v373, 16
        %v578 = vor.u32 %v576, %v574
        %v580 = vshll.u32 %v374, 16
        %v582 = vrot.slane %v580, 1
        %v583 = vsel %vm379, %v578, %v582
        %v584 = vshrl.u32 %v374, 16
        %v586 = vor.u32 %v584, %v582
        %v588 = vshll.u32 %v375, 16
        %v590 = vrot.slane %v588, 1
        %v591 = vsel %vm379, %v586, %v590
        %v592 = vshrl.u32 %v375, 16
        %v594 = vor.u32 %v592, %v590
        %v596 = vshll.u32 %v378, 16
        %v598 = vrot.slane %v596, 1
        %v599 = vsel %vm379, %v594, %v598
        %600 = vrot.lane.b32.xlu0 %v391, 64
        %v601 = vpop.permute.xlu0 %600
        %602 = vrot.lane.b32.xlu0 %v399, 64
        %v603 = vpop.permute.xlu0 %602
        %604 = vrot.lane.b32.xlu0 %v407, 64
        %v605 = vpop.permute.xlu0 %604
        %606 = vrot.lane.b32.xlu0 %v415, 64
        %v607 = vpop.permute.xlu0 %606
        %608 = vrot.lane.b32.xlu0 %v423, 64
        %v609 = vpop.permute.xlu0 %608
        %610 = vrot.lane.b32.xlu0 %v431, 64
        %v611 = vpop.permute.xlu0 %610
        %612 = vrot.lane.b32.xlu0 %v439, 64
        %v613 = vpop.permute.xlu0 %612
        %614 = vrot.lane.b32.xlu0 %v447, 64
        %v615 = vpop.permute.xlu0 %614
        %616 = vrot.lane.b32.xlu0 %v455, 64
        %v617 = vpop.permute.xlu0 %616
        %618 = vrot.lane.b32.xlu0 %v463, 64
        %v619 = vpop.permute.xlu0 %618
        %620 = vrot.lane.b32.xlu0 %v471, 64
        %v621 = vpop.permute.xlu0 %620
        %622 = vrot.lane.b32.xlu0 %v479, 64
        %v623 = vpop.permute.xlu0 %622
        %624 = vrot.lane.b32.xlu0 %v487, 64
        %v625 = vpop.permute.xlu0 %624
        %626 = vrot.lane.b32.xlu0 %v495, 64
        %v627 = vpop.permute.xlu0 %626
        %628 = vrot.lane.b32.xlu0 %v503, 64
        %v629 = vpop.permute.xlu0 %628
        %630 = vrot.lane.b32.xlu0 %v511, 64
        %v631 = vpop.permute.xlu0 %630
        %632 = vrot.lane.b32.xlu0 %v519, 64
        %v633 = vpop.permute.xlu0 %632
        %634 = vrot.lane.b32.xlu0 %v527, 64
        %v635 = vpop.permute.xlu0 %634
        %636 = vrot.lane.b32.xlu0 %v535, 64
        %v637 = vpop.permute.xlu0 %636
        %638 = vrot.lane.b32.xlu0 %v543, 64
        %v639 = vpop.permute.xlu0 %638
        %640 = vrot.lane.b32.xlu0 %v551, 64
        %v641 = vpop.permute.xlu0 %640
        %642 = vrot.lane.b32.xlu0 %v559, 64
        %v643 = vpop.permute.xlu0 %642
        %644 = vrot.lane.b32.xlu0 %v567, 64
        %v645 = vpop.permute.xlu0 %644
        %646 = vrot.lane.b32.xlu0 %v575, 64
        %v647 = vpop.permute.xlu0 %646
        %648 = vrot.lane.b32.xlu0 %v583, 64
        %v649 = vpop.permute.xlu0 %648
        %650 = vrot.lane.b32.xlu0 %v591, 64
        %v651 = vpop.permute.xlu0 %650
        %652 = vrot.lane.b32.xlu0 %v599, 64
        %v653 = vpop.permute.xlu0 %652
        %vm654 = vcmask 1046528
        %v655 = vrot.slane %v349, 1
        %v656 = vrot.slane %v350, 1
        %v657 = vsel %vm654, %v655, %v656
        %v658 = vrot.slane %v351, 1
        %v659 = vsel %vm654, %v656, %v658
        %v660 = vrot.slane %v352, 1
        %v661 = vsel %vm654, %v658, %v660
        %v662 = vrot.slane %v353, 1
        %v663 = vsel %vm654, %v660, %v662
        %v664 = vrot.slane %v354, 1
        %v665 = vsel %vm654, %v662, %v664
        %v666 = vrot.slane %v355, 1
        %v667 = vsel %vm654, %v664, %v666
        %v668 = vrot.slane %v356, 1
        %v669 = vsel %vm654, %v666, %v668
        %v670 = vrot.slane %v357, 1
        %v671 = vsel %vm654, %v668, %v670
        %v672 = vrot.slane %v358, 1
        %v673 = vsel %vm654, %v670, %v672
        %v674 = vrot.slane %v359, 1
        %v675 = vsel %vm654, %v672, %v674
        %v676 = vrot.slane %v360, 1
        %v677 = vsel %vm654, %v674, %v676
        %v678 = vrot.slane %v361, 1
        %v679 = vsel %vm654, %v676, %v678
        %v680 = vrot.slane %v362, 1
        %v681 = vsel %vm654, %v678, %v680
        %v682 = vrot.slane %v363, 1
        %v683 = vsel %vm654, %v680, %v682
        %v684 = vrot.slane %v364, 1
        %v685 = vsel %vm654, %v682, %v684
        %v686 = vrot.slane %v365, 1
        %v687 = vsel %vm654, %v684, %v686
        %v688 = vrot.slane %v366, 1
        %v689 = vsel %vm654, %v686, %v688
        %v690 = vrot.slane %v367, 1
        %v691 = vsel %vm654, %v688, %v690
        %v692 = vrot.slane %v368, 1
        %v693 = vsel %vm654, %v690, %v692
        %v694 = vrot.slane %v369, 1
        %v695 = vsel %vm654, %v692, %v694
        %v696 = vrot.slane %v370, 1
        %v697 = vsel %vm654, %v694, %v696
        %v698 = vrot.slane %v371, 1
        %v699 = vsel %vm654, %v696, %v698
        %v700 = vrot.slane %v372, 1
        %v701 = vsel %vm654, %v698, %v700
        %v702 = vrot.slane %v373, 1
        %v703 = vsel %vm654, %v700, %v702
        %v704 = vrot.slane %v374, 1
        %v705 = vsel %vm654, %v702, %v704
        %v706 = vrot.slane %v375, 1
        %v707 = vsel %vm654, %v704, %v706
        %v708 = vrot.slane %v378, 1
        %v709 = vsel %vm654, %v706, %v708
        %vm710 = vcmask 523264
        %v712 = vsel %vm710, %v349, %v601
        %v714 = vsel %vm710, %v350, %v603
        %v716 = vsel %vm710, %v351, %v605
        %v718 = vsel %vm710, %v352, %v607
        %v720 = vsel %vm710, %v353, %v609
        %v722 = vsel %vm710, %v354, %v611
        %v724 = vsel %vm710, %v355, %v613
        %v726 = vsel %vm710, %v356, %v615
        %v728 = vsel %vm710, %v357, %v617
        %v730 = vsel %vm710, %v358, %v619
        %v732 = vsel %vm710, %v359, %v621
        %v734 = vsel %vm710, %v360, %v623
        %v736 = vsel %vm710, %v361, %v625
        %v738 = vsel %vm710, %v362, %v627
        %v740 = vsel %vm710, %v363, %v629
        %v742 = vsel %vm710, %v364, %v631
        %v744 = vsel %vm710, %v365, %v633
        %v746 = vsel %vm710, %v366, %v635
        %v748 = vsel %vm710, %v367, %v637
        %v750 = vsel %vm710, %v368, %v639
        %v752 = vsel %vm710, %v369, %v641
        %v754 = vsel %vm710, %v370, %v643
        %v756 = vsel %vm710, %v371, %v645
        %v758 = vsel %vm710, %v372, %v647
        %v760 = vsel %vm710, %v373, %v649
        %v762 = vsel %vm710, %v374, %v651
        %v764 = vsel %vm710, %v375, %v653
        %v792 = vunpack.c.l.b16 %v712
        %v793 = vunpack.c.l.b16 %v657
        %v794 = vunpack.c.h.b16 %v712
        %v795 = vunpack.c.h.b16 %v657
        %v796 = vunpack.c.l.b16 %v714
        %v797 = vunpack.c.l.b16 %v659
        %v798 = vunpack.c.h.b16 %v714
        %v799 = vunpack.c.h.b16 %v659
        %v800 = vunpack.c.l.b16 %v716
        %v801 = vunpack.c.l.b16 %v661
        %v802 = vunpack.c.h.b16 %v716
        %v803 = vunpack.c.h.b16 %v661
        %v804 = vunpack.c.l.b16 %v718
        %v805 = vunpack.c.l.b16 %v663
        %v806 = vunpack.c.h.b16 %v718
        %v807 = vunpack.c.h.b16 %v663
        %v808 = vunpack.c.l.b16 %v720
        %v809 = vunpack.c.l.b16 %v665
        %v810 = vunpack.c.h.b16 %v720
        %v811 = vunpack.c.h.b16 %v665
        %v812 = vunpack.c.l.b16 %v722
        %v813 = vunpack.c.l.b16 %v667
        %v814 = vunpack.c.h.b16 %v722
        %v815 = vunpack.c.h.b16 %v667
        %v816 = vunpack.c.l.b16 %v724
        %v817 = vunpack.c.l.b16 %v669
        %v818 = vunpack.c.h.b16 %v724
        %v819 = vunpack.c.h.b16 %v669
        %v820 = vunpack.c.l.b16 %v726
        %v821 = vunpack.c.l.b16 %v671
        %v822 = vunpack.c.h.b16 %v726
        %v823 = vunpack.c.h.b16 %v671
        %v824 = vunpack.c.l.b16 %v728
        %v825 = vunpack.c.l.b16 %v673
        %v826 = vunpack.c.h.b16 %v728
        %v827 = vunpack.c.h.b16 %v673
        %v828 = vunpack.c.l.b16 %v730
        %v829 = vunpack.c.l.b16 %v675
        %v830 = vunpack.c.h.b16 %v730
        %v831 = vunpack.c.h.b16 %v675
        %v832 = vunpack.c.l.b16 %v732
        %v833 = vunpack.c.l.b16 %v677
        %v834 = vunpack.c.h.b16 %v732
        %v835 = vunpack.c.h.b16 %v677
        %v836 = vunpack.c.l.b16 %v734
        %v837 = vunpack.c.l.b16 %v679
        %v838 = vunpack.c.h.b16 %v734
        %v839 = vunpack.c.h.b16 %v679
        %v840 = vunpack.c.l.b16 %v736
        %v841 = vunpack.c.l.b16 %v681
        %v842 = vunpack.c.h.b16 %v736
        %v843 = vunpack.c.h.b16 %v681
        %v844 = vunpack.c.l.b16 %v738
        %v845 = vunpack.c.l.b16 %v683
        %v846 = vunpack.c.h.b16 %v738
        %v847 = vunpack.c.h.b16 %v683
        %v848 = vunpack.c.l.b16 %v740
        %v849 = vunpack.c.l.b16 %v685
        %v850 = vunpack.c.h.b16 %v740
        %v851 = vunpack.c.h.b16 %v685
        %v852 = vunpack.c.l.b16 %v742
        %v853 = vunpack.c.l.b16 %v687
        %v854 = vunpack.c.h.b16 %v742
        %v855 = vunpack.c.h.b16 %v687
        %v856 = vunpack.c.l.b16 %v744
        %v857 = vunpack.c.l.b16 %v689
        %v858 = vunpack.c.h.b16 %v744
        %v859 = vunpack.c.h.b16 %v689
        %v860 = vunpack.c.l.b16 %v746
        %v861 = vunpack.c.l.b16 %v691
        %v862 = vunpack.c.h.b16 %v746
        %v863 = vunpack.c.h.b16 %v691
        %v864 = vunpack.c.l.b16 %v748
        %v865 = vunpack.c.l.b16 %v693
        %v866 = vunpack.c.h.b16 %v748
        %v867 = vunpack.c.h.b16 %v693
        %v868 = vunpack.c.l.b16 %v750
        %v869 = vunpack.c.l.b16 %v695
        %v870 = vunpack.c.h.b16 %v750
        %v871 = vunpack.c.h.b16 %v695
        %v872 = vunpack.c.l.b16 %v752
        %v873 = vunpack.c.l.b16 %v697
        %v874 = vunpack.c.h.b16 %v752
        %v875 = vunpack.c.h.b16 %v697
        %v876 = vunpack.c.l.b16 %v754
        %v877 = vunpack.c.l.b16 %v699
        %v878 = vunpack.c.h.b16 %v754
        %v879 = vunpack.c.h.b16 %v699
        %v880 = vunpack.c.l.b16 %v756
        %v881 = vunpack.c.l.b16 %v701
        %v882 = vunpack.c.h.b16 %v756
        %v883 = vunpack.c.h.b16 %v701
        %v884 = vunpack.c.l.b16 %v758
        %v885 = vunpack.c.l.b16 %v703
        %v886 = vunpack.c.h.b16 %v758
        %v887 = vunpack.c.h.b16 %v703
        %v888 = vunpack.c.l.b16 %v760
        %v889 = vunpack.c.l.b16 %v705
        %v890 = vunpack.c.h.b16 %v760
        %v891 = vunpack.c.h.b16 %v705
        %v892 = vunpack.c.l.b16 %v762
        %v893 = vunpack.c.l.b16 %v707
        %v894 = vunpack.c.h.b16 %v762
        %v895 = vunpack.c.h.b16 %v707
        %v896 = vunpack.c.l.b16 %v764
        %v897 = vunpack.c.l.b16 %v709
        %v898 = vunpack.c.h.b16 %v764
        %v899 = vunpack.c.h.b16 %v709
        %v900 = vpack.c.b16 %v793, %v792
        %v901 = vpack.c.b16 %v795, %v794
        %v902 = vpack.c.b16 %v797, %v796
        %v903 = vpack.c.b16 %v799, %v798
        %v904 = vpack.c.b16 %v801, %v800
        %v905 = vpack.c.b16 %v803, %v802
        %v906 = vpack.c.b16 %v805, %v804
        %v907 = vpack.c.b16 %v807, %v806
        %v908 = vpack.c.b16 %v809, %v808
        %v909 = vpack.c.b16 %v811, %v810
        %v910 = vpack.c.b16 %v813, %v812
        %v911 = vpack.c.b16 %v815, %v814
        %v912 = vpack.c.b16 %v817, %v816
        %v913 = vpack.c.b16 %v819, %v818
        %v914 = vpack.c.b16 %v821, %v820
        %v915 = vpack.c.b16 %v823, %v822
        %v916 = vpack.c.b16 %v825, %v824
        %v917 = vpack.c.b16 %v827, %v826
        %v918 = vpack.c.b16 %v829, %v828
        %v919 = vpack.c.b16 %v831, %v830
        %v920 = vpack.c.b16 %v833, %v832
        %v921 = vpack.c.b16 %v835, %v834
        %v922 = vpack.c.b16 %v837, %v836
        %v923 = vpack.c.b16 %v839, %v838
        %v924 = vpack.c.b16 %v841, %v840
        %v925 = vpack.c.b16 %v843, %v842
        %v926 = vpack.c.b16 %v845, %v844
        %v927 = vpack.c.b16 %v847, %v846
        %v928 = vpack.c.b16 %v849, %v848
        %v929 = vpack.c.b16 %v851, %v850
        %v930 = vpack.c.b16 %v853, %v852
        %v931 = vpack.c.b16 %v855, %v854
        %v932 = vpack.c.b16 %v857, %v856
        %v933 = vpack.c.b16 %v859, %v858
        %v934 = vpack.c.b16 %v861, %v860
        %v935 = vpack.c.b16 %v863, %v862
        %v936 = vpack.c.b16 %v865, %v864
        %v937 = vpack.c.b16 %v867, %v866
        %v938 = vpack.c.b16 %v869, %v868
        %v939 = vpack.c.b16 %v871, %v870
        %v940 = vpack.c.b16 %v873, %v872
        %v941 = vpack.c.b16 %v875, %v874
        %v942 = vpack.c.b16 %v877, %v876
        %v943 = vpack.c.b16 %v879, %v878
        %v944 = vpack.c.b16 %v881, %v880
        %v945 = vpack.c.b16 %v883, %v882
        %v946 = vpack.c.b16 %v885, %v884
        %v947 = vpack.c.b16 %v887, %v886
        %v948 = vpack.c.b16 %v889, %v888
        %v949 = vpack.c.b16 %v891, %v890
        %v950 = vpack.c.b16 %v893, %v892
        %v951 = vpack.c.b16 %v895, %v894
        %v952 = vpack.c.b16 %v897, %v896
        %v953 = vpack.c.b16 %v899, %v898
        %vm1008 = vcmask 1043456
        %vm1009 = vcmask 523268
        %vm1010 = vmor %vm1009, %vm1008
        %1011 = vst.msk [vmem:[#allocation2] sm:$0xff] %vm1010, %v900
        %1012 = vst.msk [vmem:[#allocation2 + $0x8] sm:$0xff] %vm1010, %v901
        %1013 = vst.msk [vmem:[#allocation2 + $0x10] sm:$0xff] %vm1010, %v902
        %1014 = vst.msk [vmem:[#allocation2 + $0x18] sm:$0xff] %vm1010, %v903
        %1015 = vst.msk [vmem:[#allocation2 + $0x20] sm:$0xff] %vm1010, %v904
        %1016 = vst.msk [vmem:[#allocation2 + $0x28] sm:$0xff] %vm1010, %v905
        %1017 = vst.msk [vmem:[#allocation2 + $0x30] sm:$0xff] %vm1010, %v906
        %1018 = vst.msk [vmem:[#allocation2 + $0x38] sm:$0xff] %vm1010, %v907
        %1019 = vst.msk [vmem:[#allocation2 + $0x40] sm:$0xff] %vm1010, %v908
        %1020 = vst.msk [vmem:[#allocation2 + $0x48] sm:$0xff] %vm1010, %v909
        %1021 = vst.msk [vmem:[#allocation2 + $0x50] sm:$0xff] %vm1010, %v910
        %1022 = vst.msk [vmem:[#allocation2 + $0x58] sm:$0xff] %vm1010, %v911
        %1023 = vst.msk [vmem:[#allocation2 + $0x60] sm:$0xff] %vm1010, %v912
        %1024 = vst.msk [vmem:[#allocation2 + $0x68] sm:$0xff] %vm1010, %v913
        %1025 = vst.msk [vmem:[#allocation2 + $0x70] sm:$0xff] %vm1010, %v914
        %1026 = vst.msk [vmem:[#allocation2 + $0x78] sm:$0xff] %vm1010, %v915
        %1027 = vst.msk [vmem:[#allocation2 + $0x80] sm:$0xff] %vm1010, %v916
        %1028 = vst.msk [vmem:[#allocation2 + $0x88] sm:$0xff] %vm1010, %v917
        %1029 = vst.msk [vmem:[#allocation2 + $0x90] sm:$0xff] %vm1010, %v918
        %1030 = vst.msk [vmem:[#allocation2 + $0x98] sm:$0xff] %vm1010, %v919
        %1031 = vst.msk [vmem:[#allocation2 + $0xa0] sm:$0xff] %vm1010, %v920
        %1032 = vst.msk [vmem:[#allocation2 + $0xa8] sm:$0xff] %vm1010, %v921
        %1033 = vst.msk [vmem:[#allocation2 + $0xb0] sm:$0xff] %vm1010, %v922
        %1034 = vst.msk [vmem:[#allocation2 + $0xb8] sm:$0xff] %vm1010, %v923
        %1035 = vst.msk [vmem:[#allocation2 + $0xc0] sm:$0xff] %vm1010, %v924
        %1036 = vst.msk [vmem:[#allocation2 + $0xc8] sm:$0xff] %vm1010, %v925
        %1037 = vst.msk [vmem:[#allocation2 + $0xd0] sm:$0xff] %vm1010, %v926
        %1038 = vst.msk [vmem:[#allocation2 + $0xd8] sm:$0xff] %vm1010, %v927
        %1039 = vst.msk [vmem:[#allocation2 + $0xe0] sm:$0xff] %vm1010, %v928
        %1040 = vst.msk [vmem:[#allocation2 + $0xe8] sm:$0xff] %vm1010, %v929
        %1041 = vst.msk [vmem:[#allocation2 + $0xf0] sm:$0xff] %vm1010, %v930
        %1042 = vst.msk [vmem:[#allocation2 + $0xf8] sm:$0xff] %vm1010, %v931
        %1043 = vst.msk [vmem:[#allocation2 + $0x100] sm:$0xff] %vm1010, %v932
        %1044 = vst.msk [vmem:[#allocation2 + $0x108] sm:$0xff] %vm1010, %v933
        %1045 = vst.msk [vmem:[#allocation2 + $0x110] sm:$0xff] %vm1010, %v934
        %1046 = vst.msk [vmem:[#allocation2 + $0x118] sm:$0xff] %vm1010, %v935
        %1047 = vst.msk [vmem:[#allocation2 + $0x120] sm:$0xff] %vm1010, %v936
        %1048 = vst.msk [vmem:[#allocation2 + $0x128] sm:$0xff] %vm1010, %v937
        %1049 = vst.msk [vmem:[#allocation2 + $0x130] sm:$0xff] %vm1010, %v938
        %1050 = vst.msk [vmem:[#allocation2 + $0x138] sm:$0xff] %vm1010, %v939
        %1051 = vst.msk [vmem:[#allocation2 + $0x140] sm:$0xff] %vm1010, %v940
        %1052 = vst.msk [vmem:[#allocation2 + $0x148] sm:$0xff] %vm1010, %v941
        %1053 = vst.msk [vmem:[#allocation2 + $0x150] sm:$0xff] %vm1010, %v942
        %1054 = vst.msk [vmem:[#allocation2 + $0x158] sm:$0xff] %vm1010, %v943
        %1055 = vst.msk [vmem:[#allocation2 + $0x160] sm:$0xff] %vm1010, %v944
        %1056 = vst.msk [vmem:[#allocation2 + $0x168] sm:$0xff] %vm1010, %v945
        %1057 = vst.msk [vmem:[#allocation2 + $0x170] sm:$0xff] %vm1010, %v946
        %1058 = vst.msk [vmem:[#allocation2 + $0x178] sm:$0xff] %vm1010, %v947
        %1059 = vst.msk [vmem:[#allocation2 + $0x180] sm:$0xff] %vm1010, %v948
        %1060 = vst.msk [vmem:[#allocation2 + $0x188] sm:$0xff] %vm1010, %v949
        %1061 = vst.msk [vmem:[#allocation2 + $0x190] sm:$0xff] %vm1010, %v950
        %1062 = vst.msk [vmem:[#allocation2 + $0x198] sm:$0xff] %vm1010, %v951
        %1063 = vst.msk [vmem:[#allocation2 + $0x1a0] sm:$0xff] %vm1010, %v952
        %1064 = vst.msk [vmem:[#allocation2 + $0x1a8] sm:$0xff] %vm1010, %v953
      $region32: #{resnet_block_forward.2} parent=27 // pred_fallthru
        _
      %v1065 = vld [vmem:[#allocation2] sm:$0xff]
      %v1066 = vld [vmem:[#allocation2 + $0x8] sm:$0xff]
      %v1067 = vld [vmem:[#allocation2 + $0x10] sm:$0xff]
      %v1068 = vld [vmem:[#allocation2 + $0x18] sm:$0xff]
      %v1069 = vld [vmem:[#allocation2 + $0x20] sm:$0xff]
      %v1070 = vld [vmem:[#allocation2 + $0x28] sm:$0xff]
      %v1071 = vld [vmem:[#allocation2 + $0x30] sm:$0xff]
      %v1072 = vld [vmem:[#allocation2 + $0x38] sm:$0xff]
      %v1073 = vld [vmem:[#allocation2 + $0x40] sm:$0xff]
      %v1074 = vld [vmem:[#allocation2 + $0x48] sm:$0xff]
      %v1075 = vld [vmem:[#allocation2 + $0x50] sm:$0xff]
      %v1076 = vld [vmem:[#allocation2 + $0x58] sm:$0xff]
      %v1077 = vld [vmem:[#allocation2 + $0x60] sm:$0xff]
      %v1078 = vld [vmem:[#allocation2 + $0x68] sm:$0xff]
      %v1079 = vld [vmem:[#allocation2 + $0x70] sm:$0xff]
      %v1080 = vld [vmem:[#allocation2 + $0x78] sm:$0xff]
      %v1081 = vld [vmem:[#allocation2 + $0x80] sm:$0xff]
      %v1082 = vld [vmem:[#allocation2 + $0x88] sm:$0xff]
      %v1083 = vld [vmem:[#allocation2 + $0x90] sm:$0xff]
      %v1084 = vld [vmem:[#allocation2 + $0x98] sm:$0xff]
      %v1085 = vld [vmem:[#allocation2 + $0xa0] sm:$0xff]
      %v1086 = vld [vmem:[#allocation2 + $0xa8] sm:$0xff]
      %v1087 = vld [vmem:[#allocation2 + $0xb0] sm:$0xff]
      %v1088 = vld [vmem:[#allocation2 + $0xb8] sm:$0xff]
      %v1089 = vld [vmem:[#allocation2 + $0xc0] sm:$0xff]
      %v1090 = vld [vmem:[#allocation2 + $0xc8] sm:$0xff]
      %v1091 = vld [vmem:[#allocation2 + $0xd0] sm:$0xff]
      %v1092 = vld [vmem:[#allocation2 + $0xd8] sm:$0xff]
      %v1093 = vld [vmem:[#allocation2 + $0xe0] sm:$0xff]
      %v1094 = vld [vmem:[#allocation2 + $0xe8] sm:$0xff]
      %v1095 = vld [vmem:[#allocation2 + $0xf0] sm:$0xff]
      %v1096 = vld [vmem:[#allocation2 + $0xf8] sm:$0xff]
      %v1097 = vld [vmem:[#allocation2 + $0x100] sm:$0xff]
      %v1098 = vld [vmem:[#allocation2 + $0x108] sm:$0xff]
      %v1099 = vld [vmem:[#allocation2 + $0x110] sm:$0xff]
      %v1100 = vld [vmem:[#allocation2 + $0x118] sm:$0xff]
      %v1101 = vld [vmem:[#allocation2 + $0x120] sm:$0xff]
      %v1102 = vld [vmem:[#allocation2 + $0x128] sm:$0xff]
      %v1103 = vld [vmem:[#allocation2 + $0x130] sm:$0xff]
      %v1104 = vld [vmem:[#allocation2 + $0x138] sm:$0xff]
      %v1105 = vld [vmem:[#allocation2 + $0x140] sm:$0xff]
      %v1106 = vld [vmem:[#allocation2 + $0x148] sm:$0xff]
      %v1107 = vld [vmem:[#allocation2 + $0x150] sm:$0xff]
      %v1108 = vld [vmem:[#allocation2 + $0x158] sm:$0xff]
      %v1109 = vld [vmem:[#allocation2 + $0x160] sm:$0xff]
      %v1110 = vld [vmem:[#allocation2 + $0x168] sm:$0xff]
      %v1111 = vld [vmem:[#allocation2 + $0x170] sm:$0xff]
      %v1112 = vld [vmem:[#allocation2 + $0x178] sm:$0xff]
      %v1113 = vld [vmem:[%s172] sm:$0xf]
      %v1114 = vld [vmem:[%s172 + $0x4] sm:$0xf]
      %v1115 = vld [vmem:[%s172 + $0x8] sm:$0xf]
      %v1116 = vld [vmem:[%s172 + $0xc] sm:$0xf]
      %v1117 = vld [vmem:[%s172 + $0x10] sm:$0xf]
      %v1118 = vld [vmem:[%s172 + $0x14] sm:$0xf]
      %v1119 = vld [vmem:[%s172 + $0x18] sm:$0xf]
      %v1120 = vld [vmem:[%s172 + $0x1c] sm:$0xf]
      %v1121 = vld [vmem:[%s172 + $0x20] sm:$0xf]
      %v1122 = vld [vmem:[%s172 + $0x24] sm:$0xf]
      %v1123 = vld [vmem:[%s172 + $0x28] sm:$0xf]
      %v1124 = vld [vmem:[%s172 + $0x2c] sm:$0xf]
      %v1125 = vld [vmem:[%s172 + $0x30] sm:$0xf]
      %v1126 = vld [vmem:[%s172 + $0x34] sm:$0xf]
      %v1127 = vld [vmem:[%s172 + $0x38] sm:$0xf]
      %v1128 = vld [vmem:[%s172 + $0x3c] sm:$0xf]
      %v1129 = vld [vmem:[%s172 + $0x40] sm:$0xf]
      %v1130 = vld [vmem:[%s172 + $0x44] sm:$0xf]
      %v1131 = vld [vmem:[%s172 + $0x48] sm:$0xf]
      %v1132 = vld [vmem:[%s172 + $0x4c] sm:$0xf]
      %v1133 = vld [vmem:[%s172 + $0x50] sm:$0xf]
      %v1134 = vld [vmem:[%s172 + $0x54] sm:$0xf]
      %v1135 = vld [vmem:[%s172 + $0x58] sm:$0xf]
      %v1136 = vld [vmem:[%s172 + $0x5c] sm:$0xf]
      %v1137 = vld [vmem:[#allocation2 + $0x180] sm:$0xff]
      %v1138 = vld [vmem:[#allocation2 + $0x188] sm:$0xff]
      %v1139 = vld [vmem:[#allocation2 + $0x190] sm:$0xff]
      %s1140 = scalar_lea.vmem %s172, 96
      %v1141 = vld [vmem:[%s1140] sm:$0xf]
      %v1142 = vld [vmem:[%s1140 + $0x4] sm:$0xf]
      %v1143 = vld [vmem:[%s1140 + $0x8] sm:$0xf]
      %v1144 = vld [vmem:[%s1140 + $0xc] sm:$0xf]
      %v1145 = vld [vmem:[%s1140 + $0x10] sm:$0xf]
      %v1146 = vld [vmem:[%s1140 + $0x14] sm:$0xf]
      %v1147 = vld [vmem:[%s1140 + $0x18] sm:$0xf]
      %v1148 = vld [vmem:[%s1140 + $0x1c] sm:$0xf]
      %v1149 = vld [vmem:[%s1140 + $0x20] sm:$0xf]
      %v1150 = vld [vmem:[%s1140 + $0x24] sm:$0xf]
      %v1151 = vld [vmem:[%s1140 + $0x28] sm:$0xf]
      %v1152 = vld [vmem:[%s1140 + $0x2c] sm:$0xf]
      %v1153 = vld [vmem:[%s1140 + $0x30] sm:$0xf]
      %v1154 = vld [vmem:[%s1140 + $0x34] sm:$0xf]
      %v1155 = vld [vmem:[%s1140 + $0x38] sm:$0xf]
      %v1156 = vld [vmem:[%s1140 + $0x3c] sm:$0xf]
      %v1157 = vld [vmem:[%s1140 + $0x40] sm:$0xf]
      %v1158 = vld [vmem:[%s1140 + $0x44] sm:$0xf]
      %v1159 = vld [vmem:[%s1140 + $0x48] sm:$0xf]
      %v1160 = vld [vmem:[%s1140 + $0x4c] sm:$0xf]
      %v1161 = vld [vmem:[%s1140 + $0x50] sm:$0xf]
      %v1162 = vld [vmem:[%s1140 + $0x54] sm:$0xf]
      %v1163 = vld [vmem:[%s1140 + $0x58] sm:$0xf]
      %v1164 = vld [vmem:[%s1140 + $0x5c] sm:$0xf]
      %v1213 = vunpack.c.l.b16 %v1068
      %v1214 = vunpack.c.h.b16 %v1068
      %v1215 = vunpack.c.l.b16 %v1069
      %v1216 = vunpack.c.h.b16 %v1069
      %v1217 = vunpack.c.l.b16 %v1070
      %v1218 = vunpack.c.h.b16 %v1070
      %v1219 = vunpack.c.l.b16 %v1071
      %v1220 = vunpack.c.h.b16 %v1071
      %v1221 = vunpack.c.l.b16 %v1072
      %v1222 = vunpack.c.h.b16 %v1072
      %v1223 = vunpack.c.l.b16 %v1073
      %v1224 = vunpack.c.h.b16 %v1073
      %v1225 = vunpack.c.l.b16 %v1074
      %v1226 = vunpack.c.h.b16 %v1074
      %v1227 = vunpack.c.l.b16 %v1075
      %v1228 = vunpack.c.h.b16 %v1075
      %v1229 = vunpack.c.l.b16 %v1076
      %v1230 = vunpack.c.h.b16 %v1076
      %v1231 = vunpack.c.l.b16 %v1077
      %v1232 = vunpack.c.h.b16 %v1077
      %v1233 = vunpack.c.l.b16 %v1078
      %v1234 = vunpack.c.h.b16 %v1078
      %v1235 = vunpack.c.l.b16 %v1079
      %v1236 = vunpack.c.h.b16 %v1079
      %v1237 = vunpack.c.l.b16 %v1080
      %v1238 = vunpack.c.h.b16 %v1080
      %v1239 = vunpack.c.l.b16 %v1081
      %v1240 = vunpack.c.h.b16 %v1081
      %v1241 = vunpack.c.l.b16 %v1082
      %v1242 = vunpack.c.h.b16 %v1082
      %v1243 = vunpack.c.l.b16 %v1083
      %v1244 = vunpack.c.h.b16 %v1083
      %v1245 = vunpack.c.l.b16 %v1084
      %v1246 = vunpack.c.h.b16 %v1084
      %v1247 = vunpack.c.l.b16 %v1085
      %v1248 = vunpack.c.h.b16 %v1085
      %v1249 = vunpack.c.l.b16 %v1086
      %v1250 = vunpack.c.h.b16 %v1086
      %v1251 = vunpack.c.l.b16 %v1087
      %v1252 = vunpack.c.h.b16 %v1087
      %v1253 = vunpack.c.l.b16 %v1088
      %v1254 = vunpack.c.h.b16 %v1088
      %v1255 = vunpack.c.l.b16 %v1089
      %v1256 = vunpack.c.h.b16 %v1089
      %v1257 = vunpack.c.l.b16 %v1090
      %v1258 = vunpack.c.h.b16 %v1090
      %v1259 = vunpack.c.l.b16 %v1091
      %v1260 = vunpack.c.h.b16 %v1091
      %v1261 = vunpack.c.l.b16 %v1092
      %v1262 = vunpack.c.h.b16 %v1092
      %v1263 = vunpack.c.l.b16 %v1093
      %v1264 = vunpack.c.h.b16 %v1093
      %v1265 = vunpack.c.l.b16 %v1094
      %v1266 = vunpack.c.h.b16 %v1094
      %v1267 = vunpack.c.l.b16 %v1095
      %v1268 = vunpack.c.h.b16 %v1095
      %v1269 = vunpack.c.l.b16 %v1096
      %v1270 = vunpack.c.h.b16 %v1096
      %v1271 = vunpack.c.l.b16 %v1097
      %v1272 = vunpack.c.h.b16 %v1097
      %v1273 = vunpack.c.l.b16 %v1098
      %v1274 = vunpack.c.h.b16 %v1098
      %v1275 = vunpack.c.l.b16 %v1099
      %v1276 = vunpack.c.h.b16 %v1099
      %v1277 = vunpack.c.l.b16 %v1100
      %v1278 = vunpack.c.h.b16 %v1100
      %v1279 = vunpack.c.l.b16 %v1101
      %v1280 = vunpack.c.h.b16 %v1101
      %v1281 = vunpack.c.l.b16 %v1102
      %v1282 = vunpack.c.h.b16 %v1102
      %v1283 = vunpack.c.l.b16 %v1103
      %v1284 = vunpack.c.h.b16 %v1103
      %v1285 = vunpack.c.l.b16 %v1104
      %v1286 = vunpack.c.h.b16 %v1104
      %v1287 = vunpack.c.l.b16 %v1105
      %v1288 = vunpack.c.h.b16 %v1105
      %v1289 = vunpack.c.l.b16 %v1106
      %v1290 = vunpack.c.h.b16 %v1106
      %v1291 = vunpack.c.l.b16 %v1107
      %v1292 = vunpack.c.h.b16 %v1107
      %v1293 = vunpack.c.l.b16 %v1108
      %v1294 = vunpack.c.h.b16 %v1108
      %v1295 = vunpack.c.l.b16 %v1109
      %v1296 = vunpack.c.h.b16 %v1109
      %v1297 = vunpack.c.l.b16 %v1110
      %v1298 = vunpack.c.h.b16 %v1110
      %v1299 = vunpack.c.l.b16 %v1111
      %v1300 = vunpack.c.h.b16 %v1111
      %v1301 = vunpack.c.l.b16 %v1112
      %v1302 = vunpack.c.h.b16 %v1112
      %v1303 = vunpack.c.l.b16 %v1137
      %v1304 = vunpack.c.h.b16 %v1137
      %v1305 = vunpack.c.l.b16 %v1138
      %v1306 = vunpack.c.h.b16 %v1138
      %v1307 = vunpack.c.l.b16 %v1139
      %v1308 = vunpack.c.h.b16 %v1139
      %v1309 = vpack.c.b16 %v1215, %v1213
      %v1310 = vpack.c.b16 %v1216, %v1214
      %v1311 = vpack.c.b16 %v1219, %v1217
      %v1312 = vpack.c.b16 %v1220, %v1218
      %v1313 = vpack.c.b16 %v1223, %v1221
      %v1314 = vpack.c.b16 %v1224, %v1222
      %v1315 = vpack.c.b16 %v1227, %v1225
      %v1316 = vpack.c.b16 %v1228, %v1226
      %v1317 = vpack.c.b16 %v1231, %v1229
      %v1318 = vpack.c.b16 %v1232, %v1230
      %v1319 = vpack.c.b16 %v1235, %v1233
      %v1320 = vpack.c.b16 %v1236, %v1234
      %v1321 = vpack.c.b16 %v1239, %v1237
      %v1322 = vpack.c.b16 %v1240, %v1238
      %v1323 = vpack.c.b16 %v1243, %v1241
      %v1324 = vpack.c.b16 %v1244, %v1242
      %v1325 = vpack.c.b16 %v1247, %v1245
      %v1326 = vpack.c.b16 %v1248, %v1246
      %v1327 = vpack.c.b16 %v1251, %v1249
      %v1328 = vpack.c.b16 %v1252, %v1250
      %v1329 = vpack.c.b16 %v1255, %v1253
      %v1330 = vpack.c.b16 %v1256, %v1254
      %v1331 = vpack.c.b16 %v1259, %v1257
      %v1332 = vpack.c.b16 %v1260, %v1258
      %v1333 = vpack.c.b16 %v1263, %v1261
      %v1334 = vpack.c.b16 %v1264, %v1262
      %v1335 = vpack.c.b16 %v1267, %v1265
      %v1336 = vpack.c.b16 %v1268, %v1266
      %v1337 = vpack.c.b16 %v1271, %v1269
      %v1338 = vpack.c.b16 %v1272, %v1270
      %v1339 = vpack.c.b16 %v1275, %v1273
      %v1340 = vpack.c.b16 %v1276, %v1274
      %v1341 = vpack.c.b16 %v1279, %v1277
      %v1342 = vpack.c.b16 %v1280, %v1278
      %v1343 = vpack.c.b16 %v1283, %v1281
      %v1344 = vpack.c.b16 %v1284, %v1282
      %v1345 = vpack.c.b16 %v1287, %v1285
      %v1346 = vpack.c.b16 %v1288, %v1286
      %v1347 = vpack.c.b16 %v1291, %v1289
      %v1348 = vpack.c.b16 %v1292, %v1290
      %v1349 = vpack.c.b16 %v1295, %v1293
      %v1350 = vpack.c.b16 %v1296, %v1294
      %v1351 = vpack.c.b16 %v1299, %v1297
      %v1352 = vpack.c.b16 %v1300, %v1298
      %v1353 = vpack.c.b16 %v1303, %v1301
      %v1354 = vpack.c.b16 %v1304, %v1302
      %v1355 = vpack.c.b16 %v1307, %v1305
      %v1356 = vpack.c.b16 %v1308, %v1306
      %v1405 = vunpack.c.l.b16 %v1141
      %v1406 = vunpack.c.l.b16 %v1142
      %v1407 = vunpack.c.l.b16 %v1143
      %v1408 = vunpack.c.l.b16 %v1144
      %v1409 = vunpack.c.l.b16 %v1145
      %v1410 = vunpack.c.l.b16 %v1146
      %v1411 = vunpack.c.l.b16 %v1147
      %v1412 = vunpack.c.l.b16 %v1148
      %v1413 = vunpack.c.l.b16 %v1149
      %v1414 = vunpack.c.l.b16 %v1150
      %v1415 = vunpack.c.l.b16 %v1151
      %v1416 = vunpack.c.l.b16 %v1152
      %v1417 = vunpack.c.l.b16 %v1153
      %v1418 = vunpack.c.l.b16 %v1154
      %v1419 = vunpack.c.l.b16 %v1155
      %v1420 = vunpack.c.l.b16 %v1156
      %v1421 = vunpack.c.l.b16 %v1157
      %v1422 = vunpack.c.l.b16 %v1158
      %v1423 = vunpack.c.l.b16 %v1159
      %v1424 = vunpack.c.l.b16 %v1160
      %v1425 = vunpack.c.l.b16 %v1161
      %v1426 = vunpack.c.l.b16 %v1162
      %v1427 = vunpack.c.l.b16 %v1163
      %v1428 = vunpack.c.l.b16 %v1164
      %v1429 = vpack.c.b16 %v1406, %v1405
      %v1430 = vpack.c.b16 %v1408, %v1407
      %v1431 = vpack.c.b16 %v1410, %v1409
      %v1432 = vpack.c.b16 %v1412, %v1411
      %v1433 = vpack.c.b16 %v1414, %v1413
      %v1434 = vpack.c.b16 %v1416, %v1415
      %v1435 = vpack.c.b16 %v1418, %v1417
      %v1436 = vpack.c.b16 %v1420, %v1419
      %v1437 = vpack.c.b16 %v1422, %v1421
      %v1438 = vpack.c.b16 %v1424, %v1423
      %v1439 = vpack.c.b16 %v1426, %v1425
      %v1440 = vpack.c.b16 %v1428, %v1427
      %vm1453 = vcmask 523264
      %v1455 = vsel %vm1453, %v1310, 0
      %v1458 = vsel %vm1453, %v1312, 0
      %v1461 = vsel %vm1453, %v1314, 0
      %v1464 = vsel %vm1453, %v1316, 0
      %v1467 = vsel %vm1453, %v1318, 0
      %v1470 = vsel %vm1453, %v1320, 0
      %v1473 = vsel %vm1453, %v1322, 0
      %v1476 = vsel %vm1453, %v1324, 0
      %v1479 = vsel %vm1453, %v1326, 0
      %v1482 = vsel %vm1453, %v1328, 0
      %v1485 = vsel %vm1453, %v1330, 0
      %v1488 = vsel %vm1453, %v1332, 0
      %v1491 = vsel %vm1453, %v1334, 0
      %v1494 = vsel %vm1453, %v1336, 0
      %v1497 = vsel %vm1453, %v1338, 0
      %v1500 = vsel %vm1453, %v1340, 0
      %v1503 = vsel %vm1453, %v1342, 0
      %v1506 = vsel %vm1453, %v1344, 0
      %v1509 = vsel %vm1453, %v1346, 0
      %v1512 = vsel %vm1453, %v1348, 0
      %v1515 = vsel %vm1453, %v1350, 0
      %v1518 = vsel %vm1453, %v1352, 0
      %v1521 = vsel %vm1453, %v1354, 0
      %v1524 = vsel %vm1453, %v1356, 0
      %1526 = vmatprep.subr.bf16.mxu0 0
      %1527 = vmatpush1.bf16.msra.mxu0 %v1436
      %1528 = vmatprep.subr.bf16.mxu0 0
      %1529 = vmatpush1.bf16.msra.mxu0 %v1435
      %1530 = vmatprep.subr.bf16.mxu0 0
      %1531 = vmatpush1.bf16.msra.mxu0 %v1434
      %1532 = vmatprep.subr.bf16.mxu0 0
      %1533 = vmatpush1.bf16.msra.mxu0 %v1433
      %1534 = vmatprep.subr.bf16.mxu0 0
      %1535 = vmatpush1.bf16.msra.mxu0 %v1432
      %1536 = vmatprep.subr.bf16.mxu0 0
      %1537 = vmatpush1.bf16.msra.mxu0 %v1431
      %1538 = vmatprep.subr.bf16.mxu0 0
      %1539 = vmatpush1.bf16.msra.mxu0 %v1430
      %1540 = vmatprep.subr.bf16.mxu0 0
      %1541 = vmatpush1.bf16.msra.mxu0 %v1429
      %1542 = vmatprep.subr.bf16.mxu0 0
      %1543 = vmatpush2.bf16.msra.mxu0 0
      %1544 = vmatprep.subr.bf16.mxu0 0
      %1545 = vmatpush2.bf16.msra.mxu0 0
      %1546 = vmatprep.subr.bf16.mxu0 0
      %1547 = vmatpush2.bf16.msra.mxu0 0
      %1548 = vmatprep.subr.bf16.mxu0 0
      %1549 = vmatpush2.bf16.msra.mxu0 0
      %1550 = vmatprep.subr.bf16.mxu0 0
      %1551 = vmatpush2.bf16.msra.mxu0 %v1440
      %1552 = vmatprep.subr.bf16.mxu0 0
      %1553 = vmatpush2.bf16.msra.mxu0 %v1439
      %1554 = vmatprep.subr.bf16.mxu0 0
      %1555 = vmatpush2.bf16.msra.mxu0 %v1438
      %1556 = vmatprep.subr.bf16.mxu0 0
      %1557 = vmatpush2.bf16.msra.mxu0 %v1437
      %1558 = vmatprep.mubr.bf16.mxu0 %v1455
      %1559 = vmatmul.mubr.bf16.gmra.mxu0 %v1309
      %v1560 = vpop.f32.mrf.mxu0
      %v1561 = vadd.f32 0.0, %v1560
      %v1562 = vpop.f32.mrf.mxu0
      %v1563 = vpop.f32.mrf.mxu0
      %v1564 = vadd.f32 0.0, %v1563
      %v1565 = vpop.f32.mrf.mxu0
      %1566 = vmatprep.mubr.bf16.mxu0 %v1458
      %1567 = vmatmul.mubr.bf16.gmra.mxu0 %v1311
      %v1568 = vpop.f32.mrf.mxu0
      %v1569 = vadd.f32 0.0, %v1568
      %v1570 = vpop.f32.mrf.mxu0
      %v1571 = vpop.f32.mrf.mxu0
      %v1572 = vadd.f32 0.0, %v1571
      %v1573 = vpop.f32.mrf.mxu0
      %1574 = vmatprep.mubr.bf16.mxu0 %v1461
      %1575 = vmatmul.mubr.bf16.gmra.mxu0 %v1313
      %v1576 = vpop.f32.mrf.mxu0
      %v1577 = vadd.f32 0.0, %v1576
      %v1578 = vpop.f32.mrf.mxu0
      %v1579 = vpop.f32.mrf.mxu0
      %v1580 = vadd.f32 0.0, %v1579
      %v1581 = vpop.f32.mrf.mxu0
      %1582 = vmatprep.mubr.bf16.mxu0 %v1464
      %1583 = vmatmul.mubr.bf16.gmra.mxu0 %v1315
      %v1584 = vpop.f32.mrf.mxu0
      %v1585 = vadd.f32 0.0, %v1584
      %v1586 = vpop.f32.mrf.mxu0
      %v1587 = vpop.f32.mrf.mxu0
      %v1588 = vadd.f32 0.0, %v1587
      %v1589 = vpop.f32.mrf.mxu0
      %1590 = vmatprep.mubr.bf16.mxu0 %v1467
      %1591 = vmatmul.mubr.bf16.gmra.mxu0 %v1317
      %v1592 = vpop.f32.mrf.mxu0
      %v1593 = vadd.f32 0.0, %v1592
      %v1594 = vpop.f32.mrf.mxu0
      %v1595 = vpop.f32.mrf.mxu0
      %v1596 = vadd.f32 0.0, %v1595
      %v1597 = vpop.f32.mrf.mxu0
      %1598 = vmatprep.mubr.bf16.mxu0 %v1470
      %1599 = vmatmul.mubr.bf16.gmra.mxu0 %v1319
      %v1600 = vpop.f32.mrf.mxu0
      %v1601 = vadd.f32 0.0, %v1600
      %v1602 = vpop.f32.mrf.mxu0
      %v1603 = vpop.f32.mrf.mxu0
      %v1604 = vadd.f32 0.0, %v1603
      %v1605 = vpop.f32.mrf.mxu0
      %1606 = vmatprep.mubr.bf16.mxu0 %v1473
      %1607 = vmatmul.mubr.bf16.gmra.mxu0 %v1321
      %v1608 = vpop.f32.mrf.mxu0
      %v1609 = vadd.f32 0.0, %v1608
      %v1610 = vpop.f32.mrf.mxu0
      %v1611 = vpop.f32.mrf.mxu0
      %v1612 = vadd.f32 0.0, %v1611
      %v1613 = vpop.f32.mrf.mxu0
      %1614 = vmatprep.mubr.bf16.mxu0 %v1476
      %1615 = vmatmul.mubr.bf16.gmra.mxu0 %v1323
      %v1616 = vpop.f32.mrf.mxu0
      %v1617 = vadd.f32 0.0, %v1616
      %v1618 = vpop.f32.mrf.mxu0
      %v1619 = vpop.f32.mrf.mxu0
      %v1620 = vadd.f32 0.0, %v1619
      %v1621 = vpop.f32.mrf.mxu0
      %1622 = vmatprep.mubr.bf16.mxu0 %v1479
      %1623 = vmatmul.mubr.bf16.gmra.mxu0 %v1325
      %v1624 = vpop.f32.mrf.mxu0
      %v1625 = vadd.f32 0.0, %v1624
      %v1626 = vpop.f32.mrf.mxu0
      %v1627 = vpop.f32.mrf.mxu0
      %v1628 = vadd.f32 0.0, %v1627
      %v1629 = vpop.f32.mrf.mxu0
      %1630 = vmatprep.mubr.bf16.mxu0 %v1482
      %1631 = vmatmul.mubr.bf16.gmra.mxu0 %v1327
      %v1632 = vpop.f32.mrf.mxu0
      %v1633 = vadd.f32 0.0, %v1632
      %v1634 = vpop.f32.mrf.mxu0
      %v1635 = vpop.f32.mrf.mxu0
      %v1636 = vadd.f32 0.0, %v1635
      %v1637 = vpop.f32.mrf.mxu0
      %1638 = vmatprep.mubr.bf16.mxu0 %v1485
      %1639 = vmatmul.mubr.bf16.gmra.mxu0 %v1329
      %v1640 = vpop.f32.mrf.mxu0
      %v1641 = vadd.f32 0.0, %v1640
      %v1642 = vpop.f32.mrf.mxu0
      %v1643 = vpop.f32.mrf.mxu0
      %v1644 = vadd.f32 0.0, %v1643
      %v1645 = vpop.f32.mrf.mxu0
      %1646 = vmatprep.mubr.bf16.mxu0 %v1488
      %1647 = vmatmul.mubr.bf16.gmra.mxu0 %v1331
      %v1648 = vpop.f32.mrf.mxu0
      %v1649 = vadd.f32 0.0, %v1648
      %v1650 = vpop.f32.mrf.mxu0
      %v1651 = vpop.f32.mrf.mxu0
      %v1652 = vadd.f32 0.0, %v1651
      %v1653 = vpop.f32.mrf.mxu0
      %1654 = vmatprep.mubr.bf16.mxu0 %v1491
      %1655 = vmatmul.mubr.bf16.gmra.mxu0 %v1333
      %v1656 = vpop.f32.mrf.mxu0
      %v1657 = vadd.f32 0.0, %v1656
      %v1658 = vpop.f32.mrf.mxu0
      %v1659 = vpop.f32.mrf.mxu0
      %v1660 = vadd.f32 0.0, %v1659
      %v1661 = vpop.f32.mrf.mxu0
      %1662 = vmatprep.mubr.bf16.mxu0 %v1494
      %1663 = vmatmul.mubr.bf16.gmra.mxu0 %v1335
      %v1664 = vpop.f32.mrf.mxu0
      %v1665 = vadd.f32 0.0, %v1664
      %v1666 = vpop.f32.mrf.mxu0
      %v1667 = vpop.f32.mrf.mxu0
      %v1668 = vadd.f32 0.0, %v1667
      %v1669 = vpop.f32.mrf.mxu0
      %1670 = vmatprep.mubr.bf16.mxu0 %v1497
      %1671 = vmatmul.mubr.bf16.gmra.mxu0 %v1337
      %v1672 = vpop.f32.mrf.mxu0
      %v1673 = vadd.f32 0.0, %v1672
      %v1674 = vpop.f32.mrf.mxu0
      %v1675 = vpop.f32.mrf.mxu0
      %v1676 = vadd.f32 0.0, %v1675
      %v1677 = vpop.f32.mrf.mxu0
      %1678 = vmatprep.mubr.bf16.mxu0 %v1500
      %1679 = vmatmul.mubr.bf16.gmra.mxu0 %v1339
      %v1680 = vpop.f32.mrf.mxu0
      %v1681 = vadd.f32 0.0, %v1680
      %v1682 = vpop.f32.mrf.mxu0
      %v1683 = vpop.f32.mrf.mxu0
      %v1684 = vadd.f32 0.0, %v1683
      %v1685 = vpop.f32.mrf.mxu0
      %1686 = vmatprep.mubr.bf16.mxu0 %v1503
      %1687 = vmatmul.mubr.bf16.gmra.mxu0 %v1341
      %v1688 = vpop.f32.mrf.mxu0
      %v1689 = vadd.f32 0.0, %v1688
      %v1690 = vpop.f32.mrf.mxu0
      %v1691 = vpop.f32.mrf.mxu0
      %v1692 = vadd.f32 0.0, %v1691
      %v1693 = vpop.f32.mrf.mxu0
      %1694 = vmatprep.mubr.bf16.mxu0 %v1506
      %1695 = vmatmul.mubr.bf16.gmra.mxu0 %v1343
      %v1696 = vpop.f32.mrf.mxu0
      %v1697 = vadd.f32 0.0, %v1696
      %v1698 = vpop.f32.mrf.mxu0
      %v1699 = vpop.f32.mrf.mxu0
      %v1700 = vadd.f32 0.0, %v1699
      %v1701 = vpop.f32.mrf.mxu0
      %1702 = vmatprep.mubr.bf16.mxu0 %v1509
      %1703 = vmatmul.mubr.bf16.gmra.mxu0 %v1345
      %v1704 = vpop.f32.mrf.mxu0
      %v1705 = vadd.f32 0.0, %v1704
      %v1706 = vpop.f32.mrf.mxu0
      %v1707 = vpop.f32.mrf.mxu0
      %v1708 = vadd.f32 0.0, %v1707
      %v1709 = vpop.f32.mrf.mxu0
      %1710 = vmatprep.mubr.bf16.mxu0 %v1512
      %1711 = vmatmul.mubr.bf16.gmra.mxu0 %v1347
      %v1712 = vpop.f32.mrf.mxu0
      %v1713 = vadd.f32 0.0, %v1712
      %v1714 = vpop.f32.mrf.mxu0
      %v1715 = vpop.f32.mrf.mxu0
      %v1716 = vadd.f32 0.0, %v1715
      %v1717 = vpop.f32.mrf.mxu0
      %1718 = vmatprep.mubr.bf16.mxu0 %v1515
      %1719 = vmatmul.mubr.bf16.gmra.mxu0 %v1349
      %v1720 = vpop.f32.mrf.mxu0
      %v1721 = vadd.f32 0.0, %v1720
      %v1722 = vpop.f32.mrf.mxu0
      %v1723 = vpop.f32.mrf.mxu0
      %v1724 = vadd.f32 0.0, %v1723
      %v1725 = vpop.f32.mrf.mxu0
      %1726 = vmatprep.mubr.bf16.mxu0 %v1518
      %1727 = vmatmul.mubr.bf16.gmra.mxu0 %v1351
      %v1728 = vpop.f32.mrf.mxu0
      %v1729 = vadd.f32 0.0, %v1728
      %v1730 = vpop.f32.mrf.mxu0
      %v1731 = vpop.f32.mrf.mxu0
      %v1732 = vadd.f32 0.0, %v1731
      %v1733 = vpop.f32.mrf.mxu0
      %1734 = vmatprep.mubr.bf16.mxu0 %v1521
      %1735 = vmatmul.mubr.bf16.gmra.mxu0 %v1353
      %v1736 = vpop.f32.mrf.mxu0
      %v1737 = vadd.f32 0.0, %v1736
      %v1738 = vpop.f32.mrf.mxu0
      %v1739 = vpop.f32.mrf.mxu0
      %v1740 = vadd.f32 0.0, %v1739
      %v1741 = vpop.f32.mrf.mxu0
      %1742 = vmatprep.mubr.bf16.mxu0 %v1524
      %1743 = vmatmul.mubr.bf16.gmra.mxu0 %v1355
      %v1744 = vpop.f32.mrf.mxu0
      %v1745 = vadd.f32 0.0, %v1744
      %v1746 = vpop.f32.mrf.mxu0
      %v1747 = vpop.f32.mrf.mxu0
      %v1748 = vadd.f32 0.0, %v1747
      %v1749 = vpop.f32.mrf.mxu0
      %1750 = vdwg.mxu0
      %v1754 = vunpack.c.l.b16 %v1065
      %v1755 = vunpack.c.h.b16 %v1065
      %v1756 = vunpack.c.l.b16 %v1066
      %v1757 = vunpack.c.h.b16 %v1066
      %v1758 = vunpack.c.l.b16 %v1067
      %v1759 = vunpack.c.h.b16 %v1067
      %v1760 = vpack.c.b16 %v1756, %v1754
      %v1761 = vpack.c.b16 %v1757, %v1755
      %v1762 = vpack.c.b16 %v1213, %v1758
      %v1763 = vpack.c.b16 %v1214, %v1759
      %v1764 = vpack.c.b16 %v1217, %v1215
      %v1765 = vpack.c.b16 %v1218, %v1216
      %v1766 = vpack.c.b16 %v1221, %v1219
      %v1767 = vpack.c.b16 %v1222, %v1220
      %v1768 = vpack.c.b16 %v1225, %v1223
      %v1769 = vpack.c.b16 %v1226, %v1224
      %v1770 = vpack.c.b16 %v1229, %v1227
      %v1771 = vpack.c.b16 %v1230, %v1228
      %v1772 = vpack.c.b16 %v1233, %v1231
      %v1773 = vpack.c.b16 %v1234, %v1232
      %v1774 = vpack.c.b16 %v1237, %v1235
      %v1775 = vpack.c.b16 %v1238, %v1236
      %v1776 = vpack.c.b16 %v1241, %v1239
      %v1777 = vpack.c.b16 %v1242, %v1240
      %v1778 = vpack.c.b16 %v1245, %v1243
      %v1779 = vpack.c.b16 %v1246, %v1244
      %v1780 = vpack.c.b16 %v1249, %v1247
      %v1781 = vpack.c.b16 %v1250, %v1248
      %v1782 = vpack.c.b16 %v1253, %v1251
      %v1783 = vpack.c.b16 %v1254, %v1252
      %v1784 = vpack.c.b16 %v1257, %v1255
      %v1785 = vpack.c.b16 %v1258, %v1256
      %v1786 = vpack.c.b16 %v1261, %v1259
      %v1787 = vpack.c.b16 %v1262, %v1260
      %v1788 = vpack.c.b16 %v1265, %v1263
      %v1789 = vpack.c.b16 %v1266, %v1264
      %v1790 = vpack.c.b16 %v1269, %v1267
      %v1791 = vpack.c.b16 %v1270, %v1268
      %v1792 = vpack.c.b16 %v1273, %v1271
      %v1793 = vpack.c.b16 %v1274, %v1272
      %v1794 = vpack.c.b16 %v1277, %v1275
      %v1795 = vpack.c.b16 %v1278, %v1276
      %v1796 = vpack.c.b16 %v1281, %v1279
      %v1797 = vpack.c.b16 %v1282, %v1280
      %v1798 = vpack.c.b16 %v1285, %v1283
      %v1799 = vpack.c.b16 %v1286, %v1284
      %v1800 = vpack.c.b16 %v1289, %v1287
      %v1801 = vpack.c.b16 %v1290, %v1288
      %v1802 = vpack.c.b16 %v1293, %v1291
      %v1803 = vpack.c.b16 %v1294, %v1292
      %v1804 = vpack.c.b16 %v1297, %v1295
      %v1805 = vpack.c.b16 %v1298, %v1296
      %v1806 = vpack.c.b16 %v1301, %v1299
      %v1807 = vpack.c.b16 %v1302, %v1300
      %v1856 = vunpack.c.l.b16 %v1113
      %v1857 = vunpack.c.l.b16 %v1114
      %v1858 = vunpack.c.l.b16 %v1115
      %v1859 = vunpack.c.l.b16 %v1116
      %v1860 = vunpack.c.l.b16 %v1117
      %v1861 = vunpack.c.l.b16 %v1118
      %v1862 = vunpack.c.l.b16 %v1119
      %v1863 = vunpack.c.l.b16 %v1120
      %v1864 = vunpack.c.l.b16 %v1121
      %v1865 = vunpack.c.l.b16 %v1122
      %v1866 = vunpack.c.l.b16 %v1123
      %v1867 = vunpack.c.l.b16 %v1124
      %v1868 = vunpack.c.l.b16 %v1125
      %v1869 = vunpack.c.l.b16 %v1126
      %v1870 = vunpack.c.l.b16 %v1127
      %v1871 = vunpack.c.l.b16 %v1128
      %v1872 = vunpack.c.l.b16 %v1129
      %v1873 = vunpack.c.l.b16 %v1130
      %v1874 = vunpack.c.l.b16 %v1131
      %v1875 = vunpack.c.l.b16 %v1132
      %v1876 = vunpack.c.l.b16 %v1133
      %v1877 = vunpack.c.l.b16 %v1134
      %v1878 = vunpack.c.l.b16 %v1135
      %v1879 = vunpack.c.l.b16 %v1136
      %v1880 = vpack.c.b16 %v1857, %v1856
      %v1881 = vpack.c.b16 %v1859, %v1858
      %v1882 = vpack.c.b16 %v1861, %v1860
      %v1883 = vpack.c.b16 %v1863, %v1862
      %v1884 = vpack.c.b16 %v1865, %v1864
      %v1885 = vpack.c.b16 %v1867, %v1866
      %v1886 = vpack.c.b16 %v1869, %v1868
      %v1887 = vpack.c.b16 %v1871, %v1870
      %v1888 = vpack.c.b16 %v1873, %v1872
      %v1889 = vpack.c.b16 %v1875, %v1874
      %v1890 = vpack.c.b16 %v1877, %v1876
      %v1891 = vpack.c.b16 %v1879, %v1878
      %v1905 = vsel %vm1453, %v1761, 0
      %v1908 = vsel %vm1453, %v1763, 0
      %v1911 = vsel %vm1453, %v1765, 0
      %v1914 = vsel %vm1453, %v1767, 0
      %v1917 = vsel %vm1453, %v1769, 0
      %v1920 = vsel %vm1453, %v1771, 0
      %v1923 = vsel %vm1453, %v1773, 0
      %v1926 = vsel %vm1453, %v1775, 0
      %v1929 = vsel %vm1453, %v1777, 0
      %v1932 = vsel %vm1453, %v1779, 0
      %v1935 = vsel %vm1453, %v1781, 0
      %v1938 = vsel %vm1453, %v1783, 0
      %v1941 = vsel %vm1453, %v1785, 0
      %v1944 = vsel %vm1453, %v1787, 0
      %v1947 = vsel %vm1453, %v1789, 0
      %v1950 = vsel %vm1453, %v1791, 0
      %v1953 = vsel %vm1453, %v1793, 0
      %v1956 = vsel %vm1453, %v1795, 0
      %v1959 = vsel %vm1453, %v1797, 0
      %v1962 = vsel %vm1453, %v1799, 0
      %v1965 = vsel %vm1453, %v1801, 0
      %v1968 = vsel %vm1453, %v1803, 0
      %v1971 = vsel %vm1453, %v1805, 0
      %v1974 = vsel %vm1453, %v1807, 0
      %1976 = vmatprep.subr.bf16.mxu0 0
      %1977 = vmatpush1.bf16.msra.mxu0 %v1887
      %1978 = vmatprep.subr.bf16.mxu0 0
      %1979 = vmatpush1.bf16.msra.mxu0 %v1886
      %1980 = vmatprep.subr.bf16.mxu0 0
      %1981 = vmatpush1.bf16.msra.mxu0 %v1885
      %1982 = vmatprep.subr.bf16.mxu0 0
      %1983 = vmatpush1.bf16.msra.mxu0 %v1884
      %1984 = vmatprep.subr.bf16.mxu0 0
      %1985 = vmatpush1.bf16.msra.mxu0 %v1883
      %1986 = vmatprep.subr.bf16.mxu0 0
      %1987 = vmatpush1.bf16.msra.mxu0 %v1882
      %1988 = vmatprep.subr.bf16.mxu0 0
      %1989 = vmatpush1.bf16.msra.mxu0 %v1881
      %1990 = vmatprep.subr.bf16.mxu0 0
      %1991 = vmatpush1.bf16.msra.mxu0 %v1880
      %1992 = vmatprep.subr.bf16.mxu0 0
      %1993 = vmatpush2.bf16.msra.mxu0 0
      %1994 = vmatprep.subr.bf16.mxu0 0
      %1995 = vmatpush2.bf16.msra.mxu0 0
      %1996 = vmatprep.subr.bf16.mxu0 0
      %1997 = vmatpush2.bf16.msra.mxu0 0
      %1998 = vmatprep.subr.bf16.mxu0 0
      %1999 = vmatpush2.bf16.msra.mxu0 0
      %2000 = vmatprep.subr.bf16.mxu0 0
      %2001 = vmatpush2.bf16.msra.mxu0 %v1891
      %2002 = vmatprep.subr.bf16.mxu0 0
      %2003 = vmatpush2.bf16.msra.mxu0 %v1890
      %2004 = vmatprep.subr.bf16.mxu0 0
      %2005 = vmatpush2.bf16.msra.mxu0 %v1889
      %2006 = vmatprep.subr.bf16.mxu0 0
      %2007 = vmatpush2.bf16.msra.mxu0 %v1888
      %2008 = vmatprep.mubr.bf16.mxu0 %v1905
      %2009 = vmatmul.mubr.bf16.gmra.mxu0 %v1760
      %v2010 = vpop.f32.mrf.mxu0
      %v2011 = vadd.f32 %v1561, %v2010
      %v2012 = vpop.f32.mrf.mxu0
      %v2013 = vpop.f32.mrf.mxu0
      %v2014 = vadd.f32 %v1564, %v2013
      %v2015 = vpop.f32.mrf.mxu0
      %2016 = vmatprep.mubr.bf16.mxu0 %v1908
      %2017 = vmatmul.mubr.bf16.gmra.mxu0 %v1762
      %v2018 = vpop.f32.mrf.mxu0
      %v2019 = vadd.f32 %v1569, %v2018
      %v2020 = vpop.f32.mrf.mxu0
      %v2021 = vpop.f32.mrf.mxu0
      %v2022 = vadd.f32 %v1572, %v2021
      %v2023 = vpop.f32.mrf.mxu0
      %2024 = vmatprep.mubr.bf16.mxu0 %v1911
      %2025 = vmatmul.mubr.bf16.gmra.mxu0 %v1764
      %v2026 = vpop.f32.mrf.mxu0
      %v2027 = vadd.f32 %v1577, %v2026
      %v2028 = vpop.f32.mrf.mxu0
      %v2029 = vpop.f32.mrf.mxu0
      %v2030 = vadd.f32 %v1580, %v2029
      %v2031 = vpop.f32.mrf.mxu0
      %2032 = vmatprep.mubr.bf16.mxu0 %v1914
      %2033 = vmatmul.mubr.bf16.gmra.mxu0 %v1766
      %v2034 = vpop.f32.mrf.mxu0
      %v2035 = vadd.f32 %v1585, %v2034
      %v2036 = vpop.f32.mrf.mxu0
      %v2037 = vpop.f32.mrf.mxu0
      %v2038 = vadd.f32 %v1588, %v2037
      %v2039 = vpop.f32.mrf.mxu0
      %2040 = vmatprep.mubr.bf16.mxu0 %v1917
      %2041 = vmatmul.mubr.bf16.gmra.mxu0 %v1768
      %v2042 = vpop.f32.mrf.mxu0
      %v2043 = vadd.f32 %v1593, %v2042
      %v2044 = vpop.f32.mrf.mxu0
      %v2045 = vpop.f32.mrf.mxu0
      %v2046 = vadd.f32 %v1596, %v2045
      %v2047 = vpop.f32.mrf.mxu0
      %2048 = vmatprep.mubr.bf16.mxu0 %v1920
      %2049 = vmatmul.mubr.bf16.gmra.mxu0 %v1770
      %v2050 = vpop.f32.mrf.mxu0
      %v2051 = vadd.f32 %v1601, %v2050
      %v2052 = vpop.f32.mrf.mxu0
      %v2053 = vpop.f32.mrf.mxu0
      %v2054 = vadd.f32 %v1604, %v2053
      %v2055 = vpop.f32.mrf.mxu0
      %2056 = vmatprep.mubr.bf16.mxu0 %v1923
      %2057 = vmatmul.mubr.bf16.gmra.mxu0 %v1772
      %v2058 = vpop.f32.mrf.mxu0
      %v2059 = vadd.f32 %v1609, %v2058
      %v2060 = vpop.f32.mrf.mxu0
      %v2061 = vpop.f32.mrf.mxu0
      %v2062 = vadd.f32 %v1612, %v2061
      %v2063 = vpop.f32.mrf.mxu0
      %2064 = vmatprep.mubr.bf16.mxu0 %v1926
      %2065 = vmatmul.mubr.bf16.gmra.mxu0 %v1774
      %v2066 = vpop.f32.mrf.mxu0
      %v2067 = vadd.f32 %v1617, %v2066
      %v2068 = vpop.f32.mrf.mxu0
      %v2069 = vpop.f32.mrf.mxu0
      %v2070 = vadd.f32 %v1620, %v2069
      %v2071 = vpop.f32.mrf.mxu0
      %2072 = vmatprep.mubr.bf16.mxu0 %v1929
      %2073 = vmatmul.mubr.bf16.gmra.mxu0 %v1776
      %v2074 = vpop.f32.mrf.mxu0
      %v2075 = vadd.f32 %v1625, %v2074
      %v2076 = vpop.f32.mrf.mxu0
      %v2077 = vpop.f32.mrf.mxu0
      %v2078 = vadd.f32 %v1628, %v2077
      %v2079 = vpop.f32.mrf.mxu0
      %2080 = vmatprep.mubr.bf16.mxu0 %v1932
      %2081 = vmatmul.mubr.bf16.gmra.mxu0 %v1778
      %v2082 = vpop.f32.mrf.mxu0
      %v2083 = vadd.f32 %v1633, %v2082
      %v2084 = vpop.f32.mrf.mxu0
      %v2085 = vpop.f32.mrf.mxu0
      %v2086 = vadd.f32 %v1636, %v2085
      %v2087 = vpop.f32.mrf.mxu0
      %2088 = vmatprep.mubr.bf16.mxu0 %v1935
      %2089 = vmatmul.mubr.bf16.gmra.mxu0 %v1780
      %v2090 = vpop.f32.mrf.mxu0
      %v2091 = vadd.f32 %v1641, %v2090
      %v2092 = vpop.f32.mrf.mxu0
      %v2093 = vpop.f32.mrf.mxu0
      %v2094 = vadd.f32 %v1644, %v2093
      %v2095 = vpop.f32.mrf.mxu0
      %2096 = vmatprep.mubr.bf16.mxu0 %v1938
      %2097 = vmatmul.mubr.bf16.gmra.mxu0 %v1782
      %v2098 = vpop.f32.mrf.mxu0
      %v2099 = vadd.f32 %v1649, %v2098
      %v2100 = vpop.f32.mrf.mxu0
      %v2101 = vpop.f32.mrf.mxu0
      %v2102 = vadd.f32 %v1652, %v2101
      %v2103 = vpop.f32.mrf.mxu0
      %2104 = vmatprep.mubr.bf16.mxu0 %v1941
      %2105 = vmatmul.mubr.bf16.gmra.mxu0 %v1784
      %v2106 = vpop.f32.mrf.mxu0
      %v2107 = vadd.f32 %v1657, %v2106
      %v2108 = vpop.f32.mrf.mxu0
      %v2109 = vpop.f32.mrf.mxu0
      %v2110 = vadd.f32 %v1660, %v2109
      %v2111 = vpop.f32.mrf.mxu0
      %2112 = vmatprep.mubr.bf16.mxu0 %v1944
      %2113 = vmatmul.mubr.bf16.gmra.mxu0 %v1786
      %v2114 = vpop.f32.mrf.mxu0
      %v2115 = vadd.f32 %v1665, %v2114
      %v2116 = vpop.f32.mrf.mxu0
      %v2117 = vpop.f32.mrf.mxu0
      %v2118 = vadd.f32 %v1668, %v2117
      %v2119 = vpop.f32.mrf.mxu0
      %2120 = vmatprep.mubr.bf16.mxu0 %v1947
      %2121 = vmatmul.mubr.bf16.gmra.mxu0 %v1788
      %v2122 = vpop.f32.mrf.mxu0
      %v2123 = vadd.f32 %v1673, %v2122
      %v2124 = vpop.f32.mrf.mxu0
      %v2125 = vpop.f32.mrf.mxu0
      %v2126 = vadd.f32 %v1676, %v2125
      %v2127 = vpop.f32.mrf.mxu0
      %2128 = vmatprep.mubr.bf16.mxu0 %v1950
      %2129 = vmatmul.mubr.bf16.gmra.mxu0 %v1790
      %v2130 = vpop.f32.mrf.mxu0
      %v2131 = vadd.f32 %v1681, %v2130
      %v2132 = vpop.f32.mrf.mxu0
      %v2133 = vpop.f32.mrf.mxu0
      %v2134 = vadd.f32 %v1684, %v2133
      %v2135 = vpop.f32.mrf.mxu0
      %2136 = vmatprep.mubr.bf16.mxu0 %v1953
      %2137 = vmatmul.mubr.bf16.gmra.mxu0 %v1792
      %v2138 = vpop.f32.mrf.mxu0
      %v2139 = vadd.f32 %v1689, %v2138
      %v2140 = vpop.f32.mrf.mxu0
      %v2141 = vpop.f32.mrf.mxu0
      %v2142 = vadd.f32 %v1692, %v2141
      %v2143 = vpop.f32.mrf.mxu0
      %2144 = vmatprep.mubr.bf16.mxu0 %v1956
      %2145 = vmatmul.mubr.bf16.gmra.mxu0 %v1794
      %v2146 = vpop.f32.mrf.mxu0
      %v2147 = vadd.f32 %v1697, %v2146
      %v2148 = vpop.f32.mrf.mxu0
      %v2149 = vpop.f32.mrf.mxu0
      %v2150 = vadd.f32 %v1700, %v2149
      %v2151 = vpop.f32.mrf.mxu0
      %2152 = vmatprep.mubr.bf16.mxu0 %v1959
      %2153 = vmatmul.mubr.bf16.gmra.mxu0 %v1796
      %v2154 = vpop.f32.mrf.mxu0
      %v2155 = vadd.f32 %v1705, %v2154
      %v2156 = vpop.f32.mrf.mxu0
      %v2157 = vpop.f32.mrf.mxu0
      %v2158 = vadd.f32 %v1708, %v2157
      %v2159 = vpop.f32.mrf.mxu0
      %2160 = vmatprep.mubr.bf16.mxu0 %v1962
      %2161 = vmatmul.mubr.bf16.gmra.mxu0 %v1798
      %v2162 = vpop.f32.mrf.mxu0
      %v2163 = vadd.f32 %v1713, %v2162
      %v2164 = vpop.f32.mrf.mxu0
      %v2165 = vpop.f32.mrf.mxu0
      %v2166 = vadd.f32 %v1716, %v2165
      %v2167 = vpop.f32.mrf.mxu0
      %2168 = vmatprep.mubr.bf16.mxu0 %v1965
      %2169 = vmatmul.mubr.bf16.gmra.mxu0 %v1800
      %v2170 = vpop.f32.mrf.mxu0
      %v2171 = vadd.f32 %v1721, %v2170
      %v2172 = vpop.f32.mrf.mxu0
      %v2173 = vpop.f32.mrf.mxu0
      %v2174 = vadd.f32 %v1724, %v2173
      %v2175 = vpop.f32.mrf.mxu0
      %2176 = vmatprep.mubr.bf16.mxu0 %v1968
      %2177 = vmatmul.mubr.bf16.gmra.mxu0 %v1802
      %v2178 = vpop.f32.mrf.mxu0
      %v2179 = vadd.f32 %v1729, %v2178
      %v2180 = vpop.f32.mrf.mxu0
      %v2181 = vpop.f32.mrf.mxu0
      %v2182 = vadd.f32 %v1732, %v2181
      %v2183 = vpop.f32.mrf.mxu0
      %2184 = vmatprep.mubr.bf16.mxu0 %v1971
      %2185 = vmatmul.mubr.bf16.gmra.mxu0 %v1804
      %v2186 = vpop.f32.mrf.mxu0
      %v2187 = vadd.f32 %v1737, %v2186
      %v2188 = vpop.f32.mrf.mxu0
      %v2189 = vpop.f32.mrf.mxu0
      %v2190 = vadd.f32 %v1740, %v2189
      %v2191 = vpop.f32.mrf.mxu0
      %2192 = vmatprep.mubr.bf16.mxu0 %v1974
      %2193 = vmatmul.mubr.bf16.gmra.mxu0 %v1806
      %v2194 = vpop.f32.mrf.mxu0
      %v2195 = vadd.f32 %v1745, %v2194
      %v2196 = vpop.f32.mrf.mxu0
      %v2197 = vpop.f32.mrf.mxu0
      %v2198 = vadd.f32 %v1748, %v2197
      %v2199 = vpop.f32.mrf.mxu0
      %2200 = vdwg.mxu0
      %v2201 = vld [vmem:[#allocation2 + $0x30] sm:$0xff]
      %v2202 = vld [vmem:[#allocation2 + $0x38] sm:$0xff]
      %v2203 = vld [vmem:[#allocation2 + $0x40] sm:$0xff]
      %v2204 = vld [vmem:[#allocation2 + $0x48] sm:$0xff]
      %v2205 = vld [vmem:[#allocation2 + $0x50] sm:$0xff]
      %v2206 = vld [vmem:[#allocation2 + $0x58] sm:$0xff]
      %v2207 = vld [vmem:[#allocation2 + $0x60] sm:$0xff]
      %v2208 = vld [vmem:[#allocation2 + $0x68] sm:$0xff]
      %v2209 = vld [vmem:[#allocation2 + $0x70] sm:$0xff]
      %v2210 = vld [vmem:[#allocation2 + $0x78] sm:$0xff]
      %v2211 = vld [vmem:[#allocation2 + $0x80] sm:$0xff]
      %v2212 = vld [vmem:[#allocation2 + $0x88] sm:$0xff]
      %v2213 = vld [vmem:[#allocation2 + $0x90] sm:$0xff]
      %v2214 = vld [vmem:[#allocation2 + $0x98] sm:$0xff]
      %v2215 = vld [vmem:[#allocation2 + $0xa0] sm:$0xff]
      %v2216 = vld [vmem:[#allocation2 + $0xa8] sm:$0xff]
      %v2217 = vld [vmem:[#allocation2 + $0xb0] sm:$0xff]
      %v2218 = vld [vmem:[#allocation2 + $0xb8] sm:$0xff]
      %v2219 = vld [vmem:[#allocation2 + $0xc0] sm:$0xff]
      %v2220 = vld [vmem:[#allocation2 + $0xc8] sm:$0xff]
      %v2221 = vld [vmem:[#allocation2 + $0xd0] sm:$0xff]
      %v2222 = vld [vmem:[#allocation2 + $0xd8] sm:$0xff]
      %v2223 = vld [vmem:[#allocation2 + $0xe0] sm:$0xff]
      %v2224 = vld [vmem:[#allocation2 + $0xe8] sm:$0xff]
      %v2225 = vld [vmem:[#allocation2 + $0xf0] sm:$0xff]
      %v2226 = vld [vmem:[#allocation2 + $0xf8] sm:$0xff]
      %v2227 = vld [vmem:[#allocation2 + $0x100] sm:$0xff]
      %v2228 = vld [vmem:[#allocation2 + $0x108] sm:$0xff]
      %v2229 = vld [vmem:[#allocation2 + $0x110] sm:$0xff]
      %v2230 = vld [vmem:[#allocation2 + $0x118] sm:$0xff]
      %v2231 = vld [vmem:[#allocation2 + $0x120] sm:$0xff]
      %v2232 = vld [vmem:[#allocation2 + $0x128] sm:$0xff]
      %v2233 = vld [vmem:[#allocation2 + $0x130] sm:$0xff]
      %v2234 = vld [vmem:[#allocation2 + $0x138] sm:$0xff]
      %v2235 = vld [vmem:[#allocation2 + $0x140] sm:$0xff]
      %v2236 = vld [vmem:[#allocation2 + $0x148] sm:$0xff]
      %v2237 = vld [vmem:[#allocation2 + $0x150] sm:$0xff]
      %v2238 = vld [vmem:[#allocation2 + $0x158] sm:$0xff]
      %v2239 = vld [vmem:[#allocation2 + $0x160] sm:$0xff]
      %v2240 = vld [vmem:[#allocation2 + $0x168] sm:$0xff]
      %v2241 = vld [vmem:[#allocation2 + $0x170] sm:$0xff]
      %v2242 = vld [vmem:[#allocation2 + $0x178] sm:$0xff]
      %v2243 = vld [vmem:[#allocation2 + $0x180] sm:$0xff]
      %v2244 = vld [vmem:[#allocation2 + $0x188] sm:$0xff]
      %v2245 = vld [vmem:[#allocation2 + $0x190] sm:$0xff]
      %v2246 = vld [vmem:[#allocation2 + $0x198] sm:$0xff]
      %v2247 = vld [vmem:[#allocation2 + $0x1a0] sm:$0xff]
      %v2248 = vld [vmem:[#allocation2 + $0x1a8] sm:$0xff]
      %s2249 = scalar_lea.vmem %s172, 192
      %v2250 = vld [vmem:[%s2249] sm:$0xf]
      %v2251 = vld [vmem:[%s2249 + $0x4] sm:$0xf]
      %v2252 = vld [vmem:[%s2249 + $0x8] sm:$0xf]
      %v2253 = vld [vmem:[%s2249 + $0xc] sm:$0xf]
      %v2254 = vld [vmem:[%s2249 + $0x10] sm:$0xf]
      %v2255 = vld [vmem:[%s2249 + $0x14] sm:$0xf]
      %v2256 = vld [vmem:[%s2249 + $0x18] sm:$0xf]
      %v2257 = vld [vmem:[%s2249 + $0x1c] sm:$0xf]
      %v2258 = vld [vmem:[%s2249 + $0x20] sm:$0xf]
      %v2259 = vld [vmem:[%s2249 + $0x24] sm:$0xf]
      %v2260 = vld [vmem:[%s2249 + $0x28] sm:$0xf]
      %v2261 = vld [vmem:[%s2249 + $0x2c] sm:$0xf]
      %v2262 = vld [vmem:[%s2249 + $0x30] sm:$0xf]
      %v2263 = vld [vmem:[%s2249 + $0x34] sm:$0xf]
      %v2264 = vld [vmem:[%s2249 + $0x38] sm:$0xf]
      %v2265 = vld [vmem:[%s2249 + $0x3c] sm:$0xf]
      %v2266 = vld [vmem:[%s2249 + $0x40] sm:$0xf]
      %v2267 = vld [vmem:[%s2249 + $0x44] sm:$0xf]
      %v2268 = vld [vmem:[%s2249 + $0x48] sm:$0xf]
      %v2269 = vld [vmem:[%s2249 + $0x4c] sm:$0xf]
      %v2270 = vld [vmem:[%s2249 + $0x50] sm:$0xf]
      %v2271 = vld [vmem:[%s2249 + $0x54] sm:$0xf]
      %v2272 = vld [vmem:[%s2249 + $0x58] sm:$0xf]
      %v2273 = vld [vmem:[%s2249 + $0x5c] sm:$0xf]
      %v2322 = vunpack.c.l.b16 %v2201
      %v2323 = vunpack.c.h.b16 %v2201
      %v2324 = vunpack.c.l.b16 %v2202
      %v2325 = vunpack.c.h.b16 %v2202
      %v2326 = vunpack.c.l.b16 %v2203
      %v2327 = vunpack.c.h.b16 %v2203
      %v2328 = vunpack.c.l.b16 %v2204
      %v2329 = vunpack.c.h.b16 %v2204
      %v2330 = vunpack.c.l.b16 %v2205
      %v2331 = vunpack.c.h.b16 %v2205
      %v2332 = vunpack.c.l.b16 %v2206
      %v2333 = vunpack.c.h.b16 %v2206
      %v2334 = vunpack.c.l.b16 %v2207
      %v2335 = vunpack.c.h.b16 %v2207
      %v2336 = vunpack.c.l.b16 %v2208
      %v2337 = vunpack.c.h.b16 %v2208
      %v2338 = vunpack.c.l.b16 %v2209
      %v2339 = vunpack.c.h.b16 %v2209
      %v2340 = vunpack.c.l.b16 %v2210
      %v2341 = vunpack.c.h.b16 %v2210
      %v2342 = vunpack.c.l.b16 %v2211
      %v2343 = vunpack.c.h.b16 %v2211
      %v2344 = vunpack.c.l.b16 %v2212
      %v2345 = vunpack.c.h.b16 %v2212
      %v2346 = vunpack.c.l.b16 %v2213
      %v2347 = vunpack.c.h.b16 %v2213
      %v2348 = vunpack.c.l.b16 %v2214
      %v2349 = vunpack.c.h.b16 %v2214
      %v2350 = vunpack.c.l.b16 %v2215
      %v2351 = vunpack.c.h.b16 %v2215
      %v2352 = vunpack.c.l.b16 %v2216
      %v2353 = vunpack.c.h.b16 %v2216
      %v2354 = vunpack.c.l.b16 %v2217
      %v2355 = vunpack.c.h.b16 %v2217
      %v2356 = vunpack.c.l.b16 %v2218
      %v2357 = vunpack.c.h.b16 %v2218
      %v2358 = vunpack.c.l.b16 %v2219
      %v2359 = vunpack.c.h.b16 %v2219
      %v2360 = vunpack.c.l.b16 %v2220
      %v2361 = vunpack.c.h.b16 %v2220
      %v2362 = vunpack.c.l.b16 %v2221
      %v2363 = vunpack.c.h.b16 %v2221
      %v2364 = vunpack.c.l.b16 %v2222
      %v2365 = vunpack.c.h.b16 %v2222
      %v2366 = vunpack.c.l.b16 %v2223
      %v2367 = vunpack.c.h.b16 %v2223
      %v2368 = vunpack.c.l.b16 %v2224
      %v2369 = vunpack.c.h.b16 %v2224
      %v2370 = vunpack.c.l.b16 %v2225
      %v2371 = vunpack.c.h.b16 %v2225
      %v2372 = vunpack.c.l.b16 %v2226
      %v2373 = vunpack.c.h.b16 %v2226
      %v2374 = vunpack.c.l.b16 %v2227
      %v2375 = vunpack.c.h.b16 %v2227
      %v2376 = vunpack.c.l.b16 %v2228
      %v2377 = vunpack.c.h.b16 %v2228
      %v2378 = vunpack.c.l.b16 %v2229
      %v2379 = vunpack.c.h.b16 %v2229
      %v2380 = vunpack.c.l.b16 %v2230
      %v2381 = vunpack.c.h.b16 %v2230
      %v2382 = vunpack.c.l.b16 %v2231
      %v2383 = vunpack.c.h.b16 %v2231
      %v2384 = vunpack.c.l.b16 %v2232
      %v2385 = vunpack.c.h.b16 %v2232
      %v2386 = vunpack.c.l.b16 %v2233
      %v2387 = vunpack.c.h.b16 %v2233
      %v2388 = vunpack.c.l.b16 %v2234
      %v2389 = vunpack.c.h.b16 %v2234
      %v2390 = vunpack.c.l.b16 %v2235
      %v2391 = vunpack.c.h.b16 %v2235
      %v2392 = vunpack.c.l.b16 %v2236
      %v2393 = vunpack.c.h.b16 %v2236
      %v2394 = vunpack.c.l.b16 %v2237
      %v2395 = vunpack.c.h.b16 %v2237
      %v2396 = vunpack.c.l.b16 %v2238
      %v2397 = vunpack.c.h.b16 %v2238
      %v2398 = vunpack.c.l.b16 %v2239
      %v2399 = vunpack.c.h.b16 %v2239
      %v2400 = vunpack.c.l.b16 %v2240
      %v2401 = vunpack.c.h.b16 %v2240
      %v2402 = vunpack.c.l.b16 %v2241
      %v2403 = vunpack.c.h.b16 %v2241
      %v2404 = vunpack.c.l.b16 %v2242
      %v2405 = vunpack.c.h.b16 %v2242
      %v2406 = vunpack.c.l.b16 %v2243
      %v2407 = vunpack.c.h.b16 %v2243
      %v2408 = vunpack.c.l.b16 %v2244
      %v2409 = vunpack.c.h.b16 %v2244
      %v2410 = vunpack.c.l.b16 %v2245
      %v2411 = vunpack.c.h.b16 %v2245
      %v2412 = vunpack.c.l.b16 %v2246
      %v2413 = vunpack.c.h.b16 %v2246
      %v2414 = vunpack.c.l.b16 %v2247
      %v2415 = vunpack.c.h.b16 %v2247
      %v2416 = vunpack.c.l.b16 %v2248
      %v2417 = vunpack.c.h.b16 %v2248
      %v2418 = vpack.c.b16 %v2324, %v2322
      %v2419 = vpack.c.b16 %v2325, %v2323
      %v2420 = vpack.c.b16 %v2328, %v2326
      %v2421 = vpack.c.b16 %v2329, %v2327
      %v2422 = vpack.c.b16 %v2332, %v2330
      %v2423 = vpack.c.b16 %v2333, %v2331
      %v2424 = vpack.c.b16 %v2336, %v2334
      %v2425 = vpack.c.b16 %v2337, %v2335
      %v2426 = vpack.c.b16 %v2340, %v2338
      %v2427 = vpack.c.b16 %v2341, %v2339
      %v2428 = vpack.c.b16 %v2344, %v2342
      %v2429 = vpack.c.b16 %v2345, %v2343
      %v2430 = vpack.c.b16 %v2348, %v2346
      %v2431 = vpack.c.b16 %v2349, %v2347
      %v2432 = vpack.c.b16 %v2352, %v2350
      %v2433 = vpack.c.b16 %v2353, %v2351
      %v2434 = vpack.c.b16 %v2356, %v2354
      %v2435 = vpack.c.b16 %v2357, %v2355
      %v2436 = vpack.c.b16 %v2360, %v2358
      %v2437 = vpack.c.b16 %v2361, %v2359
      %v2438 = vpack.c.b16 %v2364, %v2362
      %v2439 = vpack.c.b16 %v2365, %v2363
      %v2440 = vpack.c.b16 %v2368, %v2366
      %v2441 = vpack.c.b16 %v2369, %v2367
      %v2442 = vpack.c.b16 %v2372, %v2370
      %v2443 = vpack.c.b16 %v2373, %v2371
      %v2444 = vpack.c.b16 %v2376, %v2374
      %v2445 = vpack.c.b16 %v2377, %v2375
      %v2446 = vpack.c.b16 %v2380, %v2378
      %v2447 = vpack.c.b16 %v2381, %v2379
      %v2448 = vpack.c.b16 %v2384, %v2382
      %v2449 = vpack.c.b16 %v2385, %v2383
      %v2450 = vpack.c.b16 %v2388, %v2386
      %v2451 = vpack.c.b16 %v2389, %v2387
      %v2452 = vpack.c.b16 %v2392, %v2390
      %v2453 = vpack.c.b16 %v2393, %v2391
      %v2454 = vpack.c.b16 %v2396, %v2394
      %v2455 = vpack.c.b16 %v2397, %v2395
      %v2456 = vpack.c.b16 %v2400, %v2398
      %v2457 = vpack.c.b16 %v2401, %v2399
      %v2458 = vpack.c.b16 %v2404, %v2402
      %v2459 = vpack.c.b16 %v2405, %v2403
      %v2460 = vpack.c.b16 %v2408, %v2406
      %v2461 = vpack.c.b16 %v2409, %v2407
      %v2462 = vpack.c.b16 %v2412, %v2410
      %v2463 = vpack.c.b16 %v2413, %v2411
      %v2464 = vpack.c.b16 %v2416, %v2414
      %v2465 = vpack.c.b16 %v2417, %v2415
      %v2514 = vunpack.c.l.b16 %v2250
      %v2515 = vunpack.c.l.b16 %v2251
      %v2516 = vunpack.c.l.b16 %v2252
      %v2517 = vunpack.c.l.b16 %v2253
      %v2518 = vunpack.c.l.b16 %v2254
      %v2519 = vunpack.c.l.b16 %v2255
      %v2520 = vunpack.c.l.b16 %v2256
      %v2521 = vunpack.c.l.b16 %v2257
      %v2522 = vunpack.c.l.b16 %v2258
      %v2523 = vunpack.c.l.b16 %v2259
      %v2524 = vunpack.c.l.b16 %v2260
      %v2525 = vunpack.c.l.b16 %v2261
      %v2526 = vunpack.c.l.b16 %v2262
      %v2527 = vunpack.c.l.b16 %v2263
      %v2528 = vunpack.c.l.b16 %v2264
      %v2529 = vunpack.c.l.b16 %v2265
      %v2530 = vunpack.c.l.b16 %v2266
      %v2531 = vunpack.c.l.b16 %v2267
      %v2532 = vunpack.c.l.b16 %v2268
      %v2533 = vunpack.c.l.b16 %v2269
      %v2534 = vunpack.c.l.b16 %v2270
      %v2535 = vunpack.c.l.b16 %v2271
      %v2536 = vunpack.c.l.b16 %v2272
      %v2537 = vunpack.c.l.b16 %v2273
      %v2538 = vpack.c.b16 %v2515, %v2514
      %v2539 = vpack.c.b16 %v2517, %v2516
      %v2540 = vpack.c.b16 %v2519, %v2518
      %v2541 = vpack.c.b16 %v2521, %v2520
      %v2542 = vpack.c.b16 %v2523, %v2522
      %v2543 = vpack.c.b16 %v2525, %v2524
      %v2544 = vpack.c.b16 %v2527, %v2526
      %v2545 = vpack.c.b16 %v2529, %v2528
      %v2546 = vpack.c.b16 %v2531, %v2530
      %v2547 = vpack.c.b16 %v2533, %v2532
      %v2548 = vpack.c.b16 %v2535, %v2534
      %v2549 = vpack.c.b16 %v2537, %v2536
      %v2563 = vsel %vm1453, %v2419, 0
      %v2566 = vsel %vm1453, %v2421, 0
      %v2569 = vsel %vm1453, %v2423, 0
      %v2572 = vsel %vm1453, %v2425, 0
      %v2575 = vsel %vm1453, %v2427, 0
      %v2578 = vsel %vm1453, %v2429, 0
      %v2581 = vsel %vm1453, %v2431, 0
      %v2584 = vsel %vm1453, %v2433, 0
      %v2587 = vsel %vm1453, %v2435, 0
      %v2590 = vsel %vm1453, %v2437, 0
      %v2593 = vsel %vm1453, %v2439, 0
      %v2596 = vsel %vm1453, %v2441, 0
      %v2599 = vsel %vm1453, %v2443, 0
      %v2602 = vsel %vm1453, %v2445, 0
      %v2605 = vsel %vm1453, %v2447, 0
      %v2608 = vsel %vm1453, %v2449, 0
      %v2611 = vsel %vm1453, %v2451, 0
      %v2614 = vsel %vm1453, %v2453, 0
      %v2617 = vsel %vm1453, %v2455, 0
      %v2620 = vsel %vm1453, %v2457, 0
      %v2623 = vsel %vm1453, %v2459, 0
      %v2626 = vsel %vm1453, %v2461, 0
      %v2629 = vsel %vm1453, %v2463, 0
      %v2632 = vsel %vm1453, %v2465, 0
      %2634 = vmatprep.subr.bf16.mxu0 0
      %2635 = vmatpush1.bf16.msra.mxu0 %v2545
      %2636 = vmatprep.subr.bf16.mxu0 0
      %2637 = vmatpush1.bf16.msra.mxu0 %v2544
      %2638 = vmatprep.subr.bf16.mxu0 0
      %2639 = vmatpush1.bf16.msra.mxu0 %v2543
      %2640 = vmatprep.subr.bf16.mxu0 0
      %2641 = vmatpush1.bf16.msra.mxu0 %v2542
      %2642 = vmatprep.subr.bf16.mxu0 0
      %2643 = vmatpush1.bf16.msra.mxu0 %v2541
      %2644 = vmatprep.subr.bf16.mxu0 0
      %2645 = vmatpush1.bf16.msra.mxu0 %v2540
      %2646 = vmatprep.subr.bf16.mxu0 0
      %2647 = vmatpush1.bf16.msra.mxu0 %v2539
      %2648 = vmatprep.subr.bf16.mxu0 0
      %2649 = vmatpush1.bf16.msra.mxu0 %v2538
      %2650 = vmatprep.subr.bf16.mxu0 0
      %2651 = vmatpush2.bf16.msra.mxu0 0
      %2652 = vmatprep.subr.bf16.mxu0 0
      %2653 = vmatpush2.bf16.msra.mxu0 0
      %2654 = vmatprep.subr.bf16.mxu0 0
      %2655 = vmatpush2.bf16.msra.mxu0 0
      %2656 = vmatprep.subr.bf16.mxu0 0
      %2657 = vmatpush2.bf16.msra.mxu0 0
      %2658 = vmatprep.subr.bf16.mxu0 0
      %2659 = vmatpush2.bf16.msra.mxu0 %v2549
      %2660 = vmatprep.subr.bf16.mxu0 0
      %2661 = vmatpush2.bf16.msra.mxu0 %v2548
      %2662 = vmatprep.subr.bf16.mxu0 0
      %2663 = vmatpush2.bf16.msra.mxu0 %v2547
      %2664 = vmatprep.subr.bf16.mxu0 0
      %2665 = vmatpush2.bf16.msra.mxu0 %v2546
      %2666 = vmatprep.mubr.bf16.mxu0 %v2563
      %2667 = vmatmul.mubr.bf16.gmra.mxu0 %v2418
      %v2668 = vpop.f32.mrf.mxu0
      %v2669 = vadd.f32 0.0, %v2668
      %v2670 = vpop.f32.mrf.mxu0
      %v2671 = vpop.f32.mrf.mxu0
      %v2672 = vadd.f32 0.0, %v2671
      %v2673 = vpop.f32.mrf.mxu0
      %2674 = vmatprep.mubr.bf16.mxu0 %v2566
      %2675 = vmatmul.mubr.bf16.gmra.mxu0 %v2420
      %v2676 = vpop.f32.mrf.mxu0
      %v2677 = vadd.f32 0.0, %v2676
      %v2678 = vpop.f32.mrf.mxu0
      %v2679 = vpop.f32.mrf.mxu0
      %v2680 = vadd.f32 0.0, %v2679
      %v2681 = vpop.f32.mrf.mxu0
      %2682 = vmatprep.mubr.bf16.mxu0 %v2569
      %2683 = vmatmul.mubr.bf16.gmra.mxu0 %v2422
      %v2684 = vpop.f32.mrf.mxu0
      %v2685 = vadd.f32 0.0, %v2684
      %v2686 = vpop.f32.mrf.mxu0
      %v2687 = vpop.f32.mrf.mxu0
      %v2688 = vadd.f32 0.0, %v2687
      %v2689 = vpop.f32.mrf.mxu0
      %2690 = vmatprep.mubr.bf16.mxu0 %v2572
      %2691 = vmatmul.mubr.bf16.gmra.mxu0 %v2424
      %v2692 = vpop.f32.mrf.mxu0
      %v2693 = vadd.f32 0.0, %v2692
      %v2694 = vpop.f32.mrf.mxu0
      %v2695 = vpop.f32.mrf.mxu0
      %v2696 = vadd.f32 0.0, %v2695
      %v2697 = vpop.f32.mrf.mxu0
      %2698 = vmatprep.mubr.bf16.mxu0 %v2575
      %2699 = vmatmul.mubr.bf16.gmra.mxu0 %v2426
      %v2700 = vpop.f32.mrf.mxu0
      %v2701 = vadd.f32 0.0, %v2700
      %v2702 = vpop.f32.mrf.mxu0
      %v2703 = vpop.f32.mrf.mxu0
      %v2704 = vadd.f32 0.0, %v2703
      %v2705 = vpop.f32.mrf.mxu0
      %2706 = vmatprep.mubr.bf16.mxu0 %v2578
      %2707 = vmatmul.mubr.bf16.gmra.mxu0 %v2428
      %v2708 = vpop.f32.mrf.mxu0
      %v2709 = vadd.f32 0.0, %v2708
      %v2710 = vpop.f32.mrf.mxu0
      %v2711 = vpop.f32.mrf.mxu0
      %v2712 = vadd.f32 0.0, %v2711
      %v2713 = vpop.f32.mrf.mxu0
      %2714 = vmatprep.mubr.bf16.mxu0 %v2581
      %2715 = vmatmul.mubr.bf16.gmra.mxu0 %v2430
      %v2716 = vpop.f32.mrf.mxu0
      %v2717 = vadd.f32 0.0, %v2716
      %v2718 = vpop.f32.mrf.mxu0
      %v2719 = vpop.f32.mrf.mxu0
      %v2720 = vadd.f32 0.0, %v2719
      %v2721 = vpop.f32.mrf.mxu0
      %2722 = vmatprep.mubr.bf16.mxu0 %v2584
      %2723 = vmatmul.mubr.bf16.gmra.mxu0 %v2432
      %v2724 = vpop.f32.mrf.mxu0
      %v2725 = vadd.f32 0.0, %v2724
      %v2726 = vpop.f32.mrf.mxu0
      %v2727 = vpop.f32.mrf.mxu0
      %v2728 = vadd.f32 0.0, %v2727
      %v2729 = vpop.f32.mrf.mxu0
      %2730 = vmatprep.mubr.bf16.mxu0 %v2587
      %2731 = vmatmul.mubr.bf16.gmra.mxu0 %v2434
      %v2732 = vpop.f32.mrf.mxu0
      %v2733 = vadd.f32 0.0, %v2732
      %v2734 = vpop.f32.mrf.mxu0
      %v2735 = vpop.f32.mrf.mxu0
      %v2736 = vadd.f32 0.0, %v2735
      %v2737 = vpop.f32.mrf.mxu0
      %2738 = vmatprep.mubr.bf16.mxu0 %v2590
      %2739 = vmatmul.mubr.bf16.gmra.mxu0 %v2436
      %v2740 = vpop.f32.mrf.mxu0
      %v2741 = vadd.f32 0.0, %v2740
      %v2742 = vpop.f32.mrf.mxu0
      %v2743 = vpop.f32.mrf.mxu0
      %v2744 = vadd.f32 0.0, %v2743
      %v2745 = vpop.f32.mrf.mxu0
      %2746 = vmatprep.mubr.bf16.mxu0 %v2593
      %2747 = vmatmul.mubr.bf16.gmra.mxu0 %v2438
      %v2748 = vpop.f32.mrf.mxu0
      %v2749 = vadd.f32 0.0, %v2748
      %v2750 = vpop.f32.mrf.mxu0
      %v2751 = vpop.f32.mrf.mxu0
      %v2752 = vadd.f32 0.0, %v2751
      %v2753 = vpop.f32.mrf.mxu0
      %2754 = vmatprep.mubr.bf16.mxu0 %v2596
      %2755 = vmatmul.mubr.bf16.gmra.mxu0 %v2440
      %v2756 = vpop.f32.mrf.mxu0
      %v2757 = vadd.f32 0.0, %v2756
      %v2758 = vpop.f32.mrf.mxu0
      %v2759 = vpop.f32.mrf.mxu0
      %v2760 = vadd.f32 0.0, %v2759
      %v2761 = vpop.f32.mrf.mxu0
      %2762 = vmatprep.mubr.bf16.mxu0 %v2599
      %2763 = vmatmul.mubr.bf16.gmra.mxu0 %v2442
      %v2764 = vpop.f32.mrf.mxu0
      %v2765 = vadd.f32 0.0, %v2764
      %v2766 = vpop.f32.mrf.mxu0
      %v2767 = vpop.f32.mrf.mxu0
      %v2768 = vadd.f32 0.0, %v2767
      %v2769 = vpop.f32.mrf.mxu0
      %2770 = vmatprep.mubr.bf16.mxu0 %v2602
      %2771 = vmatmul.mubr.bf16.gmra.mxu0 %v2444
      %v2772 = vpop.f32.mrf.mxu0
      %v2773 = vadd.f32 0.0, %v2772
      %v2774 = vpop.f32.mrf.mxu0
      %v2775 = vpop.f32.mrf.mxu0
      %v2776 = vadd.f32 0.0, %v2775
      %v2777 = vpop.f32.mrf.mxu0
      %2778 = vmatprep.mubr.bf16.mxu0 %v2605
      %2779 = vmatmul.mubr.bf16.gmra.mxu0 %v2446
      %v2780 = vpop.f32.mrf.mxu0
      %v2781 = vadd.f32 0.0, %v2780
      %v2782 = vpop.f32.mrf.mxu0
      %v2783 = vpop.f32.mrf.mxu0
      %v2784 = vadd.f32 0.0, %v2783
      %v2785 = vpop.f32.mrf.mxu0
      %2786 = vmatprep.mubr.bf16.mxu0 %v2608
      %2787 = vmatmul.mubr.bf16.gmra.mxu0 %v2448
      %v2788 = vpop.f32.mrf.mxu0
      %v2789 = vadd.f32 0.0, %v2788
      %v2790 = vpop.f32.mrf.mxu0
      %v2791 = vpop.f32.mrf.mxu0
      %v2792 = vadd.f32 0.0, %v2791
      %v2793 = vpop.f32.mrf.mxu0
      %2794 = vmatprep.mubr.bf16.mxu0 %v2611
      %2795 = vmatmul.mubr.bf16.gmra.mxu0 %v2450
      %v2796 = vpop.f32.mrf.mxu0
      %v2797 = vadd.f32 0.0, %v2796
      %v2798 = vpop.f32.mrf.mxu0
      %v2799 = vpop.f32.mrf.mxu0
      %v2800 = vadd.f32 0.0, %v2799
      %v2801 = vpop.f32.mrf.mxu0
      %2802 = vmatprep.mubr.bf16.mxu0 %v2614
      %2803 = vmatmul.mubr.bf16.gmra.mxu0 %v2452
      %v2804 = vpop.f32.mrf.mxu0
      %v2805 = vadd.f32 0.0, %v2804
      %v2806 = vpop.f32.mrf.mxu0
      %v2807 = vpop.f32.mrf.mxu0
      %v2808 = vadd.f32 0.0, %v2807
      %v2809 = vpop.f32.mrf.mxu0
      %2810 = vmatprep.mubr.bf16.mxu0 %v2617
      %2811 = vmatmul.mubr.bf16.gmra.mxu0 %v2454
      %v2812 = vpop.f32.mrf.mxu0
      %v2813 = vadd.f32 0.0, %v2812
      %v2814 = vpop.f32.mrf.mxu0
      %v2815 = vpop.f32.mrf.mxu0
      %v2816 = vadd.f32 0.0, %v2815
      %v2817 = vpop.f32.mrf.mxu0
      %2818 = vmatprep.mubr.bf16.mxu0 %v2620
      %2819 = vmatmul.mubr.bf16.gmra.mxu0 %v2456
      %v2820 = vpop.f32.mrf.mxu0
      %v2821 = vadd.f32 0.0, %v2820
      %v2822 = vpop.f32.mrf.mxu0
      %v2823 = vpop.f32.mrf.mxu0
      %v2824 = vadd.f32 0.0, %v2823
      %v2825 = vpop.f32.mrf.mxu0
      %2826 = vmatprep.mubr.bf16.mxu0 %v2623
      %2827 = vmatmul.mubr.bf16.gmra.mxu0 %v2458
      %v2828 = vpop.f32.mrf.mxu0
      %v2829 = vadd.f32 0.0, %v2828
      %v2830 = vpop.f32.mrf.mxu0
      %v2831 = vpop.f32.mrf.mxu0
      %v2832 = vadd.f32 0.0, %v2831
      %v2833 = vpop.f32.mrf.mxu0
      %2834 = vmatprep.mubr.bf16.mxu0 %v2626
      %2835 = vmatmul.mubr.bf16.gmra.mxu0 %v2460
      %v2836 = vpop.f32.mrf.mxu0
      %v2837 = vadd.f32 0.0, %v2836
      %v2838 = vpop.f32.mrf.mxu0
      %v2839 = vpop.f32.mrf.mxu0
      %v2840 = vadd.f32 0.0, %v2839
      %v2841 = vpop.f32.mrf.mxu0
      %2842 = vmatprep.mubr.bf16.mxu0 %v2629
      %2843 = vmatmul.mubr.bf16.gmra.mxu0 %v2462
      %v2844 = vpop.f32.mrf.mxu0
      %v2845 = vadd.f32 0.0, %v2844
      %v2846 = vpop.f32.mrf.mxu0
      %v2847 = vpop.f32.mrf.mxu0
      %v2848 = vadd.f32 0.0, %v2847
      %v2849 = vpop.f32.mrf.mxu0
      %2850 = vmatprep.mubr.bf16.mxu0 %v2632
      %2851 = vmatmul.mubr.bf16.gmra.mxu0 %v2464
      %v2852 = vpop.f32.mrf.mxu0
      %v2853 = vadd.f32 0.0, %v2852
      %v2854 = vpop.f32.mrf.mxu0
      %v2855 = vpop.f32.mrf.mxu0
      %v2856 = vadd.f32 0.0, %v2855
      %v2857 = vpop.f32.mrf.mxu0
      %2858 = vdwg.mxu0
      %v2859 = vadd.f32 %v2011, %v2669
      %v2860 = vadd.f32 %v2014, %v2672
      %v2861 = vadd.f32 %v2019, %v2677
      %v2862 = vadd.f32 %v2022, %v2680
      %v2863 = vadd.f32 %v2027, %v2685
      %v2864 = vadd.f32 %v2030, %v2688
      %v2865 = vadd.f32 %v2035, %v2693
      %v2866 = vadd.f32 %v2038, %v2696
      %v2867 = vadd.f32 %v2043, %v2701
      %v2868 = vadd.f32 %v2046, %v2704
      %v2869 = vadd.f32 %v2051, %v2709
      %v2870 = vadd.f32 %v2054, %v2712
      %v2871 = vadd.f32 %v2059, %v2717
      %v2872 = vadd.f32 %v2062, %v2720
      %v2873 = vadd.f32 %v2067, %v2725
      %v2874 = vadd.f32 %v2070, %v2728
      %v2875 = vadd.f32 %v2075, %v2733
      %v2876 = vadd.f32 %v2078, %v2736
      %v2877 = vadd.f32 %v2083, %v2741
      %v2878 = vadd.f32 %v2086, %v2744
      %v2879 = vadd.f32 %v2091, %v2749
      %v2880 = vadd.f32 %v2094, %v2752
      %v2881 = vadd.f32 %v2099, %v2757
      %v2882 = vadd.f32 %v2102, %v2760
      %v2883 = vadd.f32 %v2107, %v2765
      %v2884 = vadd.f32 %v2110, %v2768
      %v2885 = vadd.f32 %v2115, %v2773
      %v2886 = vadd.f32 %v2118, %v2776
      %v2887 = vadd.f32 %v2123, %v2781
      %v2888 = vadd.f32 %v2126, %v2784
      %v2889 = vadd.f32 %v2131, %v2789
      %v2890 = vadd.f32 %v2134, %v2792
      %v2891 = vadd.f32 %v2139, %v2797
      %v2892 = vadd.f32 %v2142, %v2800
      %v2893 = vadd.f32 %v2147, %v2805
      %v2894 = vadd.f32 %v2150, %v2808
      %v2895 = vadd.f32 %v2155, %v2813
      %v2896 = vadd.f32 %v2158, %v2816
      %v2897 = vadd.f32 %v2163, %v2821
      %v2898 = vadd.f32 %v2166, %v2824
      %v2899 = vadd.f32 %v2171, %v2829
      %v2900 = vadd.f32 %v2174, %v2832
      %v2901 = vadd.f32 %v2179, %v2837
      %v2902 = vadd.f32 %v2182, %v2840
      %v2903 = vadd.f32 %v2187, %v2845
      %v2904 = vadd.f32 %v2190, %v2848
      %v2905 = vadd.f32 %v2195, %v2853
      %v2906 = vadd.f32 %v2198, %v2856
      %v2907 = vlaneseq
      %v2908 = vshrl.u32 %v2907, 7
      %v2909 = vadd.s32 %v2908, 8
      %v2910 = vadd.s32 %v2908, 16
      %v2911 = vadd.s32 %v2908, 24
      %v2912 = vadd.s32 %v2908, 32
      %v2913 = vadd.s32 %v2908, 40
      %v2914 = vadd.s32 %v2908, 48
      %v2915 = vadd.s32 %v2908, 56
      %v2916 = vadd.s32 %v2908, 64
      %v2917 = vadd.s32 %v2908, 72
      %v2918 = vadd.s32 %v2908, 80
      %v2919 = vadd.s32 %v2908, 88
      %v2920 = vadd.s32 %v2908, 96
      %v2921 = vadd.s32 %v2908, 104
      %v2922 = vadd.s32 %v2908, 112
      %v2923 = vadd.s32 %v2908, 120
      %v2924 = vadd.s32 %v2908, 128
      %v2925 = vadd.s32 %v2908, 136
      %v2926 = vadd.s32 %v2908, 144
      %v2927 = vadd.s32 %v2908, 152
      %v2928 = vadd.s32 %v2908, 160
      %v2929 = vadd.s32 %v2908, 168
      %v2930 = vadd.s32 %v2908, 176
      %v2931 = vadd.s32 %v2908, 184
      %v2932 = vadd.s32 %v2908, 192
      %v2933 = vadd.s32 %v2908, 200
      %v2934 = vadd.s32 %v2908, 208
      %v2935 = vadd.s32 %v2908, 216
      %v2936 = vadd.s32 %v2908, 224
      %v2937 = vadd.s32 %v2908, 232
      %v2938 = vadd.s32 %v2908, 240
      %v2939 = vadd.s32 %v2908, 248
      %v2940 = vadd.s32 %v2908, 256
      %v2941 = vadd.s32 %v2908, 264
      %v2942 = vadd.s32 %v2908, 272
      %v2943 = vadd.s32 %v2908, 280
      %v2944 = vadd.s32 %v2908, 288
      %v2945 = vadd.s32 %v2908, 296
      %v2946 = vadd.s32 %v2908, 304
      %v2947 = vadd.s32 %v2908, 312
      %v2948 = vadd.s32 %v2908, 320
      %v2949 = vadd.s32 %v2908, 328
      %v2950 = vadd.s32 %v2908, 336
      %v2951 = vadd.s32 %v2908, 344
      %v2952 = vadd.s32 %v2908, 352
      %v2953 = vadd.s32 %v2908, 360
      %v2954 = vadd.s32 %v2908, 368
      %v2955 = vadd.s32 %v2908, 376
      %vm2956 = vcmp.lt.s32.totalorder %v2908, 0
      %v2957 = vsub.s32 0, %v2908
      %v2958 = vsel %vm2956, %v2957, %v2908
      %v2959 = vmul.u32.u64.compose %v2958, 2863311531
      %v2960 = vextract.low.u32 %v2959
      %v2961 = vextract.high.u32 %v2959
      %v2962 = vshrl.u32 %v2961, 4
      %v2963 = vmul.u32 %v2962, 24
      %v2964 = vsub.s32 %v2958, %v2963
      %v2965 = vsub.s32 0, %v2964
      %v2966 = vsel %vm2956, %v2965, %v2964
      %vm2967 = vcmp.lt.s32.totalorder %v2909, 0
      %v2968 = vsub.s32 0, %v2909
      %v2969 = vsel %vm2967, %v2968, %v2909
      %v2970 = vmul.u32.u64.compose %v2969, 2863311531
      %v2971 = vextract.low.u32 %v2970
      %v2972 = vextract.high.u32 %v2970
      %v2973 = vshrl.u32 %v2972, 4
      %v2974 = vmul.u32 %v2973, 24
      %v2975 = vsub.s32 %v2969, %v2974
      %v2976 = vsub.s32 0, %v2975
      %v2977 = vsel %vm2967, %v2976, %v2975
      %vm2978 = vcmp.lt.s32.totalorder %v2910, 0
      %v2979 = vsub.s32 0, %v2910
      %v2980 = vsel %vm2978, %v2979, %v2910
      %v2981 = vmul.u32.u64.compose %v2980, 2863311531
      %v2982 = vextract.low.u32 %v2981
      %v2983 = vextract.high.u32 %v2981
      %v2984 = vshrl.u32 %v2983, 4
      %v2985 = vmul.u32 %v2984, 24
      %v2986 = vsub.s32 %v2980, %v2985
      %v2987 = vsub.s32 0, %v2986
      %v2988 = vsel %vm2978, %v2987, %v2986
      %vm2989 = vcmp.lt.s32.totalorder %v2911, 0
      %v2990 = vsub.s32 0, %v2911
      %v2991 = vsel %vm2989, %v2990, %v2911
      %v2992 = vmul.u32.u64.compose %v2991, 2863311531
      %v2993 = vextract.low.u32 %v2992
      %v2994 = vextract.high.u32 %v2992
      %v2995 = vshrl.u32 %v2994, 4
      %v2996 = vmul.u32 %v2995, 24
      %v2997 = vsub.s32 %v2991, %v2996
      %v2998 = vsub.s32 0, %v2997
      %v2999 = vsel %vm2989, %v2998, %v2997
      %vm3000 = vcmp.lt.s32.totalorder %v2912, 0
      %v3001 = vsub.s32 0, %v2912
      %v3002 = vsel %vm3000, %v3001, %v2912
      %v3003 = vmul.u32.u64.compose %v3002, 2863311531
      %v3004 = vextract.low.u32 %v3003
      %v3005 = vextract.high.u32 %v3003
      %v3006 = vshrl.u32 %v3005, 4
      %v3007 = vmul.u32 %v3006, 24
      %v3008 = vsub.s32 %v3002, %v3007
      %v3009 = vsub.s32 0, %v3008
      %v3010 = vsel %vm3000, %v3009, %v3008
      %vm3011 = vcmp.lt.s32.totalorder %v2913, 0
      %v3012 = vsub.s32 0, %v2913
      %v3013 = vsel %vm3011, %v3012, %v2913
      %v3014 = vmul.u32.u64.compose %v3013, 2863311531
      %v3015 = vextract.low.u32 %v3014
      %v3016 = vextract.high.u32 %v3014
      %v3017 = vshrl.u32 %v3016, 4
      %v3018 = vmul.u32 %v3017, 24
      %v3019 = vsub.s32 %v3013, %v3018
      %v3020 = vsub.s32 0, %v3019
      %v3021 = vsel %vm3011, %v3020, %v3019
      %vm3022 = vcmp.lt.s32.totalorder %v2914, 0
      %v3023 = vsub.s32 0, %v2914
      %v3024 = vsel %vm3022, %v3023, %v2914
      %v3025 = vmul.u32.u64.compose %v3024, 2863311531
      %v3026 = vextract.low.u32 %v3025
      %v3027 = vextract.high.u32 %v3025
      %v3028 = vshrl.u32 %v3027, 4
      %v3029 = vmul.u32 %v3028, 24
      %v3030 = vsub.s32 %v3024, %v3029
      %v3031 = vsub.s32 0, %v3030
      %v3032 = vsel %vm3022, %v3031, %v3030
      %vm3033 = vcmp.lt.s32.totalorder %v2915, 0
      %v3034 = vsub.s32 0, %v2915
      %v3035 = vsel %vm3033, %v3034, %v2915
      %v3036 = vmul.u32.u64.compose %v3035, 2863311531
      %v3037 = vextract.low.u32 %v3036
      %v3038 = vextract.high.u32 %v3036
      %v3039 = vshrl.u32 %v3038, 4
      %v3040 = vmul.u32 %v3039, 24
      %v3041 = vsub.s32 %v3035, %v3040
      %v3042 = vsub.s32 0, %v3041
      %v3043 = vsel %vm3033, %v3042, %v3041
      %vm3044 = vcmp.lt.s32.totalorder %v2916, 0
      %v3045 = vsub.s32 0, %v2916
      %v3046 = vsel %vm3044, %v3045, %v2916
      %v3047 = vmul.u32.u64.compose %v3046, 2863311531
      %v3048 = vextract.low.u32 %v3047
      %v3049 = vextract.high.u32 %v3047
      %v3050 = vshrl.u32 %v3049, 4
      %v3051 = vmul.u32 %v3050, 24
      %v3052 = vsub.s32 %v3046, %v3051
      %v3053 = vsub.s32 0, %v3052
      %v3054 = vsel %vm3044, %v3053, %v3052
      %vm3055 = vcmp.lt.s32.totalorder %v2917, 0
      %v3056 = vsub.s32 0, %v2917
      %v3057 = vsel %vm3055, %v3056, %v2917
      %v3058 = vmul.u32.u64.compose %v3057, 2863311531
      %v3059 = vextract.low.u32 %v3058
      %v3060 = vextract.high.u32 %v3058
      %v3061 = vshrl.u32 %v3060, 4
      %v3062 = vmul.u32 %v3061, 24
      %v3063 = vsub.s32 %v3057, %v3062
      %v3064 = vsub.s32 0, %v3063
      %v3065 = vsel %vm3055, %v3064, %v3063
      %vm3066 = vcmp.lt.s32.totalorder %v2918, 0
      %v3067 = vsub.s32 0, %v2918
      %v3068 = vsel %vm3066, %v3067, %v2918
      %v3069 = vmul.u32.u64.compose %v3068, 2863311531
      %v3070 = vextract.low.u32 %v3069
      %v3071 = vextract.high.u32 %v3069
      %v3072 = vshrl.u32 %v3071, 4
      %v3073 = vmul.u32 %v3072, 24
      %v3074 = vsub.s32 %v3068, %v3073
      %v3075 = vsub.s32 0, %v3074
      %v3076 = vsel %vm3066, %v3075, %v3074
      %vm3077 = vcmp.lt.s32.totalorder %v2919, 0
      %v3078 = vsub.s32 0, %v2919
      %v3079 = vsel %vm3077, %v3078, %v2919
      %v3080 = vmul.u32.u64.compose %v3079, 2863311531
      %v3081 = vextract.low.u32 %v3080
      %v3082 = vextract.high.u32 %v3080
      %v3083 = vshrl.u32 %v3082, 4
      %v3084 = vmul.u32 %v3083, 24
      %v3085 = vsub.s32 %v3079, %v3084
      %v3086 = vsub.s32 0, %v3085
      %v3087 = vsel %vm3077, %v3086, %v3085
      %vm3088 = vcmp.lt.s32.totalorder %v2920, 0
      %v3089 = vsub.s32 0, %v2920
      %v3090 = vsel %vm3088, %v3089, %v2920
      %v3091 = vmul.u32.u64.compose %v3090, 2863311531
      %v3092 = vextract.low.u32 %v3091
      %v3093 = vextract.high.u32 %v3091
      %v3094 = vshrl.u32 %v3093, 4
      %v3095 = vmul.u32 %v3094, 24
      %v3096 = vsub.s32 %v3090, %v3095
      %v3097 = vsub.s32 0, %v3096
      %v3098 = vsel %vm3088, %v3097, %v3096
      %vm3099 = vcmp.lt.s32.totalorder %v2921, 0
      %v3100 = vsub.s32 0, %v2921
      %v3101 = vsel %vm3099, %v3100, %v2921
      %v3102 = vmul.u32.u64.compose %v3101, 2863311531
      %v3103 = vextract.low.u32 %v3102
      %v3104 = vextract.high.u32 %v3102
      %v3105 = vshrl.u32 %v3104, 4
      %v3106 = vmul.u32 %v3105, 24
      %v3107 = vsub.s32 %v3101, %v3106
      %v3108 = vsub.s32 0, %v3107
      %v3109 = vsel %vm3099, %v3108, %v3107
      %vm3110 = vcmp.lt.s32.totalorder %v2922, 0
      %v3111 = vsub.s32 0, %v2922
      %v3112 = vsel %vm3110, %v3111, %v2922
      %v3113 = vmul.u32.u64.compose %v3112, 2863311531
      %v3114 = vextract.low.u32 %v3113
      %v3115 = vextract.high.u32 %v3113
      %v3116 = vshrl.u32 %v3115, 4
      %v3117 = vmul.u32 %v3116, 24
      %v3118 = vsub.s32 %v3112, %v3117
      %v3119 = vsub.s32 0, %v3118
      %v3120 = vsel %vm3110, %v3119, %v3118
      %vm3121 = vcmp.lt.s32.totalorder %v2923, 0
      %v3122 = vsub.s32 0, %v2923
      %v3123 = vsel %vm3121, %v3122, %v2923
      %v3124 = vmul.u32.u64.compose %v3123, 2863311531
      %v3125 = vextract.low.u32 %v3124
      %v3126 = vextract.high.u32 %v3124
      %v3127 = vshrl.u32 %v3126, 4
      %v3128 = vmul.u32 %v3127, 24
      %v3129 = vsub.s32 %v3123, %v3128
      %v3130 = vsub.s32 0, %v3129
      %v3131 = vsel %vm3121, %v3130, %v3129
      %vm3132 = vcmp.lt.s32.totalorder %v2924, 0
      %v3133 = vsub.s32 0, %v2924
      %v3134 = vsel %vm3132, %v3133, %v2924
      %v3135 = vmul.u32.u64.compose %v3134, 2863311531
      %v3136 = vextract.low.u32 %v3135
      %v3137 = vextract.high.u32 %v3135
      %v3138 = vshrl.u32 %v3137, 4
      %v3139 = vmul.u32 %v3138, 24
      %v3140 = vsub.s32 %v3134, %v3139
      %v3141 = vsub.s32 0, %v3140
      %v3142 = vsel %vm3132, %v3141, %v3140
      %vm3143 = vcmp.lt.s32.totalorder %v2925, 0
      %v3144 = vsub.s32 0, %v2925
      %v3145 = vsel %vm3143, %v3144, %v2925
      %v3146 = vmul.u32.u64.compose %v3145, 2863311531
      %v3147 = vextract.low.u32 %v3146
      %v3148 = vextract.high.u32 %v3146
      %v3149 = vshrl.u32 %v3148, 4
      %v3150 = vmul.u32 %v3149, 24
      %v3151 = vsub.s32 %v3145, %v3150
      %v3152 = vsub.s32 0, %v3151
      %v3153 = vsel %vm3143, %v3152, %v3151
      %vm3154 = vcmp.lt.s32.totalorder %v2926, 0
      %v3155 = vsub.s32 0, %v2926
      %v3156 = vsel %vm3154, %v3155, %v2926
      %v3157 = vmul.u32.u64.compose %v3156, 2863311531
      %v3158 = vextract.low.u32 %v3157
      %v3159 = vextract.high.u32 %v3157
      %v3160 = vshrl.u32 %v3159, 4
      %v3161 = vmul.u32 %v3160, 24
      %v3162 = vsub.s32 %v3156, %v3161
      %v3163 = vsub.s32 0, %v3162
      %v3164 = vsel %vm3154, %v3163, %v3162
      %vm3165 = vcmp.lt.s32.totalorder %v2927, 0
      %v3166 = vsub.s32 0, %v2927
      %v3167 = vsel %vm3165, %v3166, %v2927
      %v3168 = vmul.u32.u64.compose %v3167, 2863311531
      %v3169 = vextract.low.u32 %v3168
      %v3170 = vextract.high.u32 %v3168
      %v3171 = vshrl.u32 %v3170, 4
      %v3172 = vmul.u32 %v3171, 24
      %v3173 = vsub.s32 %v3167, %v3172
      %v3174 = vsub.s32 0, %v3173
      %v3175 = vsel %vm3165, %v3174, %v3173
      %vm3176 = vcmp.lt.s32.totalorder %v2928, 0
      %v3177 = vsub.s32 0, %v2928
      %v3178 = vsel %vm3176, %v3177, %v2928
      %v3179 = vmul.u32.u64.compose %v3178, 2863311531
      %v3180 = vextract.low.u32 %v3179
      %v3181 = vextract.high.u32 %v3179
      %v3182 = vshrl.u32 %v3181, 4
      %v3183 = vmul.u32 %v3182, 24
      %v3184 = vsub.s32 %v3178, %v3183
      %v3185 = vsub.s32 0, %v3184
      %v3186 = vsel %vm3176, %v3185, %v3184
      %vm3187 = vcmp.lt.s32.totalorder %v2929, 0
      %v3188 = vsub.s32 0, %v2929
      %v3189 = vsel %vm3187, %v3188, %v2929
      %v3190 = vmul.u32.u64.compose %v3189, 2863311531
      %v3191 = vextract.low.u32 %v3190
      %v3192 = vextract.high.u32 %v3190
      %v3193 = vshrl.u32 %v3192, 4
      %v3194 = vmul.u32 %v3193, 24
      %v3195 = vsub.s32 %v3189, %v3194
      %v3196 = vsub.s32 0, %v3195
      %v3197 = vsel %vm3187, %v3196, %v3195
      %vm3198 = vcmp.lt.s32.totalorder %v2930, 0
      %v3199 = vsub.s32 0, %v2930
      %v3200 = vsel %vm3198, %v3199, %v2930
      %v3201 = vmul.u32.u64.compose %v3200, 2863311531
      %v3202 = vextract.low.u32 %v3201
      %v3203 = vextract.high.u32 %v3201
      %v3204 = vshrl.u32 %v3203, 4
      %v3205 = vmul.u32 %v3204, 24
      %v3206 = vsub.s32 %v3200, %v3205
      %v3207 = vsub.s32 0, %v3206
      %v3208 = vsel %vm3198, %v3207, %v3206
      %vm3209 = vcmp.lt.s32.totalorder %v2931, 0
      %v3210 = vsub.s32 0, %v2931
      %v3211 = vsel %vm3209, %v3210, %v2931
      %v3212 = vmul.u32.u64.compose %v3211, 2863311531
      %v3213 = vextract.low.u32 %v3212
      %v3214 = vextract.high.u32 %v3212
      %v3215 = vshrl.u32 %v3214, 4
      %v3216 = vmul.u32 %v3215, 24
      %v3217 = vsub.s32 %v3211, %v3216
      %v3218 = vsub.s32 0, %v3217
      %v3219 = vsel %vm3209, %v3218, %v3217
      %vm3220 = vcmp.lt.s32.totalorder %v2932, 0
      %v3221 = vsub.s32 0, %v2932
      %v3222 = vsel %vm3220, %v3221, %v2932
      %v3223 = vmul.u32.u64.compose %v3222, 2863311531
      %v3224 = vextract.low.u32 %v3223
      %v3225 = vextract.high.u32 %v3223
      %v3226 = vshrl.u32 %v3225, 4
      %v3227 = vmul.u32 %v3226, 24
      %v3228 = vsub.s32 %v3222, %v3227
      %v3229 = vsub.s32 0, %v3228
      %v3230 = vsel %vm3220, %v3229, %v3228
      %vm3231 = vcmp.lt.s32.totalorder %v2933, 0
      %v3232 = vsub.s32 0, %v2933
      %v3233 = vsel %vm3231, %v3232, %v2933
      %v3234 = vmul.u32.u64.compose %v3233, 2863311531
      %v3235 = vextract.low.u32 %v3234
      %v3236 = vextract.high.u32 %v3234
      %v3237 = vshrl.u32 %v3236, 4
      %v3238 = vmul.u32 %v3237, 24
      %v3239 = vsub.s32 %v3233, %v3238
      %v3240 = vsub.s32 0, %v3239
      %v3241 = vsel %vm3231, %v3240, %v3239
      %vm3242 = vcmp.lt.s32.totalorder %v2934, 0
      %v3243 = vsub.s32 0, %v2934
      %v3244 = vsel %vm3242, %v3243, %v2934
      %v3245 = vmul.u32.u64.compose %v3244, 2863311531
      %v3246 = vextract.low.u32 %v3245
      %v3247 = vextract.high.u32 %v3245
      %v3248 = vshrl.u32 %v3247, 4
      %v3249 = vmul.u32 %v3248, 24
      %v3250 = vsub.s32 %v3244, %v3249
      %v3251 = vsub.s32 0, %v3250
      %v3252 = vsel %vm3242, %v3251, %v3250
      %vm3253 = vcmp.lt.s32.totalorder %v2935, 0
      %v3254 = vsub.s32 0, %v2935
      %v3255 = vsel %vm3253, %v3254, %v2935
      %v3256 = vmul.u32.u64.compose %v3255, 2863311531
      %v3257 = vextract.low.u32 %v3256
      %v3258 = vextract.high.u32 %v3256
      %v3259 = vshrl.u32 %v3258, 4
      %v3260 = vmul.u32 %v3259, 24
      %v3261 = vsub.s32 %v3255, %v3260
      %v3262 = vsub.s32 0, %v3261
      %v3263 = vsel %vm3253, %v3262, %v3261
      %vm3264 = vcmp.lt.s32.totalorder %v2936, 0
      %v3265 = vsub.s32 0, %v2936
      %v3266 = vsel %vm3264, %v3265, %v2936
      %v3267 = vmul.u32.u64.compose %v3266, 2863311531
      %v3268 = vextract.low.u32 %v3267
      %v3269 = vextract.high.u32 %v3267
      %v3270 = vshrl.u32 %v3269, 4
      %v3271 = vmul.u32 %v3270, 24
      %v3272 = vsub.s32 %v3266, %v3271
      %v3273 = vsub.s32 0, %v3272
      %v3274 = vsel %vm3264, %v3273, %v3272
      %vm3275 = vcmp.lt.s32.totalorder %v2937, 0
      %v3276 = vsub.s32 0, %v2937
      %v3277 = vsel %vm3275, %v3276, %v2937
      %v3278 = vmul.u32.u64.compose %v3277, 2863311531
      %v3279 = vextract.low.u32 %v3278
      %v3280 = vextract.high.u32 %v3278
      %v3281 = vshrl.u32 %v3280, 4
      %v3282 = vmul.u32 %v3281, 24
      %v3283 = vsub.s32 %v3277, %v3282
      %v3284 = vsub.s32 0, %v3283
      %v3285 = vsel %vm3275, %v3284, %v3283
      %vm3286 = vcmp.lt.s32.totalorder %v2938, 0
      %v3287 = vsub.s32 0, %v2938
      %v3288 = vsel %vm3286, %v3287, %v2938
      %v3289 = vmul.u32.u64.compose %v3288, 2863311531
      %v3290 = vextract.low.u32 %v3289
      %v3291 = vextract.high.u32 %v3289
      %v3292 = vshrl.u32 %v3291, 4
      %v3293 = vmul.u32 %v3292, 24
      %v3294 = vsub.s32 %v3288, %v3293
      %v3295 = vsub.s32 0, %v3294
      %v3296 = vsel %vm3286, %v3295, %v3294
      %vm3297 = vcmp.lt.s32.totalorder %v2939, 0
      %v3298 = vsub.s32 0, %v2939
      %v3299 = vsel %vm3297, %v3298, %v2939
      %v3300 = vmul.u32.u64.compose %v3299, 2863311531
      %v3301 = vextract.low.u32 %v3300
      %v3302 = vextract.high.u32 %v3300
      %v3303 = vshrl.u32 %v3302, 4
      %v3304 = vmul.u32 %v3303, 24
      %v3305 = vsub.s32 %v3299, %v3304
      %v3306 = vsub.s32 0, %v3305
      %v3307 = vsel %vm3297, %v3306, %v3305
      %vm3308 = vcmp.lt.s32.totalorder %v2940, 0
      %v3309 = vsub.s32 0, %v2940
      %v3310 = vsel %vm3308, %v3309, %v2940
      %v3311 = vmul.u32.u64.compose %v3310, 2863311531
      %v3312 = vextract.low.u32 %v3311
      %v3313 = vextract.high.u32 %v3311
      %v3314 = vshrl.u32 %v3313, 4
      %v3315 = vmul.u32 %v3314, 24
      %v3316 = vsub.s32 %v3310, %v3315
      %v3317 = vsub.s32 0, %v3316
      %v3318 = vsel %vm3308, %v3317, %v3316
      %vm3319 = vcmp.lt.s32.totalorder %v2941, 0
      %v3320 = vsub.s32 0, %v2941
      %v3321 = vsel %vm3319, %v3320, %v2941
      %v3322 = vmul.u32.u64.compose %v3321, 2863311531
      %v3323 = vextract.low.u32 %v3322
      %v3324 = vextract.high.u32 %v3322
      %v3325 = vshrl.u32 %v3324, 4
      %v3326 = vmul.u32 %v3325, 24
      %v3327 = vsub.s32 %v3321, %v3326
      %v3328 = vsub.s32 0, %v3327
      %v3329 = vsel %vm3319, %v3328, %v3327
      %vm3330 = vcmp.lt.s32.totalorder %v2942, 0
      %v3331 = vsub.s32 0, %v2942
      %v3332 = vsel %vm3330, %v3331, %v2942
      %v3333 = vmul.u32.u64.compose %v3332, 2863311531
      %v3334 = vextract.low.u32 %v3333
      %v3335 = vextract.high.u32 %v3333
      %v3336 = vshrl.u32 %v3335, 4
      %v3337 = vmul.u32 %v3336, 24
      %v3338 = vsub.s32 %v3332, %v3337
      %v3339 = vsub.s32 0, %v3338
      %v3340 = vsel %vm3330, %v3339, %v3338
      %vm3341 = vcmp.lt.s32.totalorder %v2943, 0
      %v3342 = vsub.s32 0, %v2943
      %v3343 = vsel %vm3341, %v3342, %v2943
      %v3344 = vmul.u32.u64.compose %v3343, 2863311531
      %v3345 = vextract.low.u32 %v3344
      %v3346 = vextract.high.u32 %v3344
      %v3347 = vshrl.u32 %v3346, 4
      %v3348 = vmul.u32 %v3347, 24
      %v3349 = vsub.s32 %v3343, %v3348
      %v3350 = vsub.s32 0, %v3349
      %v3351 = vsel %vm3341, %v3350, %v3349
      %vm3352 = vcmp.lt.s32.totalorder %v2944, 0
      %v3353 = vsub.s32 0, %v2944
      %v3354 = vsel %vm3352, %v3353, %v2944
      %v3355 = vmul.u32.u64.compose %v3354, 2863311531
      %v3356 = vextract.low.u32 %v3355
      %v3357 = vextract.high.u32 %v3355
      %v3358 = vshrl.u32 %v3357, 4
      %v3359 = vmul.u32 %v3358, 24
      %v3360 = vsub.s32 %v3354, %v3359
      %v3361 = vsub.s32 0, %v3360
      %v3362 = vsel %vm3352, %v3361, %v3360
      %vm3363 = vcmp.lt.s32.totalorder %v2945, 0
      %v3364 = vsub.s32 0, %v2945
      %v3365 = vsel %vm3363, %v3364, %v2945
      %v3366 = vmul.u32.u64.compose %v3365, 2863311531
      %v3367 = vextract.low.u32 %v3366
      %v3368 = vextract.high.u32 %v3366
      %v3369 = vshrl.u32 %v3368, 4
      %v3370 = vmul.u32 %v3369, 24
      %v3371 = vsub.s32 %v3365, %v3370
      %v3372 = vsub.s32 0, %v3371
      %v3373 = vsel %vm3363, %v3372, %v3371
      %vm3374 = vcmp.lt.s32.totalorder %v2946, 0
      %v3375 = vsub.s32 0, %v2946
      %v3376 = vsel %vm3374, %v3375, %v2946
      %v3377 = vmul.u32.u64.compose %v3376, 2863311531
      %v3378 = vextract.low.u32 %v3377
      %v3379 = vextract.high.u32 %v3377
      %v3380 = vshrl.u32 %v3379, 4
      %v3381 = vmul.u32 %v3380, 24
      %v3382 = vsub.s32 %v3376, %v3381
      %v3383 = vsub.s32 0, %v3382
      %v3384 = vsel %vm3374, %v3383, %v3382
      %vm3385 = vcmp.lt.s32.totalorder %v2947, 0
      %v3386 = vsub.s32 0, %v2947
      %v3387 = vsel %vm3385, %v3386, %v2947
      %v3388 = vmul.u32.u64.compose %v3387, 2863311531
      %v3389 = vextract.low.u32 %v3388
      %v3390 = vextract.high.u32 %v3388
      %v3391 = vshrl.u32 %v3390, 4
      %v3392 = vmul.u32 %v3391, 24
      %v3393 = vsub.s32 %v3387, %v3392
      %v3394 = vsub.s32 0, %v3393
      %v3395 = vsel %vm3385, %v3394, %v3393
      %vm3396 = vcmp.lt.s32.totalorder %v2948, 0
      %v3397 = vsub.s32 0, %v2948
      %v3398 = vsel %vm3396, %v3397, %v2948
      %v3399 = vmul.u32.u64.compose %v3398, 2863311531
      %v3400 = vextract.low.u32 %v3399
      %v3401 = vextract.high.u32 %v3399
      %v3402 = vshrl.u32 %v3401, 4
      %v3403 = vmul.u32 %v3402, 24
      %v3404 = vsub.s32 %v3398, %v3403
      %v3405 = vsub.s32 0, %v3404
      %v3406 = vsel %vm3396, %v3405, %v3404
      %vm3407 = vcmp.lt.s32.totalorder %v2949, 0
      %v3408 = vsub.s32 0, %v2949
      %v3409 = vsel %vm3407, %v3408, %v2949
      %v3410 = vmul.u32.u64.compose %v3409, 2863311531
      %v3411 = vextract.low.u32 %v3410
      %v3412 = vextract.high.u32 %v3410
      %v3413 = vshrl.u32 %v3412, 4
      %v3414 = vmul.u32 %v3413, 24
      %v3415 = vsub.s32 %v3409, %v3414
      %v3416 = vsub.s32 0, %v3415
      %v3417 = vsel %vm3407, %v3416, %v3415
      %vm3418 = vcmp.lt.s32.totalorder %v2950, 0
      %v3419 = vsub.s32 0, %v2950
      %v3420 = vsel %vm3418, %v3419, %v2950
      %v3421 = vmul.u32.u64.compose %v3420, 2863311531
      %v3422 = vextract.low.u32 %v3421
      %v3423 = vextract.high.u32 %v3421
      %v3424 = vshrl.u32 %v3423, 4
      %v3425 = vmul.u32 %v3424, 24
      %v3426 = vsub.s32 %v3420, %v3425
      %v3427 = vsub.s32 0, %v3426
      %v3428 = vsel %vm3418, %v3427, %v3426
      %vm3429 = vcmp.lt.s32.totalorder %v2951, 0
      %v3430 = vsub.s32 0, %v2951
      %v3431 = vsel %vm3429, %v3430, %v2951
      %v3432 = vmul.u32.u64.compose %v3431, 2863311531
      %v3433 = vextract.low.u32 %v3432
      %v3434 = vextract.high.u32 %v3432
      %v3435 = vshrl.u32 %v3434, 4
      %v3436 = vmul.u32 %v3435, 24
      %v3437 = vsub.s32 %v3431, %v3436
      %v3438 = vsub.s32 0, %v3437
      %v3439 = vsel %vm3429, %v3438, %v3437
      %vm3440 = vcmp.lt.s32.totalorder %v2952, 0
      %v3441 = vsub.s32 0, %v2952
      %v3442 = vsel %vm3440, %v3441, %v2952
      %v3443 = vmul.u32.u64.compose %v3442, 2863311531
      %v3444 = vextract.low.u32 %v3443
      %v3445 = vextract.high.u32 %v3443
      %v3446 = vshrl.u32 %v3445, 4
      %v3447 = vmul.u32 %v3446, 24
      %v3448 = vsub.s32 %v3442, %v3447
      %v3449 = vsub.s32 0, %v3448
      %v3450 = vsel %vm3440, %v3449, %v3448
      %vm3451 = vcmp.lt.s32.totalorder %v2953, 0
      %v3452 = vsub.s32 0, %v2953
      %v3453 = vsel %vm3451, %v3452, %v2953
      %v3454 = vmul.u32.u64.compose %v3453, 2863311531
      %v3455 = vextract.low.u32 %v3454
      %v3456 = vextract.high.u32 %v3454
      %v3457 = vshrl.u32 %v3456, 4
      %v3458 = vmul.u32 %v3457, 24
      %v3459 = vsub.s32 %v3453, %v3458
      %v3460 = vsub.s32 0, %v3459
      %v3461 = vsel %vm3451, %v3460, %v3459
      %vm3462 = vcmp.lt.s32.totalorder %v2954, 0
      %v3463 = vsub.s32 0, %v2954
      %v3464 = vsel %vm3462, %v3463, %v2954
      %v3465 = vmul.u32.u64.compose %v3464, 2863311531
      %v3466 = vextract.low.u32 %v3465
      %v3467 = vextract.high.u32 %v3465
      %v3468 = vshrl.u32 %v3467, 4
      %v3469 = vmul.u32 %v3468, 24
      %v3470 = vsub.s32 %v3464, %v3469
      %v3471 = vsub.s32 0, %v3470
      %v3472 = vsel %vm3462, %v3471, %v3470
      %vm3473 = vcmp.lt.s32.totalorder %v2955, 0
      %v3474 = vsub.s32 0, %v2955
      %v3475 = vsel %vm3473, %v3474, %v2955
      %v3476 = vmul.u32.u64.compose %v3475, 2863311531
      %v3477 = vextract.low.u32 %v3476
      %v3478 = vextract.high.u32 %v3476
      %v3479 = vshrl.u32 %v3478, 4
      %v3480 = vmul.u32 %v3479, 24
      %v3481 = vsub.s32 %v3475, %v3480
      %v3482 = vsub.s32 0, %v3481
      %v3483 = vsel %vm3473, %v3482, %v3481
      %vm3484 = vcmp.ne.s32.totalorder %v2966, 0
      %vm3485 = vcmp.ne.s32.totalorder %v2977, 0
      %vm3486 = vcmp.ne.s32.totalorder %v2988, 0
      %vm3487 = vcmp.ne.s32.totalorder %v2999, 0
      %vm3488 = vcmp.ne.s32.totalorder %v3010, 0
      %vm3489 = vcmp.ne.s32.totalorder %v3021, 0
      %vm3490 = vcmp.ne.s32.totalorder %v3032, 0
      %vm3491 = vcmp.ne.s32.totalorder %v3043, 0
      %vm3492 = vcmp.ne.s32.totalorder %v3054, 0
      %vm3493 = vcmp.ne.s32.totalorder %v3065, 0
      %vm3494 = vcmp.ne.s32.totalorder %v3076, 0
      %vm3495 = vcmp.ne.s32.totalorder %v3087, 0
      %vm3496 = vcmp.ne.s32.totalorder %v3098, 0
      %vm3497 = vcmp.ne.s32.totalorder %v3109, 0
      %vm3498 = vcmp.ne.s32.totalorder %v3120, 0
      %vm3499 = vcmp.ne.s32.totalorder %v3131, 0
      %vm3500 = vcmp.ne.s32.totalorder %v3142, 0
      %vm3501 = vcmp.ne.s32.totalorder %v3153, 0
      %vm3502 = vcmp.ne.s32.totalorder %v3164, 0
      %vm3503 = vcmp.ne.s32.totalorder %v3175, 0
      %vm3504 = vcmp.ne.s32.totalorder %v3186, 0
      %vm3505 = vcmp.ne.s32.totalorder %v3197, 0
      %vm3506 = vcmp.ne.s32.totalorder %v3208, 0
      %vm3507 = vcmp.ne.s32.totalorder %v3219, 0
      %vm3508 = vcmp.ne.s32.totalorder %v3230, 0
      %vm3509 = vcmp.ne.s32.totalorder %v3241, 0
      %vm3510 = vcmp.ne.s32.totalorder %v3252, 0
      %vm3511 = vcmp.ne.s32.totalorder %v3263, 0
      %vm3512 = vcmp.ne.s32.totalorder %v3274, 0
      %vm3513 = vcmp.ne.s32.totalorder %v3285, 0
      %vm3514 = vcmp.ne.s32.totalorder %v3296, 0
      %vm3515 = vcmp.ne.s32.totalorder %v3307, 0
      %vm3516 = vcmp.ne.s32.totalorder %v3318, 0
      %vm3517 = vcmp.ne.s32.totalorder %v3329, 0
      %vm3518 = vcmp.ne.s32.totalorder %v3340, 0
      %vm3519 = vcmp.ne.s32.totalorder %v3351, 0
      %vm3520 = vcmp.ne.s32.totalorder %v3362, 0
      %vm3521 = vcmp.ne.s32.totalorder %v3373, 0
      %vm3522 = vcmp.ne.s32.totalorder %v3384, 0
      %vm3523 = vcmp.ne.s32.totalorder %v3395, 0
      %vm3524 = vcmp.ne.s32.totalorder %v3406, 0
      %vm3525 = vcmp.ne.s32.totalorder %v3417, 0
      %vm3526 = vcmp.ne.s32.totalorder %v3428, 0
      %vm3527 = vcmp.ne.s32.totalorder %v3439, 0
      %vm3528 = vcmp.ne.s32.totalorder %v3450, 0
      %vm3529 = vcmp.ne.s32.totalorder %v3461, 0
      %vm3530 = vcmp.ne.s32.totalorder %v3472, 0
      %vm3531 = vcmp.ne.s32.totalorder %v3483, 0
      %vm3532 = vcmp.lt.s32.totalorder %v2966, 0
      %vm3533 = vcmp.lt.s32.totalorder %v2977, 0
      %vm3534 = vcmp.lt.s32.totalorder %v2988, 0
      %vm3535 = vcmp.lt.s32.totalorder %v2999, 0
      %vm3536 = vcmp.lt.s32.totalorder %v3010, 0
      %vm3537 = vcmp.lt.s32.totalorder %v3021, 0
      %vm3538 = vcmp.lt.s32.totalorder %v3032, 0
      %vm3539 = vcmp.lt.s32.totalorder %v3043, 0
      %vm3540 = vcmp.lt.s32.totalorder %v3054, 0
      %vm3541 = vcmp.lt.s32.totalorder %v3065, 0
      %vm3542 = vcmp.lt.s32.totalorder %v3076, 0
      %vm3543 = vcmp.lt.s32.totalorder %v3087, 0
      %vm3544 = vcmp.lt.s32.totalorder %v3098, 0
      %vm3545 = vcmp.lt.s32.totalorder %v3109, 0
      %vm3546 = vcmp.lt.s32.totalorder %v3120, 0
      %vm3547 = vcmp.lt.s32.totalorder %v3131, 0
      %vm3548 = vcmp.lt.s32.totalorder %v3142, 0
      %vm3549 = vcmp.lt.s32.totalorder %v3153, 0
      %vm3550 = vcmp.lt.s32.totalorder %v3164, 0
      %vm3551 = vcmp.lt.s32.totalorder %v3175, 0
      %vm3552 = vcmp.lt.s32.totalorder %v3186, 0
      %vm3553 = vcmp.lt.s32.totalorder %v3197, 0
      %vm3554 = vcmp.lt.s32.totalorder %v3208, 0
      %vm3555 = vcmp.lt.s32.totalorder %v3219, 0
      %vm3556 = vcmp.lt.s32.totalorder %v3230, 0
      %vm3557 = vcmp.lt.s32.totalorder %v3241, 0
      %vm3558 = vcmp.lt.s32.totalorder %v3252, 0
      %vm3559 = vcmp.lt.s32.totalorder %v3263, 0
      %vm3560 = vcmp.lt.s32.totalorder %v3274, 0
      %vm3561 = vcmp.lt.s32.totalorder %v3285, 0
      %vm3562 = vcmp.lt.s32.totalorder %v3296, 0
      %vm3563 = vcmp.lt.s32.totalorder %v3307, 0
      %vm3564 = vcmp.lt.s32.totalorder %v3318, 0
      %vm3565 = vcmp.lt.s32.totalorder %v3329, 0
      %vm3566 = vcmp.lt.s32.totalorder %v3340, 0
      %vm3567 = vcmp.lt.s32.totalorder %v3351, 0
      %vm3568 = vcmp.lt.s32.totalorder %v3362, 0
      %vm3569 = vcmp.lt.s32.totalorder %v3373, 0
      %vm3570 = vcmp.lt.s32.totalorder %v3384, 0
      %vm3571 = vcmp.lt.s32.totalorder %v3395, 0
      %vm3572 = vcmp.lt.s32.totalorder %v3406, 0
      %vm3573 = vcmp.lt.s32.totalorder %v3417, 0
      %vm3574 = vcmp.lt.s32.totalorder %v3428, 0
      %vm3575 = vcmp.lt.s32.totalorder %v3439, 0
      %vm3576 = vcmp.lt.s32.totalorder %v3450, 0
      %vm3577 = vcmp.lt.s32.totalorder %v3461, 0
      %vm3578 = vcmp.lt.s32.totalorder %v3472, 0
      %vm3579 = vcmp.lt.s32.totalorder %v3483, 0
      %vm3580 = vmand %vm3532, %vm3484
      %vm3581 = vmand %vm3533, %vm3485
      %vm3582 = vmand %vm3534, %vm3486
      %vm3583 = vmand %vm3535, %vm3487
      %vm3584 = vmand %vm3536, %vm3488
      %vm3585 = vmand %vm3537, %vm3489
      %vm3586 = vmand %vm3538, %vm3490
      %vm3587 = vmand %vm3539, %vm3491
      %vm3588 = vmand %vm3540, %vm3492
      %vm3589 = vmand %vm3541, %vm3493
      %vm3590 = vmand %vm3542, %vm3494
      %vm3591 = vmand %vm3543, %vm3495
      %vm3592 = vmand %vm3544, %vm3496
      %vm3593 = vmand %vm3545, %vm3497
      %vm3594 = vmand %vm3546, %vm3498
      %vm3595 = vmand %vm3547, %vm3499
      %vm3596 = vmand %vm3548, %vm3500
      %vm3597 = vmand %vm3549, %vm3501
      %vm3598 = vmand %vm3550, %vm3502
      %vm3599 = vmand %vm3551, %vm3503
      %vm3600 = vmand %vm3552, %vm3504
      %vm3601 = vmand %vm3553, %vm3505
      %vm3602 = vmand %vm3554, %vm3506
      %vm3603 = vmand %vm3555, %vm3507
      %vm3604 = vmand %vm3556, %vm3508
      %vm3605 = vmand %vm3557, %vm3509
      %vm3606 = vmand %vm3558, %vm3510
      %vm3607 = vmand %vm3559, %vm3511
      %vm3608 = vmand %vm3560, %vm3512
      %vm3609 = vmand %vm3561, %vm3513
      %vm3610 = vmand %vm3562, %vm3514
      %vm3611 = vmand %vm3563, %vm3515
      %vm3612 = vmand %vm3564, %vm3516
      %vm3613 = vmand %vm3565, %vm3517
      %vm3614 = vmand %vm3566, %vm3518
      %vm3615 = vmand %vm3567, %vm3519
      %vm3616 = vmand %vm3568, %vm3520
      %vm3617 = vmand %vm3569, %vm3521
      %vm3618 = vmand %vm3570, %vm3522
      %vm3619 = vmand %vm3571, %vm3523
      %vm3620 = vmand %vm3572, %vm3524
      %vm3621 = vmand %vm3573, %vm3525
      %vm3622 = vmand %vm3574, %vm3526
      %vm3623 = vmand %vm3575, %vm3527
      %vm3624 = vmand %vm3576, %vm3528
      %vm3625 = vmand %vm3577, %vm3529
      %vm3626 = vmand %vm3578, %vm3530
      %vm3627 = vmand %vm3579, %vm3531
      %v3628 = vadd.s32 %v2966, 24
      %v3629 = vadd.s32 %v2977, 24
      %v3630 = vadd.s32 %v2988, 24
      %v3631 = vadd.s32 %v2999, 24
      %v3632 = vadd.s32 %v3010, 24
      %v3633 = vadd.s32 %v3021, 24
      %v3634 = vadd.s32 %v3032, 24
      %v3635 = vadd.s32 %v3043, 24
      %v3636 = vadd.s32 %v3054, 24
      %v3637 = vadd.s32 %v3065, 24
      %v3638 = vadd.s32 %v3076, 24
      %v3639 = vadd.s32 %v3087, 24
      %v3640 = vadd.s32 %v3098, 24
      %v3641 = vadd.s32 %v3109, 24
      %v3642 = vadd.s32 %v3120, 24
      %v3643 = vadd.s32 %v3131, 24
      %v3644 = vadd.s32 %v3142, 24
      %v3645 = vadd.s32 %v3153, 24
      %v3646 = vadd.s32 %v3164, 24
      %v3647 = vadd.s32 %v3175, 24
      %v3648 = vadd.s32 %v3186, 24
      %v3649 = vadd.s32 %v3197, 24
      %v3650 = vadd.s32 %v3208, 24
      %v3651 = vadd.s32 %v3219, 24
      %v3652 = vadd.s32 %v3230, 24
      %v3653 = vadd.s32 %v3241, 24
      %v3654 = vadd.s32 %v3252, 24
      %v3655 = vadd.s32 %v3263, 24
      %v3656 = vadd.s32 %v3274, 24
      %v3657 = vadd.s32 %v3285, 24
      %v3658 = vadd.s32 %v3296, 24
      %v3659 = vadd.s32 %v3307, 24
      %v3660 = vadd.s32 %v3318, 24
      %v3661 = vadd.s32 %v3329, 24
      %v3662 = vadd.s32 %v3340, 24
      %v3663 = vadd.s32 %v3351, 24
      %v3664 = vadd.s32 %v3362, 24
      %v3665 = vadd.s32 %v3373, 24
      %v3666 = vadd.s32 %v3384, 24
      %v3667 = vadd.s32 %v3395, 24
      %v3668 = vadd.s32 %v3406, 24
      %v3669 = vadd.s32 %v3417, 24
      %v3670 = vadd.s32 %v3428, 24
      %v3671 = vadd.s32 %v3439, 24
      %v3672 = vadd.s32 %v3450, 24
      %v3673 = vadd.s32 %v3461, 24
      %v3674 = vadd.s32 %v3472, 24
      %v3675 = vadd.s32 %v3483, 24
      %v3676 = vsel %vm3580, %v3628, %v2966
      %v3677 = vsel %vm3581, %v3629, %v2977
      %v3678 = vsel %vm3582, %v3630, %v2988
      %v3679 = vsel %vm3583, %v3631, %v2999
      %v3680 = vsel %vm3584, %v3632, %v3010
      %v3681 = vsel %vm3585, %v3633, %v3021
      %v3682 = vsel %vm3586, %v3634, %v3032
      %v3683 = vsel %vm3587, %v3635, %v3043
      %v3684 = vsel %vm3588, %v3636, %v3054
      %v3685 = vsel %vm3589, %v3637, %v3065
      %v3686 = vsel %vm3590, %v3638, %v3076
      %v3687 = vsel %vm3591, %v3639, %v3087
      %v3688 = vsel %vm3592, %v3640, %v3098
      %v3689 = vsel %vm3593, %v3641, %v3109
      %v3690 = vsel %vm3594, %v3642, %v3120
      %v3691 = vsel %vm3595, %v3643, %v3131
      %v3692 = vsel %vm3596, %v3644, %v3142
      %v3693 = vsel %vm3597, %v3645, %v3153
      %v3694 = vsel %vm3598, %v3646, %v3164
      %v3695 = vsel %vm3599, %v3647, %v3175
      %v3696 = vsel %vm3600, %v3648, %v3186
      %v3697 = vsel %vm3601, %v3649, %v3197
      %v3698 = vsel %vm3602, %v3650, %v3208
      %v3699 = vsel %vm3603, %v3651, %v3219
      %v3700 = vsel %vm3604, %v3652, %v3230
      %v3701 = vsel %vm3605, %v3653, %v3241
      %v3702 = vsel %vm3606, %v3654, %v3252
      %v3703 = vsel %vm3607, %v3655, %v3263
      %v3704 = vsel %vm3608, %v3656, %v3274
      %v3705 = vsel %vm3609, %v3657, %v3285
      %v3706 = vsel %vm3610, %v3658, %v3296
      %v3707 = vsel %vm3611, %v3659, %v3307
      %v3708 = vsel %vm3612, %v3660, %v3318
      %v3709 = vsel %vm3613, %v3661, %v3329
      %v3710 = vsel %vm3614, %v3662, %v3340
      %v3711 = vsel %vm3615, %v3663, %v3351
      %v3712 = vsel %vm3616, %v3664, %v3362
      %v3713 = vsel %vm3617, %v3665, %v3373
      %v3714 = vsel %vm3618, %v3666, %v3384
      %v3715 = vsel %vm3619, %v3667, %v3395
      %v3716 = vsel %vm3620, %v3668, %v3406
      %v3717 = vsel %vm3621, %v3669, %v3417
      %v3718 = vsel %vm3622, %v3670, %v3428
      %v3719 = vsel %vm3623, %v3671, %v3439
      %v3720 = vsel %vm3624, %v3672, %v3450
      %v3721 = vsel %vm3625, %v3673, %v3461
      %v3722 = vsel %vm3626, %v3674, %v3472
      %v3723 = vsel %vm3627, %v3675, %v3483
      %vm3724 = vcmp.lt.s32.totalorder %v3676, 16
      %vm3725 = vcmp.lt.s32.totalorder %v3677, 16
      %vm3726 = vcmp.lt.s32.totalorder %v3678, 16
      %vm3727 = vcmp.lt.s32.totalorder %v3679, 16
      %vm3728 = vcmp.lt.s32.totalorder %v3680, 16
      %vm3729 = vcmp.lt.s32.totalorder %v3681, 16
      %vm3730 = vcmp.lt.s32.totalorder %v3682, 16
      %vm3731 = vcmp.lt.s32.totalorder %v3683, 16
      %vm3732 = vcmp.lt.s32.totalorder %v3684, 16
      %vm3733 = vcmp.lt.s32.totalorder %v3685, 16
      %vm3734 = vcmp.lt.s32.totalorder %v3686, 16
      %vm3735 = vcmp.lt.s32.totalorder %v3687, 16
      %vm3736 = vcmp.lt.s32.totalorder %v3688, 16
      %vm3737 = vcmp.lt.s32.totalorder %v3689, 16
      %vm3738 = vcmp.lt.s32.totalorder %v3690, 16
      %vm3739 = vcmp.lt.s32.totalorder %v3691, 16
      %vm3740 = vcmp.lt.s32.totalorder %v3692, 16
      %vm3741 = vcmp.lt.s32.totalorder %v3693, 16
      %vm3742 = vcmp.lt.s32.totalorder %v3694, 16
      %vm3743 = vcmp.lt.s32.totalorder %v3695, 16
      %vm3744 = vcmp.lt.s32.totalorder %v3696, 16
      %vm3745 = vcmp.lt.s32.totalorder %v3697, 16
      %vm3746 = vcmp.lt.s32.totalorder %v3698, 16
      %vm3747 = vcmp.lt.s32.totalorder %v3699, 16
      %vm3748 = vcmp.lt.s32.totalorder %v3700, 16
      %vm3749 = vcmp.lt.s32.totalorder %v3701, 16
      %vm3750 = vcmp.lt.s32.totalorder %v3702, 16
      %vm3751 = vcmp.lt.s32.totalorder %v3703, 16
      %vm3752 = vcmp.lt.s32.totalorder %v3704, 16
      %vm3753 = vcmp.lt.s32.totalorder %v3705, 16
      %vm3754 = vcmp.lt.s32.totalorder %v3706, 16
      %vm3755 = vcmp.lt.s32.totalorder %v3707, 16
      %vm3756 = vcmp.lt.s32.totalorder %v3708, 16
      %vm3757 = vcmp.lt.s32.totalorder %v3709, 16
      %vm3758 = vcmp.lt.s32.totalorder %v3710, 16
      %vm3759 = vcmp.lt.s32.totalorder %v3711, 16
      %vm3760 = vcmp.lt.s32.totalorder %v3712, 16
      %vm3761 = vcmp.lt.s32.totalorder %v3713, 16
      %vm3762 = vcmp.lt.s32.totalorder %v3714, 16
      %vm3763 = vcmp.lt.s32.totalorder %v3715, 16
      %vm3764 = vcmp.lt.s32.totalorder %v3716, 16
      %vm3765 = vcmp.lt.s32.totalorder %v3717, 16
      %vm3766 = vcmp.lt.s32.totalorder %v3718, 16
      %vm3767 = vcmp.lt.s32.totalorder %v3719, 16
      %vm3768 = vcmp.lt.s32.totalorder %v3720, 16
      %vm3769 = vcmp.lt.s32.totalorder %v3721, 16
      %vm3770 = vcmp.lt.s32.totalorder %v3722, 16
      %vm3771 = vcmp.lt.s32.totalorder %v3723, 16
      %v3772 = vsel %vm3724, 1, 0
      %v3773 = vsel %vm3725, 1, 0
      %v3774 = vsel %vm3726, 1, 0
      %v3775 = vsel %vm3727, 1, 0
      %v3776 = vsel %vm3728, 1, 0
      %v3777 = vsel %vm3729, 1, 0
      %v3778 = vsel %vm3730, 1, 0
      %v3779 = vsel %vm3731, 1, 0
      %v3780 = vsel %vm3732, 1, 0
      %v3781 = vsel %vm3733, 1, 0
      %v3782 = vsel %vm3734, 1, 0
      %v3783 = vsel %vm3735, 1, 0
      %v3784 = vsel %vm3736, 1, 0
      %v3785 = vsel %vm3737, 1, 0
      %v3786 = vsel %vm3738, 1, 0
      %v3787 = vsel %vm3739, 1, 0
      %v3788 = vsel %vm3740, 1, 0
      %v3789 = vsel %vm3741, 1, 0
      %v3790 = vsel %vm3742, 1, 0
      %v3791 = vsel %vm3743, 1, 0
      %v3792 = vsel %vm3744, 1, 0
      %v3793 = vsel %vm3745, 1, 0
      %v3794 = vsel %vm3746, 1, 0
      %v3795 = vsel %vm3747, 1, 0
      %v3796 = vsel %vm3748, 1, 0
      %v3797 = vsel %vm3749, 1, 0
      %v3798 = vsel %vm3750, 1, 0
      %v3799 = vsel %vm3751, 1, 0
      %v3800 = vsel %vm3752, 1, 0
      %v3801 = vsel %vm3753, 1, 0
      %v3802 = vsel %vm3754, 1, 0
      %v3803 = vsel %vm3755, 1, 0
      %v3804 = vsel %vm3756, 1, 0
      %v3805 = vsel %vm3757, 1, 0
      %v3806 = vsel %vm3758, 1, 0
      %v3807 = vsel %vm3759, 1, 0
      %v3808 = vsel %vm3760, 1, 0
      %v3809 = vsel %vm3761, 1, 0
      %v3810 = vsel %vm3762, 1, 0
      %v3811 = vsel %vm3763, 1, 0
      %v3812 = vsel %vm3764, 1, 0
      %v3813 = vsel %vm3765, 1, 0
      %v3814 = vsel %vm3766, 1, 0
      %v3815 = vsel %vm3767, 1, 0
      %v3816 = vsel %vm3768, 1, 0
      %v3817 = vsel %vm3769, 1, 0
      %v3818 = vsel %vm3770, 1, 0
      %v3819 = vsel %vm3771, 1, 0
      %v3820 = vcvt.s32.f32 %v3772
      %v3821 = vcvt.s32.f32 %v3773
      %v3822 = vcvt.s32.f32 %v3774
      %v3823 = vcvt.s32.f32 %v3775
      %v3824 = vcvt.s32.f32 %v3776
      %v3825 = vcvt.s32.f32 %v3777
      %v3826 = vcvt.s32.f32 %v3778
      %v3827 = vcvt.s32.f32 %v3779
      %v3828 = vcvt.s32.f32 %v3780
      %v3829 = vcvt.s32.f32 %v3781
      %v3830 = vcvt.s32.f32 %v3782
      %v3831 = vcvt.s32.f32 %v3783
      %v3832 = vcvt.s32.f32 %v3784
      %v3833 = vcvt.s32.f32 %v3785
      %v3834 = vcvt.s32.f32 %v3786
      %v3835 = vcvt.s32.f32 %v3787
      %v3836 = vcvt.s32.f32 %v3788
      %v3837 = vcvt.s32.f32 %v3789
      %v3838 = vcvt.s32.f32 %v3790
      %v3839 = vcvt.s32.f32 %v3791
      %v3840 = vcvt.s32.f32 %v3792
      %v3841 = vcvt.s32.f32 %v3793
      %v3842 = vcvt.s32.f32 %v3794
      %v3843 = vcvt.s32.f32 %v3795
      %v3844 = vcvt.s32.f32 %v3796
      %v3845 = vcvt.s32.f32 %v3797
      %v3846 = vcvt.s32.f32 %v3798
      %v3847 = vcvt.s32.f32 %v3799
      %v3848 = vcvt.s32.f32 %v3800
      %v3849 = vcvt.s32.f32 %v3801
      %v3850 = vcvt.s32.f32 %v3802
      %v3851 = vcvt.s32.f32 %v3803
      %v3852 = vcvt.s32.f32 %v3804
      %v3853 = vcvt.s32.f32 %v3805
      %v3854 = vcvt.s32.f32 %v3806
      %v3855 = vcvt.s32.f32 %v3807
      %v3856 = vcvt.s32.f32 %v3808
      %v3857 = vcvt.s32.f32 %v3809
      %v3858 = vcvt.s32.f32 %v3810
      %v3859 = vcvt.s32.f32 %v3811
      %v3860 = vcvt.s32.f32 %v3812
      %v3861 = vcvt.s32.f32 %v3813
      %v3862 = vcvt.s32.f32 %v3814
      %v3863 = vcvt.s32.f32 %v3815
      %v3864 = vcvt.s32.f32 %v3816
      %v3865 = vcvt.s32.f32 %v3817
      %v3866 = vcvt.s32.f32 %v3818
      %v3867 = vcvt.s32.f32 %v3819
      %v3868 = vmul.f32 %v2859, %v3820
      %v3869 = vmul.f32 %v2860, %v3821
      %v3870 = vmul.f32 %v2861, %v3822
      %v3871 = vmul.f32 %v2862, %v3823
      %v3872 = vmul.f32 %v2863, %v3824
      %v3873 = vmul.f32 %v2864, %v3825
      %v3874 = vmul.f32 %v2865, %v3826
      %v3875 = vmul.f32 %v2866, %v3827
      %v3876 = vmul.f32 %v2867, %v3828
      %v3877 = vmul.f32 %v2868, %v3829
      %v3878 = vmul.f32 %v2869, %v3830
      %v3879 = vmul.f32 %v2870, %v3831
      %v3880 = vmul.f32 %v2871, %v3832
      %v3881 = vmul.f32 %v2872, %v3833
      %v3882 = vmul.f32 %v2873, %v3834
      %v3883 = vmul.f32 %v2874, %v3835
      %v3884 = vmul.f32 %v2875, %v3836
      %v3885 = vmul.f32 %v2876, %v3837
      %v3886 = vmul.f32 %v2877, %v3838
      %v3887 = vmul.f32 %v2878, %v3839
      %v3888 = vmul.f32 %v2879, %v3840
      %v3889 = vmul.f32 %v2880, %v3841
      %v3890 = vmul.f32 %v2881, %v3842
      %v3891 = vmul.f32 %v2882, %v3843
      %v3892 = vmul.f32 %v2883, %v3844
      %v3893 = vmul.f32 %v2884, %v3845
      %v3894 = vmul.f32 %v2885, %v3846
      %v3895 = vmul.f32 %v2886, %v3847
      %v3896 = vmul.f32 %v2887, %v3848
      %v3897 = vmul.f32 %v2888, %v3849
      %v3898 = vmul.f32 %v2889, %v3850
      %v3899 = vmul.f32 %v2890, %v3851
      %v3900 = vmul.f32 %v2891, %v3852
      %v3901 = vmul.f32 %v2892, %v3853
      %v3902 = vmul.f32 %v2893, %v3854
      %v3903 = vmul.f32 %v2894, %v3855
      %v3904 = vmul.f32 %v2895, %v3856
      %v3905 = vmul.f32 %v2896, %v3857
      %v3906 = vmul.f32 %v2897, %v3858
      %v3907 = vmul.f32 %v2898, %v3859
      %v3908 = vmul.f32 %v2899, %v3860
      %v3909 = vmul.f32 %v2900, %v3861
      %v3910 = vmul.f32 %v2901, %v3862
      %v3911 = vmul.f32 %v2902, %v3863
      %v3912 = vmul.f32 %v2903, %v3864
      %v3913 = vmul.f32 %v2904, %v3865
      %v3914 = vmul.f32 %v2905, %v3866
      %v3915 = vmul.f32 %v2906, %v3867
      %v3916 = vsel %vm1453, %v3868, 0.0
      %v3917 = vsel %vm1453, %v3869, 0.0
      %v3918 = vadd.f32 %v3916, %v3917
      %v3919 = vsel %vm1453, %v3870, 0.0
      %v3920 = vadd.f32 %v3918, %v3919
      %v3921 = vsel %vm1453, %v3871, 0.0
      %v3922 = vadd.f32 %v3920, %v3921
      %v3923 = vsel %vm1453, %v3872, 0.0
      %v3924 = vadd.f32 %v3922, %v3923
      %v3925 = vsel %vm1453, %v3873, 0.0
      %v3926 = vadd.f32 %v3924, %v3925
      %v3927 = vsel %vm1453, %v3874, 0.0
      %v3928 = vadd.f32 %v3926, %v3927
      %v3929 = vsel %vm1453, %v3875, 0.0
      %v3930 = vadd.f32 %v3928, %v3929
      %v3931 = vsel %vm1453, %v3876, 0.0
      %v3932 = vadd.f32 %v3930, %v3931
      %v3933 = vsel %vm1453, %v3877, 0.0
      %v3934 = vadd.f32 %v3932, %v3933
      %v3935 = vsel %vm1453, %v3878, 0.0
      %v3936 = vadd.f32 %v3934, %v3935
      %v3937 = vsel %vm1453, %v3879, 0.0
      %v3938 = vadd.f32 %v3936, %v3937
      %v3939 = vsel %vm1453, %v3880, 0.0
      %v3940 = vadd.f32 %v3938, %v3939
      %v3941 = vsel %vm1453, %v3881, 0.0
      %v3942 = vadd.f32 %v3940, %v3941
      %v3943 = vsel %vm1453, %v3882, 0.0
      %v3944 = vadd.f32 %v3942, %v3943
      %v3945 = vsel %vm1453, %v3883, 0.0
      %v3946 = vadd.f32 %v3944, %v3945
      %v3947 = vsel %vm1453, %v3884, 0.0
      %v3948 = vadd.f32 %v3946, %v3947
      %v3949 = vsel %vm1453, %v3885, 0.0
      %v3950 = vadd.f32 %v3948, %v3949
      %v3951 = vsel %vm1453, %v3886, 0.0
      %v3952 = vadd.f32 %v3950, %v3951
      %v3953 = vsel %vm1453, %v3887, 0.0
      %v3954 = vadd.f32 %v3952, %v3953
      %v3955 = vsel %vm1453, %v3888, 0.0
      %v3956 = vadd.f32 %v3954, %v3955
      %v3957 = vsel %vm1453, %v3889, 0.0
      %v3958 = vadd.f32 %v3956, %v3957
      %v3959 = vsel %vm1453, %v3890, 0.0
      %v3960 = vadd.f32 %v3958, %v3959
      %v3961 = vsel %vm1453, %v3891, 0.0
      %v3962 = vadd.f32 %v3960, %v3961
      %v3963 = vsel %vm1453, %v3892, 0.0
      %v3964 = vadd.f32 %v3962, %v3963
      %v3965 = vsel %vm1453, %v3893, 0.0
      %v3966 = vadd.f32 %v3964, %v3965
      %v3967 = vsel %vm1453, %v3894, 0.0
      %v3968 = vadd.f32 %v3966, %v3967
      %v3969 = vsel %vm1453, %v3895, 0.0
      %v3970 = vadd.f32 %v3968, %v3969
      %v3971 = vsel %vm1453, %v3896, 0.0
      %v3972 = vadd.f32 %v3970, %v3971
      %v3973 = vsel %vm1453, %v3897, 0.0
      %v3974 = vadd.f32 %v3972, %v3973
      %v3975 = vsel %vm1453, %v3898, 0.0
      %v3976 = vadd.f32 %v3974, %v3975
      %v3977 = vsel %vm1453, %v3899, 0.0
      %v3978 = vadd.f32 %v3976, %v3977
      %v3979 = vsel %vm1453, %v3900, 0.0
      %v3980 = vadd.f32 %v3978, %v3979
      %v3981 = vsel %vm1453, %v3901, 0.0
      %v3982 = vadd.f32 %v3980, %v3981
      %v3983 = vsel %vm1453, %v3902, 0.0
      %v3984 = vadd.f32 %v3982, %v3983
      %v3985 = vsel %vm1453, %v3903, 0.0
      %v3986 = vadd.f32 %v3984, %v3985
      %v3987 = vsel %vm1453, %v3904, 0.0
      %v3988 = vadd.f32 %v3986, %v3987
      %v3989 = vsel %vm1453, %v3905, 0.0
      %v3990 = vadd.f32 %v3988, %v3989
      %v3991 = vsel %vm1453, %v3906, 0.0
      %v3992 = vadd.f32 %v3990, %v3991
      %v3993 = vsel %vm1453, %v3907, 0.0
      %v3994 = vadd.f32 %v3992, %v3993
      %v3995 = vsel %vm1453, %v3908, 0.0
      %v3996 = vadd.f32 %v3994, %v3995
      %v3997 = vsel %vm1453, %v3909, 0.0
      %v3998 = vadd.f32 %v3996, %v3997
      %v3999 = vsel %vm1453, %v3910, 0.0
      %v4000 = vadd.f32 %v3998, %v3999
      %v4001 = vsel %vm1453, %v3911, 0.0
      %v4002 = vadd.f32 %v4000, %v4001
      %v4003 = vsel %vm1453, %v3912, 0.0
      %v4004 = vadd.f32 %v4002, %v4003
      %v4005 = vsel %vm1453, %v3913, 0.0
      %v4006 = vadd.f32 %v4004, %v4005
      %v4007 = vsel %vm1453, %v3914, 0.0
      %v4008 = vadd.f32 %v4006, %v4007
      %v4009 = vsel %vm1453, %v3915, 0.0
      %v4010 = vadd.f32 %v4008, %v4009
      %v4011 = vrot.slane %v4010, 4
      %v4012 = vadd.f32 %v4010, %v4011
      %v4013 = vrot.slane %v4012, 2
      %v4014 = vadd.f32 %v4012, %v4013
      %v4015 = vrot.slane %v4014, 1
      %v4016 = vadd.f32 %v4014, %v4015
      %v4017 = vmul.f32 %v2859, %v2859
      %v4018 = vmul.f32 %v2860, %v2860
      %v4019 = vmul.f32 %v2861, %v2861
      %v4020 = vmul.f32 %v2862, %v2862
      %v4021 = vmul.f32 %v2863, %v2863
      %v4022 = vmul.f32 %v2864, %v2864
      %v4023 = vmul.f32 %v2865, %v2865
      %v4024 = vmul.f32 %v2866, %v2866
      %v4025 = vmul.f32 %v2867, %v2867
      %v4026 = vmul.f32 %v2868, %v2868
      %v4027 = vmul.f32 %v2869, %v2869
      %v4028 = vmul.f32 %v2870, %v2870
      %v4029 = vmul.f32 %v2871, %v2871
      %v4030 = vmul.f32 %v2872, %v2872
      %v4031 = vmul.f32 %v2873, %v2873
      %v4032 = vmul.f32 %v2874, %v2874
      %v4033 = vmul.f32 %v2875, %v2875
      %v4034 = vmul.f32 %v2876, %v2876
      %v4035 = vmul.f32 %v2877, %v2877
      %v4036 = vmul.f32 %v2878, %v2878
      %v4037 = vmul.f32 %v2879, %v2879
      %v4038 = vmul.f32 %v2880, %v2880
      %v4039 = vmul.f32 %v2881, %v2881
      %v4040 = vmul.f32 %v2882, %v2882
      %v4041 = vmul.f32 %v2883, %v2883
      %v4042 = vmul.f32 %v2884, %v2884
      %v4043 = vmul.f32 %v2885, %v2885
      %v4044 = vmul.f32 %v2886, %v2886
      %v4045 = vmul.f32 %v2887, %v2887
      %v4046 = vmul.f32 %v2888, %v2888
      %v4047 = vmul.f32 %v2889, %v2889
      %v4048 = vmul.f32 %v2890, %v2890
      %v4049 = vmul.f32 %v2891, %v2891
      %v4050 = vmul.f32 %v2892, %v2892
      %v4051 = vmul.f32 %v2893, %v2893
      %v4052 = vmul.f32 %v2894, %v2894
      %v4053 = vmul.f32 %v2895, %v2895
      %v4054 = vmul.f32 %v2896, %v2896
      %v4055 = vmul.f32 %v2897, %v2897
      %v4056 = vmul.f32 %v2898, %v2898
      %v4057 = vmul.f32 %v2899, %v2899
      %v4058 = vmul.f32 %v2900, %v2900
      %v4059 = vmul.f32 %v2901, %v2901
      %v4060 = vmul.f32 %v2902, %v2902
      %v4061 = vmul.f32 %v2903, %v2903
      %v4062 = vmul.f32 %v2904, %v2904
      %v4063 = vmul.f32 %v2905, %v2905
      %v4064 = vmul.f32 %v2906, %v2906
      %v4065 = vmul.f32 %v4017, %v3820
      %v4066 = vmul.f32 %v4018, %v3821
      %v4067 = vmul.f32 %v4019, %v3822
      %v4068 = vmul.f32 %v4020, %v3823
      %v4069 = vmul.f32 %v4021, %v3824
      %v4070 = vmul.f32 %v4022, %v3825
      %v4071 = vmul.f32 %v4023, %v3826
      %v4072 = vmul.f32 %v4024, %v3827
      %v4073 = vmul.f32 %v4025, %v3828
      %v4074 = vmul.f32 %v4026, %v3829
      %v4075 = vmul.f32 %v4027, %v3830
      %v4076 = vmul.f32 %v4028, %v3831
      %v4077 = vmul.f32 %v4029, %v3832
      %v4078 = vmul.f32 %v4030, %v3833
      %v4079 = vmul.f32 %v4031, %v3834
      %v4080 = vmul.f32 %v4032, %v3835
      %v4081 = vmul.f32 %v4033, %v3836
      %v4082 = vmul.f32 %v4034, %v3837
      %v4083 = vmul.f32 %v4035, %v3838
      %v4084 = vmul.f32 %v4036, %v3839
      %v4085 = vmul.f32 %v4037, %v3840
      %v4086 = vmul.f32 %v4038, %v3841
      %v4087 = vmul.f32 %v4039, %v3842
      %v4088 = vmul.f32 %v4040, %v3843
      %v4089 = vmul.f32 %v4041, %v3844
      %v4090 = vmul.f32 %v4042, %v3845
      %v4091 = vmul.f32 %v4043, %v3846
      %v4092 = vmul.f32 %v4044, %v3847
      %v4093 = vmul.f32 %v4045, %v3848
      %v4094 = vmul.f32 %v4046, %v3849
      %v4095 = vmul.f32 %v4047, %v3850
      %v4096 = vmul.f32 %v4048, %v3851
      %v4097 = vmul.f32 %v4049, %v3852
      %v4098 = vmul.f32 %v4050, %v3853
      %v4099 = vmul.f32 %v4051, %v3854
      %v4100 = vmul.f32 %v4052, %v3855
      %v4101 = vmul.f32 %v4053, %v3856
      %v4102 = vmul.f32 %v4054, %v3857
      %v4103 = vmul.f32 %v4055, %v3858
      %v4104 = vmul.f32 %v4056, %v3859
      %v4105 = vmul.f32 %v4057, %v3860
      %v4106 = vmul.f32 %v4058, %v3861
      %v4107 = vmul.f32 %v4059, %v3862
      %v4108 = vmul.f32 %v4060, %v3863
      %v4109 = vmul.f32 %v4061, %v3864
      %v4110 = vmul.f32 %v4062, %v3865
      %v4111 = vmul.f32 %v4063, %v3866
      %v4112 = vmul.f32 %v4064, %v3867
      %v4113 = vsel %vm1453, %v4065, 0.0
      %v4114 = vsel %vm1453, %v4066, 0.0
      %v4115 = vadd.f32 %v4113, %v4114
      %v4116 = vsel %vm1453, %v4067, 0.0
      %v4117 = vadd.f32 %v4115, %v4116
      %v4118 = vsel %vm1453, %v4068, 0.0
      %v4119 = vadd.f32 %v4117, %v4118
      %v4120 = vsel %vm1453, %v4069, 0.0
      %v4121 = vadd.f32 %v4119, %v4120
      %v4122 = vsel %vm1453, %v4070, 0.0
      %v4123 = vadd.f32 %v4121, %v4122
      %v4124 = vsel %vm1453, %v4071, 0.0
      %v4125 = vadd.f32 %v4123, %v4124
      %v4126 = vsel %vm1453, %v4072, 0.0
      %v4127 = vadd.f32 %v4125, %v4126
      %v4128 = vsel %vm1453, %v4073, 0.0
      %v4129 = vadd.f32 %v4127, %v4128
      %v4130 = vsel %vm1453, %v4074, 0.0
      %v4131 = vadd.f32 %v4129, %v4130
      %v4132 = vsel %vm1453, %v4075, 0.0
      %v4133 = vadd.f32 %v4131, %v4132
      %v4134 = vsel %vm1453, %v4076, 0.0
      %v4135 = vadd.f32 %v4133, %v4134
      %v4136 = vsel %vm1453, %v4077, 0.0
      %v4137 = vadd.f32 %v4135, %v4136
      %v4138 = vsel %vm1453, %v4078, 0.0
      %v4139 = vadd.f32 %v4137, %v4138
      %v4140 = vsel %vm1453, %v4079, 0.0
      %v4141 = vadd.f32 %v4139, %v4140
      %v4142 = vsel %vm1453, %v4080, 0.0
      %v4143 = vadd.f32 %v4141, %v4142
      %v4144 = vsel %vm1453, %v4081, 0.0
      %v4145 = vadd.f32 %v4143, %v4144
      %v4146 = vsel %vm1453, %v4082, 0.0
      %v4147 = vadd.f32 %v4145, %v4146
      %v4148 = vsel %vm1453, %v4083, 0.0
      %v4149 = vadd.f32 %v4147, %v4148
      %v4150 = vsel %vm1453, %v4084, 0.0
      %v4151 = vadd.f32 %v4149, %v4150
      %v4152 = vsel %vm1453, %v4085, 0.0
      %v4153 = vadd.f32 %v4151, %v4152
      %v4154 = vsel %vm1453, %v4086, 0.0
      %v4155 = vadd.f32 %v4153, %v4154
      %v4156 = vsel %vm1453, %v4087, 0.0
      %v4157 = vadd.f32 %v4155, %v4156
      %v4158 = vsel %vm1453, %v4088, 0.0
      %v4159 = vadd.f32 %v4157, %v4158
      %v4160 = vsel %vm1453, %v4089, 0.0
      %v4161 = vadd.f32 %v4159, %v4160
      %v4162 = vsel %vm1453, %v4090, 0.0
      %v4163 = vadd.f32 %v4161, %v4162
      %v4164 = vsel %vm1453, %v4091, 0.0
      %v4165 = vadd.f32 %v4163, %v4164
      %v4166 = vsel %vm1453, %v4092, 0.0
      %v4167 = vadd.f32 %v4165, %v4166
      %v4168 = vsel %vm1453, %v4093, 0.0
      %v4169 = vadd.f32 %v4167, %v4168
      %v4170 = vsel %vm1453, %v4094, 0.0
      %v4171 = vadd.f32 %v4169, %v4170
      %v4172 = vsel %vm1453, %v4095, 0.0
      %v4173 = vadd.f32 %v4171, %v4172
      %v4174 = vsel %vm1453, %v4096, 0.0
      %v4175 = vadd.f32 %v4173, %v4174
      %v4176 = vsel %vm1453, %v4097, 0.0
      %v4177 = vadd.f32 %v4175, %v4176
      %v4178 = vsel %vm1453, %v4098, 0.0
      %v4179 = vadd.f32 %v4177, %v4178
      %v4180 = vsel %vm1453, %v4099, 0.0
      %v4181 = vadd.f32 %v4179, %v4180
      %v4182 = vsel %vm1453, %v4100, 0.0
      %v4183 = vadd.f32 %v4181, %v4182
      %v4184 = vsel %vm1453, %v4101, 0.0
      %v4185 = vadd.f32 %v4183, %v4184
      %v4186 = vsel %vm1453, %v4102, 0.0
      %v4187 = vadd.f32 %v4185, %v4186
      %v4188 = vsel %vm1453, %v4103, 0.0
      %v4189 = vadd.f32 %v4187, %v4188
      %v4190 = vsel %vm1453, %v4104, 0.0
      %v4191 = vadd.f32 %v4189, %v4190
      %v4192 = vsel %vm1453, %v4105, 0.0
      %v4193 = vadd.f32 %v4191, %v4192
      %v4194 = vsel %vm1453, %v4106, 0.0
      %v4195 = vadd.f32 %v4193, %v4194
      %v4196 = vsel %vm1453, %v4107, 0.0
      %v4197 = vadd.f32 %v4195, %v4196
      %v4198 = vsel %vm1453, %v4108, 0.0
      %v4199 = vadd.f32 %v4197, %v4198
      %v4200 = vsel %vm1453, %v4109, 0.0
      %v4201 = vadd.f32 %v4199, %v4200
      %v4202 = vsel %vm1453, %v4110, 0.0
      %v4203 = vadd.f32 %v4201, %v4202
      %v4204 = vsel %vm1453, %v4111, 0.0
      %v4205 = vadd.f32 %v4203, %v4204
      %v4206 = vsel %vm1453, %v4112, 0.0
      %v4207 = vadd.f32 %v4205, %v4206
      %v4208 = vrot.slane %v4207, 4
      %v4209 = vadd.f32 %v4207, %v4208
      %v4210 = vrot.slane %v4209, 2
      %v4211 = vadd.f32 %v4209, %v4210
      %v4212 = vrot.slane %v4211, 1
      %v4213 = vadd.f32 %v4211, %v4212
      %v4214 = vrcp.pop 256.0
      %v4215 = vmul.f32 %v4016, %v4214
      %v4216 = vmul.f32 %v4213, %v4214
      %v4217 = vmul.f32 %v4215, %v4215
      %v4218 = vsub.f32 %v4216, %v4217
      %v4219 = vmax.f32 %v4218, 0.0
      %v4220 = vsub.f32 %v2859, %v4215
      %v4221 = vsub.f32 %v2860, %v4215
      %v4222 = vsub.f32 %v2862, %v4215
      %v4223 = vsub.f32 %v2863, %v4215
      %v4224 = vsub.f32 %v2865, %v4215
      %v4225 = vsub.f32 %v2866, %v4215
      %v4226 = vsub.f32 %v2868, %v4215
      %v4227 = vsub.f32 %v2869, %v4215
      %v4228 = vsub.f32 %v2871, %v4215
      %v4229 = vsub.f32 %v2872, %v4215
      %v4230 = vsub.f32 %v2874, %v4215
      %v4231 = vsub.f32 %v2875, %v4215
      %v4232 = vsub.f32 %v2877, %v4215
      %v4233 = vsub.f32 %v2878, %v4215
      %v4234 = vsub.f32 %v2880, %v4215
      %v4235 = vsub.f32 %v2881, %v4215
      %v4236 = vsub.f32 %v2883, %v4215
      %v4237 = vsub.f32 %v2884, %v4215
      %v4238 = vsub.f32 %v2886, %v4215
      %v4239 = vsub.f32 %v2887, %v4215
      %v4240 = vsub.f32 %v2889, %v4215
      %v4241 = vsub.f32 %v2890, %v4215
      %v4242 = vsub.f32 %v2892, %v4215
      %v4243 = vsub.f32 %v2893, %v4215
      %v4244 = vsub.f32 %v2895, %v4215
      %v4245 = vsub.f32 %v2896, %v4215
      %v4246 = vsub.f32 %v2898, %v4215
      %v4247 = vsub.f32 %v2899, %v4215
      %v4248 = vsub.f32 %v2901, %v4215
      %v4249 = vsub.f32 %v2902, %v4215
      %v4250 = vsub.f32 %v2904, %v4215
      %v4251 = vsub.f32 %v2905, %v4215
      %v4252 = vadd.f32 %v4219, 1e-05
      %v4253 = vrsqrt.pop %v4252
      %v4254 = vmul.f32 %v4220, %v4253
      %v4255 = vmul.f32 %v4221, %v4253
      %v4256 = vmul.f32 %v4222, %v4253
      %v4257 = vmul.f32 %v4223, %v4253
      %v4258 = vmul.f32 %v4224, %v4253
      %v4259 = vmul.f32 %v4225, %v4253
      %v4260 = vmul.f32 %v4226, %v4253
      %v4261 = vmul.f32 %v4227, %v4253
      %v4262 = vmul.f32 %v4228, %v4253
      %v4263 = vmul.f32 %v4229, %v4253
      %v4264 = vmul.f32 %v4230, %v4253
      %v4265 = vmul.f32 %v4231, %v4253
      %v4266 = vmul.f32 %v4232, %v4253
      %v4267 = vmul.f32 %v4233, %v4253
      %v4268 = vmul.f32 %v4234, %v4253
      %v4269 = vmul.f32 %v4235, %v4253
      %v4270 = vmul.f32 %v4236, %v4253
      %v4271 = vmul.f32 %v4237, %v4253
      %v4272 = vmul.f32 %v4238, %v4253
      %v4273 = vmul.f32 %v4239, %v4253
      %v4274 = vmul.f32 %v4240, %v4253
      %v4275 = vmul.f32 %v4241, %v4253
      %v4276 = vmul.f32 %v4242, %v4253
      %v4277 = vmul.f32 %v4243, %v4253
      %v4278 = vmul.f32 %v4244, %v4253
      %v4279 = vmul.f32 %v4245, %v4253
      %v4280 = vmul.f32 %v4246, %v4253
      %v4281 = vmul.f32 %v4247, %v4253
      %v4282 = vmul.f32 %v4248, %v4253
      %v4283 = vmul.f32 %v4249, %v4253
      %v4284 = vmul.f32 %v4250, %v4253
      %v4285 = vmul.f32 %v4251, %v4253
      %v4286 = vmax.f32 %v4254, 0.0
      %v4287 = vmax.f32 %v4255, 0.0
      %v4288 = vmax.f32 %v4256, 0.0
      %v4289 = vmax.f32 %v4257, 0.0
      %v4290 = vmax.f32 %v4258, 0.0
      %v4291 = vmax.f32 %v4259, 0.0
      %v4292 = vmax.f32 %v4260, 0.0
      %v4293 = vmax.f32 %v4261, 0.0
      %v4294 = vmax.f32 %v4262, 0.0
      %v4295 = vmax.f32 %v4263, 0.0
      %v4296 = vmax.f32 %v4264, 0.0
      %v4297 = vmax.f32 %v4265, 0.0
      %v4298 = vmax.f32 %v4266, 0.0
      %v4299 = vmax.f32 %v4267, 0.0
      %v4300 = vmax.f32 %v4268, 0.0
      %v4301 = vmax.f32 %v4269, 0.0
      %v4302 = vmax.f32 %v4270, 0.0
      %v4303 = vmax.f32 %v4271, 0.0
      %v4304 = vmax.f32 %v4272, 0.0
      %v4305 = vmax.f32 %v4273, 0.0
      %v4306 = vmax.f32 %v4274, 0.0
      %v4307 = vmax.f32 %v4275, 0.0
      %v4308 = vmax.f32 %v4276, 0.0
      %v4309 = vmax.f32 %v4277, 0.0
      %v4310 = vmax.f32 %v4278, 0.0
      %v4311 = vmax.f32 %v4279, 0.0
      %v4312 = vmax.f32 %v4280, 0.0
      %v4313 = vmax.f32 %v4281, 0.0
      %v4314 = vmax.f32 %v4282, 0.0
      %v4315 = vmax.f32 %v4283, 0.0
      %v4316 = vmax.f32 %v4284, 0.0
      %v4317 = vmax.f32 %v4285, 0.0
      %v4318 = vpack.c.bf16 %v4287, %v4286
      %v4319 = vpack.c.bf16 %v4289, %v4288
      %v4320 = vpack.c.bf16 %v4291, %v4290
      %v4321 = vpack.c.bf16 %v4293, %v4292
      %v4322 = vpack.c.bf16 %v4295, %v4294
      %v4323 = vpack.c.bf16 %v4297, %v4296
      %v4324 = vpack.c.bf16 %v4299, %v4298
      %v4325 = vpack.c.bf16 %v4301, %v4300
      %v4326 = vpack.c.bf16 %v4303, %v4302
      %v4327 = vpack.c.bf16 %v4305, %v4304
      %v4328 = vpack.c.bf16 %v4307, %v4306
      %v4329 = vpack.c.bf16 %v4309, %v4308
      %v4330 = vpack.c.bf16 %v4311, %v4310
      %v4331 = vpack.c.bf16 %v4313, %v4312
      %v4332 = vpack.c.bf16 %v4315, %v4314
      %v4333 = vpack.c.bf16 %v4317, %v4316
      %v4335 = vshrl.u32 %v4318, 16
      %v4338 = vshrl.u32 %v4319, 16
      %v4341 = vshrl.u32 %v4320, 16
      %v4344 = vshrl.u32 %v4321, 16
      %v4347 = vshrl.u32 %v4322, 16
      %v4350 = vshrl.u32 %v4323, 16
      %v4353 = vshrl.u32 %v4324, 16
      %v4356 = vshrl.u32 %v4325, 16
      %v4359 = vshrl.u32 %v4326, 16
      %v4362 = vshrl.u32 %v4327, 16
      %v4365 = vshrl.u32 %v4328, 16
      %v4368 = vshrl.u32 %v4329, 16
      %v4371 = vshrl.u32 %v4330, 16
      %v4374 = vshrl.u32 %v4331, 16
      %v4377 = vshrl.u32 %v4332, 16
      %v4380 = vshrl.u32 %v4333, 16
      %v4398 = vrot.slane %v4335, 7
      %v4399 = vshll.u32 %v4318, 16
      %v4401 = vor.u32 %v4398, %v4399
      %v4402 = vrot.slane %v4338, 7
      %v4403 = vshll.u32 %v4319, 16
      %v4405 = vor.u32 %v4402, %v4403
      %v4406 = vrot.slane %v4341, 7
      %v4407 = vshll.u32 %v4320, 16
      %v4409 = vor.u32 %v4406, %v4407
      %v4410 = vrot.slane %v4344, 7
      %v4411 = vshll.u32 %v4321, 16
      %v4413 = vor.u32 %v4410, %v4411
      %v4414 = vrot.slane %v4347, 7
      %v4415 = vshll.u32 %v4322, 16
      %v4417 = vor.u32 %v4414, %v4415
      %v4418 = vrot.slane %v4350, 7
      %v4419 = vshll.u32 %v4323, 16
      %v4421 = vor.u32 %v4418, %v4419
      %v4422 = vrot.slane %v4353, 7
      %v4423 = vshll.u32 %v4324, 16
      %v4425 = vor.u32 %v4422, %v4423
      %v4426 = vrot.slane %v4356, 7
      %v4427 = vshll.u32 %v4325, 16
      %v4429 = vor.u32 %v4426, %v4427
      %v4430 = vrot.slane %v4359, 7
      %v4431 = vshll.u32 %v4326, 16
      %v4433 = vor.u32 %v4430, %v4431
      %v4434 = vrot.slane %v4362, 7
      %v4435 = vshll.u32 %v4327, 16
      %v4437 = vor.u32 %v4434, %v4435
      %v4438 = vrot.slane %v4365, 7
      %v4439 = vshll.u32 %v4328, 16
      %v4441 = vor.u32 %v4438, %v4439
      %v4442 = vrot.slane %v4368, 7
      %v4443 = vshll.u32 %v4329, 16
      %v4445 = vor.u32 %v4442, %v4443
      %v4446 = vrot.slane %v4371, 7
      %v4447 = vshll.u32 %v4330, 16
      %v4449 = vor.u32 %v4446, %v4447
      %v4450 = vrot.slane %v4374, 7
      %v4451 = vshll.u32 %v4331, 16
      %v4453 = vor.u32 %v4450, %v4451
      %v4454 = vrot.slane %v4377, 7
      %v4455 = vshll.u32 %v4332, 16
      %v4457 = vor.u32 %v4454, %v4455
      %v4458 = vrot.slane %v4380, 7
      %v4459 = vshll.u32 %v4333, 16
      %v4461 = vor.u32 %v4458, %v4459
      %v4494 = vrot.slane %v4399, 7
      %v4495 = vrot.slane %v4403, 7
      %v4496 = vrot.slane %v4407, 7
      %v4497 = vrot.slane %v4411, 7
      %v4498 = vrot.slane %v4415, 7
      %v4499 = vrot.slane %v4419, 7
      %v4500 = vrot.slane %v4423, 7
      %v4501 = vrot.slane %v4427, 7
      %v4502 = vrot.slane %v4431, 7
      %v4503 = vrot.slane %v4435, 7
      %v4504 = vrot.slane %v4439, 7
      %v4505 = vrot.slane %v4443, 7
      %v4506 = vrot.slane %v4447, 7
      %v4507 = vrot.slane %v4451, 7
      %v4508 = vrot.slane %v4455, 7
      %v4509 = vrot.slane %v4459, 7
      %vm4526 = vcmask 1040384
      %vm4527 = vsmask.f32 256
      %vm4528 = vmand %vm4526, %vm4527
      %v4529 = vsel %vm4528, %v4335, %v4401
      %v4530 = vsel %vm4528, %v4338, %v4405
      %v4531 = vsel %vm4528, %v4341, %v4409
      %v4532 = vsel %vm4528, %v4344, %v4413
      %v4533 = vsel %vm4528, %v4347, %v4417
      %v4534 = vsel %vm4528, %v4350, %v4421
      %v4535 = vsel %vm4528, %v4353, %v4425
      %v4536 = vsel %vm4528, %v4356, %v4429
      %v4537 = vsel %vm4528, %v4359, %v4433
      %v4538 = vsel %vm4528, %v4362, %v4437
      %v4539 = vsel %vm4528, %v4365, %v4441
      %v4540 = vsel %vm4528, %v4368, %v4445
      %v4541 = vsel %vm4528, %v4371, %v4449
      %v4542 = vsel %vm4528, %v4374, %v4453
      %v4543 = vsel %vm4528, %v4377, %v4457
      %v4544 = vsel %vm4528, %v4380, %v4461
      %v4545 = vsel %vm4528, %v4398, %v4494
      %v4546 = vsel %vm4528, %v4402, %v4495
      %v4547 = vsel %vm4528, %v4406, %v4496
      %v4548 = vsel %vm4528, %v4410, %v4497
      %v4549 = vsel %vm4528, %v4414, %v4498
      %v4550 = vsel %vm4528, %v4418, %v4499
      %v4551 = vsel %vm4528, %v4422, %v4500
      %v4552 = vsel %vm4528, %v4426, %v4501
      %v4553 = vsel %vm4528, %v4430, %v4502
      %v4554 = vsel %vm4528, %v4434, %v4503
      %v4555 = vsel %vm4528, %v4438, %v4504
      %v4556 = vsel %vm4528, %v4442, %v4505
      %v4557 = vsel %vm4528, %v4446, %v4506
      %v4558 = vsel %vm4528, %v4450, %v4507
      %v4559 = vsel %vm4528, %v4454, %v4508
      %v4560 = vsel %vm4528, %v4458, %v4509
      %vm4561 = vcmask 1040384
      %v4564 = vsel %vm4561, %v4545, 0
      %v4566 = vsel %vm4561, %v4546, 0
      %v4568 = vsel %vm4561, %v4547, 0
      %v4570 = vsel %vm4561, %v4548, 0
      %v4572 = vsel %vm4561, %v4549, 0
      %v4574 = vsel %vm4561, %v4550, 0
      %v4576 = vsel %vm4561, %v4551, 0
      %v4578 = vsel %vm4561, %v4552, 0
      %v4580 = vsel %vm4561, %v4553, 0
      %v4582 = vsel %vm4561, %v4554, 0
      %v4584 = vsel %vm4561, %v4555, 0
      %v4586 = vsel %vm4561, %v4556, 0
      %v4588 = vsel %vm4561, %v4557, 0
      %v4590 = vsel %vm4561, %v4558, 0
      %v4592 = vsel %vm4561, %v4559, 0
      %v4594 = vsel %vm4561, %v4560, 0
      %v4627 = vunpack.c.l.b16 %v4530
      %v4628 = vunpack.c.h.b16 %v4530
      %v4629 = vunpack.c.l.b16 %v4566
      %v4630 = vunpack.c.l.b16 %v4529
      %v4631 = vunpack.c.h.b16 %v4529
      %v4632 = vunpack.c.l.b16 %v4564
      %v4633 = vunpack.c.l.b16 %v4531
      %v4634 = vunpack.c.h.b16 %v4531
      %v4635 = vunpack.c.l.b16 %v4568
      %v4636 = vunpack.c.l.b16 %v4532
      %v4637 = vunpack.c.h.b16 %v4532
      %v4638 = vunpack.c.l.b16 %v4570
      %v4639 = vunpack.c.l.b16 %v4533
      %v4640 = vunpack.c.h.b16 %v4533
      %v4641 = vunpack.c.l.b16 %v4572
      %v4642 = vunpack.c.l.b16 %v4534
      %v4643 = vunpack.c.h.b16 %v4534
      %v4644 = vunpack.c.l.b16 %v4574
      %v4645 = vunpack.c.l.b16 %v4535
      %v4646 = vunpack.c.h.b16 %v4535
      %v4647 = vunpack.c.l.b16 %v4576
      %v4648 = vunpack.c.l.b16 %v4536
      %v4649 = vunpack.c.h.b16 %v4536
      %v4650 = vunpack.c.l.b16 %v4578
      %v4651 = vunpack.c.l.b16 %v4537
      %v4652 = vunpack.c.h.b16 %v4537
      %v4653 = vunpack.c.l.b16 %v4580
      %v4654 = vunpack.c.l.b16 %v4538
      %v4655 = vunpack.c.h.b16 %v4538
      %v4656 = vunpack.c.l.b16 %v4582
      %v4657 = vunpack.c.l.b16 %v4539
      %v4658 = vunpack.c.h.b16 %v4539
      %v4659 = vunpack.c.l.b16 %v4584
      %v4660 = vunpack.c.l.b16 %v4540
      %v4661 = vunpack.c.h.b16 %v4540
      %v4662 = vunpack.c.l.b16 %v4586
      %v4663 = vunpack.c.l.b16 %v4541
      %v4664 = vunpack.c.h.b16 %v4541
      %v4665 = vunpack.c.l.b16 %v4588
      %v4666 = vunpack.c.l.b16 %v4542
      %v4667 = vunpack.c.h.b16 %v4542
      %v4668 = vunpack.c.l.b16 %v4590
      %v4669 = vunpack.c.l.b16 %v4543
      %v4670 = vunpack.c.h.b16 %v4543
      %v4671 = vunpack.c.l.b16 %v4592
      %v4672 = vunpack.c.l.b16 %v4544
      %v4673 = vunpack.c.h.b16 %v4544
      %v4674 = vunpack.c.l.b16 %v4594
      %v4676 = vunpack.c.l.b16 0
      %v4677 = vpack.c.b16 %v4627, %v4627
      %v4678 = vpack.c.b16 %v4628, %v4628
      %v4679 = vpack.c.b16 %v4629, %v4629
      %v4680 = vpack.c.b16 %v4630, %v4630
      %v4681 = vpack.c.b16 %v4631, %v4631
      %v4682 = vpack.c.b16 %v4632, %v4632
      %v4683 = vpack.c.b16 %v4633, %v4633
      %v4684 = vpack.c.b16 %v4634, %v4634
      %v4685 = vpack.c.b16 %v4635, %v4635
      %v4686 = vpack.c.b16 %v4636, %v4636
      %v4687 = vpack.c.b16 %v4637, %v4637
      %v4688 = vpack.c.b16 %v4638, %v4638
      %v4689 = vpack.c.b16 %v4639, %v4639
      %v4690 = vpack.c.b16 %v4640, %v4640
      %v4691 = vpack.c.b16 %v4641, %v4641
      %v4692 = vpack.c.b16 %v4642, %v4642
      %v4693 = vpack.c.b16 %v4643, %v4643
      %v4694 = vpack.c.b16 %v4644, %v4644
      %v4695 = vpack.c.b16 %v4645, %v4645
      %v4696 = vpack.c.b16 %v4646, %v4646
      %v4697 = vpack.c.b16 %v4647, %v4647
      %v4698 = vpack.c.b16 %v4648, %v4648
      %v4699 = vpack.c.b16 %v4649, %v4649
      %v4700 = vpack.c.b16 %v4650, %v4650
      %v4701 = vpack.c.b16 %v4651, %v4651
      %v4702 = vpack.c.b16 %v4652, %v4652
      %v4703 = vpack.c.b16 %v4653, %v4653
      %v4704 = vpack.c.b16 %v4654, %v4654
      %v4705 = vpack.c.b16 %v4655, %v4655
      %v4706 = vpack.c.b16 %v4656, %v4656
      %v4707 = vpack.c.b16 %v4657, %v4657
      %v4708 = vpack.c.b16 %v4658, %v4658
      %v4709 = vpack.c.b16 %v4659, %v4659
      %v4710 = vpack.c.b16 %v4660, %v4660
      %v4711 = vpack.c.b16 %v4661, %v4661
      %v4712 = vpack.c.b16 %v4662, %v4662
      %v4713 = vpack.c.b16 %v4663, %v4663
      %v4714 = vpack.c.b16 %v4664, %v4664
      %v4715 = vpack.c.b16 %v4665, %v4665
      %v4716 = vpack.c.b16 %v4666, %v4666
      %v4717 = vpack.c.b16 %v4667, %v4667
      %v4718 = vpack.c.b16 %v4668, %v4668
      %v4719 = vpack.c.b16 %v4669, %v4669
      %v4720 = vpack.c.b16 %v4670, %v4670
      %v4721 = vpack.c.b16 %v4671, %v4671
      %v4722 = vpack.c.b16 %v4672, %v4672
      %v4723 = vpack.c.b16 %v4673, %v4673
      %v4724 = vpack.c.b16 %v4674, %v4674
      %v4725 = vpack.c.b16 %v4676, %v4676
      %vm4775 = vcmask 519168
      %4776 = vst.msk [vmem:[%s180] sm:$0xf] %vm4775, %v4677
      %4777 = vst.msk [vmem:[%s180 + $0x4] sm:$0xf] %vm4775, %v4678
      %4778 = vst.msk [vmem:[%s180 + $0x8] sm:$0xf] %vm4775, %v4679
      %4779 = vst.msk [vmem:[%s180 + $0xc] sm:$0xf] %vm4775, %v4680
      %4780 = vst.msk [vmem:[%s180 + $0x10] sm:$0xf] %vm4775, %v4681
      %4781 = vst.msk [vmem:[%s180 + $0x14] sm:$0xf] %vm4775, %v4682
      %4782 = vst.msk [vmem:[%s180 + $0x18] sm:$0xf] %vm4775, %v4677
      %4783 = vst.msk [vmem:[%s180 + $0x1c] sm:$0xf] %vm4775, %v4678
      %4784 = vst.msk [vmem:[%s180 + $0x20] sm:$0xf] %vm4775, %v4679
      %4785 = vst.msk [vmem:[%s180 + $0x24] sm:$0xf] %vm4775, %v4683
      %4786 = vst.msk [vmem:[%s180 + $0x28] sm:$0xf] %vm4775, %v4684
      %4787 = vst.msk [vmem:[%s180 + $0x2c] sm:$0xf] %vm4775, %v4685
      %4788 = vst.msk [vmem:[%s180 + $0x30] sm:$0xf] %vm4775, %v4686
      %4789 = vst.msk [vmem:[%s180 + $0x34] sm:$0xf] %vm4775, %v4687
      %4790 = vst.msk [vmem:[%s180 + $0x38] sm:$0xf] %vm4775, %v4688
      %4791 = vst.msk [vmem:[%s180 + $0x3c] sm:$0xf] %vm4775, %v4689
      %4792 = vst.msk [vmem:[%s180 + $0x40] sm:$0xf] %vm4775, %v4690
      %4793 = vst.msk [vmem:[%s180 + $0x44] sm:$0xf] %vm4775, %v4691
      %4794 = vst.msk [vmem:[%s180 + $0x48] sm:$0xf] %vm4775, %v4692
      %4795 = vst.msk [vmem:[%s180 + $0x4c] sm:$0xf] %vm4775, %v4693
      %4796 = vst.msk [vmem:[%s180 + $0x50] sm:$0xf] %vm4775, %v4694
      %4797 = vst.msk [vmem:[%s180 + $0x54] sm:$0xf] %vm4775, %v4695
      %4798 = vst.msk [vmem:[%s180 + $0x58] sm:$0xf] %vm4775, %v4696
      %4799 = vst.msk [vmem:[%s180 + $0x5c] sm:$0xf] %vm4775, %v4697
      %4800 = vst.msk [vmem:[%s180 + $0x60] sm:$0xf] %vm4775, %v4698
      %4801 = vst.msk [vmem:[%s180 + $0x64] sm:$0xf] %vm4775, %v4699
      %4802 = vst.msk [vmem:[%s180 + $0x68] sm:$0xf] %vm4775, %v4700
      %4803 = vst.msk [vmem:[%s180 + $0x6c] sm:$0xf] %vm4775, %v4701
      %4804 = vst.msk [vmem:[%s180 + $0x70] sm:$0xf] %vm4775, %v4702
      %4805 = vst.msk [vmem:[%s180 + $0x74] sm:$0xf] %vm4775, %v4703
      %4806 = vst.msk [vmem:[%s180 + $0x78] sm:$0xf] %vm4775, %v4704
      %4807 = vst.msk [vmem:[%s180 + $0x7c] sm:$0xf] %vm4775, %v4705
      %4808 = vst.msk [vmem:[%s180 + $0x80] sm:$0xf] %vm4775, %v4706
      %4809 = vst.msk [vmem:[%s180 + $0x84] sm:$0xf] %vm4775, %v4707
      %4810 = vst.msk [vmem:[%s180 + $0x88] sm:$0xf] %vm4775, %v4708
      %4811 = vst.msk [vmem:[%s180 + $0x8c] sm:$0xf] %vm4775, %v4709
      %4812 = vst.msk [vmem:[%s180 + $0x90] sm:$0xf] %vm4775, %v4710
      %4813 = vst.msk [vmem:[%s180 + $0x94] sm:$0xf] %vm4775, %v4711
      %4814 = vst.msk [vmem:[%s180 + $0x98] sm:$0xf] %vm4775, %v4712
      %4815 = vst.msk [vmem:[%s180 + $0x9c] sm:$0xf] %vm4775, %v4713
      %4816 = vst.msk [vmem:[%s180 + $0xa0] sm:$0xf] %vm4775, %v4714
      %4817 = vst.msk [vmem:[%s180 + $0xa4] sm:$0xf] %vm4775, %v4715
      %4818 = vst.msk [vmem:[%s180 + $0xa8] sm:$0xf] %vm4775, %v4716
      %4819 = vst.msk [vmem:[%s180 + $0xac] sm:$0xf] %vm4775, %v4717
      %4820 = vst.msk [vmem:[%s180 + $0xb0] sm:$0xf] %vm4775, %v4718
      %4821 = vst.msk [vmem:[%s180 + $0xb4] sm:$0xf] %vm4775, %v4719
      %4822 = vst.msk [vmem:[%s180 + $0xb8] sm:$0xf] %vm4775, %v4720
      %4823 = vst.msk [vmem:[%s180 + $0xbc] sm:$0xf] %vm4775, %v4721
      %4824 = vst.msk [vmem:[%s180 + $0xc0] sm:$0xf] %vm4775, %v4722
      %4825 = vst.msk [vmem:[%s180 + $0xc4] sm:$0xf] %vm4775, %v4723
      %4826 = vst.msk [vmem:[%s180 + $0xc8] sm:$0xf] %vm4775, %v4724
      %4827 = vst.msk [vmem:[%s180 + $0xcc] sm:$0xf] %vm4775, %v4719
      %4828 = vst.msk [vmem:[%s180 + $0xd0] sm:$0xf] %vm4775, %v4720
      %4829 = vst.msk [vmem:[%s180 + $0xd4] sm:$0xf] %vm4775, %v4721
      %4830 = vst.msk [vmem:[%s180 + $0xd8] sm:$0xf] %vm4775, %v4725
      %p4831 = scmp.lt.s32.totalorder %s17, 1
      %s4832 = scalar_select %p4831, %s17, 1
      %p4833 = scmp.lt.s32.totalorder %s18, 0
      %s4834 = scalar_select %p4833, %s18, 0
      %s4835 = smul.addr %s4832, 55
      %s4836 = sadd.s32 %s4834, %s4835
      %s4837 = smul.addr %s4836, 4
      %s4838 = scalar_lea.vmem %s2, %s4837
      // Predicated region
      $region33: #{resnet_block_forward.2} parent=27 // pred_check
        %p4839 = pneg %p97
      $region34: #{resnet_block_forward.2} parent=27 // pred_check_branch
        %4841 = sbr.rel (%p4839) target = $region36
      $region35: #{resnet_block_forward.2} parent=27 // pred_region
        _
      $region36: #{resnet_block_forward.2} parent=27 // pred_fallthru
        _
    $region28: #{resnet_block_forward.2} parent=5 // pred_fallthru
      _
    %p4842 = scmp.le.s32.totalorder 2, %s8
    // Predicated region
    $region37: #{resnet_block_forward.2} parent=5 // pred_check
      %p4843 = pneg %p4842
    $region38: #{resnet_block_forward.2} parent=5 // pred_check_branch
      %4845 = sbr.rel (%p4843) target = $region40
    $region39: #{resnet_block_forward.2} parent=5 // pred_region
      %s4846 = ssub.s32 %s8, 2
      // Predicated region
      $region41: #{resnet_block_forward.2} parent=39 // pred_check
        %p4847 = pneg %p103
      $region42: #{resnet_block_forward.2} parent=39 // pred_check_branch
        %4849 = sbr.rel (%p4847) target = $region44
      $region43: #{resnet_block_forward.2} parent=39 // pred_region
        %p4850 = scmp.lt.s32.totalorder %s19, 1
        %s4851 = scalar_select %p4850, %s19, 1
        %p4852 = scmp.lt.s32.totalorder %s20, 0
        %s4853 = scalar_select %p4852, %s20, 0
        %s4854 = smul.addr %s4851, 55
        %s4855 = sadd.s32 %s4853, %s4854
        %s4856 = smul.addr %s4855, 4
        %s4857 = scalar_lea.vmem %s2, %s4856
      $region44: #{resnet_block_forward.2} parent=39 // pred_fallthru
        _
    $region40: #{resnet_block_forward.2} parent=5 // pred_fallthru
      _
  $region6: #{resnet_block_forward.2} parent=0 // loop_footer
    %s12 = sadd.s32 1, %s8
  $region7: #{resnet_block_forward.2} parent=0 // loop_footer_branch
    %7 = sbr.rel target = $region3
  $region8: #{resnet_block_forward.2} parent=0 // loop_exit
    _

</llo_original>
